<compile_context>
chip_gen: v5e
topology: v5e:2x2
jax: 0.10.0
libtpu: 0.0.40
codegen_flags: <defaults>
</compile_context>

<pallas_src>
import numpy as np
import jax
import jax.numpy as jnp
from jax import lax
from jax.experimental import pallas as pl
from jax.experimental.pallas import tpu as pltpu


BLK_B = 8          # images per grid step (stacked into one 2-D slab)
LANE_IN = 128      # input slab lane width (32*3 = 96, padded to 128)
KH = 5             # all three convs are 5x5


# --------------------------- fused Pallas kernel ----------------------------

def _fused_net_kernel(
        x_ref,
        b1_ref, c1b_ref, re1_ref, ro1_ref, ce1_ref, co1_ref,
        b2_ref, c2b_ref, re2_ref, ro2_ref, ce2_ref, co2_ref,
        b3_ref, c3b_ref, re3_ref, ro3_ref, ce3_ref, co3_ref,
        f1w_ref, f1b_ref, f2w_ref, f2b_ref, f3w_ref, f3b_ref,
        o_ref):
    """Whole Net forward for BLK_B stacked images; activations stay in VMEM."""
    f32, bf16 = jnp.float32, jnp.bfloat16

    def conv_relu(a, band_ref, bias_ref):
        # Implicit-GEMM conv: fold the KH row-shifted views into ONE matmul by
        # concatenating them along lanes (every piece is 128-lane aligned).
        r_out = a.shape[0] - (KH - 1)
        x_cat = jnp.concatenate([a[u:u + r_out, :] for u in range(KH)], axis=1)
        acc = jnp.dot(x_cat.astype(bf16), band_ref[...],
                      preferred_element_type=f32)
        return jnp.maximum(acc + bias_ref[...], 0.0)

    def maxpool(a, re_ref, ro_ref, ce_ref, co_ref):
        # 2x2/2 max-pool as exact 0/1-selection matmuls + elementwise max.
        # Row selectors also drop cross-image garbage rows of the stacked conv
        # output and (pool1) insert conv2's zero padding rows.
        ab = a.astype(bf16)
        rmax = jnp.maximum(
            jnp.dot(re_ref[...], ab, preferred_element_type=f32),
            jnp.dot(ro_ref[...], ab, preferred_element_type=f32))
        rb = rmax.astype(bf16)
        return jnp.maximum(
            jnp.dot(rb, ce_ref[...], preferred_element_type=f32),
            jnp.dot(rb, co_ref[...], preferred_element_type=f32))

    x = x_ref[...]                                         # (n*32, 128)  f32
    a1 = conv_relu(x, b1_ref, c1b_ref)                     # (n*32-4, 280)
    p1 = maxpool(a1, re1_ref, ro1_ref, ce1_ref, co1_ref)   # (n*16, 256) padded
    a2 = conv_relu(p1, b2_ref, c2b_ref)                    # (n*16-4, 240)
    p2 = maxpool(a2, re2_ref, ro2_ref, ce2_ref, co2_ref)   # (n*6, 128) padded
    a3 = conv_relu(p2, b3_ref, c3b_ref)                    # (n*6-4, 70)
    p3 = maxpool(a3, re3_ref, ro3_ref, ce3_ref, co3_ref)   # (n, 35)

    # Batched FC tail: M = BLK_B for all three matmuls, one (n, 10) store.
    h = jnp.maximum(jnp.dot(p3.astype(bf16), f1w_ref[...],
                            preferred_element_type=f32) + f1b_ref[...], 0.0)
    h = jnp.maximum(jnp.dot(h.astype(bf16), f2w_ref[...],
                            preferred_element_type=f32) + f2b_ref[...], 0.0)
    o_ref[...] = (jnp.dot(h.astype(bf16), f3w_ref[...],
                          preferred_element_type=f32) + f3b_ref[...])


# ------------------------ constant / weight preparation ----------------------

def _conv_band_folded(w_oihw, b, *, w_in, pad, lane_in, dtype):
    """Single folded block-Toeplitz matrix for the implicit-GEMM conv.

    band[u*lane_in + x*Cin + ci, w*Cout + co] = W[co, ci, u, x - w + pad]
    (zero where invalid / in the lane-padding rows), so that
        out2d = concat(X[u:u+Hout, :], axis=1) @ band + bias_row.
    """
    w_np = np.asarray(w_oihw, np.float32)
    cout, cin, kh, kw = w_np.shape
    w_out = w_in + 2 * pad - kw + 1
    assert w_in * cin <= lane_in
    wt = w_np.transpose(2, 3, 1, 0)                       # (kh, kw, cin, cout)
    band = np.zeros((kh, lane_in, w_out * cout), np.float32)
    for u in range(kh):
        for x in range(w_in):
            for wo in range(w_out):
                v = x - wo + pad
                if 0 <= v < kw:
                    band[u, x * cin:(x + 1) * cin,
                         wo * cout:(wo + 1) * cout] = wt[u, v]
    band = band.reshape(kh * lane_in, w_out * cout)
    bias = np.tile(np.asarray(b, np.float32), w_out).reshape(1, w_out * cout)
    return jnp.asarray(band, dtype), jnp.asarray(bias, jnp.float32)


def _pool_selectors_stacked(n, *, row_stride, h_valid, w_in, c,
                            row_pad_out, lane_out, dtype):
    """0/1 selection matrices for a batched (stacked) 2x2 max-pool.

    Stacked conv-output row of image i, local row r, sits at i*row_stride + r
    (valid for r < h_valid; other rows are cross-image garbage and are never
    selected).  Pooled block of image i occupies rows
    [i*(h_valid//2 + 2*row_pad_out), ...) with row_pad_out zero rows above and
    below (the next conv's vertical padding).
    """
    hp, wp = h_valid // 2, w_in // 2
    rows_in = (n - 1) * row_stride + h_valid
    rows_out_per_img = hp + 2 * row_pad_out
    re = np.zeros((n * rows_out_per_img, rows_in), np.float32)
    ro = np.zeros_like(re)
    for i in range(n):
        for j in range(hp):
            re[i * rows_out_per_img + row_pad_out + j,
               i * row_stride + 2 * j] = 1.0
            ro[i * rows_out_per_img + row_pad_out + j,
               i * row_stride + 2 * j + 1] = 1.0
    ce = np.zeros((w_in * c, lane_out), np.float32)       # lane_out >= wp*c
    co = np.zeros_like(ce)
    for j in range(wp):
        for ch in range(c):
            ce[(2 * j) * c + ch, j * c + ch] = 1.0
            co[(2 * j + 1) * c + ch, j * c + ch] = 1.0
    return tuple(jnp.asarray(a, dtype) for a in (re, ro, ce, co))


def prepare_params(p, blk_b=BLK_B):
    """One-time layout prep: folded banded conv weights, stacked pool selectors,
    FC transposes.  MXU operands are stored in bf16; biases stay f32."""
    n = blk_b
    wdt = jnp.bfloat16
    b1, c1b = _conv_band_folded(p["c1_w"], p["c1_b"],
                                w_in=32, pad=0, lane_in=128, dtype=wdt)
    re1, ro1, ce1, co1 = _pool_selectors_stacked(
        n, row_stride=32, h_valid=28, w_in=28, c=10,
        row_pad_out=1, lane_out=256, dtype=wdt)
    b2, c2b = _conv_band_folded(p["c2_w"], p["c2_b"],
                                w_in=14, pad=1, lane_in=256, dtype=wdt)
    re2, ro2, ce2, co2 = _pool_selectors_stacked(
        n, row_stride=16, h_valid=12, w_in=12, c=20,
        row_pad_out=0, lane_out=128, dtype=wdt)
    b3, c3b = _conv_band_folded(p["c3_w"], p["c3_b"],
                                w_in=6, pad=0, lane_in=128, dtype=wdt)
    re3, ro3, ce3, co3 = _pool_selectors_stacked(
        n, row_stride=6, h_valid=2, w_in=2, c=35,
        row_pad_out=0, lane_out=35, dtype=wdt)
    f1w = jnp.asarray(p["f1_w"]).T.astype(wdt)
    f1b = jnp.asarray(p["f1_b"], jnp.float32).reshape(1, -1)
    f2w = jnp.asarray(p["f2_w"]).T.astype(wdt)
    f2b = jnp.asarray(p["f2_b"], jnp.float32).reshape(1, -1)
    f3w = jnp.asarray(p["f3_w"]).T.astype(wdt)
    f3b = jnp.asarray(p["f3_b"], jnp.float32).reshape(1, -1)
    return (b1, c1b, re1, ro1, ce1, co1,
            b2, c2b, re2, ro2, ce2, co2,
            b3, c3b, re3, ro3, ce3, co3,
            f1w, f1b, f2w, f2b, f3w, f3b)


# ------------------------------- forward pass --------------------------------

def _whole_array_spec(a):
    nd = a.ndim
    return pl.BlockSpec(a.shape, lambda *args, nd=nd: (0,) * nd)


def net_forward(x_nchw, consts, blk_b=BLK_B):
    B, C, H, W = x_nchw.shape
    assert (C, H, W) == (3, 32, 32), "architecture requires 3x32x32 input"
    assert consts[2].shape == (blk_b * 16, blk_b * 32 - 4), \
        "constants were prepared for a different BLK_B"
    nblk = pl.cdiv(B, blk_b)
    bp = nblk * blk_b

    # NCHW -> lane-dense stacked 2-D slab: row = img*32 + h, col = w*3 + c,
    # lanes zero-padded 96 -> 128, batch zero-padded to a multiple of BLK_B.
    x2d = jnp.transpose(x_nchw, (0, 2, 3, 1)).reshape(B, H, W * C)
    x2d = jnp.pad(x2d, ((0, bp - B), (0, 0), (0, LANE_IN - W * C)))
    x2d = x2d.reshape(bp * H, LANE_IN).astype(jnp.float32)

    in_specs = [pl.BlockSpec((blk_b * H, LANE_IN), lambda b: (b, 0))]
    in_specs += [_whole_array_spec(a) for a in consts]

    out = pl.pallas_call(
        _fused_net_kernel,
        out_shape=jax.ShapeDtypeStruct((bp, 10), jnp.float32),
        grid=(nblk,),
        in_specs=in_specs,
        out_specs=pl.BlockSpec((blk_b, 10), lambda b: (b, 0)),
        compiler_params=pltpu.CompilerParams(
            dimension_semantics=("parallel",)),
    )(x2d, *consts)
    return out[:B]


# ---------------------- plain-JAX reference (for checking) ------------------

def ref_forward(x, p):
    def conv(x, w, b, pad):
        y = lax.conv_general_dilated(
            x, w, (1, 1), [(pad, pad), (pad, pad)],
            dimension_numbers=("NCHW", "OIHW", "NCHW"),
            precision=lax.Precision.HIGHEST)
        return y + b.reshape(1, -1, 1, 1)

    def pool(x):
        return lax.reduce_window(x, -jnp.inf, lax.max,
                                 (1, 1, 2, 2), (1, 1, 2, 2), "VALID")

    x = pool(jnp.maximum(conv(x, p["c1_w"], p["c1_b"], 0), 0.0))
    x = pool(jnp.maximum(conv(x, p["c2_w"], p["c2_b"], 1), 0.0))
    x = pool(jnp.maximum(conv(x, p["c3_w"], p["c3_b"], 0), 0.0))
    x = x.reshape(x.shape[0], -1)
    x = jnp.maximum(x @ p["f1_w"].T + p["f1_b"], 0.0)
    x = jnp.maximum(x @ p["f2_w"].T + p["f2_b"], 0.0)
    return x @ p["f3_w"].T + p["f3_b"]


# ------------------------------ parameters -----------------------------------

def init_params(key):
    def conv_init(k, cout, cin, ks):
        k1, k2 = jax.random.split(k)
        bound = 1.0 / np.sqrt(cin * ks * ks)
        w = jax.random.uniform(k1, (cout, cin, ks, ks), jnp.float32, -bound, bound)
        b = jax.random.uniform(k2, (cout,), jnp.float32, -bound, bound)
        return w, b

    def lin_init(k, cout, cin):
        k1, k2 = jax.random.split(k)
        bound = 1.0 / np.sqrt(cin)
        w = jax.random.uniform(k1, (cout, cin), jnp.float32, -bound, bound)
        b = jax.random.uniform(k2, (cout,), jnp.float32, -bound, bound)
        return w, b

    ks = jax.random.split(key, 6)
    p = {}
    p["c1_w"], p["c1_b"] = conv_init(ks[0], 10, 3, 5)
    p["c2_w"], p["c2_b"] = conv_init(ks[1], 20, 10, 5)
    p["c3_w"], p["c3_b"] = conv_init(ks[2], 35, 20, 5)
    p["f1_w"], p["f1_b"] = lin_init(ks[3], 30, 35)
    p["f2_w"], p["f2_b"] = lin_init(ks[4], 20, 30)
    p["f3_w"], p["f3_b"] = lin_init(ks[5], 10, 20)
    return p


# --------------------------------- main --------------------------------------

if __name__ == "__main__":
    root = jax.random.PRNGKey(0)
    k_params, k_x = jax.random.split(root)
    params = init_params(k_params)

    # Architecture requires 3x32x32 input (fc1 expects exactly 35 flat feats).
    # B=16 -> two "parallel" grid steps of BLK_B=8 images (feeds both v7x TCs).
    B = 16
    x = jax.random.normal(k_x, (B, 3, 32, 32), dtype=jnp.float32)

    consts = prepare_params(params, BLK_B)      # one-time weight-layout prep
    out = jax.block_until_ready(jax.jit(net_forward)(x, consts))
    ref = jax.block_until_ready(jax.jit(ref_forward)(x, params))

    assert out.shape == (B, 10), out.shape
    err = float(np.max(np.abs(np.asarray(out) - np.asarray(ref))))
    assert np.allclose(np.asarray(out), np.asarray(ref),
                       atol=1e-2, rtol=1e-2), f"max abs err = {err}"
    print("KERNEL_OK")
</pallas_src>

<mosaic_0001>
module attributes {stable_mosaic.version = 11 : i64} {
  func.func @_fused_net_kernel(%arg0: i32, %arg1: memref<256x128xf32, #tpu.memory_space<vmem>>, %arg2: memref<640x280xbf16, #tpu.memory_space<vmem>>, %arg3: memref<1x280xf32, #tpu.memory_space<vmem>>, %arg4: memref<128x252xbf16, #tpu.memory_space<vmem>>, %arg5: memref<128x252xbf16, #tpu.memory_space<vmem>>, %arg6: memref<280x256xbf16, #tpu.memory_space<vmem>>, %arg7: memref<280x256xbf16, #tpu.memory_space<vmem>>, %arg8: memref<1280x240xbf16, #tpu.memory_space<vmem>>, %arg9: memref<1x240xf32, #tpu.memory_space<vmem>>, %arg10: memref<48x124xbf16, #tpu.memory_space<vmem>>, %arg11: memref<48x124xbf16, #tpu.memory_space<vmem>>, %arg12: memref<240x128xbf16, #tpu.memory_space<vmem>>, %arg13: memref<240x128xbf16, #tpu.memory_space<vmem>>, %arg14: memref<640x70xbf16, #tpu.memory_space<vmem>>, %arg15: memref<1x70xf32, #tpu.memory_space<vmem>>, %arg16: memref<8x44xbf16, #tpu.memory_space<vmem>>, %arg17: memref<8x44xbf16, #tpu.memory_space<vmem>>, %arg18: memref<70x35xbf16, #tpu.memory_space<vmem>>, %arg19: memref<70x35xbf16, #tpu.memory_space<vmem>>, %arg20: memref<35x30xbf16, #tpu.memory_space<vmem>>, %arg21: memref<1x30xf32, #tpu.memory_space<vmem>>, %arg22: memref<30x20xbf16, #tpu.memory_space<vmem>>, %arg23: memref<1x20xf32, #tpu.memory_space<vmem>>, %arg24: memref<20x10xbf16, #tpu.memory_space<vmem>>, %arg25: memref<1x10xf32, #tpu.memory_space<vmem>>, %arg26: memref<8x10xf32, #tpu.memory_space<vmem>>) attributes {dimension_semantics = [#tpu.dimension_semantics<parallel>], iteration_bounds = array<i64: 2>, scalar_prefetch = 0 : i64, scratch_operands = 0 : i64, tpu.core_type = #tpu.core_type<tc>, window_params = [{transform_indices = @transform_0, window_bounds = array<i64: 256, 128>}, {pipeline_mode = #tpu.pipeline_mode<synchronous>, transform_indices = @transform_1, window_bounds = array<i64: 640, 280>}, {pipeline_mode = #tpu.pipeline_mode<synchronous>, transform_indices = @transform_2, window_bounds = array<i64: 1, 280>}, {pipeline_mode = #tpu.pipeline_mode<synchronous>, transform_indices = @transform_3, window_bounds = array<i64: 128, 252>}, {pipeline_mode = #tpu.pipeline_mode<synchronous>, transform_indices = @transform_4, window_bounds = array<i64: 128, 252>}, {pipeline_mode = #tpu.pipeline_mode<synchronous>, transform_indices = @transform_5, window_bounds = array<i64: 280, 256>}, {pipeline_mode = #tpu.pipeline_mode<synchronous>, transform_indices = @transform_6, window_bounds = array<i64: 280, 256>}, {pipeline_mode = #tpu.pipeline_mode<synchronous>, transform_indices = @transform_7, window_bounds = array<i64: 1280, 240>}, {pipeline_mode = #tpu.pipeline_mode<synchronous>, transform_indices = @transform_8, window_bounds = array<i64: 1, 240>}, {pipeline_mode = #tpu.pipeline_mode<synchronous>, transform_indices = @transform_9, window_bounds = array<i64: 48, 124>}, {pipeline_mode = #tpu.pipeline_mode<synchronous>, transform_indices = @transform_10, window_bounds = array<i64: 48, 124>}, {pipeline_mode = #tpu.pipeline_mode<synchronous>, transform_indices = @transform_11, window_bounds = array<i64: 240, 128>}, {pipeline_mode = #tpu.pipeline_mode<synchronous>, transform_indices = @transform_12, window_bounds = array<i64: 240, 128>}, {pipeline_mode = #tpu.pipeline_mode<synchronous>, transform_indices = @transform_13, window_bounds = array<i64: 640, 70>}, {pipeline_mode = #tpu.pipeline_mode<synchronous>, transform_indices = @transform_14, window_bounds = array<i64: 1, 70>}, {pipeline_mode = #tpu.pipeline_mode<synchronous>, transform_indices = @transform_15, window_bounds = array<i64: 8, 44>}, {pipeline_mode = #tpu.pipeline_mode<synchronous>, transform_indices = @transform_16, window_bounds = array<i64: 8, 44>}, {pipeline_mode = #tpu.pipeline_mode<synchronous>, transform_indices = @transform_17, window_bounds = array<i64: 70, 35>}, {pipeline_mode = #tpu.pipeline_mode<synchronous>, transform_indices = @transform_18, window_bounds = array<i64: 70, 35>}, {pipeline_mode = #tpu.pipeline_mode<synchronous>, transform_indices = @transform_19, window_bounds = array<i64: 35, 30>}, {pipeline_mode = #tpu.pipeline_mode<synchronous>, transform_indices = @transform_20, window_bounds = array<i64: 1, 30>}, {pipeline_mode = #tpu.pipeline_mode<synchronous>, transform_indices = @transform_21, window_bounds = array<i64: 30, 20>}, {pipeline_mode = #tpu.pipeline_mode<synchronous>, transform_indices = @transform_22, window_bounds = array<i64: 1, 20>}, {pipeline_mode = #tpu.pipeline_mode<synchronous>, transform_indices = @transform_23, window_bounds = array<i64: 20, 10>}, {pipeline_mode = #tpu.pipeline_mode<synchronous>, transform_indices = @transform_24, window_bounds = array<i64: 1, 10>}, {transform_indices = @transform_25, window_bounds = array<i64: 8, 10>}]} {
    %c0 = arith.constant 0 : index
    %c0_0 = arith.constant 0 : index
    %0 = vector.load %arg1[%c0, %c0_0] : memref<256x128xf32, #tpu.memory_space<vmem>>, vector<256x128xf32>
    %1 = vector.extract_strided_slice %0 {offsets = [0, 0], sizes = [252, 128], strides = [1, 1]} : vector<256x128xf32> to vector<252x128xf32>
    %2 = vector.extract_strided_slice %0 {offsets = [1, 0], sizes = [252, 128], strides = [1, 1]} : vector<256x128xf32> to vector<252x128xf32>
    %3 = vector.extract_strided_slice %0 {offsets = [2, 0], sizes = [252, 128], strides = [1, 1]} : vector<256x128xf32> to vector<252x128xf32>
    %4 = vector.extract_strided_slice %0 {offsets = [3, 0], sizes = [252, 128], strides = [1, 1]} : vector<256x128xf32> to vector<252x128xf32>
    %5 = vector.extract_strided_slice %0 {offsets = [4, 0], sizes = [252, 128], strides = [1, 1]} : vector<256x128xf32> to vector<252x128xf32>
    %6 = tpu.concatenate %1, %2, %3, %4, %5 in 1 : vector<252x128xf32>, vector<252x128xf32>, vector<252x128xf32>, vector<252x128xf32>, vector<252x128xf32> -> vector<252x640xf32>
    %7 = arith.truncf %6 : vector<252x640xf32> to vector<252x640xbf16>
    %c0_1 = arith.constant 0 : index
    %c0_2 = arith.constant 0 : index
    %8 = vector.load %arg2[%c0_1, %c0_2] : memref<640x280xbf16, #tpu.memory_space<vmem>>, vector<640x280xbf16>
    %cst = arith.constant dense<0.000000e+00> : vector<252x280xf32>
    %9 = tpu.matmul %7, %8, %cst {dimension_numbers = #tpu.dot_dimension_numbers<[1], [0], [0], [1], [0, 0, 1, 1], [], []>} : vector<252x640xbf16>, vector<640x280xbf16>, vector<252x280xf32> -> vector<252x280xf32>
    %c0_3 = arith.constant 0 : index
    %c0_4 = arith.constant 0 : index
    %10 = vector.load %arg3[%c0_3, %c0_4] : memref<1x280xf32, #tpu.memory_space<vmem>>, vector<1x280xf32>
    %11 = vector.broadcast %10 : vector<1x280xf32> to vector<252x280xf32>
    %12 = arith.addf %9, %11 : vector<252x280xf32>
    %cst_5 = arith.constant 0.000000e+00 : f32
    %13 = vector.broadcast %cst_5 : f32 to vector<252x280xf32>
    %14 = arith.maximumf %12, %13 : vector<252x280xf32>
    %15 = arith.truncf %14 : vector<252x280xf32> to vector<252x280xbf16>
    %c0_6 = arith.constant 0 : index
    %c0_7 = arith.constant 0 : index
    %16 = vector.load %arg4[%c0_6, %c0_7] : memref<128x252xbf16, #tpu.memory_space<vmem>>, vector<128x252xbf16>
    %cst_8 = arith.constant dense<0.000000e+00> : vector<128x280xf32>
    %17 = tpu.matmul %16, %15, %cst_8 {dimension_numbers = #tpu.dot_dimension_numbers<[1], [0], [0], [1], [0, 0, 1, 1], [], []>} : vector<128x252xbf16>, vector<252x280xbf16>, vector<128x280xf32> -> vector<128x280xf32>
    %c0_9 = arith.constant 0 : index
    %c0_10 = arith.constant 0 : index
    %18 = vector.load %arg5[%c0_9, %c0_10] : memref<128x252xbf16, #tpu.memory_space<vmem>>, vector<128x252xbf16>
    %cst_11 = arith.constant dense<0.000000e+00> : vector<128x280xf32>
    %19 = tpu.matmul %18, %15, %cst_11 {dimension_numbers = #tpu.dot_dimension_numbers<[1], [0], [0], [1], [0, 0, 1, 1], [], []>} : vector<128x252xbf16>, vector<252x280xbf16>, vector<128x280xf32> -> vector<128x280xf32>
    %20 = arith.maximumf %17, %19 : vector<128x280xf32>
    %21 = arith.truncf %20 : vector<128x280xf32> to vector<128x280xbf16>
    %c0_12 = arith.constant 0 : index
    %c0_13 = arith.constant 0 : index
    %22 = vector.load %arg6[%c0_12, %c0_13] : memref<280x256xbf16, #tpu.memory_space<vmem>>, vector<280x256xbf16>
    %cst_14 = arith.constant dense<0.000000e+00> : vector<128x256xf32>
    %23 = tpu.matmul %21, %22, %cst_14 {dimension_numbers = #tpu.dot_dimension_numbers<[1], [0], [0], [1], [0, 0, 1, 1], [], []>} : vector<128x280xbf16>, vector<280x256xbf16>, vector<128x256xf32> -> vector<128x256xf32>
    %c0_15 = arith.constant 0 : index
    %c0_16 = arith.constant 0 : index
    %24 = vector.load %arg7[%c0_15, %c0_16] : memref<280x256xbf16, #tpu.memory_space<vmem>>, vector<280x256xbf16>
    %cst_17 = arith.constant dense<0.000000e+00> : vector<128x256xf32>
    %25 = tpu.matmul %21, %24, %cst_17 {dimension_numbers = #tpu.dot_dimension_numbers<[1], [0], [0], [1], [0, 0, 1, 1], [], []>} : vector<128x280xbf16>, vector<280x256xbf16>, vector<128x256xf32> -> vector<128x256xf32>
    %26 = arith.maximumf %23, %25 : vector<128x256xf32>
    %27 = vector.extract_strided_slice %26 {offsets = [0, 0], sizes = [124, 256], strides = [1, 1]} : vector<128x256xf32> to vector<124x256xf32>
    %28 = vector.extract_strided_slice %26 {offsets = [1, 0], sizes = [124, 256], strides = [1, 1]} : vector<128x256xf32> to vector<124x256xf32>
    %29 = vector.extract_strided_slice %26 {offsets = [2, 0], sizes = [124, 256], strides = [1, 1]} : vector<128x256xf32> to vector<124x256xf32>
    %30 = vector.extract_strided_slice %26 {offsets = [3, 0], sizes = [124, 256], strides = [1, 1]} : vector<128x256xf32> to vector<124x256xf32>
    %31 = vector.extract_strided_slice %26 {offsets = [4, 0], sizes = [124, 256], strides = [1, 1]} : vector<128x256xf32> to vector<124x256xf32>
    %32 = tpu.concatenate %27, %28, %29, %30, %31 in 1 : vector<124x256xf32>, vector<124x256xf32>, vector<124x256xf32>, vector<124x256xf32>, vector<124x256xf32> -> vector<124x1280xf32>
    %33 = arith.truncf %32 : vector<124x1280xf32> to vector<124x1280xbf16>
    %c0_18 = arith.constant 0 : index
    %c0_19 = arith.constant 0 : index
    %34 = vector.load %arg8[%c0_18, %c0_19] : memref<1280x240xbf16, #tpu.memory_space<vmem>>, vector<1280x240xbf16>
    %cst_20 = arith.constant dense<0.000000e+00> : vector<124x240xf32>
    %35 = tpu.matmul %33, %34, %cst_20 {dimension_numbers = #tpu.dot_dimension_numbers<[1], [0], [0], [1], [0, 0, 1, 1], [], []>} : vector<124x1280xbf16>, vector<1280x240xbf16>, vector<124x240xf32> -> vector<124x240xf32>
    %c0_21 = arith.constant 0 : index
    %c0_22 = arith.constant 0 : index
    %36 = vector.load %arg9[%c0_21, %c0_22] : memref<1x240xf32, #tpu.memory_space<vmem>>, vector<1x240xf32>
    %37 = vector.broadcast %36 : vector<1x240xf32> to vector<124x240xf32>
    %38 = arith.addf %35, %37 : vector<124x240xf32>
    %cst_23 = arith.constant 0.000000e+00 : f32
    %39 = vector.broadcast %cst_23 : f32 to vector<124x240xf32>
    %40 = arith.maximumf %38, %39 : vector<124x240xf32>
    %41 = arith.truncf %40 : vector<124x240xf32> to vector<124x240xbf16>
    %c0_24 = arith.constant 0 : index
    %c0_25 = arith.constant 0 : index
    %42 = vector.load %arg10[%c0_24, %c0_25] : memref<48x124xbf16, #tpu.memory_space<vmem>>, vector<48x124xbf16>
    %cst_26 = arith.constant dense<0.000000e+00> : vector<48x240xf32>
    %43 = tpu.matmul %42, %41, %cst_26 {dimension_numbers = #tpu.dot_dimension_numbers<[1], [0], [0], [1], [0, 0, 1, 1], [], []>} : vector<48x124xbf16>, vector<124x240xbf16>, vector<48x240xf32> -> vector<48x240xf32>
    %c0_27 = arith.constant 0 : index
    %c0_28 = arith.constant 0 : index
    %44 = vector.load %arg11[%c0_27, %c0_28] : memref<48x124xbf16, #tpu.memory_space<vmem>>, vector<48x124xbf16>
    %cst_29 = arith.constant dense<0.000000e+00> : vector<48x240xf32>
    %45 = tpu.matmul %44, %41, %cst_29 {dimension_numbers = #tpu.dot_dimension_numbers<[1], [0], [0], [1], [0, 0, 1, 1], [], []>} : vector<48x124xbf16>, vector<124x240xbf16>, vector<48x240xf32> -> vector<48x240xf32>
    %46 = arith.maximumf %43, %45 : vector<48x240xf32>
    %47 = arith.truncf %46 : vector<48x240xf32> to vector<48x240xbf16>
    %c0_30 = arith.constant 0 : index
    %c0_31 = arith.constant 0 : index
    %48 = vector.load %arg12[%c0_30, %c0_31] : memref<240x128xbf16, #tpu.memory_space<vmem>>, vector<240x128xbf16>
    %cst_32 = arith.constant dense<0.000000e+00> : vector<48x128xf32>
    %49 = tpu.matmul %47, %48, %cst_32 {dimension_numbers = #tpu.dot_dimension_numbers<[1], [0], [0], [1], [0, 0, 1, 1], [], []>} : vector<48x240xbf16>, vector<240x128xbf16>, vector<48x128xf32> -> vector<48x128xf32>
    %c0_33 = arith.constant 0 : index
    %c0_34 = arith.constant 0 : index
    %50 = vector.load %arg13[%c0_33, %c0_34] : memref<240x128xbf16, #tpu.memory_space<vmem>>, vector<240x128xbf16>
    %cst_35 = arith.constant dense<0.000000e+00> : vector<48x128xf32>
    %51 = tpu.matmul %47, %50, %cst_35 {dimension_numbers = #tpu.dot_dimension_numbers<[1], [0], [0], [1], [0, 0, 1, 1], [], []>} : vector<48x240xbf16>, vector<240x128xbf16>, vector<48x128xf32> -> vector<48x128xf32>
    %52 = arith.maximumf %49, %51 : vector<48x128xf32>
    %53 = vector.extract_strided_slice %52 {offsets = [0, 0], sizes = [44, 128], strides = [1, 1]} : vector<48x128xf32> to vector<44x128xf32>
    %54 = vector.extract_strided_slice %52 {offsets = [1, 0], sizes = [44, 128], strides = [1, 1]} : vector<48x128xf32> to vector<44x128xf32>
    %55 = vector.extract_strided_slice %52 {offsets = [2, 0], sizes = [44, 128], strides = [1, 1]} : vector<48x128xf32> to vector<44x128xf32>
    %56 = vector.extract_strided_slice %52 {offsets = [3, 0], sizes = [44, 128], strides = [1, 1]} : vector<48x128xf32> to vector<44x128xf32>
    %57 = vector.extract_strided_slice %52 {offsets = [4, 0], sizes = [44, 128], strides = [1, 1]} : vector<48x128xf32> to vector<44x128xf32>
    %58 = tpu.concatenate %53, %54, %55, %56, %57 in 1 : vector<44x128xf32>, vector<44x128xf32>, vector<44x128xf32>, vector<44x128xf32>, vector<44x128xf32> -> vector<44x640xf32>
    %59 = arith.truncf %58 : vector<44x640xf32> to vector<44x640xbf16>
    %c0_36 = arith.constant 0 : index
    %c0_37 = arith.constant 0 : index
    %60 = vector.load %arg14[%c0_36, %c0_37] : memref<640x70xbf16, #tpu.memory_space<vmem>>, vector<640x70xbf16>
    %cst_38 = arith.constant dense<0.000000e+00> : vector<44x70xf32>
    %61 = tpu.matmul %59, %60, %cst_38 {dimension_numbers = #tpu.dot_dimension_numbers<[1], [0], [0], [1], [0, 0, 1, 1], [], []>} : vector<44x640xbf16>, vector<640x70xbf16>, vector<44x70xf32> -> vector<44x70xf32>
    %c0_39 = arith.constant 0 : index
    %c0_40 = arith.constant 0 : index
    %62 = vector.load %arg15[%c0_39, %c0_40] : memref<1x70xf32, #tpu.memory_space<vmem>>, vector<1x70xf32>
    %63 = vector.broadcast %62 : vector<1x70xf32> to vector<44x70xf32>
    %64 = arith.addf %61, %63 : vector<44x70xf32>
    %cst_41 = arith.constant 0.000000e+00 : f32
    %65 = vector.broadcast %cst_41 : f32 to vector<44x70xf32>
    %66 = arith.maximumf %64, %65 : vector<44x70xf32>
    %67 = arith.truncf %66 : vector<44x70xf32> to vector<44x70xbf16>
    %c0_42 = arith.constant 0 : index
    %c0_43 = arith.constant 0 : index
    %68 = vector.load %arg16[%c0_42, %c0_43] : memref<8x44xbf16, #tpu.memory_space<vmem>>, vector<8x44xbf16>
    %cst_44 = arith.constant dense<0.000000e+00> : vector<8x70xf32>
    %69 = tpu.matmul %68, %67, %cst_44 {dimension_numbers = #tpu.dot_dimension_numbers<[1], [0], [0], [1], [0, 0, 1, 1], [], []>} : vector<8x44xbf16>, vector<44x70xbf16>, vector<8x70xf32> -> vector<8x70xf32>
    %c0_45 = arith.constant 0 : index
    %c0_46 = arith.constant 0 : index
    %70 = vector.load %arg17[%c0_45, %c0_46] : memref<8x44xbf16, #tpu.memory_space<vmem>>, vector<8x44xbf16>
    %cst_47 = arith.constant dense<0.000000e+00> : vector<8x70xf32>
    %71 = tpu.matmul %70, %67, %cst_47 {dimension_numbers = #tpu.dot_dimension_numbers<[1], [0], [0], [1], [0, 0, 1, 1], [], []>} : vector<8x44xbf16>, vector<44x70xbf16>, vector<8x70xf32> -> vector<8x70xf32>
    %72 = arith.maximumf %69, %71 : vector<8x70xf32>
    %73 = arith.truncf %72 : vector<8x70xf32> to vector<8x70xbf16>
    %c0_48 = arith.constant 0 : index
    %c0_49 = arith.constant 0 : index
    %74 = vector.load %arg18[%c0_48, %c0_49] : memref<70x35xbf16, #tpu.memory_space<vmem>>, vector<70x35xbf16>
    %cst_50 = arith.constant dense<0.000000e+00> : vector<8x35xf32>
    %75 = tpu.matmul %73, %74, %cst_50 {dimension_numbers = #tpu.dot_dimension_numbers<[1], [0], [0], [1], [0, 0, 1, 1], [], []>} : vector<8x70xbf16>, vector<70x35xbf16>, vector<8x35xf32> -> vector<8x35xf32>
    %c0_51 = arith.constant 0 : index
    %c0_52 = arith.constant 0 : index
    %76 = vector.load %arg19[%c0_51, %c0_52] : memref<70x35xbf16, #tpu.memory_space<vmem>>, vector<70x35xbf16>
    %cst_53 = arith.constant dense<0.000000e+00> : vector<8x35xf32>
    %77 = tpu.matmul %73, %76, %cst_53 {dimension_numbers = #tpu.dot_dimension_numbers<[1], [0], [0], [1], [0, 0, 1, 1], [], []>} : vector<8x70xbf16>, vector<70x35xbf16>, vector<8x35xf32> -> vector<8x35xf32>
    %78 = arith.maximumf %75, %77 : vector<8x35xf32>
    %79 = arith.truncf %78 : vector<8x35xf32> to vector<8x35xbf16>
    %c0_54 = arith.constant 0 : index
    %c0_55 = arith.constant 0 : index
    %80 = vector.load %arg20[%c0_54, %c0_55] : memref<35x30xbf16, #tpu.memory_space<vmem>>, vector<35x30xbf16>
    %cst_56 = arith.constant dense<0.000000e+00> : vector<8x30xf32>
    %81 = tpu.matmul %79, %80, %cst_56 {dimension_numbers = #tpu.dot_dimension_numbers<[1], [0], [0], [1], [0, 0, 1, 1], [], []>} : vector<8x35xbf16>, vector<35x30xbf16>, vector<8x30xf32> -> vector<8x30xf32>
    %c0_57 = arith.constant 0 : index
    %c0_58 = arith.constant 0 : index
    %82 = vector.load %arg21[%c0_57, %c0_58] : memref<1x30xf32, #tpu.memory_space<vmem>>, vector<1x30xf32>
    %83 = vector.broadcast %82 : vector<1x30xf32> to vector<8x30xf32>
    %84 = arith.addf %81, %83 : vector<8x30xf32>
    %cst_59 = arith.constant 0.000000e+00 : f32
    %85 = vector.broadcast %cst_59 : f32 to vector<8x30xf32>
    %86 = arith.maximumf %84, %85 : vector<8x30xf32>
    %87 = arith.truncf %86 : vector<8x30xf32> to vector<8x30xbf16>
    %c0_60 = arith.constant 0 : index
    %c0_61 = arith.constant 0 : index
    %88 = vector.load %arg22[%c0_60, %c0_61] : memref<30x20xbf16, #tpu.memory_space<vmem>>, vector<30x20xbf16>
    %cst_62 = arith.constant dense<0.000000e+00> : vector<8x20xf32>
    %89 = tpu.matmul %87, %88, %cst_62 {dimension_numbers = #tpu.dot_dimension_numbers<[1], [0], [0], [1], [0, 0, 1, 1], [], []>} : vector<8x30xbf16>, vector<30x20xbf16>, vector<8x20xf32> -> vector<8x20xf32>
    %c0_63 = arith.constant 0 : index
    %c0_64 = arith.constant 0 : index
    %90 = vector.load %arg23[%c0_63, %c0_64] : memref<1x20xf32, #tpu.memory_space<vmem>>, vector<1x20xf32>
    %91 = vector.broadcast %90 : vector<1x20xf32> to vector<8x20xf32>
    %92 = arith.addf %89, %91 : vector<8x20xf32>
    %cst_65 = arith.constant 0.000000e+00 : f32
    %93 = vector.broadcast %cst_65 : f32 to vector<8x20xf32>
    %94 = arith.maximumf %92, %93 : vector<8x20xf32>
    %95 = arith.truncf %94 : vector<8x20xf32> to vector<8x20xbf16>
    %c0_66 = arith.constant 0 : index
    %c0_67 = arith.constant 0 : index
    %96 = vector.load %arg24[%c0_66, %c0_67] : memref<20x10xbf16, #tpu.memory_space<vmem>>, vector<20x10xbf16>
    %cst_68 = arith.constant dense<0.000000e+00> : vector<8x10xf32>
    %97 = tpu.matmul %95, %96, %cst_68 {dimension_numbers = #tpu.dot_dimension_numbers<[1], [0], [0], [1], [0, 0, 1, 1], [], []>} : vector<8x20xbf16>, vector<20x10xbf16>, vector<8x10xf32> -> vector<8x10xf32>
    %c0_69 = arith.constant 0 : index
    %c0_70 = arith.constant 0 : index
    %98 = vector.load %arg25[%c0_69, %c0_70] : memref<1x10xf32, #tpu.memory_space<vmem>>, vector<1x10xf32>
    %99 = vector.broadcast %98 : vector<1x10xf32> to vector<8x10xf32>
    %100 = arith.addf %97, %99 : vector<8x10xf32>
    %c0_71 = arith.constant 0 : index
    %c0_72 = arith.constant 0 : index
    %101 = vector.load %arg26[%c0_71, %c0_72] : memref<8x10xf32, #tpu.memory_space<vmem>>, vector<8x10xf32>
    tpu.vector_store %arg26[%c0_71, %c0_72], %100 {strides = array<i32>} : memref<8x10xf32, #tpu.memory_space<vmem>>, vector<8x10xf32>,
    return
  }
  func.func @transform_0(%arg0: i32) -> (i32, i32) {
    %c0_i32 = arith.constant 0 : i32
    %c0_i32_0 = arith.constant 0 : i32
    return %arg0, %c0_i32 : i32, i32
  }
  func.func @transform_1(%arg0: i32) -> (i32, i32) {
    %c0_i32 = arith.constant 0 : i32
    %c0_i32_0 = arith.constant 0 : i32
    %c0_i32_1 = arith.constant 0 : i32
    return %c0_i32, %c0_i32_0 : i32, i32
  }
  func.func @transform_2(%arg0: i32) -> (i32, i32) {
    %c0_i32 = arith.constant 0 : i32
    %c0_i32_0 = arith.constant 0 : i32
    %c0_i32_1 = arith.constant 0 : i32
    return %c0_i32, %c0_i32_0 : i32, i32
  }
  func.func @transform_3(%arg0: i32) -> (i32, i32) {
    %c0_i32 = arith.constant 0 : i32
    %c0_i32_0 = arith.constant 0 : i32
    %c0_i32_1 = arith.constant 0 : i32
    return %c0_i32, %c0_i32_0 : i32, i32
  }
  func.func @transform_4(%arg0: i32) -> (i32, i32) {
    %c0_i32 = arith.constant 0 : i32
    %c0_i32_0 = arith.constant 0 : i32
    %c0_i32_1 = arith.constant 0 : i32
    return %c0_i32, %c0_i32_0 : i32, i32
  }
  func.func @transform_5(%arg0: i32) -> (i32, i32) {
    %c0_i32 = arith.constant 0 : i32
    %c0_i32_0 = arith.constant 0 : i32
    %c0_i32_1 = arith.constant 0 : i32
    return %c0_i32, %c0_i32_0 : i32, i32
  }
  func.func @transform_6(%arg0: i32) -> (i32, i32) {
    %c0_i32 = arith.constant 0 : i32
    %c0_i32_0 = arith.constant 0 : i32
    %c0_i32_1 = arith.constant 0 : i32
    return %c0_i32, %c0_i32_0 : i32, i32
  }
  func.func @transform_7(%arg0: i32) -> (i32, i32) {
    %c0_i32 = arith.constant 0 : i32
    %c0_i32_0 = arith.constant 0 : i32
    %c0_i32_1 = arith.constant 0 : i32
    return %c0_i32, %c0_i32_0 : i32, i32
  }
  func.func @transform_8(%arg0: i32) -> (i32, i32) {
    %c0_i32 = arith.constant 0 : i32
    %c0_i32_0 = arith.constant 0 : i32
    %c0_i32_1 = arith.constant 0 : i32
    return %c0_i32, %c0_i32_0 : i32, i32
  }
  func.func @transform_9(%arg0: i32) -> (i32, i32) {
    %c0_i32 = arith.constant 0 : i32
    %c0_i32_0 = arith.constant 0 : i32
    %c0_i32_1 = arith.constant 0 : i32
    return %c0_i32, %c0_i32_0 : i32, i32
  }
  func.func @transform_10(%arg0: i32) -> (i32, i32) {
    %c0_i32 = arith.constant 0 : i32
    %c0_i32_0 = arith.constant 0 : i32
    %c0_i32_1 = arith.constant 0 : i32
    return %c0_i32, %c0_i32_0 : i32, i32
  }
  func.func @transform_11(%arg0: i32) -> (i32, i32) {
    %c0_i32 = arith.constant 0 : i32
    %c0_i32_0 = arith.constant 0 : i32
    %c0_i32_1 = arith.constant 0 : i32
    return %c0_i32, %c0_i32_0 : i32, i32
  }
  func.func @transform_12(%arg0: i32) -> (i32, i32) {
    %c0_i32 = arith.constant 0 : i32
    %c0_i32_0 = arith.constant 0 : i32
    %c0_i32_1 = arith.constant 0 : i32
    return %c0_i32, %c0_i32_0 : i32, i32
  }
  func.func @transform_13(%arg0: i32) -> (i32, i32) {
    %c0_i32 = arith.constant 0 : i32
    %c0_i32_0 = arith.constant 0 : i32
    %c0_i32_1 = arith.constant 0 : i32
    return %c0_i32, %c0_i32_0 : i32, i32
  }
  func.func @transform_14(%arg0: i32) -> (i32, i32) {
    %c0_i32 = arith.constant 0 : i32
    %c0_i32_0 = arith.constant 0 : i32
    %c0_i32_1 = arith.constant 0 : i32
    return %c0_i32, %c0_i32_0 : i32, i32
  }
  func.func @transform_15(%arg0: i32) -> (i32, i32) {
    %c0_i32 = arith.constant 0 : i32
    %c0_i32_0 = arith.constant 0 : i32
    %c0_i32_1 = arith.constant 0 : i32
    return %c0_i32, %c0_i32_0 : i32, i32
  }
  func.func @transform_16(%arg0: i32) -> (i32, i32) {
    %c0_i32 = arith.constant 0 : i32
    %c0_i32_0 = arith.constant 0 : i32
    %c0_i32_1 = arith.constant 0 : i32
    return %c0_i32, %c0_i32_0 : i32, i32
  }
  func.func @transform_17(%arg0: i32) -> (i32, i32) {
    %c0_i32 = arith.constant 0 : i32
    %c0_i32_0 = arith.constant 0 : i32
    %c0_i32_1 = arith.constant 0 : i32
    return %c0_i32, %c0_i32_0 : i32, i32
  }
  func.func @transform_18(%arg0: i32) -> (i32, i32) {
    %c0_i32 = arith.constant 0 : i32
    %c0_i32_0 = arith.constant 0 : i32
    %c0_i32_1 = arith.constant 0 : i32
    return %c0_i32, %c0_i32_0 : i32, i32
  }
  func.func @transform_19(%arg0: i32) -> (i32, i32) {
    %c0_i32 = arith.constant 0 : i32
    %c0_i32_0 = arith.constant 0 : i32
    %c0_i32_1 = arith.constant 0 : i32
    return %c0_i32, %c0_i32_0 : i32, i32
  }
  func.func @transform_20(%arg0: i32) -> (i32, i32) {
    %c0_i32 = arith.constant 0 : i32
    %c0_i32_0 = arith.constant 0 : i32
    %c0_i32_1 = arith.constant 0 : i32
    return %c0_i32, %c0_i32_0 : i32, i32
  }
  func.func @transform_21(%arg0: i32) -> (i32, i32) {
    %c0_i32 = arith.constant 0 : i32
    %c0_i32_0 = arith.constant 0 : i32
    %c0_i32_1 = arith.constant 0 : i32
    return %c0_i32, %c0_i32_0 : i32, i32
  }
  func.func @transform_22(%arg0: i32) -> (i32, i32) {
    %c0_i32 = arith.constant 0 : i32
    %c0_i32_0 = arith.constant 0 : i32
    %c0_i32_1 = arith.constant 0 : i32
    return %c0_i32, %c0_i32_0 : i32, i32
  }
  func.func @transform_23(%arg0: i32) -> (i32, i32) {
    %c0_i32 = arith.constant 0 : i32
    %c0_i32_0 = arith.constant 0 : i32
    %c0_i32_1 = arith.constant 0 : i32
    return %c0_i32, %c0_i32_0 : i32, i32
  }
  func.func @transform_24(%arg0: i32) -> (i32, i32) {
    %c0_i32 = arith.constant 0 : i32
    %c0_i32_0 = arith.constant 0 : i32
    %c0_i32_1 = arith.constant 0 : i32
    return %c0_i32, %c0_i32_0 : i32, i32
  }
  func.func @transform_25(%arg0: i32) -> (i32, i32) {
    %c0_i32 = arith.constant 0 : i32
    %c0_i32_0 = arith.constant 0 : i32
    return %arg0, %c0_i32 : i32, i32
  }
}

</mosaic_0001>

<llo_original>
// kernel: net_forward.1
$region0: #{net_forward.1}
  #allocation0 [shape = 'u32[]', space=smem, size = 0x4, offset = 0x4, fixed_abs, tag = 'smem constant byte address 0x4 - core index']
  #allocation1 [shape = 'u32[72,128]{1,0:T(1,128)}', space=vmem, size = 0x9000, scoped, tag = 'internal scratch']
  %s0 = inlined_call_operand.vmem [shape: f32[512,128], index: 0, kind: input, shape index: {}]
  %s1 = inlined_call_operand.vmem [shape: bf16[640,280], index: 1, kind: input, shape index: {}]
  %s2 = inlined_call_operand.vmem [shape: f32[1,280], index: 2, kind: input, shape index: {}]
  %s3 = inlined_call_operand.vmem [shape: bf16[128,252], index: 3, kind: input, shape index: {}]
  %s4 = inlined_call_operand.vmem [shape: bf16[128,252], index: 4, kind: input, shape index: {}]
  %s5 = inlined_call_operand.vmem [shape: bf16[280,256], index: 5, kind: input, shape index: {}]
  %s6 = inlined_call_operand.vmem [shape: bf16[280,256], index: 6, kind: input, shape index: {}]
  %s7 = inlined_call_operand.vmem [shape: bf16[1280,240], index: 7, kind: input, shape index: {}]
  %s8 = inlined_call_operand.vmem [shape: f32[1,240], index: 8, kind: input, shape index: {}]
  %s9 = inlined_call_operand.vmem [shape: bf16[48,124], index: 9, kind: input, shape index: {}]
  %s10 = inlined_call_operand.vmem [shape: bf16[48,124], index: 10, kind: input, shape index: {}]
  %s11 = inlined_call_operand.vmem [shape: bf16[240,128], index: 11, kind: input, shape index: {}]
  %s12 = inlined_call_operand.vmem [shape: bf16[240,128], index: 12, kind: input, shape index: {}]
  %s13 = inlined_call_operand.vmem [shape: bf16[640,70], index: 13, kind: input, shape index: {}]
  %s14 = inlined_call_operand.vmem [shape: f32[1,70], index: 14, kind: input, shape index: {}]
  %s15 = inlined_call_operand.vmem [shape: bf16[8,44], index: 15, kind: input, shape index: {}]
  %s16 = inlined_call_operand.vmem [shape: bf16[8,44], index: 16, kind: input, shape index: {}]
  %s17 = inlined_call_operand.vmem [shape: bf16[70,35], index: 17, kind: input, shape index: {}]
  %s18 = inlined_call_operand.vmem [shape: bf16[70,35], index: 18, kind: input, shape index: {}]
  %s19 = inlined_call_operand.vmem [shape: bf16[35,30], index: 19, kind: input, shape index: {}]
  %s20 = inlined_call_operand.vmem [shape: f32[1,30], index: 20, kind: input, shape index: {}]
  %s21 = inlined_call_operand.vmem [shape: bf16[30,20], index: 21, kind: input, shape index: {}]
  %s22 = inlined_call_operand.vmem [shape: f32[1,20], index: 22, kind: input, shape index: {}]
  %s23 = inlined_call_operand.vmem [shape: bf16[20,10], index: 23, kind: input, shape index: {}]
  %s24 = inlined_call_operand.vmem [shape: f32[1,10], index: 24, kind: input, shape index: {}]
  %s25 = inlined_call_operand.hbm [shape: f32[16,10], index: 25, kind: output, shape index: {}]
  %s26 = sld [smem:[#allocation0]]
  $region133: #{net_forward.1} parent=0
    _
  %s28 = ssub.s32 1, %s26
  %s29 = scalar_select 0, %s28, %s26
  $region1: #{net_forward.1} parent=0
    #allocation2 [shape = 'u8[8192]{0}', space=vmem, size = 0x2000, scoped, tag = 'output window, operand 0']
    #allocation3 [shape = 's32[2]{0}', space=sflag, size = 0x8, scoped, tag = 'scoped memory for net_forward.1']
    %30 = vsyncpa [#allocation3], 0
    %s31 = scalar_lea.sflag [#allocation3], 1
    %32 = vsyncpa %s31, 0
    loop: start=0, step=1, limit=4
    $region2: #{net_forward.1} parent=1 // loop_pre_header
      _
    $region3: #{net_forward.1} parent=1 // loop_header
      %s34 = sphi 0, %s38
      %p35 = scmp.ge.s32.totalorder %s34, 4
      %s44 = sphi 0, %s46
      %s47 = sphi 0, %s44
      %s48 = sphi 0, %s47
      %s64 = sphi 0, %s48
      %s68 = sphi 0, %s68
      %s70 = sphi 0, %s68
      %s71 = sphi 0, %s70
      %s85 = sphi 0, %s71
      %s89 = sphi 0, %s89
      %s91 = sphi 0, %s89
      %s92 = sphi 0, %s91
      %s106 = sphi 0, %s92
      %s110 = sphi 0, %s110
      %s112 = sphi 0, %s110
      %s113 = sphi 0, %s112
      %s127 = sphi 0, %s113
      %s131 = sphi 0, %s131
      %s133 = sphi 0, %s131
      %s134 = sphi 0, %s133
      %s148 = sphi 0, %s134
      %s152 = sphi 0, %s152
      %s154 = sphi 0, %s152
      %s155 = sphi 0, %s154
      %s169 = sphi 0, %s155
      %s173 = sphi 0, %s173
      %s175 = sphi 0, %s173
      %s176 = sphi 0, %s175
      %s190 = sphi 0, %s176
      %s194 = sphi 0, %s194
      %s196 = sphi 0, %s194
      %s197 = sphi 0, %s196
      %s211 = sphi 0, %s197
      %s215 = sphi 0, %s215
      %s217 = sphi 0, %s215
      %s218 = sphi 0, %s217
      %s232 = sphi 0, %s218
      %s236 = sphi 0, %s236
      %s238 = sphi 0, %s236
      %s239 = sphi 0, %s238
      %s253 = sphi 0, %s239
      %s257 = sphi 0, %s257
      %s259 = sphi 0, %s257
      %s260 = sphi 0, %s259
      %s274 = sphi 0, %s260
      %s278 = sphi 0, %s278
      %s280 = sphi 0, %s278
      %s281 = sphi 0, %s280
      %s295 = sphi 0, %s281
      %s299 = sphi 0, %s299
      %s301 = sphi 0, %s299
      %s302 = sphi 0, %s301
      %s316 = sphi 0, %s302
      %s320 = sphi 0, %s320
      %s322 = sphi 0, %s320
      %s323 = sphi 0, %s322
      %s337 = sphi 0, %s323
      %s341 = sphi 0, %s341
      %s343 = sphi 0, %s341
      %s344 = sphi 0, %s343
      %s358 = sphi 0, %s344
      %s362 = sphi 0, %s362
      %s364 = sphi 0, %s362
      %s365 = sphi 0, %s364
      %s379 = sphi 0, %s365
      %s383 = sphi 0, %s383
      %s385 = sphi 0, %s383
      %s386 = sphi 0, %s385
      %s400 = sphi 0, %s386
      %s404 = sphi 0, %s404
      %s406 = sphi 0, %s404
      %s407 = sphi 0, %s406
      %s421 = sphi 0, %s407
      %s425 = sphi 0, %s425
      %s427 = sphi 0, %s425
      %s428 = sphi 0, %s427
      %s442 = sphi 0, %s428
      %s446 = sphi 0, %s446
      %s448 = sphi 0, %s446
      %s449 = sphi 0, %s448
      %s463 = sphi 0, %s449
      %s467 = sphi 0, %s467
      %s469 = sphi 0, %s467
      %s470 = sphi 0, %s469
      %s484 = sphi 0, %s470
      %s488 = sphi 0, %s488
      %s490 = sphi 0, %s488
      %s491 = sphi 0, %s490
      %s505 = sphi 0, %s491
      %s509 = sphi 0, %s509
      %s511 = sphi 0, %s509
      %s512 = sphi 0, %s511
      %s526 = sphi 0, %s512
      %s530 = sphi 0, %s530
      %s532 = sphi 0, %s530
      %s533 = sphi 0, %s532
      %s547 = sphi 0, %s533
      %s551 = sphi 0, %s551
      %s553 = sphi 0, %s551
      %s554 = sphi 0, %s553
      %s568 = sphi 0, %s554
      %s574 = sphi 0, %s576
      %s577 = sphi 0, %s574
      %s578 = sphi 0, %s577
      %s594 = sphi 0, %s578
    $region4: #{net_forward.1} parent=1 // loop_header_branch
      %37 = sbr.rel (%p35) target = $region8
    $region5: #{net_forward.1} parent=1 // loop_body
      %s39 = ssub.s32 %s34, 1
      %s40 = ssub.s32 %s34, 2
      %s41 = sadd.s32 %s34, 1
      %s42 = ssub.s32 %s34, %s41
      %p43 = scmp.eq.s32.totalorder %s42, 0
      %s45 = sadd.s32 %s44, 1
      %s46 = scalar_select %p43, %s44, %s45
      %p49 = pneg %p43
      %p50 = scmp.eq.s32.totalorder %s34, 1
      %p51 = por %p49, %p50
      %p52 = scmp.ne.s32.totalorder %s44, %s47
      %p53 = scmp.eq.s32.totalorder %s34, 0
      %p54 = por %p52, %p53
      %p55 = scmp.ne.s32.totalorder %s44, %s47
      %p56 = scmp.eq.s32.totalorder %s39, 1
      %p57 = por %p55, %p56
      %p58 = scmp.ne.s32.totalorder %s47, %s48
      %p59 = scmp.eq.s32.totalorder %s39, 0
      %p60 = por %p58, %p59
      %p61 = scmp.ne.s32.totalorder %s47, %s48
      %p62 = scmp.eq.s32.totalorder %s40, 1
      %p63 = por %p61, %p62
      %p65 = scmp.ne.s32.totalorder %s48, %s64
      %p66 = scmp.eq.s32.totalorder %s40, 0
      %p67 = por %p65, %p66
      %s69 = sadd.s32 %s68, 1
      %p72 = scmp.eq.s32.totalorder %s34, 1
      %p73 = scmp.ne.s32.totalorder %s68, %s70
      %p74 = scmp.eq.s32.totalorder %s34, 0
      %p75 = por %p73, %p74
      %p76 = scmp.ne.s32.totalorder %s68, %s70
      %p77 = scmp.eq.s32.totalorder %s39, 1
      %p78 = por %p76, %p77
      %p79 = scmp.ne.s32.totalorder %s70, %s71
      %p80 = scmp.eq.s32.totalorder %s39, 0
      %p81 = por %p79, %p80
      %p82 = scmp.ne.s32.totalorder %s70, %s71
      %p83 = scmp.eq.s32.totalorder %s40, 1
      %p84 = por %p82, %p83
      %p86 = scmp.ne.s32.totalorder %s71, %s85
      %p87 = scmp.eq.s32.totalorder %s40, 0
      %p88 = por %p86, %p87
      %s90 = sadd.s32 %s89, 1
      %p93 = scmp.eq.s32.totalorder %s34, 1
      %p94 = scmp.ne.s32.totalorder %s89, %s91
      %p95 = scmp.eq.s32.totalorder %s34, 0
      %p96 = por %p94, %p95
      %p97 = scmp.ne.s32.totalorder %s89, %s91
      %p98 = scmp.eq.s32.totalorder %s39, 1
      %p99 = por %p97, %p98
      %p100 = scmp.ne.s32.totalorder %s91, %s92
      %p101 = scmp.eq.s32.totalorder %s39, 0
      %p102 = por %p100, %p101
      %p103 = scmp.ne.s32.totalorder %s91, %s92
      %p104 = scmp.eq.s32.totalorder %s40, 1
      %p105 = por %p103, %p104
      %p107 = scmp.ne.s32.totalorder %s92, %s106
      %p108 = scmp.eq.s32.totalorder %s40, 0
      %p109 = por %p107, %p108
      %s111 = sadd.s32 %s110, 1
      %p114 = scmp.eq.s32.totalorder %s34, 1
      %p115 = scmp.ne.s32.totalorder %s110, %s112
      %p116 = scmp.eq.s32.totalorder %s34, 0
      %p117 = por %p115, %p116
      %p118 = scmp.ne.s32.totalorder %s110, %s112
      %p119 = scmp.eq.s32.totalorder %s39, 1
      %p120 = por %p118, %p119
      %p121 = scmp.ne.s32.totalorder %s112, %s113
      %p122 = scmp.eq.s32.totalorder %s39, 0
      %p123 = por %p121, %p122
      %p124 = scmp.ne.s32.totalorder %s112, %s113
      %p125 = scmp.eq.s32.totalorder %s40, 1
      %p126 = por %p124, %p125
      %p128 = scmp.ne.s32.totalorder %s113, %s127
      %p129 = scmp.eq.s32.totalorder %s40, 0
      %p130 = por %p128, %p129
      %s132 = sadd.s32 %s131, 1
      %p135 = scmp.eq.s32.totalorder %s34, 1
      %p136 = scmp.ne.s32.totalorder %s131, %s133
      %p137 = scmp.eq.s32.totalorder %s34, 0
      %p138 = por %p136, %p137
      %p139 = scmp.ne.s32.totalorder %s131, %s133
      %p140 = scmp.eq.s32.totalorder %s39, 1
      %p141 = por %p139, %p140
      %p142 = scmp.ne.s32.totalorder %s133, %s134
      %p143 = scmp.eq.s32.totalorder %s39, 0
      %p144 = por %p142, %p143
      %p145 = scmp.ne.s32.totalorder %s133, %s134
      %p146 = scmp.eq.s32.totalorder %s40, 1
      %p147 = por %p145, %p146
      %p149 = scmp.ne.s32.totalorder %s134, %s148
      %p150 = scmp.eq.s32.totalorder %s40, 0
      %p151 = por %p149, %p150
      %s153 = sadd.s32 %s152, 1
      %p156 = scmp.eq.s32.totalorder %s34, 1
      %p157 = scmp.ne.s32.totalorder %s152, %s154
      %p158 = scmp.eq.s32.totalorder %s34, 0
      %p159 = por %p157, %p158
      %p160 = scmp.ne.s32.totalorder %s152, %s154
      %p161 = scmp.eq.s32.totalorder %s39, 1
      %p162 = por %p160, %p161
      %p163 = scmp.ne.s32.totalorder %s154, %s155
      %p164 = scmp.eq.s32.totalorder %s39, 0
      %p165 = por %p163, %p164
      %p166 = scmp.ne.s32.totalorder %s154, %s155
      %p167 = scmp.eq.s32.totalorder %s40, 1
      %p168 = por %p166, %p167
      %p170 = scmp.ne.s32.totalorder %s155, %s169
      %p171 = scmp.eq.s32.totalorder %s40, 0
      %p172 = por %p170, %p171
      %s174 = sadd.s32 %s173, 1
      %p177 = scmp.eq.s32.totalorder %s34, 1
      %p178 = scmp.ne.s32.totalorder %s173, %s175
      %p179 = scmp.eq.s32.totalorder %s34, 0
      %p180 = por %p178, %p179
      %p181 = scmp.ne.s32.totalorder %s173, %s175
      %p182 = scmp.eq.s32.totalorder %s39, 1
      %p183 = por %p181, %p182
      %p184 = scmp.ne.s32.totalorder %s175, %s176
      %p185 = scmp.eq.s32.totalorder %s39, 0
      %p186 = por %p184, %p185
      %p187 = scmp.ne.s32.totalorder %s175, %s176
      %p188 = scmp.eq.s32.totalorder %s40, 1
      %p189 = por %p187, %p188
      %p191 = scmp.ne.s32.totalorder %s176, %s190
      %p192 = scmp.eq.s32.totalorder %s40, 0
      %p193 = por %p191, %p192
      %s195 = sadd.s32 %s194, 1
      %p198 = scmp.eq.s32.totalorder %s34, 1
      %p199 = scmp.ne.s32.totalorder %s194, %s196
      %p200 = scmp.eq.s32.totalorder %s34, 0
      %p201 = por %p199, %p200
      %p202 = scmp.ne.s32.totalorder %s194, %s196
      %p203 = scmp.eq.s32.totalorder %s39, 1
      %p204 = por %p202, %p203
      %p205 = scmp.ne.s32.totalorder %s196, %s197
      %p206 = scmp.eq.s32.totalorder %s39, 0
      %p207 = por %p205, %p206
      %p208 = scmp.ne.s32.totalorder %s196, %s197
      %p209 = scmp.eq.s32.totalorder %s40, 1
      %p210 = por %p208, %p209
      %p212 = scmp.ne.s32.totalorder %s197, %s211
      %p213 = scmp.eq.s32.totalorder %s40, 0
      %p214 = por %p212, %p213
      %s216 = sadd.s32 %s215, 1
      %p219 = scmp.eq.s32.totalorder %s34, 1
      %p220 = scmp.ne.s32.totalorder %s215, %s217
      %p221 = scmp.eq.s32.totalorder %s34, 0
      %p222 = por %p220, %p221
      %p223 = scmp.ne.s32.totalorder %s215, %s217
      %p224 = scmp.eq.s32.totalorder %s39, 1
      %p225 = por %p223, %p224
      %p226 = scmp.ne.s32.totalorder %s217, %s218
      %p227 = scmp.eq.s32.totalorder %s39, 0
      %p228 = por %p226, %p227
      %p229 = scmp.ne.s32.totalorder %s217, %s218
      %p230 = scmp.eq.s32.totalorder %s40, 1
      %p231 = por %p229, %p230
      %p233 = scmp.ne.s32.totalorder %s218, %s232
      %p234 = scmp.eq.s32.totalorder %s40, 0
      %p235 = por %p233, %p234
      %s237 = sadd.s32 %s236, 1
      %p240 = scmp.eq.s32.totalorder %s34, 1
      %p241 = scmp.ne.s32.totalorder %s236, %s238
      %p242 = scmp.eq.s32.totalorder %s34, 0
      %p243 = por %p241, %p242
      %p244 = scmp.ne.s32.totalorder %s236, %s238
      %p245 = scmp.eq.s32.totalorder %s39, 1
      %p246 = por %p244, %p245
      %p247 = scmp.ne.s32.totalorder %s238, %s239
      %p248 = scmp.eq.s32.totalorder %s39, 0
      %p249 = por %p247, %p248
      %p250 = scmp.ne.s32.totalorder %s238, %s239
      %p251 = scmp.eq.s32.totalorder %s40, 1
      %p252 = por %p250, %p251
      %p254 = scmp.ne.s32.totalorder %s239, %s253
      %p255 = scmp.eq.s32.totalorder %s40, 0
      %p256 = por %p254, %p255
      %s258 = sadd.s32 %s257, 1
      %p261 = scmp.eq.s32.totalorder %s34, 1
      %p262 = scmp.ne.s32.totalorder %s257, %s259
      %p263 = scmp.eq.s32.totalorder %s34, 0
      %p264 = por %p262, %p263
      %p265 = scmp.ne.s32.totalorder %s257, %s259
      %p266 = scmp.eq.s32.totalorder %s39, 1
      %p267 = por %p265, %p266
      %p268 = scmp.ne.s32.totalorder %s259, %s260
      %p269 = scmp.eq.s32.totalorder %s39, 0
      %p270 = por %p268, %p269
      %p271 = scmp.ne.s32.totalorder %s259, %s260
      %p272 = scmp.eq.s32.totalorder %s40, 1
      %p273 = por %p271, %p272
      %p275 = scmp.ne.s32.totalorder %s260, %s274
      %p276 = scmp.eq.s32.totalorder %s40, 0
      %p277 = por %p275, %p276
      %s279 = sadd.s32 %s278, 1
      %p282 = scmp.eq.s32.totalorder %s34, 1
      %p283 = scmp.ne.s32.totalorder %s278, %s280
      %p284 = scmp.eq.s32.totalorder %s34, 0
      %p285 = por %p283, %p284
      %p286 = scmp.ne.s32.totalorder %s278, %s280
      %p287 = scmp.eq.s32.totalorder %s39, 1
      %p288 = por %p286, %p287
      %p289 = scmp.ne.s32.totalorder %s280, %s281
      %p290 = scmp.eq.s32.totalorder %s39, 0
      %p291 = por %p289, %p290
      %p292 = scmp.ne.s32.totalorder %s280, %s281
      %p293 = scmp.eq.s32.totalorder %s40, 1
      %p294 = por %p292, %p293
      %p296 = scmp.ne.s32.totalorder %s281, %s295
      %p297 = scmp.eq.s32.totalorder %s40, 0
      %p298 = por %p296, %p297
      %s300 = sadd.s32 %s299, 1
      %p303 = scmp.eq.s32.totalorder %s34, 1
      %p304 = scmp.ne.s32.totalorder %s299, %s301
      %p305 = scmp.eq.s32.totalorder %s34, 0
      %p306 = por %p304, %p305
      %p307 = scmp.ne.s32.totalorder %s299, %s301
      %p308 = scmp.eq.s32.totalorder %s39, 1
      %p309 = por %p307, %p308
      %p310 = scmp.ne.s32.totalorder %s301, %s302
      %p311 = scmp.eq.s32.totalorder %s39, 0
      %p312 = por %p310, %p311
      %p313 = scmp.ne.s32.totalorder %s301, %s302
      %p314 = scmp.eq.s32.totalorder %s40, 1
      %p315 = por %p313, %p314
      %p317 = scmp.ne.s32.totalorder %s302, %s316
      %p318 = scmp.eq.s32.totalorder %s40, 0
      %p319 = por %p317, %p318
      %s321 = sadd.s32 %s320, 1
      %p324 = scmp.eq.s32.totalorder %s34, 1
      %p325 = scmp.ne.s32.totalorder %s320, %s322
      %p326 = scmp.eq.s32.totalorder %s34, 0
      %p327 = por %p325, %p326
      %p328 = scmp.ne.s32.totalorder %s320, %s322
      %p329 = scmp.eq.s32.totalorder %s39, 1
      %p330 = por %p328, %p329
      %p331 = scmp.ne.s32.totalorder %s322, %s323
      %p332 = scmp.eq.s32.totalorder %s39, 0
      %p333 = por %p331, %p332
      %p334 = scmp.ne.s32.totalorder %s322, %s323
      %p335 = scmp.eq.s32.totalorder %s40, 1
      %p336 = por %p334, %p335
      %p338 = scmp.ne.s32.totalorder %s323, %s337
      %p339 = scmp.eq.s32.totalorder %s40, 0
      %p340 = por %p338, %p339
      %s342 = sadd.s32 %s341, 1
      %p345 = scmp.eq.s32.totalorder %s34, 1
      %p346 = scmp.ne.s32.totalorder %s341, %s343
      %p347 = scmp.eq.s32.totalorder %s34, 0
      %p348 = por %p346, %p347
      %p349 = scmp.ne.s32.totalorder %s341, %s343
      %p350 = scmp.eq.s32.totalorder %s39, 1
      %p351 = por %p349, %p350
      %p352 = scmp.ne.s32.totalorder %s343, %s344
      %p353 = scmp.eq.s32.totalorder %s39, 0
      %p354 = por %p352, %p353
      %p355 = scmp.ne.s32.totalorder %s343, %s344
      %p356 = scmp.eq.s32.totalorder %s40, 1
      %p357 = por %p355, %p356
      %p359 = scmp.ne.s32.totalorder %s344, %s358
      %p360 = scmp.eq.s32.totalorder %s40, 0
      %p361 = por %p359, %p360
      %s363 = sadd.s32 %s362, 1
      %p366 = scmp.eq.s32.totalorder %s34, 1
      %p367 = scmp.ne.s32.totalorder %s362, %s364
      %p368 = scmp.eq.s32.totalorder %s34, 0
      %p369 = por %p367, %p368
      %p370 = scmp.ne.s32.totalorder %s362, %s364
      %p371 = scmp.eq.s32.totalorder %s39, 1
      %p372 = por %p370, %p371
      %p373 = scmp.ne.s32.totalorder %s364, %s365
      %p374 = scmp.eq.s32.totalorder %s39, 0
      %p375 = por %p373, %p374
      %p376 = scmp.ne.s32.totalorder %s364, %s365
      %p377 = scmp.eq.s32.totalorder %s40, 1
      %p378 = por %p376, %p377
      %p380 = scmp.ne.s32.totalorder %s365, %s379
      %p381 = scmp.eq.s32.totalorder %s40, 0
      %p382 = por %p380, %p381
      %s384 = sadd.s32 %s383, 1
      %p387 = scmp.eq.s32.totalorder %s34, 1
      %p388 = scmp.ne.s32.totalorder %s383, %s385
      %p389 = scmp.eq.s32.totalorder %s34, 0
      %p390 = por %p388, %p389
      %p391 = scmp.ne.s32.totalorder %s383, %s385
      %p392 = scmp.eq.s32.totalorder %s39, 1
      %p393 = por %p391, %p392
      %p394 = scmp.ne.s32.totalorder %s385, %s386
      %p395 = scmp.eq.s32.totalorder %s39, 0
      %p396 = por %p394, %p395
      %p397 = scmp.ne.s32.totalorder %s385, %s386
      %p398 = scmp.eq.s32.totalorder %s40, 1
      %p399 = por %p397, %p398
      %p401 = scmp.ne.s32.totalorder %s386, %s400
      %p402 = scmp.eq.s32.totalorder %s40, 0
      %p403 = por %p401, %p402
      %s405 = sadd.s32 %s404, 1
      %p408 = scmp.eq.s32.totalorder %s34, 1
      %p409 = scmp.ne.s32.totalorder %s404, %s406
      %p410 = scmp.eq.s32.totalorder %s34, 0
      %p411 = por %p409, %p410
      %p412 = scmp.ne.s32.totalorder %s404, %s406
      %p413 = scmp.eq.s32.totalorder %s39, 1
      %p414 = por %p412, %p413
      %p415 = scmp.ne.s32.totalorder %s406, %s407
      %p416 = scmp.eq.s32.totalorder %s39, 0
      %p417 = por %p415, %p416
      %p418 = scmp.ne.s32.totalorder %s406, %s407
      %p419 = scmp.eq.s32.totalorder %s40, 1
      %p420 = por %p418, %p419
      %p422 = scmp.ne.s32.totalorder %s407, %s421
      %p423 = scmp.eq.s32.totalorder %s40, 0
      %p424 = por %p422, %p423
      %s426 = sadd.s32 %s425, 1
      %p429 = scmp.eq.s32.totalorder %s34, 1
      %p430 = scmp.ne.s32.totalorder %s425, %s427
      %p431 = scmp.eq.s32.totalorder %s34, 0
      %p432 = por %p430, %p431
      %p433 = scmp.ne.s32.totalorder %s425, %s427
      %p434 = scmp.eq.s32.totalorder %s39, 1
      %p435 = por %p433, %p434
      %p436 = scmp.ne.s32.totalorder %s427, %s428
      %p437 = scmp.eq.s32.totalorder %s39, 0
      %p438 = por %p436, %p437
      %p439 = scmp.ne.s32.totalorder %s427, %s428
      %p440 = scmp.eq.s32.totalorder %s40, 1
      %p441 = por %p439, %p440
      %p443 = scmp.ne.s32.totalorder %s428, %s442
      %p444 = scmp.eq.s32.totalorder %s40, 0
      %p445 = por %p443, %p444
      %s447 = sadd.s32 %s446, 1
      %p450 = scmp.eq.s32.totalorder %s34, 1
      %p451 = scmp.ne.s32.totalorder %s446, %s448
      %p452 = scmp.eq.s32.totalorder %s34, 0
      %p453 = por %p451, %p452
      %p454 = scmp.ne.s32.totalorder %s446, %s448
      %p455 = scmp.eq.s32.totalorder %s39, 1
      %p456 = por %p454, %p455
      %p457 = scmp.ne.s32.totalorder %s448, %s449
      %p458 = scmp.eq.s32.totalorder %s39, 0
      %p459 = por %p457, %p458
      %p460 = scmp.ne.s32.totalorder %s448, %s449
      %p461 = scmp.eq.s32.totalorder %s40, 1
      %p462 = por %p460, %p461
      %p464 = scmp.ne.s32.totalorder %s449, %s463
      %p465 = scmp.eq.s32.totalorder %s40, 0
      %p466 = por %p464, %p465
      %s468 = sadd.s32 %s467, 1
      %p471 = scmp.eq.s32.totalorder %s34, 1
      %p472 = scmp.ne.s32.totalorder %s467, %s469
      %p473 = scmp.eq.s32.totalorder %s34, 0
      %p474 = por %p472, %p473
      %p475 = scmp.ne.s32.totalorder %s467, %s469
      %p476 = scmp.eq.s32.totalorder %s39, 1
      %p477 = por %p475, %p476
      %p478 = scmp.ne.s32.totalorder %s469, %s470
      %p479 = scmp.eq.s32.totalorder %s39, 0
      %p480 = por %p478, %p479
      %p481 = scmp.ne.s32.totalorder %s469, %s470
      %p482 = scmp.eq.s32.totalorder %s40, 1
      %p483 = por %p481, %p482
      %p485 = scmp.ne.s32.totalorder %s470, %s484
      %p486 = scmp.eq.s32.totalorder %s40, 0
      %p487 = por %p485, %p486
      %s489 = sadd.s32 %s488, 1
      %p492 = scmp.eq.s32.totalorder %s34, 1
      %p493 = scmp.ne.s32.totalorder %s488, %s490
      %p494 = scmp.eq.s32.totalorder %s34, 0
      %p495 = por %p493, %p494
      %p496 = scmp.ne.s32.totalorder %s488, %s490
      %p497 = scmp.eq.s32.totalorder %s39, 1
      %p498 = por %p496, %p497
      %p499 = scmp.ne.s32.totalorder %s490, %s491
      %p500 = scmp.eq.s32.totalorder %s39, 0
      %p501 = por %p499, %p500
      %p502 = scmp.ne.s32.totalorder %s490, %s491
      %p503 = scmp.eq.s32.totalorder %s40, 1
      %p504 = por %p502, %p503
      %p506 = scmp.ne.s32.totalorder %s491, %s505
      %p507 = scmp.eq.s32.totalorder %s40, 0
      %p508 = por %p506, %p507
      %s510 = sadd.s32 %s509, 1
      %p513 = scmp.eq.s32.totalorder %s34, 1
      %p514 = scmp.ne.s32.totalorder %s509, %s511
      %p515 = scmp.eq.s32.totalorder %s34, 0
      %p516 = por %p514, %p515
      %p517 = scmp.ne.s32.totalorder %s509, %s511
      %p518 = scmp.eq.s32.totalorder %s39, 1
      %p519 = por %p517, %p518
      %p520 = scmp.ne.s32.totalorder %s511, %s512
      %p521 = scmp.eq.s32.totalorder %s39, 0
      %p522 = por %p520, %p521
      %p523 = scmp.ne.s32.totalorder %s511, %s512
      %p524 = scmp.eq.s32.totalorder %s40, 1
      %p525 = por %p523, %p524
      %p527 = scmp.ne.s32.totalorder %s512, %s526
      %p528 = scmp.eq.s32.totalorder %s40, 0
      %p529 = por %p527, %p528
      %s531 = sadd.s32 %s530, 1
      %p534 = scmp.eq.s32.totalorder %s34, 1
      %p535 = scmp.ne.s32.totalorder %s530, %s532
      %p536 = scmp.eq.s32.totalorder %s34, 0
      %p537 = por %p535, %p536
      %p538 = scmp.ne.s32.totalorder %s530, %s532
      %p539 = scmp.eq.s32.totalorder %s39, 1
      %p540 = por %p538, %p539
      %p541 = scmp.ne.s32.totalorder %s532, %s533
      %p542 = scmp.eq.s32.totalorder %s39, 0
      %p543 = por %p541, %p542
      %p544 = scmp.ne.s32.totalorder %s532, %s533
      %p545 = scmp.eq.s32.totalorder %s40, 1
      %p546 = por %p544, %p545
      %p548 = scmp.ne.s32.totalorder %s533, %s547
      %p549 = scmp.eq.s32.totalorder %s40, 0
      %p550 = por %p548, %p549
      %s552 = sadd.s32 %s551, 1
      %p555 = scmp.eq.s32.totalorder %s34, 1
      %p556 = scmp.ne.s32.totalorder %s551, %s553
      %p557 = scmp.eq.s32.totalorder %s34, 0
      %p558 = por %p556, %p557
      %p559 = scmp.ne.s32.totalorder %s551, %s553
      %p560 = scmp.eq.s32.totalorder %s39, 1
      %p561 = por %p559, %p560
      %p562 = scmp.ne.s32.totalorder %s553, %s554
      %p563 = scmp.eq.s32.totalorder %s39, 0
      %p564 = por %p562, %p563
      %p565 = scmp.ne.s32.totalorder %s553, %s554
      %p566 = scmp.eq.s32.totalorder %s40, 1
      %p567 = por %p565, %p566
      %p569 = scmp.ne.s32.totalorder %s554, %s568
      %p570 = scmp.eq.s32.totalorder %s40, 0
      %p571 = por %p569, %p570
      %s572 = ssub.s32 %s34, %s41
      %p573 = scmp.eq.s32.totalorder %s572, 0
      %s575 = sadd.s32 %s574, 1
      %s576 = scalar_select %p573, %s574, %s575
      %p579 = pneg %p573
      %p580 = scmp.eq.s32.totalorder %s34, 1
      %p581 = por %p579, %p580
      %p582 = scmp.ne.s32.totalorder %s574, %s577
      %p583 = scmp.eq.s32.totalorder %s34, 0
      %p584 = por %p582, %p583
      %p585 = scmp.ne.s32.totalorder %s574, %s577
      %p586 = scmp.eq.s32.totalorder %s39, 1
      %p587 = por %p585, %p586
      %p588 = scmp.ne.s32.totalorder %s577, %s578
      %p589 = scmp.eq.s32.totalorder %s39, 0
      %p590 = por %p588, %p589
      %p591 = scmp.ne.s32.totalorder %s577, %s578
      %p592 = scmp.eq.s32.totalorder %s40, 1
      %p593 = por %p591, %p592
      %p595 = scmp.ne.s32.totalorder %s578, %s594
      %p596 = scmp.eq.s32.totalorder %s40, 0
      %p597 = por %p595, %p596
      %p598 = scmp.le.s32.totalorder 1, %s34
      %p599 = scmp.lt.s32.totalorder %s34, 3
      %p600 = pnand %p598, %p599
      %p601 = pneg %p600
      // Predicated region
      $region9: #{net_forward.1} parent=5 // pred_check
        _
      $region10: #{net_forward.1} parent=5 // pred_check_branch
        %603 = sbr.rel (%p600) target = $region12
      $region11: #{net_forward.1} parent=5 // pred_region
        %s604 = ssub.s32 %s34, 1
        // Predicated region
        $region13: #{net_forward.1} parent=11 // pred_check
          %p605 = pneg %p81
        $region14: #{net_forward.1} parent=11 // pred_check_branch
          %607 = sbr.rel (%p605) target = $region16
        $region15: #{net_forward.1} parent=11 // pred_region
          _
        $region16: #{net_forward.1} parent=11 // pred_fallthru
          _
        // Predicated region
        $region17: #{net_forward.1} parent=11 // pred_check
          %p608 = pneg %p102
        $region18: #{net_forward.1} parent=11 // pred_check_branch
          %610 = sbr.rel (%p608) target = $region20
        $region19: #{net_forward.1} parent=11 // pred_region
          _
        $region20: #{net_forward.1} parent=11 // pred_fallthru
          _
        // Predicated region
        $region21: #{net_forward.1} parent=11 // pred_check
          %p611 = pneg %p123
        $region22: #{net_forward.1} parent=11 // pred_check_branch
          %613 = sbr.rel (%p611) target = $region24
        $region23: #{net_forward.1} parent=11 // pred_region
          _
        $region24: #{net_forward.1} parent=11 // pred_fallthru
          _
        // Predicated region
        $region25: #{net_forward.1} parent=11 // pred_check
          %p614 = pneg %p144
        $region26: #{net_forward.1} parent=11 // pred_check_branch
          %616 = sbr.rel (%p614) target = $region28
        $region27: #{net_forward.1} parent=11 // pred_region
          _
        $region28: #{net_forward.1} parent=11 // pred_fallthru
          _
        // Predicated region
        $region29: #{net_forward.1} parent=11 // pred_check
          %p617 = pneg %p165
        $region30: #{net_forward.1} parent=11 // pred_check_branch
          %619 = sbr.rel (%p617) target = $region32
        $region31: #{net_forward.1} parent=11 // pred_region
          _
        $region32: #{net_forward.1} parent=11 // pred_fallthru
          _
        // Predicated region
        $region33: #{net_forward.1} parent=11 // pred_check
          %p620 = pneg %p186
        $region34: #{net_forward.1} parent=11 // pred_check_branch
          %622 = sbr.rel (%p620) target = $region36
        $region35: #{net_forward.1} parent=11 // pred_region
          _
        $region36: #{net_forward.1} parent=11 // pred_fallthru
          _
        // Predicated region
        $region37: #{net_forward.1} parent=11 // pred_check
          %p623 = pneg %p207
        $region38: #{net_forward.1} parent=11 // pred_check_branch
          %625 = sbr.rel (%p623) target = $region40
        $region39: #{net_forward.1} parent=11 // pred_region
          _
        $region40: #{net_forward.1} parent=11 // pred_fallthru
          _
        // Predicated region
        $region41: #{net_forward.1} parent=11 // pred_check
          %p626 = pneg %p228
        $region42: #{net_forward.1} parent=11 // pred_check_branch
          %628 = sbr.rel (%p626) target = $region44
        $region43: #{net_forward.1} parent=11 // pred_region
          _
        $region44: #{net_forward.1} parent=11 // pred_fallthru
          _
        // Predicated region
        $region45: #{net_forward.1} parent=11 // pred_check
          %p629 = pneg %p249
        $region46: #{net_forward.1} parent=11 // pred_check_branch
          %631 = sbr.rel (%p629) target = $region48
        $region47: #{net_forward.1} parent=11 // pred_region
          _
        $region48: #{net_forward.1} parent=11 // pred_fallthru
          _
        // Predicated region
        $region49: #{net_forward.1} parent=11 // pred_check
          %p632 = pneg %p270
        $region50: #{net_forward.1} parent=11 // pred_check_branch
          %634 = sbr.rel (%p632) target = $region52
        $region51: #{net_forward.1} parent=11 // pred_region
          _
        $region52: #{net_forward.1} parent=11 // pred_fallthru
          _
        // Predicated region
        $region53: #{net_forward.1} parent=11 // pred_check
          %p635 = pneg %p291
        $region54: #{net_forward.1} parent=11 // pred_check_branch
          %637 = sbr.rel (%p635) target = $region56
        $region55: #{net_forward.1} parent=11 // pred_region
          _
        $region56: #{net_forward.1} parent=11 // pred_fallthru
          _
        // Predicated region
        $region57: #{net_forward.1} parent=11 // pred_check
          %p638 = pneg %p312
        $region58: #{net_forward.1} parent=11 // pred_check_branch
          %640 = sbr.rel (%p638) target = $region60
        $region59: #{net_forward.1} parent=11 // pred_region
          _
        $region60: #{net_forward.1} parent=11 // pred_fallthru
          _
        // Predicated region
        $region61: #{net_forward.1} parent=11 // pred_check
          %p641 = pneg %p333
        $region62: #{net_forward.1} parent=11 // pred_check_branch
          %643 = sbr.rel (%p641) target = $region64
        $region63: #{net_forward.1} parent=11 // pred_region
          _
        $region64: #{net_forward.1} parent=11 // pred_fallthru
          _
        // Predicated region
        $region65: #{net_forward.1} parent=11 // pred_check
          %p644 = pneg %p354
        $region66: #{net_forward.1} parent=11 // pred_check_branch
          %646 = sbr.rel (%p644) target = $region68
        $region67: #{net_forward.1} parent=11 // pred_region
          _
        $region68: #{net_forward.1} parent=11 // pred_fallthru
          _
        // Predicated region
        $region69: #{net_forward.1} parent=11 // pred_check
          %p647 = pneg %p375
        $region70: #{net_forward.1} parent=11 // pred_check_branch
          %649 = sbr.rel (%p647) target = $region72
        $region71: #{net_forward.1} parent=11 // pred_region
          _
        $region72: #{net_forward.1} parent=11 // pred_fallthru
          _
        // Predicated region
        $region73: #{net_forward.1} parent=11 // pred_check
          %p650 = pneg %p396
        $region74: #{net_forward.1} parent=11 // pred_check_branch
          %652 = sbr.rel (%p650) target = $region76
        $region75: #{net_forward.1} parent=11 // pred_region
          _
        $region76: #{net_forward.1} parent=11 // pred_fallthru
          _
        // Predicated region
        $region77: #{net_forward.1} parent=11 // pred_check
          %p653 = pneg %p417
        $region78: #{net_forward.1} parent=11 // pred_check_branch
          %655 = sbr.rel (%p653) target = $region80
        $region79: #{net_forward.1} parent=11 // pred_region
          _
        $region80: #{net_forward.1} parent=11 // pred_fallthru
          _
        // Predicated region
        $region81: #{net_forward.1} parent=11 // pred_check
          %p656 = pneg %p438
        $region82: #{net_forward.1} parent=11 // pred_check_branch
          %658 = sbr.rel (%p656) target = $region84
        $region83: #{net_forward.1} parent=11 // pred_region
          _
        $region84: #{net_forward.1} parent=11 // pred_fallthru
          _
        // Predicated region
        $region85: #{net_forward.1} parent=11 // pred_check
          %p659 = pneg %p459
        $region86: #{net_forward.1} parent=11 // pred_check_branch
          %661 = sbr.rel (%p659) target = $region88
        $region87: #{net_forward.1} parent=11 // pred_region
          _
        $region88: #{net_forward.1} parent=11 // pred_fallthru
          _
        // Predicated region
        $region89: #{net_forward.1} parent=11 // pred_check
          %p662 = pneg %p480
        $region90: #{net_forward.1} parent=11 // pred_check_branch
          %664 = sbr.rel (%p662) target = $region92
        $region91: #{net_forward.1} parent=11 // pred_region
          _
        $region92: #{net_forward.1} parent=11 // pred_fallthru
          _
        // Predicated region
        $region93: #{net_forward.1} parent=11 // pred_check
          %p665 = pneg %p501
        $region94: #{net_forward.1} parent=11 // pred_check_branch
          %667 = sbr.rel (%p665) target = $region96
        $region95: #{net_forward.1} parent=11 // pred_region
          _
        $region96: #{net_forward.1} parent=11 // pred_fallthru
          _
        // Predicated region
        $region97: #{net_forward.1} parent=11 // pred_check
          %p668 = pneg %p522
        $region98: #{net_forward.1} parent=11 // pred_check_branch
          %670 = sbr.rel (%p668) target = $region100
        $region99: #{net_forward.1} parent=11 // pred_region
          _
        $region100: #{net_forward.1} parent=11 // pred_fallthru
          _
        // Predicated region
        $region101: #{net_forward.1} parent=11 // pred_check
          %p671 = pneg %p543
        $region102: #{net_forward.1} parent=11 // pred_check_branch
          %673 = sbr.rel (%p671) target = $region104
        $region103: #{net_forward.1} parent=11 // pred_region
          _
        $region104: #{net_forward.1} parent=11 // pred_fallthru
          _
        // Predicated region
        $region105: #{net_forward.1} parent=11 // pred_check
          %p674 = pneg %p564
        $region106: #{net_forward.1} parent=11 // pred_check_branch
          %676 = sbr.rel (%p674) target = $region108
        $region107: #{net_forward.1} parent=11 // pred_region
          _
        $region108: #{net_forward.1} parent=11 // pred_fallthru
          _
      $region12: #{net_forward.1} parent=5 // pred_fallthru
        _
      %p677 = scmp.lt.s32.totalorder %s34, 2
      // Predicated region
      $region109: #{net_forward.1} parent=5 // pred_check
        %p678 = pneg %p677
      $region110: #{net_forward.1} parent=5 // pred_check_branch
        %680 = sbr.rel (%p678) target = $region112
      $region111: #{net_forward.1} parent=5 // pred_region
        // Predicated region
        $region113: #{net_forward.1} parent=111 // pred_check
          %p681 = pneg %p54
        $region114: #{net_forward.1} parent=111 // pred_check_branch
          %683 = sbr.rel (%p681) target = $region116
        $region115: #{net_forward.1} parent=111 // pred_region
          %s684 = smul.u32 32, %s34
          %p685 = scmp.lt.s32.totalorder %s684, 63
          %s686 = scalar_select %p685, %s684, 63
          %s687 = smul.addr %s686, 8
          %s688 = scalar_lea.vmem %s0, %s687
          %s689 = smul.u32 32, %s34
        $region116: #{net_forward.1} parent=111 // pred_fallthru
          _
      $region112: #{net_forward.1} parent=5 // pred_fallthru
        _
      %p690 = scmp.le.s32.totalorder 1, %s34
      %p691 = scmp.lt.s32.totalorder %s34, 3
      %p692 = pnand %p690, %p691
      %p693 = pneg %p692
      // Predicated region
      $region117: #{net_forward.1} parent=5 // pred_check
        _
      $region118: #{net_forward.1} parent=5 // pred_check_branch
        %695 = sbr.rel (%p692) target = $region120
      $region119: #{net_forward.1} parent=5 // pred_region
        %s696 = ssub.s32 %s34, 1
        %s697 = smul.u32 32, %s39
        %p698 = scmp.lt.s32.totalorder %s697, 63
        %s699 = scalar_select %p698, %s697, 63
        %s700 = smul.addr %s699, 8
        %s701 = scalar_lea.vmem %s0, %s700
        %p702 = pneg %p60
        %p703 = pneg %p57
        %p704 = pneg %p81
        %p705 = pneg %p78
        %p706 = pneg %p102
        %p707 = pneg %p99
        %p708 = pneg %p123
        %p709 = pneg %p120
        %p710 = pneg %p144
        %p711 = pneg %p141
        %p712 = pneg %p165
        %p713 = pneg %p162
        %p714 = pneg %p186
        %p715 = pneg %p183
        %p716 = pneg %p207
        %p717 = pneg %p204
        %p718 = pneg %p228
        %p719 = pneg %p225
        %p720 = pneg %p249
        %p721 = pneg %p246
        %p722 = pneg %p270
        %p723 = pneg %p267
        %p724 = pneg %p291
        %p725 = pneg %p288
        %p726 = pneg %p312
        %p727 = pneg %p309
        %p728 = pneg %p333
        %p729 = pneg %p330
        %p730 = pneg %p354
        %p731 = pneg %p351
        %p732 = pneg %p375
        %p733 = pneg %p372
        %p734 = pneg %p396
        %p735 = pneg %p393
        %p736 = pneg %p417
        %p737 = pneg %p414
        %p738 = pneg %p438
        %p739 = pneg %p435
        %p740 = pneg %p459
        %p741 = pneg %p456
        %p742 = pneg %p480
        %p743 = pneg %p477
        %p744 = pneg %p501
        %p745 = pneg %p498
        %p746 = pneg %p522
        %p747 = pneg %p519
        %p748 = pneg %p543
        %p749 = pneg %p540
        %p750 = pneg %p564
        %p751 = pneg %p561
        %p752 = pneg %p590
        %p753 = pneg %p587
        %s754 = sand.u32 %s577, 1
        %s755 = scalar_lea.sflag [#allocation3], %s754
        %s756 = sand.u32 %s577, 1
        %s757 = smul.addr %s756, 8
        %s758 = scalar_lea.vmem [#allocation2], %s757
        %s759 = smul.u32 32, %s39
        %p760 = scmp.lt.s32.totalorder %s759, 63
        %s761 = scalar_select %p760, %s759, 63
        %s762 = smul.addr %s761, 8
        %s763 = scalar_lea.vmem %s0, %s762
        %s764 = smul.u32 32, %s39
        %v766 = vld [vmem:[%s763] sm:$0xff]
        %v767 = vld [vmem:[%s763 + $0x8] sm:$0xff]
        %v768 = vld [vmem:[%s763 + $0x10] sm:$0xff]
        %v769 = vld [vmem:[%s763 + $0x18] sm:$0xff]
        %v770 = vld [vmem:[%s763 + $0x20] sm:$0xff]
        %v771 = vld [vmem:[%s763 + $0x28] sm:$0xff]
        %v772 = vld [vmem:[%s763 + $0x30] sm:$0xff]
        %v773 = vld [vmem:[%s763 + $0x38] sm:$0xff]
        %v774 = vld [vmem:[%s763 + $0x40] sm:$0xff]
        %v775 = vld [vmem:[%s763 + $0x48] sm:$0xff]
        %v776 = vld [vmem:[%s763 + $0x50] sm:$0xff]
        %v777 = vld [vmem:[%s763 + $0x58] sm:$0xff]
        %v778 = vld [vmem:[%s763 + $0x60] sm:$0xff]
        %v779 = vld [vmem:[%s763 + $0x68] sm:$0xff]
        %v780 = vld [vmem:[%s763 + $0x70] sm:$0xff]
        %v781 = vld [vmem:[%s763 + $0x78] sm:$0xff]
        %v782 = vld [vmem:[%s763 + $0x80] sm:$0xff]
        %v783 = vld [vmem:[%s763 + $0x88] sm:$0xff]
        %v784 = vld [vmem:[%s763 + $0x90] sm:$0xff]
        %v785 = vld [vmem:[%s763 + $0x98] sm:$0xff]
        %v786 = vld [vmem:[%s763 + $0xa0] sm:$0xff]
        %v787 = vld [vmem:[%s763 + $0xa8] sm:$0xff]
        %v788 = vld [vmem:[%s763 + $0xb0] sm:$0xff]
        %v789 = vld [vmem:[%s763 + $0xb8] sm:$0xff]
        %v790 = vld [vmem:[%s763 + $0xc0] sm:$0xff]
        %v791 = vld [vmem:[%s763 + $0xc8] sm:$0xff]
        %v792 = vld [vmem:[%s763 + $0xd0] sm:$0xff]
        %v793 = vld [vmem:[%s763 + $0xd8] sm:$0xff]
        %v794 = vld [vmem:[%s763 + $0xe0] sm:$0xff]
        %v795 = vld [vmem:[%s763 + $0xe8] sm:$0xff]
        %v796 = vld [vmem:[%s763 + $0xf0] sm:$0xff]
        %v797 = vld [vmem:[%s763 + $0xf8] sm:$0xff]
        %vm830 = vcmask 1046528
        %v831 = vrot.slane %v766, 1
        %v832 = vrot.slane %v767, 1
        %v833 = vsel %vm830, %v831, %v832
        %v834 = vrot.slane %v768, 1
        %v835 = vsel %vm830, %v832, %v834
        %v836 = vrot.slane %v769, 1
        %v837 = vsel %vm830, %v834, %v836
        %v838 = vrot.slane %v770, 1
        %v839 = vsel %vm830, %v836, %v838
        %v840 = vrot.slane %v771, 1
        %v841 = vsel %vm830, %v838, %v840
        %v842 = vrot.slane %v772, 1
        %v843 = vsel %vm830, %v840, %v842
        %v844 = vrot.slane %v773, 1
        %v845 = vsel %vm830, %v842, %v844
        %v846 = vrot.slane %v774, 1
        %v847 = vsel %vm830, %v844, %v846
        %v848 = vrot.slane %v775, 1
        %v849 = vsel %vm830, %v846, %v848
        %v850 = vrot.slane %v776, 1
        %v851 = vsel %vm830, %v848, %v850
        %v852 = vrot.slane %v777, 1
        %v853 = vsel %vm830, %v850, %v852
        %v854 = vrot.slane %v778, 1
        %v855 = vsel %vm830, %v852, %v854
        %v856 = vrot.slane %v779, 1
        %v857 = vsel %vm830, %v854, %v856
        %v858 = vrot.slane %v780, 1
        %v859 = vsel %vm830, %v856, %v858
        %v860 = vrot.slane %v781, 1
        %v861 = vsel %vm830, %v858, %v860
        %v862 = vrot.slane %v782, 1
        %v863 = vsel %vm830, %v860, %v862
        %v864 = vrot.slane %v783, 1
        %v865 = vsel %vm830, %v862, %v864
        %v866 = vrot.slane %v784, 1
        %v867 = vsel %vm830, %v864, %v866
        %v868 = vrot.slane %v785, 1
        %v869 = vsel %vm830, %v866, %v868
        %v870 = vrot.slane %v786, 1
        %v871 = vsel %vm830, %v868, %v870
        %v872 = vrot.slane %v787, 1
        %v873 = vsel %vm830, %v870, %v872
        %v874 = vrot.slane %v788, 1
        %v875 = vsel %vm830, %v872, %v874
        %v876 = vrot.slane %v789, 1
        %v877 = vsel %vm830, %v874, %v876
        %v878 = vrot.slane %v790, 1
        %v879 = vsel %vm830, %v876, %v878
        %v880 = vrot.slane %v791, 1
        %v881 = vsel %vm830, %v878, %v880
        %v882 = vrot.slane %v792, 1
        %v883 = vsel %vm830, %v880, %v882
        %v884 = vrot.slane %v793, 1
        %v885 = vsel %vm830, %v882, %v884
        %v886 = vrot.slane %v794, 1
        %v887 = vsel %vm830, %v884, %v886
        %v888 = vrot.slane %v795, 1
        %v889 = vsel %vm830, %v886, %v888
        %v890 = vrot.slane %v796, 1
        %v891 = vsel %vm830, %v888, %v890
        %v892 = vrot.slane %v797, 1
        %v893 = vsel %vm830, %v890, %v892
        %vm926 = vcmask 1045504
        %v927 = vrot.slane %v766, 2
        %v928 = vrot.slane %v767, 2
        %v929 = vsel %vm926, %v927, %v928
        %v930 = vrot.slane %v768, 2
        %v931 = vsel %vm926, %v928, %v930
        %v932 = vrot.slane %v769, 2
        %v933 = vsel %vm926, %v930, %v932
        %v934 = vrot.slane %v770, 2
        %v935 = vsel %vm926, %v932, %v934
        %v936 = vrot.slane %v771, 2
        %v937 = vsel %vm926, %v934, %v936
        %v938 = vrot.slane %v772, 2
        %v939 = vsel %vm926, %v936, %v938
        %v940 = vrot.slane %v773, 2
        %v941 = vsel %vm926, %v938, %v940
        %v942 = vrot.slane %v774, 2
        %v943 = vsel %vm926, %v940, %v942
        %v944 = vrot.slane %v775, 2
        %v945 = vsel %vm926, %v942, %v944
        %v946 = vrot.slane %v776, 2
        %v947 = vsel %vm926, %v944, %v946
        %v948 = vrot.slane %v777, 2
        %v949 = vsel %vm926, %v946, %v948
        %v950 = vrot.slane %v778, 2
        %v951 = vsel %vm926, %v948, %v950
        %v952 = vrot.slane %v779, 2
        %v953 = vsel %vm926, %v950, %v952
        %v954 = vrot.slane %v780, 2
        %v955 = vsel %vm926, %v952, %v954
        %v956 = vrot.slane %v781, 2
        %v957 = vsel %vm926, %v954, %v956
        %v958 = vrot.slane %v782, 2
        %v959 = vsel %vm926, %v956, %v958
        %v960 = vrot.slane %v783, 2
        %v961 = vsel %vm926, %v958, %v960
        %v962 = vrot.slane %v784, 2
        %v963 = vsel %vm926, %v960, %v962
        %v964 = vrot.slane %v785, 2
        %v965 = vsel %vm926, %v962, %v964
        %v966 = vrot.slane %v786, 2
        %v967 = vsel %vm926, %v964, %v966
        %v968 = vrot.slane %v787, 2
        %v969 = vsel %vm926, %v966, %v968
        %v970 = vrot.slane %v788, 2
        %v971 = vsel %vm926, %v968, %v970
        %v972 = vrot.slane %v789, 2
        %v973 = vsel %vm926, %v970, %v972
        %v974 = vrot.slane %v790, 2
        %v975 = vsel %vm926, %v972, %v974
        %v976 = vrot.slane %v791, 2
        %v977 = vsel %vm926, %v974, %v976
        %v978 = vrot.slane %v792, 2
        %v979 = vsel %vm926, %v976, %v978
        %v980 = vrot.slane %v793, 2
        %v981 = vsel %vm926, %v978, %v980
        %v982 = vrot.slane %v794, 2
        %v983 = vsel %vm926, %v980, %v982
        %v984 = vrot.slane %v795, 2
        %v985 = vsel %vm926, %v982, %v984
        %v986 = vrot.slane %v796, 2
        %v987 = vsel %vm926, %v984, %v986
        %v988 = vrot.slane %v797, 2
        %v989 = vsel %vm926, %v986, %v988
        %vm1022 = vcmask 1044480
        %v1023 = vrot.slane %v766, 3
        %v1024 = vrot.slane %v767, 3
        %v1025 = vsel %vm1022, %v1023, %v1024
        %v1026 = vrot.slane %v768, 3
        %v1027 = vsel %vm1022, %v1024, %v1026
        %v1028 = vrot.slane %v769, 3
        %v1029 = vsel %vm1022, %v1026, %v1028
        %v1030 = vrot.slane %v770, 3
        %v1031 = vsel %vm1022, %v1028, %v1030
        %v1032 = vrot.slane %v771, 3
        %v1033 = vsel %vm1022, %v1030, %v1032
        %v1034 = vrot.slane %v772, 3
        %v1035 = vsel %vm1022, %v1032, %v1034
        %v1036 = vrot.slane %v773, 3
        %v1037 = vsel %vm1022, %v1034, %v1036
        %v1038 = vrot.slane %v774, 3
        %v1039 = vsel %vm1022, %v1036, %v1038
        %v1040 = vrot.slane %v775, 3
        %v1041 = vsel %vm1022, %v1038, %v1040
        %v1042 = vrot.slane %v776, 3
        %v1043 = vsel %vm1022, %v1040, %v1042
        %v1044 = vrot.slane %v777, 3
        %v1045 = vsel %vm1022, %v1042, %v1044
        %v1046 = vrot.slane %v778, 3
        %v1047 = vsel %vm1022, %v1044, %v1046
        %v1048 = vrot.slane %v779, 3
        %v1049 = vsel %vm1022, %v1046, %v1048
        %v1050 = vrot.slane %v780, 3
        %v1051 = vsel %vm1022, %v1048, %v1050
        %v1052 = vrot.slane %v781, 3
        %v1053 = vsel %vm1022, %v1050, %v1052
        %v1054 = vrot.slane %v782, 3
        %v1055 = vsel %vm1022, %v1052, %v1054
        %v1056 = vrot.slane %v783, 3
        %v1057 = vsel %vm1022, %v1054, %v1056
        %v1058 = vrot.slane %v784, 3
        %v1059 = vsel %vm1022, %v1056, %v1058
        %v1060 = vrot.slane %v785, 3
        %v1061 = vsel %vm1022, %v1058, %v1060
        %v1062 = vrot.slane %v786, 3
        %v1063 = vsel %vm1022, %v1060, %v1062
        %v1064 = vrot.slane %v787, 3
        %v1065 = vsel %vm1022, %v1062, %v1064
        %v1066 = vrot.slane %v788, 3
        %v1067 = vsel %vm1022, %v1064, %v1066
        %v1068 = vrot.slane %v789, 3
        %v1069 = vsel %vm1022, %v1066, %v1068
        %v1070 = vrot.slane %v790, 3
        %v1071 = vsel %vm1022, %v1068, %v1070
        %v1072 = vrot.slane %v791, 3
        %v1073 = vsel %vm1022, %v1070, %v1072
        %v1074 = vrot.slane %v792, 3
        %v1075 = vsel %vm1022, %v1072, %v1074
        %v1076 = vrot.slane %v793, 3
        %v1077 = vsel %vm1022, %v1074, %v1076
        %v1078 = vrot.slane %v794, 3
        %v1079 = vsel %vm1022, %v1076, %v1078
        %v1080 = vrot.slane %v795, 3
        %v1081 = vsel %vm1022, %v1078, %v1080
        %v1082 = vrot.slane %v796, 3
        %v1083 = vsel %vm1022, %v1080, %v1082
        %v1084 = vrot.slane %v797, 3
        %v1085 = vsel %vm1022, %v1082, %v1084
        %vm1118 = vcmask 1043456
        %v1119 = vrot.slane %v766, 4
        %v1120 = vrot.slane %v767, 4
        %v1121 = vsel %vm1118, %v1119, %v1120
        %v1122 = vrot.slane %v768, 4
        %v1123 = vsel %vm1118, %v1120, %v1122
        %v1124 = vrot.slane %v769, 4
        %v1125 = vsel %vm1118, %v1122, %v1124
        %v1126 = vrot.slane %v770, 4
        %v1127 = vsel %vm1118, %v1124, %v1126
        %v1128 = vrot.slane %v771, 4
        %v1129 = vsel %vm1118, %v1126, %v1128
        %v1130 = vrot.slane %v772, 4
        %v1131 = vsel %vm1118, %v1128, %v1130
        %v1132 = vrot.slane %v773, 4
        %v1133 = vsel %vm1118, %v1130, %v1132
        %v1134 = vrot.slane %v774, 4
        %v1135 = vsel %vm1118, %v1132, %v1134
        %v1136 = vrot.slane %v775, 4
        %v1137 = vsel %vm1118, %v1134, %v1136
        %v1138 = vrot.slane %v776, 4
        %v1139 = vsel %vm1118, %v1136, %v1138
        %v1140 = vrot.slane %v777, 4
        %v1141 = vsel %vm1118, %v1138, %v1140
        %v1142 = vrot.slane %v778, 4
        %v1143 = vsel %vm1118, %v1140, %v1142
        %v1144 = vrot.slane %v779, 4
        %v1145 = vsel %vm1118, %v1142, %v1144
        %v1146 = vrot.slane %v780, 4
        %v1147 = vsel %vm1118, %v1144, %v1146
        %v1148 = vrot.slane %v781, 4
        %v1149 = vsel %vm1118, %v1146, %v1148
        %v1150 = vrot.slane %v782, 4
        %v1151 = vsel %vm1118, %v1148, %v1150
        %v1152 = vrot.slane %v783, 4
        %v1153 = vsel %vm1118, %v1150, %v1152
        %v1154 = vrot.slane %v784, 4
        %v1155 = vsel %vm1118, %v1152, %v1154
        %v1156 = vrot.slane %v785, 4
        %v1157 = vsel %vm1118, %v1154, %v1156
        %v1158 = vrot.slane %v786, 4
        %v1159 = vsel %vm1118, %v1156, %v1158
        %v1160 = vrot.slane %v787, 4
        %v1161 = vsel %vm1118, %v1158, %v1160
        %v1162 = vrot.slane %v788, 4
        %v1163 = vsel %vm1118, %v1160, %v1162
        %v1164 = vrot.slane %v789, 4
        %v1165 = vsel %vm1118, %v1162, %v1164
        %v1166 = vrot.slane %v790, 4
        %v1167 = vsel %vm1118, %v1164, %v1166
        %v1168 = vrot.slane %v791, 4
        %v1169 = vsel %vm1118, %v1166, %v1168
        %v1170 = vrot.slane %v792, 4
        %v1171 = vsel %vm1118, %v1168, %v1170
        %v1172 = vrot.slane %v793, 4
        %v1173 = vsel %vm1118, %v1170, %v1172
        %v1174 = vrot.slane %v794, 4
        %v1175 = vsel %vm1118, %v1172, %v1174
        %v1176 = vrot.slane %v795, 4
        %v1177 = vsel %vm1118, %v1174, %v1176
        %v1178 = vrot.slane %v796, 4
        %v1179 = vsel %vm1118, %v1176, %v1178
        %v1180 = vrot.slane %v797, 4
        %v1181 = vsel %vm1118, %v1178, %v1180
        %v1214 = vpack.c.bf16 %v767, %v766
        %v1215 = vpack.c.bf16 %v835, %v833
        %v1216 = vpack.c.bf16 %v931, %v929
        %v1217 = vpack.c.bf16 %v1027, %v1025
        %v1218 = vpack.c.bf16 %v1123, %v1121
        %v1219 = vpack.c.bf16 %v769, %v768
        %v1220 = vpack.c.bf16 %v839, %v837
        %v1221 = vpack.c.bf16 %v935, %v933
        %v1222 = vpack.c.bf16 %v1031, %v1029
        %v1223 = vpack.c.bf16 %v1127, %v1125
        %v1224 = vpack.c.bf16 %v771, %v770
        %v1225 = vpack.c.bf16 %v843, %v841
        %v1226 = vpack.c.bf16 %v939, %v937
        %v1227 = vpack.c.bf16 %v1035, %v1033
        %v1228 = vpack.c.bf16 %v1131, %v1129
        %v1229 = vpack.c.bf16 %v773, %v772
        %v1230 = vpack.c.bf16 %v847, %v845
        %v1231 = vpack.c.bf16 %v943, %v941
        %v1232 = vpack.c.bf16 %v1039, %v1037
        %v1233 = vpack.c.bf16 %v1135, %v1133
        %v1234 = vpack.c.bf16 %v775, %v774
        %v1235 = vpack.c.bf16 %v851, %v849
        %v1236 = vpack.c.bf16 %v947, %v945
        %v1237 = vpack.c.bf16 %v1043, %v1041
        %v1238 = vpack.c.bf16 %v1139, %v1137
        %v1239 = vpack.c.bf16 %v777, %v776
        %v1240 = vpack.c.bf16 %v855, %v853
        %v1241 = vpack.c.bf16 %v951, %v949
        %v1242 = vpack.c.bf16 %v1047, %v1045
        %v1243 = vpack.c.bf16 %v1143, %v1141
        %v1244 = vpack.c.bf16 %v779, %v778
        %v1245 = vpack.c.bf16 %v859, %v857
        %v1246 = vpack.c.bf16 %v955, %v953
        %v1247 = vpack.c.bf16 %v1051, %v1049
        %v1248 = vpack.c.bf16 %v1147, %v1145
        %v1249 = vpack.c.bf16 %v781, %v780
        %v1250 = vpack.c.bf16 %v863, %v861
        %v1251 = vpack.c.bf16 %v959, %v957
        %v1252 = vpack.c.bf16 %v1055, %v1053
        %v1253 = vpack.c.bf16 %v1151, %v1149
        %v1254 = vpack.c.bf16 %v783, %v782
        %v1255 = vpack.c.bf16 %v867, %v865
        %v1256 = vpack.c.bf16 %v963, %v961
        %v1257 = vpack.c.bf16 %v1059, %v1057
        %v1258 = vpack.c.bf16 %v1155, %v1153
        %v1259 = vpack.c.bf16 %v785, %v784
        %v1260 = vpack.c.bf16 %v871, %v869
        %v1261 = vpack.c.bf16 %v967, %v965
        %v1262 = vpack.c.bf16 %v1063, %v1061
        %v1263 = vpack.c.bf16 %v1159, %v1157
        %v1264 = vpack.c.bf16 %v787, %v786
        %v1265 = vpack.c.bf16 %v875, %v873
        %v1266 = vpack.c.bf16 %v971, %v969
        %v1267 = vpack.c.bf16 %v1067, %v1065
        %v1268 = vpack.c.bf16 %v1163, %v1161
        %v1269 = vpack.c.bf16 %v789, %v788
        %v1270 = vpack.c.bf16 %v879, %v877
        %v1271 = vpack.c.bf16 %v975, %v973
        %v1272 = vpack.c.bf16 %v1071, %v1069
        %v1273 = vpack.c.bf16 %v1167, %v1165
        %v1274 = vpack.c.bf16 %v791, %v790
        %v1275 = vpack.c.bf16 %v883, %v881
        %v1276 = vpack.c.bf16 %v979, %v977
        %v1277 = vpack.c.bf16 %v1075, %v1073
        %v1278 = vpack.c.bf16 %v1171, %v1169
        %v1279 = vpack.c.bf16 %v793, %v792
        %v1280 = vpack.c.bf16 %v887, %v885
        %v1281 = vpack.c.bf16 %v983, %v981
        %v1282 = vpack.c.bf16 %v1079, %v1077
        %v1283 = vpack.c.bf16 %v1175, %v1173
        %v1284 = vpack.c.bf16 %v795, %v794
        %v1285 = vpack.c.bf16 %v891, %v889
        %v1286 = vpack.c.bf16 %v987, %v985
        %v1287 = vpack.c.bf16 %v1083, %v1081
        %v1288 = vpack.c.bf16 %v1179, %v1177
        %v1289 = vpack.c.bf16 %v797, %v796
        %v1290 = vpack.c.bf16 %v892, %v893
        %v1291 = vpack.c.bf16 %v988, %v989
        %v1292 = vpack.c.bf16 %v1084, %v1085
        %v1293 = vpack.c.bf16 %v1180, %v1181
        %v1294 = vld [vmem:[%s1] sm:$0xff]
        %v1295 = vld [vmem:[%s1 + $0x8] sm:$0xf]
        %v1296 = vld [vmem:[%s1 + $0xc] sm:$0xff]
        %v1297 = vld [vmem:[%s1 + $0x14] sm:$0xf]
        %v1298 = vld [vmem:[%s1 + $0x18] sm:$0xff]
        %v1299 = vld [vmem:[%s1 + $0x20] sm:$0xf]
        %v1300 = vld [vmem:[%s1 + $0x24] sm:$0xff]
        %v1301 = vld [vmem:[%s1 + $0x2c] sm:$0xf]
        %v1302 = vld [vmem:[%s1 + $0x30] sm:$0xff]
        %v1303 = vld [vmem:[%s1 + $0x38] sm:$0xf]
        %v1304 = vld [vmem:[%s1 + $0x3c] sm:$0xff]
        %v1305 = vld [vmem:[%s1 + $0x44] sm:$0xf]
        %v1306 = vld [vmem:[%s1 + $0x48] sm:$0xff]
        %v1307 = vld [vmem:[%s1 + $0x50] sm:$0xf]
        %v1308 = vld [vmem:[%s1 + $0x54] sm:$0xff]
        %v1309 = vld [vmem:[%s1 + $0x5c] sm:$0xf]
        %v1310 = vld [vmem:[%s1 + $0x60] sm:$0xff]
        %v1311 = vld [vmem:[%s1 + $0x68] sm:$0xf]
        %v1312 = vld [vmem:[%s1 + $0x6c] sm:$0xff]
        %v1313 = vld [vmem:[%s1 + $0x74] sm:$0xf]
        %v1314 = vld [vmem:[%s1 + $0x78] sm:$0xff]
        %v1315 = vld [vmem:[%s1 + $0x80] sm:$0xf]
        %v1316 = vld [vmem:[%s1 + $0x84] sm:$0xff]
        %v1317 = vld [vmem:[%s1 + $0x8c] sm:$0xf]
        %v1318 = vld [vmem:[%s1 + $0x90] sm:$0xff]
        %v1319 = vld [vmem:[%s1 + $0x98] sm:$0xf]
        %v1320 = vld [vmem:[%s1 + $0x9c] sm:$0xff]
        %v1321 = vld [vmem:[%s1 + $0xa4] sm:$0xf]
        %v1322 = vld [vmem:[%s1 + $0xa8] sm:$0xff]
        %v1323 = vld [vmem:[%s1 + $0xb0] sm:$0xf]
        %v1324 = vld [vmem:[%s1 + $0xb4] sm:$0xff]
        %v1325 = vld [vmem:[%s1 + $0xbc] sm:$0xf]
        %v1326 = vld [vmem:[%s1 + $0xc0] sm:$0xff]
        %v1327 = vld [vmem:[%s1 + $0xc8] sm:$0xf]
        %v1328 = vld [vmem:[%s1 + $0xcc] sm:$0xff]
        %v1329 = vld [vmem:[%s1 + $0xd4] sm:$0xf]
        %v1330 = vld [vmem:[%s1 + $0xd8] sm:$0xff]
        %v1331 = vld [vmem:[%s1 + $0xe0] sm:$0xf]
        %v1332 = vld [vmem:[%s1 + $0xe4] sm:$0xff]
        %v1333 = vld [vmem:[%s1 + $0xec] sm:$0xf]
        %v1334 = vld [vmem:[%s1 + $0xf0] sm:$0xff]
        %v1335 = vld [vmem:[%s1 + $0xf8] sm:$0xf]
        %v1336 = vld [vmem:[%s1 + $0xfc] sm:$0xff]
        %v1337 = vld [vmem:[%s1 + $0x104] sm:$0xf]
        %v1338 = vld [vmem:[%s1 + $0x108] sm:$0xff]
        %v1339 = vld [vmem:[%s1 + $0x110] sm:$0xf]
        %v1340 = vld [vmem:[%s1 + $0x114] sm:$0xff]
        %v1341 = vld [vmem:[%s1 + $0x11c] sm:$0xf]
        %v1342 = vld [vmem:[%s1 + $0x120] sm:$0xff]
        %v1343 = vld [vmem:[%s1 + $0x128] sm:$0xf]
        %v1344 = vld [vmem:[%s1 + $0x12c] sm:$0xff]
        %v1345 = vld [vmem:[%s1 + $0x134] sm:$0xf]
        %v1346 = vld [vmem:[%s1 + $0x138] sm:$0xff]
        %v1347 = vld [vmem:[%s1 + $0x140] sm:$0xf]
        %v1348 = vld [vmem:[%s1 + $0x144] sm:$0xff]
        %v1349 = vld [vmem:[%s1 + $0x14c] sm:$0xf]
        %v1350 = vld [vmem:[%s1 + $0x150] sm:$0xff]
        %v1351 = vld [vmem:[%s1 + $0x158] sm:$0xf]
        %v1352 = vld [vmem:[%s1 + $0x15c] sm:$0xff]
        %v1353 = vld [vmem:[%s1 + $0x164] sm:$0xf]
        %v1354 = vld [vmem:[%s1 + $0x168] sm:$0xff]
        %v1355 = vld [vmem:[%s1 + $0x170] sm:$0xf]
        %v1356 = vld [vmem:[%s1 + $0x174] sm:$0xff]
        %v1357 = vld [vmem:[%s1 + $0x17c] sm:$0xf]
        %v1358 = vld [vmem:[%s1 + $0x180] sm:$0xff]
        %v1359 = vld [vmem:[%s1 + $0x188] sm:$0xf]
        %v1360 = vld [vmem:[%s1 + $0x18c] sm:$0xff]
        %v1361 = vld [vmem:[%s1 + $0x194] sm:$0xf]
        %v1362 = vld [vmem:[%s1 + $0x198] sm:$0xff]
        %v1363 = vld [vmem:[%s1 + $0x1a0] sm:$0xf]
        %v1364 = vld [vmem:[%s1 + $0x1a4] sm:$0xff]
        %v1365 = vld [vmem:[%s1 + $0x1ac] sm:$0xf]
        %v1366 = vld [vmem:[%s1 + $0x1b0] sm:$0xff]
        %v1367 = vld [vmem:[%s1 + $0x1b8] sm:$0xf]
        %v1368 = vld [vmem:[%s1 + $0x1bc] sm:$0xff]
        %v1369 = vld [vmem:[%s1 + $0x1c4] sm:$0xf]
        %v1370 = vld [vmem:[%s1 + $0x1c8] sm:$0xff]
        %v1371 = vld [vmem:[%s1 + $0x1d0] sm:$0xf]
        %v1372 = vld [vmem:[%s1 + $0x1d4] sm:$0xff]
        %v1373 = vld [vmem:[%s1 + $0x1dc] sm:$0xf]
        %v1374 = vld [vmem:[%s1 + $0x1e0] sm:$0xff]
        %v1375 = vld [vmem:[%s1 + $0x1e8] sm:$0xf]
        %v1376 = vld [vmem:[%s1 + $0x1ec] sm:$0xff]
        %v1377 = vld [vmem:[%s1 + $0x1f4] sm:$0xf]
        %v1378 = vld [vmem:[%s1 + $0x1f8] sm:$0xff]
        %v1379 = vld [vmem:[%s1 + $0x200] sm:$0xf]
        %v1380 = vld [vmem:[%s1 + $0x204] sm:$0xff]
        %v1381 = vld [vmem:[%s1 + $0x20c] sm:$0xf]
        %v1382 = vld [vmem:[%s1 + $0x210] sm:$0xff]
        %v1383 = vld [vmem:[%s1 + $0x218] sm:$0xf]
        %v1384 = vld [vmem:[%s1 + $0x21c] sm:$0xff]
        %v1385 = vld [vmem:[%s1 + $0x224] sm:$0xf]
        %v1386 = vld [vmem:[%s1 + $0x228] sm:$0xff]
        %v1387 = vld [vmem:[%s1 + $0x230] sm:$0xf]
        %v1388 = vld [vmem:[%s1 + $0x234] sm:$0xff]
        %v1389 = vld [vmem:[%s1 + $0x23c] sm:$0xf]
        %v1390 = vld [vmem:[%s1 + $0x240] sm:$0xff]
        %v1391 = vld [vmem:[%s1 + $0x248] sm:$0xf]
        %v1392 = vld [vmem:[%s1 + $0x24c] sm:$0xff]
        %v1393 = vld [vmem:[%s1 + $0x254] sm:$0xf]
        %v1394 = vld [vmem:[%s1 + $0x258] sm:$0xff]
        %v1395 = vld [vmem:[%s1 + $0x260] sm:$0xf]
        %v1396 = vld [vmem:[%s1 + $0x264] sm:$0xff]
        %v1397 = vld [vmem:[%s1 + $0x26c] sm:$0xf]
        %v1398 = vld [vmem:[%s1 + $0x270] sm:$0xff]
        %v1399 = vld [vmem:[%s1 + $0x278] sm:$0xf]
        %v1400 = vld [vmem:[%s1 + $0x27c] sm:$0xff]
        %v1401 = vld [vmem:[%s1 + $0x284] sm:$0xf]
        %v1402 = vld [vmem:[%s1 + $0x288] sm:$0xff]
        %v1403 = vld [vmem:[%s1 + $0x290] sm:$0xf]
        %v1404 = vld [vmem:[%s1 + $0x294] sm:$0xff]
        %v1405 = vld [vmem:[%s1 + $0x29c] sm:$0xf]
        %v1406 = vld [vmem:[%s1 + $0x2a0] sm:$0xff]
        %v1407 = vld [vmem:[%s1 + $0x2a8] sm:$0xf]
        %v1408 = vld [vmem:[%s1 + $0x2ac] sm:$0xff]
        %v1409 = vld [vmem:[%s1 + $0x2b4] sm:$0xf]
        %v1410 = vld [vmem:[%s1 + $0x2b8] sm:$0xff]
        %v1411 = vld [vmem:[%s1 + $0x2c0] sm:$0xf]
        %v1412 = vld [vmem:[%s1 + $0x2c4] sm:$0xff]
        %v1413 = vld [vmem:[%s1 + $0x2cc] sm:$0xf]
        %v1414 = vld [vmem:[%s1 + $0x2d0] sm:$0xff]
        %v1415 = vld [vmem:[%s1 + $0x2d8] sm:$0xf]
        %v1416 = vld [vmem:[%s1 + $0x2dc] sm:$0xff]
        %v1417 = vld [vmem:[%s1 + $0x2e4] sm:$0xf]
        %v1418 = vld [vmem:[%s1 + $0x2e8] sm:$0xff]
        %v1419 = vld [vmem:[%s1 + $0x2f0] sm:$0xf]
        %v1420 = vld [vmem:[%s1 + $0x2f4] sm:$0xff]
        %v1421 = vld [vmem:[%s1 + $0x2fc] sm:$0xf]
        %v1422 = vld [vmem:[%s1 + $0x300] sm:$0xff]
        %v1423 = vld [vmem:[%s1 + $0x308] sm:$0xf]
        %v1424 = vld [vmem:[%s1 + $0x30c] sm:$0xff]
        %v1425 = vld [vmem:[%s1 + $0x314] sm:$0xf]
        %v1426 = vld [vmem:[%s1 + $0x318] sm:$0xff]
        %v1427 = vld [vmem:[%s1 + $0x320] sm:$0xf]
        %v1428 = vld [vmem:[%s1 + $0x324] sm:$0xff]
        %v1429 = vld [vmem:[%s1 + $0x32c] sm:$0xf]
        %v1430 = vld [vmem:[%s1 + $0x330] sm:$0xff]
        %v1431 = vld [vmem:[%s1 + $0x338] sm:$0xf]
        %v1432 = vld [vmem:[%s1 + $0x33c] sm:$0xff]
        %v1433 = vld [vmem:[%s1 + $0x344] sm:$0xf]
        %v1434 = vld [vmem:[%s1 + $0x348] sm:$0xff]
        %v1435 = vld [vmem:[%s1 + $0x350] sm:$0xf]
        %v1436 = vld [vmem:[%s1 + $0x354] sm:$0xff]
        %v1437 = vld [vmem:[%s1 + $0x35c] sm:$0xf]
        %v1438 = vld [vmem:[%s1 + $0x360] sm:$0xff]
        %v1439 = vld [vmem:[%s1 + $0x368] sm:$0xf]
        %v1440 = vld [vmem:[%s1 + $0x36c] sm:$0xff]
        %v1441 = vld [vmem:[%s1 + $0x374] sm:$0xf]
        %v1442 = vld [vmem:[%s1 + $0x378] sm:$0xff]
        %v1443 = vld [vmem:[%s1 + $0x380] sm:$0xf]
        %v1444 = vld [vmem:[%s1 + $0x384] sm:$0xff]
        %v1445 = vld [vmem:[%s1 + $0x38c] sm:$0xf]
        %v1446 = vld [vmem:[%s1 + $0x390] sm:$0xff]
        %v1447 = vld [vmem:[%s1 + $0x398] sm:$0xf]
        %v1448 = vld [vmem:[%s1 + $0x39c] sm:$0xff]
        %v1449 = vld [vmem:[%s1 + $0x3a4] sm:$0xf]
        %v1450 = vld [vmem:[%s1 + $0x3a8] sm:$0xff]
        %v1451 = vld [vmem:[%s1 + $0x3b0] sm:$0xf]
        %v1452 = vld [vmem:[%s1 + $0x3b4] sm:$0xff]
        %v1453 = vld [vmem:[%s1 + $0x3bc] sm:$0xf]
        %v1454 = vld [vmem:[%s2] sm:$0x7]
        %v1456 = vperm.slane %v1454, 0
        %v1457 = vperm.slane %v1454, 1
        %v1458 = vperm.slane %v1454, 2
        %v1622 = vunpack.c.l.b16 %v1294
        %v1623 = vunpack.c.h.b16 %v1294
        %v1624 = vunpack.c.l.b16 %v1295
        %v1625 = vunpack.c.l.b16 %v1296
        %v1626 = vunpack.c.h.b16 %v1296
        %v1627 = vunpack.c.l.b16 %v1297
        %v1628 = vunpack.c.l.b16 %v1298
        %v1629 = vunpack.c.h.b16 %v1298
        %v1630 = vunpack.c.l.b16 %v1299
        %v1631 = vunpack.c.l.b16 %v1300
        %v1632 = vunpack.c.h.b16 %v1300
        %v1633 = vunpack.c.l.b16 %v1301
        %v1634 = vunpack.c.l.b16 %v1302
        %v1635 = vunpack.c.h.b16 %v1302
        %v1636 = vunpack.c.l.b16 %v1303
        %v1637 = vunpack.c.l.b16 %v1304
        %v1638 = vunpack.c.h.b16 %v1304
        %v1639 = vunpack.c.l.b16 %v1305
        %v1640 = vunpack.c.l.b16 %v1306
        %v1641 = vunpack.c.h.b16 %v1306
        %v1642 = vunpack.c.l.b16 %v1307
        %v1643 = vunpack.c.l.b16 %v1308
        %v1644 = vunpack.c.h.b16 %v1308
        %v1645 = vunpack.c.l.b16 %v1309
        %v1646 = vunpack.c.l.b16 %v1310
        %v1647 = vunpack.c.h.b16 %v1310
        %v1648 = vunpack.c.l.b16 %v1311
        %v1649 = vunpack.c.l.b16 %v1312
        %v1650 = vunpack.c.h.b16 %v1312
        %v1651 = vunpack.c.l.b16 %v1313
        %v1652 = vunpack.c.l.b16 %v1314
        %v1653 = vunpack.c.h.b16 %v1314
        %v1654 = vunpack.c.l.b16 %v1315
        %v1655 = vunpack.c.l.b16 %v1316
        %v1656 = vunpack.c.h.b16 %v1316
        %v1657 = vunpack.c.l.b16 %v1317
        %v1658 = vunpack.c.l.b16 %v1318
        %v1659 = vunpack.c.h.b16 %v1318
        %v1660 = vunpack.c.l.b16 %v1319
        %v1661 = vunpack.c.l.b16 %v1320
        %v1662 = vunpack.c.h.b16 %v1320
        %v1663 = vunpack.c.l.b16 %v1321
        %v1664 = vunpack.c.l.b16 %v1322
        %v1665 = vunpack.c.h.b16 %v1322
        %v1666 = vunpack.c.l.b16 %v1323
        %v1667 = vunpack.c.l.b16 %v1324
        %v1668 = vunpack.c.h.b16 %v1324
        %v1669 = vunpack.c.l.b16 %v1325
        %v1670 = vunpack.c.l.b16 %v1326
        %v1671 = vunpack.c.h.b16 %v1326
        %v1672 = vunpack.c.l.b16 %v1327
        %v1673 = vunpack.c.l.b16 %v1328
        %v1674 = vunpack.c.h.b16 %v1328
        %v1675 = vunpack.c.l.b16 %v1329
        %v1676 = vunpack.c.l.b16 %v1330
        %v1677 = vunpack.c.h.b16 %v1330
        %v1678 = vunpack.c.l.b16 %v1331
        %v1679 = vunpack.c.l.b16 %v1332
        %v1680 = vunpack.c.h.b16 %v1332
        %v1681 = vunpack.c.l.b16 %v1333
        %v1682 = vunpack.c.l.b16 %v1334
        %v1683 = vunpack.c.h.b16 %v1334
        %v1684 = vunpack.c.l.b16 %v1335
        %v1685 = vunpack.c.l.b16 %v1336
        %v1686 = vunpack.c.h.b16 %v1336
        %v1687 = vunpack.c.l.b16 %v1337
        %v1688 = vunpack.c.l.b16 %v1338
        %v1689 = vunpack.c.h.b16 %v1338
        %v1690 = vunpack.c.l.b16 %v1339
        %v1691 = vunpack.c.l.b16 %v1340
        %v1692 = vunpack.c.h.b16 %v1340
        %v1693 = vunpack.c.l.b16 %v1341
        %v1694 = vunpack.c.l.b16 %v1342
        %v1695 = vunpack.c.h.b16 %v1342
        %v1696 = vunpack.c.l.b16 %v1343
        %v1697 = vunpack.c.l.b16 %v1344
        %v1698 = vunpack.c.h.b16 %v1344
        %v1699 = vunpack.c.l.b16 %v1345
        %v1700 = vunpack.c.l.b16 %v1346
        %v1701 = vunpack.c.h.b16 %v1346
        %v1702 = vunpack.c.l.b16 %v1347
        %v1703 = vunpack.c.l.b16 %v1348
        %v1704 = vunpack.c.h.b16 %v1348
        %v1705 = vunpack.c.l.b16 %v1349
        %v1706 = vunpack.c.l.b16 %v1350
        %v1707 = vunpack.c.h.b16 %v1350
        %v1708 = vunpack.c.l.b16 %v1351
        %v1709 = vunpack.c.l.b16 %v1352
        %v1710 = vunpack.c.h.b16 %v1352
        %v1711 = vunpack.c.l.b16 %v1353
        %v1712 = vunpack.c.l.b16 %v1354
        %v1713 = vunpack.c.h.b16 %v1354
        %v1714 = vunpack.c.l.b16 %v1355
        %v1715 = vunpack.c.l.b16 %v1356
        %v1716 = vunpack.c.h.b16 %v1356
        %v1717 = vunpack.c.l.b16 %v1357
        %v1718 = vunpack.c.l.b16 %v1358
        %v1719 = vunpack.c.h.b16 %v1358
        %v1720 = vunpack.c.l.b16 %v1359
        %v1721 = vunpack.c.l.b16 %v1360
        %v1722 = vunpack.c.h.b16 %v1360
        %v1723 = vunpack.c.l.b16 %v1361
        %v1724 = vunpack.c.l.b16 %v1362
        %v1725 = vunpack.c.h.b16 %v1362
        %v1726 = vunpack.c.l.b16 %v1363
        %v1727 = vunpack.c.l.b16 %v1364
        %v1728 = vunpack.c.h.b16 %v1364
        %v1729 = vunpack.c.l.b16 %v1365
        %v1730 = vunpack.c.l.b16 %v1366
        %v1731 = vunpack.c.h.b16 %v1366
        %v1732 = vunpack.c.l.b16 %v1367
        %v1733 = vunpack.c.l.b16 %v1368
        %v1734 = vunpack.c.h.b16 %v1368
        %v1735 = vunpack.c.l.b16 %v1369
        %v1736 = vunpack.c.l.b16 %v1370
        %v1737 = vunpack.c.h.b16 %v1370
        %v1738 = vunpack.c.l.b16 %v1371
        %v1739 = vunpack.c.l.b16 %v1372
        %v1740 = vunpack.c.h.b16 %v1372
        %v1741 = vunpack.c.l.b16 %v1373
        %v1742 = vunpack.c.l.b16 %v1374
        %v1743 = vunpack.c.h.b16 %v1374
        %v1744 = vunpack.c.l.b16 %v1375
        %v1745 = vunpack.c.l.b16 %v1376
        %v1746 = vunpack.c.h.b16 %v1376
        %v1747 = vunpack.c.l.b16 %v1377
        %v1748 = vunpack.c.l.b16 %v1378
        %v1749 = vunpack.c.h.b16 %v1378
        %v1750 = vunpack.c.l.b16 %v1379
        %v1751 = vunpack.c.l.b16 %v1380
        %v1752 = vunpack.c.h.b16 %v1380
        %v1753 = vunpack.c.l.b16 %v1381
        %v1754 = vunpack.c.l.b16 %v1382
        %v1755 = vunpack.c.h.b16 %v1382
        %v1756 = vunpack.c.l.b16 %v1383
        %v1757 = vunpack.c.l.b16 %v1384
        %v1758 = vunpack.c.h.b16 %v1384
        %v1759 = vunpack.c.l.b16 %v1385
        %v1760 = vunpack.c.l.b16 %v1386
        %v1761 = vunpack.c.h.b16 %v1386
        %v1762 = vunpack.c.l.b16 %v1387
        %v1763 = vunpack.c.l.b16 %v1388
        %v1764 = vunpack.c.h.b16 %v1388
        %v1765 = vunpack.c.l.b16 %v1389
        %v1766 = vunpack.c.l.b16 %v1390
        %v1767 = vunpack.c.h.b16 %v1390
        %v1768 = vunpack.c.l.b16 %v1391
        %v1769 = vunpack.c.l.b16 %v1392
        %v1770 = vunpack.c.h.b16 %v1392
        %v1771 = vunpack.c.l.b16 %v1393
        %v1772 = vunpack.c.l.b16 %v1394
        %v1773 = vunpack.c.h.b16 %v1394
        %v1774 = vunpack.c.l.b16 %v1395
        %v1775 = vunpack.c.l.b16 %v1396
        %v1776 = vunpack.c.h.b16 %v1396
        %v1777 = vunpack.c.l.b16 %v1397
        %v1778 = vunpack.c.l.b16 %v1398
        %v1779 = vunpack.c.h.b16 %v1398
        %v1780 = vunpack.c.l.b16 %v1399
        %v1781 = vunpack.c.l.b16 %v1400
        %v1782 = vunpack.c.h.b16 %v1400
        %v1783 = vunpack.c.l.b16 %v1401
        %v1784 = vunpack.c.l.b16 %v1402
        %v1785 = vunpack.c.h.b16 %v1402
        %v1786 = vunpack.c.l.b16 %v1403
        %v1787 = vunpack.c.l.b16 %v1404
        %v1788 = vunpack.c.h.b16 %v1404
        %v1789 = vunpack.c.l.b16 %v1405
        %v1790 = vunpack.c.l.b16 %v1406
        %v1791 = vunpack.c.h.b16 %v1406
        %v1792 = vunpack.c.l.b16 %v1407
        %v1793 = vunpack.c.l.b16 %v1408
        %v1794 = vunpack.c.h.b16 %v1408
        %v1795 = vunpack.c.l.b16 %v1409
        %v1796 = vunpack.c.l.b16 %v1410
        %v1797 = vunpack.c.h.b16 %v1410
        %v1798 = vunpack.c.l.b16 %v1411
        %v1799 = vunpack.c.l.b16 %v1412
        %v1800 = vunpack.c.h.b16 %v1412
        %v1801 = vunpack.c.l.b16 %v1413
        %v1802 = vunpack.c.l.b16 %v1414
        %v1803 = vunpack.c.h.b16 %v1414
        %v1804 = vunpack.c.l.b16 %v1415
        %v1805 = vunpack.c.l.b16 %v1416
        %v1806 = vunpack.c.h.b16 %v1416
        %v1807 = vunpack.c.l.b16 %v1417
        %v1808 = vunpack.c.l.b16 %v1418
        %v1809 = vunpack.c.h.b16 %v1418
        %v1810 = vunpack.c.l.b16 %v1419
        %v1811 = vunpack.c.l.b16 %v1420
        %v1812 = vunpack.c.h.b16 %v1420
        %v1813 = vunpack.c.l.b16 %v1421
        %v1814 = vunpack.c.l.b16 %v1422
        %v1815 = vunpack.c.h.b16 %v1422
        %v1816 = vunpack.c.l.b16 %v1423
        %v1817 = vunpack.c.l.b16 %v1424
        %v1818 = vunpack.c.h.b16 %v1424
        %v1819 = vunpack.c.l.b16 %v1425
        %v1820 = vunpack.c.l.b16 %v1426
        %v1821 = vunpack.c.h.b16 %v1426
        %v1822 = vunpack.c.l.b16 %v1427
        %v1823 = vunpack.c.l.b16 %v1428
        %v1824 = vunpack.c.h.b16 %v1428
        %v1825 = vunpack.c.l.b16 %v1429
        %v1826 = vunpack.c.l.b16 %v1430
        %v1827 = vunpack.c.h.b16 %v1430
        %v1828 = vunpack.c.l.b16 %v1431
        %v1829 = vunpack.c.l.b16 %v1432
        %v1830 = vunpack.c.h.b16 %v1432
        %v1831 = vunpack.c.l.b16 %v1433
        %v1832 = vunpack.c.l.b16 %v1434
        %v1833 = vunpack.c.h.b16 %v1434
        %v1834 = vunpack.c.l.b16 %v1435
        %v1835 = vunpack.c.l.b16 %v1436
        %v1836 = vunpack.c.h.b16 %v1436
        %v1837 = vunpack.c.l.b16 %v1437
        %v1838 = vunpack.c.l.b16 %v1438
        %v1839 = vunpack.c.h.b16 %v1438
        %v1840 = vunpack.c.l.b16 %v1439
        %v1841 = vunpack.c.l.b16 %v1440
        %v1842 = vunpack.c.h.b16 %v1440
        %v1843 = vunpack.c.l.b16 %v1441
        %v1844 = vunpack.c.l.b16 %v1442
        %v1845 = vunpack.c.h.b16 %v1442
        %v1846 = vunpack.c.l.b16 %v1443
        %v1847 = vunpack.c.l.b16 %v1444
        %v1848 = vunpack.c.h.b16 %v1444
        %v1849 = vunpack.c.l.b16 %v1445
        %v1850 = vunpack.c.l.b16 %v1446
        %v1851 = vunpack.c.h.b16 %v1446
        %v1852 = vunpack.c.l.b16 %v1447
        %v1853 = vunpack.c.l.b16 %v1448
        %v1854 = vunpack.c.h.b16 %v1448
        %v1855 = vunpack.c.l.b16 %v1449
        %v1856 = vunpack.c.l.b16 %v1450
        %v1857 = vunpack.c.h.b16 %v1450
        %v1858 = vunpack.c.l.b16 %v1451
        %v1859 = vunpack.c.l.b16 %v1452
        %v1860 = vunpack.c.h.b16 %v1452
        %v1861 = vunpack.c.l.b16 %v1453
        %v1862 = vpack.c.b16 %v1625, %v1622
        %v1863 = vpack.c.b16 %v1626, %v1623
        %v1864 = vpack.c.b16 %v1627, %v1624
        %v1865 = vpack.c.b16 %v1631, %v1628
        %v1866 = vpack.c.b16 %v1632, %v1629
        %v1867 = vpack.c.b16 %v1633, %v1630
        %v1868 = vpack.c.b16 %v1637, %v1634
        %v1869 = vpack.c.b16 %v1638, %v1635
        %v1870 = vpack.c.b16 %v1639, %v1636
        %v1871 = vpack.c.b16 %v1643, %v1640
        %v1872 = vpack.c.b16 %v1644, %v1641
        %v1873 = vpack.c.b16 %v1645, %v1642
        %v1874 = vpack.c.b16 %v1649, %v1646
        %v1875 = vpack.c.b16 %v1650, %v1647
        %v1876 = vpack.c.b16 %v1651, %v1648
        %v1877 = vpack.c.b16 %v1655, %v1652
        %v1878 = vpack.c.b16 %v1656, %v1653
        %v1879 = vpack.c.b16 %v1657, %v1654
        %v1880 = vpack.c.b16 %v1661, %v1658
        %v1881 = vpack.c.b16 %v1662, %v1659
        %v1882 = vpack.c.b16 %v1663, %v1660
        %v1883 = vpack.c.b16 %v1667, %v1664
        %v1884 = vpack.c.b16 %v1668, %v1665
        %v1885 = vpack.c.b16 %v1669, %v1666
        %v1886 = vpack.c.b16 %v1673, %v1670
        %v1887 = vpack.c.b16 %v1674, %v1671
        %v1888 = vpack.c.b16 %v1675, %v1672
        %v1889 = vpack.c.b16 %v1679, %v1676
        %v1890 = vpack.c.b16 %v1680, %v1677
        %v1891 = vpack.c.b16 %v1681, %v1678
        %v1892 = vpack.c.b16 %v1685, %v1682
        %v1893 = vpack.c.b16 %v1686, %v1683
        %v1894 = vpack.c.b16 %v1687, %v1684
        %v1895 = vpack.c.b16 %v1691, %v1688
        %v1896 = vpack.c.b16 %v1692, %v1689
        %v1897 = vpack.c.b16 %v1693, %v1690
        %v1898 = vpack.c.b16 %v1697, %v1694
        %v1899 = vpack.c.b16 %v1698, %v1695
        %v1900 = vpack.c.b16 %v1699, %v1696
        %v1901 = vpack.c.b16 %v1703, %v1700
        %v1902 = vpack.c.b16 %v1704, %v1701
        %v1903 = vpack.c.b16 %v1705, %v1702
        %v1904 = vpack.c.b16 %v1709, %v1706
        %v1905 = vpack.c.b16 %v1710, %v1707
        %v1906 = vpack.c.b16 %v1711, %v1708
        %v1907 = vpack.c.b16 %v1715, %v1712
        %v1908 = vpack.c.b16 %v1716, %v1713
        %v1909 = vpack.c.b16 %v1717, %v1714
        %v1910 = vpack.c.b16 %v1721, %v1718
        %v1911 = vpack.c.b16 %v1722, %v1719
        %v1912 = vpack.c.b16 %v1723, %v1720
        %v1913 = vpack.c.b16 %v1727, %v1724
        %v1914 = vpack.c.b16 %v1728, %v1725
        %v1915 = vpack.c.b16 %v1729, %v1726
        %v1916 = vpack.c.b16 %v1733, %v1730
        %v1917 = vpack.c.b16 %v1734, %v1731
        %v1918 = vpack.c.b16 %v1735, %v1732
        %v1919 = vpack.c.b16 %v1739, %v1736
        %v1920 = vpack.c.b16 %v1740, %v1737
        %v1921 = vpack.c.b16 %v1741, %v1738
        %v1922 = vpack.c.b16 %v1745, %v1742
        %v1923 = vpack.c.b16 %v1746, %v1743
        %v1924 = vpack.c.b16 %v1747, %v1744
        %v1925 = vpack.c.b16 %v1751, %v1748
        %v1926 = vpack.c.b16 %v1752, %v1749
        %v1927 = vpack.c.b16 %v1753, %v1750
        %v1928 = vpack.c.b16 %v1757, %v1754
        %v1929 = vpack.c.b16 %v1758, %v1755
        %v1930 = vpack.c.b16 %v1759, %v1756
        %v1931 = vpack.c.b16 %v1763, %v1760
        %v1932 = vpack.c.b16 %v1764, %v1761
        %v1933 = vpack.c.b16 %v1765, %v1762
        %v1934 = vpack.c.b16 %v1769, %v1766
        %v1935 = vpack.c.b16 %v1770, %v1767
        %v1936 = vpack.c.b16 %v1771, %v1768
        %v1937 = vpack.c.b16 %v1775, %v1772
        %v1938 = vpack.c.b16 %v1776, %v1773
        %v1939 = vpack.c.b16 %v1777, %v1774
        %v1940 = vpack.c.b16 %v1781, %v1778
        %v1941 = vpack.c.b16 %v1782, %v1779
        %v1942 = vpack.c.b16 %v1783, %v1780
        %v1943 = vpack.c.b16 %v1787, %v1784
        %v1944 = vpack.c.b16 %v1788, %v1785
        %v1945 = vpack.c.b16 %v1789, %v1786
        %v1946 = vpack.c.b16 %v1793, %v1790
        %v1947 = vpack.c.b16 %v1794, %v1791
        %v1948 = vpack.c.b16 %v1795, %v1792
        %v1949 = vpack.c.b16 %v1799, %v1796
        %v1950 = vpack.c.b16 %v1800, %v1797
        %v1951 = vpack.c.b16 %v1801, %v1798
        %v1952 = vpack.c.b16 %v1805, %v1802
        %v1953 = vpack.c.b16 %v1806, %v1803
        %v1954 = vpack.c.b16 %v1807, %v1804
        %v1955 = vpack.c.b16 %v1811, %v1808
        %v1956 = vpack.c.b16 %v1812, %v1809
        %v1957 = vpack.c.b16 %v1813, %v1810
        %v1958 = vpack.c.b16 %v1817, %v1814
        %v1959 = vpack.c.b16 %v1818, %v1815
        %v1960 = vpack.c.b16 %v1819, %v1816
        %v1961 = vpack.c.b16 %v1823, %v1820
        %v1962 = vpack.c.b16 %v1824, %v1821
        %v1963 = vpack.c.b16 %v1825, %v1822
        %v1964 = vpack.c.b16 %v1829, %v1826
        %v1965 = vpack.c.b16 %v1830, %v1827
        %v1966 = vpack.c.b16 %v1831, %v1828
        %v1967 = vpack.c.b16 %v1835, %v1832
        %v1968 = vpack.c.b16 %v1836, %v1833
        %v1969 = vpack.c.b16 %v1837, %v1834
        %v1970 = vpack.c.b16 %v1841, %v1838
        %v1971 = vpack.c.b16 %v1842, %v1839
        %v1972 = vpack.c.b16 %v1843, %v1840
        %v1973 = vpack.c.b16 %v1847, %v1844
        %v1974 = vpack.c.b16 %v1848, %v1845
        %v1975 = vpack.c.b16 %v1849, %v1846
        %v1976 = vpack.c.b16 %v1853, %v1850
        %v1977 = vpack.c.b16 %v1854, %v1851
        %v1978 = vpack.c.b16 %v1855, %v1852
        %v1979 = vpack.c.b16 %v1859, %v1856
        %v1980 = vpack.c.b16 %v1860, %v1857
        %v1981 = vpack.c.b16 %v1861, %v1858
        %2102 = vmatpush.bf16.msra.mxu0 %v1883
        %2103 = vmatpush.bf16.msra.mxu0 %v1880
        %2104 = vmatpush.bf16.msra.mxu0 %v1877
        %2105 = vmatpush.bf16.msra.mxu0 %v1874
        %2106 = vmatpush.bf16.msra.mxu0 %v1871
        %2107 = vmatpush.bf16.msra.mxu0 %v1868
        %2108 = vmatpush.bf16.msra.mxu0 %v1865
        %2109 = vmatpush.bf16.msra.mxu0 %v1862
        %2110 = vmatmul.bf16.gmra.mxu0 %v1214
        %v2111 = vpop.f32.mrf.mxu0
        %v2112 = vadd.f32 %v1456, %v2111
        %v2113 = vpop.f32.mrf.mxu0
        %v2114 = vadd.f32 %v1456, %v2113
        %2115 = vmatmul.bf16.gmra.mxu0 %v1219
        %v2116 = vpop.f32.mrf.mxu0
        %v2117 = vadd.f32 %v1456, %v2116
        %v2118 = vpop.f32.mrf.mxu0
        %v2119 = vadd.f32 %v1456, %v2118
        %2120 = vmatmul.bf16.gmra.mxu0 %v1224
        %v2121 = vpop.f32.mrf.mxu0
        %v2122 = vadd.f32 %v1456, %v2121
        %v2123 = vpop.f32.mrf.mxu0
        %v2124 = vadd.f32 %v1456, %v2123
        %2125 = vmatmul.bf16.gmra.mxu0 %v1229
        %v2126 = vpop.f32.mrf.mxu0
        %v2127 = vadd.f32 %v1456, %v2126
        %v2128 = vpop.f32.mrf.mxu0
        %v2129 = vadd.f32 %v1456, %v2128
        %2130 = vmatmul.bf16.gmra.mxu0 %v1234
        %v2131 = vpop.f32.mrf.mxu0
        %v2132 = vadd.f32 %v1456, %v2131
        %v2133 = vpop.f32.mrf.mxu0
        %v2134 = vadd.f32 %v1456, %v2133
        %2135 = vmatmul.bf16.gmra.mxu0 %v1239
        %v2136 = vpop.f32.mrf.mxu0
        %v2137 = vadd.f32 %v1456, %v2136
        %v2138 = vpop.f32.mrf.mxu0
        %v2139 = vadd.f32 %v1456, %v2138
        %2140 = vmatmul.bf16.gmra.mxu0 %v1244
        %v2141 = vpop.f32.mrf.mxu0
        %v2142 = vadd.f32 %v1456, %v2141
        %v2143 = vpop.f32.mrf.mxu0
        %v2144 = vadd.f32 %v1456, %v2143
        %2145 = vmatmul.bf16.gmra.mxu0 %v1249
        %v2146 = vpop.f32.mrf.mxu0
        %v2147 = vadd.f32 %v1456, %v2146
        %v2148 = vpop.f32.mrf.mxu0
        %v2149 = vadd.f32 %v1456, %v2148
        %2150 = vmatmul.bf16.gmra.mxu0 %v1254
        %v2151 = vpop.f32.mrf.mxu0
        %v2152 = vadd.f32 %v1456, %v2151
        %v2153 = vpop.f32.mrf.mxu0
        %v2154 = vadd.f32 %v1456, %v2153
        %2155 = vmatmul.bf16.gmra.mxu0 %v1259
        %v2156 = vpop.f32.mrf.mxu0
        %v2157 = vadd.f32 %v1456, %v2156
        %v2158 = vpop.f32.mrf.mxu0
        %v2159 = vadd.f32 %v1456, %v2158
        %2160 = vmatmul.bf16.gmra.mxu0 %v1264
        %v2161 = vpop.f32.mrf.mxu0
        %v2162 = vadd.f32 %v1456, %v2161
        %v2163 = vpop.f32.mrf.mxu0
        %v2164 = vadd.f32 %v1456, %v2163
        %2165 = vmatmul.bf16.gmra.mxu0 %v1269
        %v2166 = vpop.f32.mrf.mxu0
        %v2167 = vadd.f32 %v1456, %v2166
        %v2168 = vpop.f32.mrf.mxu0
        %v2169 = vadd.f32 %v1456, %v2168
        %2170 = vmatmul.bf16.gmra.mxu0 %v1274
        %v2171 = vpop.f32.mrf.mxu0
        %v2172 = vadd.f32 %v1456, %v2171
        %v2173 = vpop.f32.mrf.mxu0
        %v2174 = vadd.f32 %v1456, %v2173
        %2175 = vmatmul.bf16.gmra.mxu0 %v1279
        %v2176 = vpop.f32.mrf.mxu0
        %v2177 = vadd.f32 %v1456, %v2176
        %v2178 = vpop.f32.mrf.mxu0
        %v2179 = vadd.f32 %v1456, %v2178
        %2180 = vmatmul.bf16.gmra.mxu0 %v1284
        %v2181 = vpop.f32.mrf.mxu0
        %v2182 = vadd.f32 %v1456, %v2181
        %v2183 = vpop.f32.mrf.mxu0
        %v2184 = vadd.f32 %v1456, %v2183
        %2185 = vmatmul.bf16.gmra.mxu0 %v1289
        %v2186 = vpop.f32.mrf.mxu0
        %v2187 = vadd.f32 %v1456, %v2186
        %v2188 = vpop.f32.mrf.mxu0
        %v2189 = vadd.f32 %v1456, %v2188
        %2190 = vdwg.mxu0
        %2191 = vmatpush.bf16.msra.mxu0 %v1907
        %2192 = vmatpush.bf16.msra.mxu0 %v1904
        %2193 = vmatpush.bf16.msra.mxu0 %v1901
        %2194 = vmatpush.bf16.msra.mxu0 %v1898
        %2195 = vmatpush.bf16.msra.mxu0 %v1895
        %2196 = vmatpush.bf16.msra.mxu0 %v1892
        %2197 = vmatpush.bf16.msra.mxu0 %v1889
        %2198 = vmatpush.bf16.msra.mxu0 %v1886
        %2199 = vmatmul.bf16.gmra.mxu0 %v1215
        %v2200 = vpop.f32.mrf.mxu0
        %v2201 = vadd.f32 %v2112, %v2200
        %v2202 = vpop.f32.mrf.mxu0
        %v2203 = vadd.f32 %v2114, %v2202
        %2204 = vmatmul.bf16.gmra.mxu0 %v1220
        %v2205 = vpop.f32.mrf.mxu0
        %v2206 = vadd.f32 %v2117, %v2205
        %v2207 = vpop.f32.mrf.mxu0
        %v2208 = vadd.f32 %v2119, %v2207
        %2209 = vmatmul.bf16.gmra.mxu0 %v1225
        %v2210 = vpop.f32.mrf.mxu0
        %v2211 = vadd.f32 %v2122, %v2210
        %v2212 = vpop.f32.mrf.mxu0
        %v2213 = vadd.f32 %v2124, %v2212
        %2214 = vmatmul.bf16.gmra.mxu0 %v1230
        %v2215 = vpop.f32.mrf.mxu0
        %v2216 = vadd.f32 %v2127, %v2215
        %v2217 = vpop.f32.mrf.mxu0
        %v2218 = vadd.f32 %v2129, %v2217
        %2219 = vmatmul.bf16.gmra.mxu0 %v1235
        %v2220 = vpop.f32.mrf.mxu0
        %v2221 = vadd.f32 %v2132, %v2220
        %v2222 = vpop.f32.mrf.mxu0
        %v2223 = vadd.f32 %v2134, %v2222
        %2224 = vmatmul.bf16.gmra.mxu0 %v1240
        %v2225 = vpop.f32.mrf.mxu0
        %v2226 = vadd.f32 %v2137, %v2225
        %v2227 = vpop.f32.mrf.mxu0
        %v2228 = vadd.f32 %v2139, %v2227
        %2229 = vmatmul.bf16.gmra.mxu0 %v1245
        %v2230 = vpop.f32.mrf.mxu0
        %v2231 = vadd.f32 %v2142, %v2230
        %v2232 = vpop.f32.mrf.mxu0
        %v2233 = vadd.f32 %v2144, %v2232
        %2234 = vmatmul.bf16.gmra.mxu0 %v1250
        %v2235 = vpop.f32.mrf.mxu0
        %v2236 = vadd.f32 %v2147, %v2235
        %v2237 = vpop.f32.mrf.mxu0
        %v2238 = vadd.f32 %v2149, %v2237
        %2239 = vmatmul.bf16.gmra.mxu0 %v1255
        %v2240 = vpop.f32.mrf.mxu0
        %v2241 = vadd.f32 %v2152, %v2240
        %v2242 = vpop.f32.mrf.mxu0
        %v2243 = vadd.f32 %v2154, %v2242
        %2244 = vmatmul.bf16.gmra.mxu0 %v1260
        %v2245 = vpop.f32.mrf.mxu0
        %v2246 = vadd.f32 %v2157, %v2245
        %v2247 = vpop.f32.mrf.mxu0
        %v2248 = vadd.f32 %v2159, %v2247
        %2249 = vmatmul.bf16.gmra.mxu0 %v1265
        %v2250 = vpop.f32.mrf.mxu0
        %v2251 = vadd.f32 %v2162, %v2250
        %v2252 = vpop.f32.mrf.mxu0
        %v2253 = vadd.f32 %v2164, %v2252
        %2254 = vmatmul.bf16.gmra.mxu0 %v1270
        %v2255 = vpop.f32.mrf.mxu0
        %v2256 = vadd.f32 %v2167, %v2255
        %v2257 = vpop.f32.mrf.mxu0
        %v2258 = vadd.f32 %v2169, %v2257
        %2259 = vmatmul.bf16.gmra.mxu0 %v1275
        %v2260 = vpop.f32.mrf.mxu0
        %v2261 = vadd.f32 %v2172, %v2260
        %v2262 = vpop.f32.mrf.mxu0
        %v2263 = vadd.f32 %v2174, %v2262
        %2264 = vmatmul.bf16.gmra.mxu0 %v1280
        %v2265 = vpop.f32.mrf.mxu0
        %v2266 = vadd.f32 %v2177, %v2265
        %v2267 = vpop.f32.mrf.mxu0
        %v2268 = vadd.f32 %v2179, %v2267
        %2269 = vmatmul.bf16.gmra.mxu0 %v1285
        %v2270 = vpop.f32.mrf.mxu0
        %v2271 = vadd.f32 %v2182, %v2270
        %v2272 = vpop.f32.mrf.mxu0
        %v2273 = vadd.f32 %v2184, %v2272
        %2274 = vmatmul.bf16.gmra.mxu0 %v1290
        %v2275 = vpop.f32.mrf.mxu0
        %v2276 = vadd.f32 %v2187, %v2275
        %v2277 = vpop.f32.mrf.mxu0
        %v2278 = vadd.f32 %v2189, %v2277
        %2279 = vdwg.mxu0
        %2280 = vmatpush.bf16.msra.mxu0 %v1931
        %2281 = vmatpush.bf16.msra.mxu0 %v1928
        %2282 = vmatpush.bf16.msra.mxu0 %v1925
        %2283 = vmatpush.bf16.msra.mxu0 %v1922
        %2284 = vmatpush.bf16.msra.mxu0 %v1919
        %2285 = vmatpush.bf16.msra.mxu0 %v1916
        %2286 = vmatpush.bf16.msra.mxu0 %v1913
        %2287 = vmatpush.bf16.msra.mxu0 %v1910
        %2288 = vmatmul.bf16.gmra.mxu0 %v1216
        %v2289 = vpop.f32.mrf.mxu0
        %v2290 = vadd.f32 %v2201, %v2289
        %v2291 = vpop.f32.mrf.mxu0
        %v2292 = vadd.f32 %v2203, %v2291
        %2293 = vmatmul.bf16.gmra.mxu0 %v1221
        %v2294 = vpop.f32.mrf.mxu0
        %v2295 = vadd.f32 %v2206, %v2294
        %v2296 = vpop.f32.mrf.mxu0
        %v2297 = vadd.f32 %v2208, %v2296
        %2298 = vmatmul.bf16.gmra.mxu0 %v1226
        %v2299 = vpop.f32.mrf.mxu0
        %v2300 = vadd.f32 %v2211, %v2299
        %v2301 = vpop.f32.mrf.mxu0
        %v2302 = vadd.f32 %v2213, %v2301
        %2303 = vmatmul.bf16.gmra.mxu0 %v1231
        %v2304 = vpop.f32.mrf.mxu0
        %v2305 = vadd.f32 %v2216, %v2304
        %v2306 = vpop.f32.mrf.mxu0
        %v2307 = vadd.f32 %v2218, %v2306
        %2308 = vmatmul.bf16.gmra.mxu0 %v1236
        %v2309 = vpop.f32.mrf.mxu0
        %v2310 = vadd.f32 %v2221, %v2309
        %v2311 = vpop.f32.mrf.mxu0
        %v2312 = vadd.f32 %v2223, %v2311
        %2313 = vmatmul.bf16.gmra.mxu0 %v1241
        %v2314 = vpop.f32.mrf.mxu0
        %v2315 = vadd.f32 %v2226, %v2314
        %v2316 = vpop.f32.mrf.mxu0
        %v2317 = vadd.f32 %v2228, %v2316
        %2318 = vmatmul.bf16.gmra.mxu0 %v1246
        %v2319 = vpop.f32.mrf.mxu0
        %v2320 = vadd.f32 %v2231, %v2319
        %v2321 = vpop.f32.mrf.mxu0
        %v2322 = vadd.f32 %v2233, %v2321
        %2323 = vmatmul.bf16.gmra.mxu0 %v1251
        %v2324 = vpop.f32.mrf.mxu0
        %v2325 = vadd.f32 %v2236, %v2324
        %v2326 = vpop.f32.mrf.mxu0
        %v2327 = vadd.f32 %v2238, %v2326
        %2328 = vmatmul.bf16.gmra.mxu0 %v1256
        %v2329 = vpop.f32.mrf.mxu0
        %v2330 = vadd.f32 %v2241, %v2329
        %v2331 = vpop.f32.mrf.mxu0
        %v2332 = vadd.f32 %v2243, %v2331
        %2333 = vmatmul.bf16.gmra.mxu0 %v1261
        %v2334 = vpop.f32.mrf.mxu0
        %v2335 = vadd.f32 %v2246, %v2334
        %v2336 = vpop.f32.mrf.mxu0
        %v2337 = vadd.f32 %v2248, %v2336
        %2338 = vmatmul.bf16.gmra.mxu0 %v1266
        %v2339 = vpop.f32.mrf.mxu0
        %v2340 = vadd.f32 %v2251, %v2339
        %v2341 = vpop.f32.mrf.mxu0
        %v2342 = vadd.f32 %v2253, %v2341
        %2343 = vmatmul.bf16.gmra.mxu0 %v1271
        %v2344 = vpop.f32.mrf.mxu0
        %v2345 = vadd.f32 %v2256, %v2344
        %v2346 = vpop.f32.mrf.mxu0
        %v2347 = vadd.f32 %v2258, %v2346
        %2348 = vmatmul.bf16.gmra.mxu0 %v1276
        %v2349 = vpop.f32.mrf.mxu0
        %v2350 = vadd.f32 %v2261, %v2349
        %v2351 = vpop.f32.mrf.mxu0
        %v2352 = vadd.f32 %v2263, %v2351
        %2353 = vmatmul.bf16.gmra.mxu0 %v1281
        %v2354 = vpop.f32.mrf.mxu0
        %v2355 = vadd.f32 %v2266, %v2354
        %v2356 = vpop.f32.mrf.mxu0
        %v2357 = vadd.f32 %v2268, %v2356
        %2358 = vmatmul.bf16.gmra.mxu0 %v1286
        %v2359 = vpop.f32.mrf.mxu0
        %v2360 = vadd.f32 %v2271, %v2359
        %v2361 = vpop.f32.mrf.mxu0
        %v2362 = vadd.f32 %v2273, %v2361
        %2363 = vmatmul.bf16.gmra.mxu0 %v1291
        %v2364 = vpop.f32.mrf.mxu0
        %v2365 = vadd.f32 %v2276, %v2364
        %v2366 = vpop.f32.mrf.mxu0
        %v2367 = vadd.f32 %v2278, %v2366
        %2368 = vdwg.mxu0
        %2369 = vmatpush.bf16.msra.mxu0 %v1955
        %2370 = vmatpush.bf16.msra.mxu0 %v1952
        %2371 = vmatpush.bf16.msra.mxu0 %v1949
        %2372 = vmatpush.bf16.msra.mxu0 %v1946
        %2373 = vmatpush.bf16.msra.mxu0 %v1943
        %2374 = vmatpush.bf16.msra.mxu0 %v1940
        %2375 = vmatpush.bf16.msra.mxu0 %v1937
        %2376 = vmatpush.bf16.msra.mxu0 %v1934
        %2377 = vmatmul.bf16.gmra.mxu0 %v1217
        %v2378 = vpop.f32.mrf.mxu0
        %v2379 = vadd.f32 %v2290, %v2378
        %v2380 = vpop.f32.mrf.mxu0
        %v2381 = vadd.f32 %v2292, %v2380
        %2382 = vmatmul.bf16.gmra.mxu0 %v1222
        %v2383 = vpop.f32.mrf.mxu0
        %v2384 = vadd.f32 %v2295, %v2383
        %v2385 = vpop.f32.mrf.mxu0
        %v2386 = vadd.f32 %v2297, %v2385
        %2387 = vmatmul.bf16.gmra.mxu0 %v1227
        %v2388 = vpop.f32.mrf.mxu0
        %v2389 = vadd.f32 %v2300, %v2388
        %v2390 = vpop.f32.mrf.mxu0
        %v2391 = vadd.f32 %v2302, %v2390
        %2392 = vmatmul.bf16.gmra.mxu0 %v1232
        %v2393 = vpop.f32.mrf.mxu0
        %v2394 = vadd.f32 %v2305, %v2393
        %v2395 = vpop.f32.mrf.mxu0
        %v2396 = vadd.f32 %v2307, %v2395
        %2397 = vmatmul.bf16.gmra.mxu0 %v1237
        %v2398 = vpop.f32.mrf.mxu0
        %v2399 = vadd.f32 %v2310, %v2398
        %v2400 = vpop.f32.mrf.mxu0
        %v2401 = vadd.f32 %v2312, %v2400
        %2402 = vmatmul.bf16.gmra.mxu0 %v1242
        %v2403 = vpop.f32.mrf.mxu0
        %v2404 = vadd.f32 %v2315, %v2403
        %v2405 = vpop.f32.mrf.mxu0
        %v2406 = vadd.f32 %v2317, %v2405
        %2407 = vmatmul.bf16.gmra.mxu0 %v1247
        %v2408 = vpop.f32.mrf.mxu0
        %v2409 = vadd.f32 %v2320, %v2408
        %v2410 = vpop.f32.mrf.mxu0
        %v2411 = vadd.f32 %v2322, %v2410
        %2412 = vmatmul.bf16.gmra.mxu0 %v1252
        %v2413 = vpop.f32.mrf.mxu0
        %v2414 = vadd.f32 %v2325, %v2413
        %v2415 = vpop.f32.mrf.mxu0
        %v2416 = vadd.f32 %v2327, %v2415
        %2417 = vmatmul.bf16.gmra.mxu0 %v1257
        %v2418 = vpop.f32.mrf.mxu0
        %v2419 = vadd.f32 %v2330, %v2418
        %v2420 = vpop.f32.mrf.mxu0
        %v2421 = vadd.f32 %v2332, %v2420
        %2422 = vmatmul.bf16.gmra.mxu0 %v1262
        %v2423 = vpop.f32.mrf.mxu0
        %v2424 = vadd.f32 %v2335, %v2423
        %v2425 = vpop.f32.mrf.mxu0
        %v2426 = vadd.f32 %v2337, %v2425
        %2427 = vmatmul.bf16.gmra.mxu0 %v1267
        %v2428 = vpop.f32.mrf.mxu0
        %v2429 = vadd.f32 %v2340, %v2428
        %v2430 = vpop.f32.mrf.mxu0
        %v2431 = vadd.f32 %v2342, %v2430
        %2432 = vmatmul.bf16.gmra.mxu0 %v1272
        %v2433 = vpop.f32.mrf.mxu0
        %v2434 = vadd.f32 %v2345, %v2433
        %v2435 = vpop.f32.mrf.mxu0
        %v2436 = vadd.f32 %v2347, %v2435
        %2437 = vmatmul.bf16.gmra.mxu0 %v1277
        %v2438 = vpop.f32.mrf.mxu0
        %v2439 = vadd.f32 %v2350, %v2438
        %v2440 = vpop.f32.mrf.mxu0
        %v2441 = vadd.f32 %v2352, %v2440
        %2442 = vmatmul.bf16.gmra.mxu0 %v1282
        %v2443 = vpop.f32.mrf.mxu0
        %v2444 = vadd.f32 %v2355, %v2443
        %v2445 = vpop.f32.mrf.mxu0
        %v2446 = vadd.f32 %v2357, %v2445
        %2447 = vmatmul.bf16.gmra.mxu0 %v1287
        %v2448 = vpop.f32.mrf.mxu0
        %v2449 = vadd.f32 %v2360, %v2448
        %v2450 = vpop.f32.mrf.mxu0
        %v2451 = vadd.f32 %v2362, %v2450
        %2452 = vmatmul.bf16.gmra.mxu0 %v1292
        %v2453 = vpop.f32.mrf.mxu0
        %v2454 = vadd.f32 %v2365, %v2453
        %v2455 = vpop.f32.mrf.mxu0
        %v2456 = vadd.f32 %v2367, %v2455
        %2457 = vdwg.mxu0
        %2458 = vmatpush.bf16.msra.mxu0 %v1979
        %2459 = vmatpush.bf16.msra.mxu0 %v1976
        %2460 = vmatpush.bf16.msra.mxu0 %v1973
        %2461 = vmatpush.bf16.msra.mxu0 %v1970
        %2462 = vmatpush.bf16.msra.mxu0 %v1967
        %2463 = vmatpush.bf16.msra.mxu0 %v1964
        %2464 = vmatpush.bf16.msra.mxu0 %v1961
        %2465 = vmatpush.bf16.msra.mxu0 %v1958
        %2466 = vmatmul.bf16.gmra.mxu0 %v1218
        %v2467 = vpop.f32.mrf.mxu0
        %v2468 = vadd.f32 %v2379, %v2467
        %v2469 = vpop.f32.mrf.mxu0
        %v2470 = vadd.f32 %v2381, %v2469
        %2471 = vmatmul.bf16.gmra.mxu0 %v1223
        %v2472 = vpop.f32.mrf.mxu0
        %v2473 = vadd.f32 %v2384, %v2472
        %v2474 = vpop.f32.mrf.mxu0
        %v2475 = vadd.f32 %v2386, %v2474
        %2476 = vmatmul.bf16.gmra.mxu0 %v1228
        %v2477 = vpop.f32.mrf.mxu0
        %v2478 = vadd.f32 %v2389, %v2477
        %v2479 = vpop.f32.mrf.mxu0
        %v2480 = vadd.f32 %v2391, %v2479
        %2481 = vmatmul.bf16.gmra.mxu0 %v1233
        %v2482 = vpop.f32.mrf.mxu0
        %v2483 = vadd.f32 %v2394, %v2482
        %v2484 = vpop.f32.mrf.mxu0
        %v2485 = vadd.f32 %v2396, %v2484
        %2486 = vmatmul.bf16.gmra.mxu0 %v1238
        %v2487 = vpop.f32.mrf.mxu0
        %v2488 = vadd.f32 %v2399, %v2487
        %v2489 = vpop.f32.mrf.mxu0
        %v2490 = vadd.f32 %v2401, %v2489
        %2491 = vmatmul.bf16.gmra.mxu0 %v1243
        %v2492 = vpop.f32.mrf.mxu0
        %v2493 = vadd.f32 %v2404, %v2492
        %v2494 = vpop.f32.mrf.mxu0
        %v2495 = vadd.f32 %v2406, %v2494
        %2496 = vmatmul.bf16.gmra.mxu0 %v1248
        %v2497 = vpop.f32.mrf.mxu0
        %v2498 = vadd.f32 %v2409, %v2497
        %v2499 = vpop.f32.mrf.mxu0
        %v2500 = vadd.f32 %v2411, %v2499
        %2501 = vmatmul.bf16.gmra.mxu0 %v1253
        %v2502 = vpop.f32.mrf.mxu0
        %v2503 = vadd.f32 %v2414, %v2502
        %v2504 = vpop.f32.mrf.mxu0
        %v2505 = vadd.f32 %v2416, %v2504
        %2506 = vmatmul.bf16.gmra.mxu0 %v1258
        %v2507 = vpop.f32.mrf.mxu0
        %v2508 = vadd.f32 %v2419, %v2507
        %v2509 = vpop.f32.mrf.mxu0
        %v2510 = vadd.f32 %v2421, %v2509
        %2511 = vmatmul.bf16.gmra.mxu0 %v1263
        %v2512 = vpop.f32.mrf.mxu0
        %v2513 = vadd.f32 %v2424, %v2512
        %v2514 = vpop.f32.mrf.mxu0
        %v2515 = vadd.f32 %v2426, %v2514
        %2516 = vmatmul.bf16.gmra.mxu0 %v1268
        %v2517 = vpop.f32.mrf.mxu0
        %v2518 = vadd.f32 %v2429, %v2517
        %v2519 = vpop.f32.mrf.mxu0
        %v2520 = vadd.f32 %v2431, %v2519
        %2521 = vmatmul.bf16.gmra.mxu0 %v1273
        %v2522 = vpop.f32.mrf.mxu0
        %v2523 = vadd.f32 %v2434, %v2522
        %v2524 = vpop.f32.mrf.mxu0
        %v2525 = vadd.f32 %v2436, %v2524
        %2526 = vmatmul.bf16.gmra.mxu0 %v1278
        %v2527 = vpop.f32.mrf.mxu0
        %v2528 = vadd.f32 %v2439, %v2527
        %v2529 = vpop.f32.mrf.mxu0
        %v2530 = vadd.f32 %v2441, %v2529
        %2531 = vmatmul.bf16.gmra.mxu0 %v1283
        %v2532 = vpop.f32.mrf.mxu0
        %v2533 = vadd.f32 %v2444, %v2532
        %v2534 = vpop.f32.mrf.mxu0
        %v2535 = vadd.f32 %v2446, %v2534
        %2536 = vmatmul.bf16.gmra.mxu0 %v1288
        %v2537 = vpop.f32.mrf.mxu0
        %v2538 = vadd.f32 %v2449, %v2537
        %v2539 = vpop.f32.mrf.mxu0
        %v2540 = vadd.f32 %v2451, %v2539
        %2541 = vmatmul.bf16.gmra.mxu0 %v1293
        %v2542 = vpop.f32.mrf.mxu0
        %v2543 = vadd.f32 %v2454, %v2542
        %v2544 = vpop.f32.mrf.mxu0
        %v2545 = vadd.f32 %v2456, %v2544
        %2546 = vdwg.mxu0
        %2547 = vmatpush.bf16.msra.mxu0 %v1884
        %2548 = vmatpush.bf16.msra.mxu0 %v1881
        %2549 = vmatpush.bf16.msra.mxu0 %v1878
        %2550 = vmatpush.bf16.msra.mxu0 %v1875
        %2551 = vmatpush.bf16.msra.mxu0 %v1872
        %2552 = vmatpush.bf16.msra.mxu0 %v1869
        %2553 = vmatpush.bf16.msra.mxu0 %v1866
        %2554 = vmatpush.bf16.msra.mxu0 %v1863
        %2555 = vmatmul.bf16.gmra.mxu0 %v1214
        %v2556 = vpop.f32.mrf.mxu0
        %v2557 = vadd.f32 %v1457, %v2556
        %v2558 = vpop.f32.mrf.mxu0
        %v2559 = vadd.f32 %v1457, %v2558
        %2560 = vmatmul.bf16.gmra.mxu0 %v1219
        %v2561 = vpop.f32.mrf.mxu0
        %v2562 = vadd.f32 %v1457, %v2561
        %v2563 = vpop.f32.mrf.mxu0
        %v2564 = vadd.f32 %v1457, %v2563
        %2565 = vmatmul.bf16.gmra.mxu0 %v1224
        %v2566 = vpop.f32.mrf.mxu0
        %v2567 = vadd.f32 %v1457, %v2566
        %v2568 = vpop.f32.mrf.mxu0
        %v2569 = vadd.f32 %v1457, %v2568
        %2570 = vmatmul.bf16.gmra.mxu0 %v1229
        %v2571 = vpop.f32.mrf.mxu0
        %v2572 = vadd.f32 %v1457, %v2571
        %v2573 = vpop.f32.mrf.mxu0
        %v2574 = vadd.f32 %v1457, %v2573
        %2575 = vmatmul.bf16.gmra.mxu0 %v1234
        %v2576 = vpop.f32.mrf.mxu0
        %v2577 = vadd.f32 %v1457, %v2576
        %v2578 = vpop.f32.mrf.mxu0
        %v2579 = vadd.f32 %v1457, %v2578
        %2580 = vmatmul.bf16.gmra.mxu0 %v1239
        %v2581 = vpop.f32.mrf.mxu0
        %v2582 = vadd.f32 %v1457, %v2581
        %v2583 = vpop.f32.mrf.mxu0
        %v2584 = vadd.f32 %v1457, %v2583
        %2585 = vmatmul.bf16.gmra.mxu0 %v1244
        %v2586 = vpop.f32.mrf.mxu0
        %v2587 = vadd.f32 %v1457, %v2586
        %v2588 = vpop.f32.mrf.mxu0
        %v2589 = vadd.f32 %v1457, %v2588
        %2590 = vmatmul.bf16.gmra.mxu0 %v1249
        %v2591 = vpop.f32.mrf.mxu0
        %v2592 = vadd.f32 %v1457, %v2591
        %v2593 = vpop.f32.mrf.mxu0
        %v2594 = vadd.f32 %v1457, %v2593
        %2595 = vmatmul.bf16.gmra.mxu0 %v1254
        %v2596 = vpop.f32.mrf.mxu0
        %v2597 = vadd.f32 %v1457, %v2596
        %v2598 = vpop.f32.mrf.mxu0
        %v2599 = vadd.f32 %v1457, %v2598
        %2600 = vmatmul.bf16.gmra.mxu0 %v1259
        %v2601 = vpop.f32.mrf.mxu0
        %v2602 = vadd.f32 %v1457, %v2601
        %v2603 = vpop.f32.mrf.mxu0
        %v2604 = vadd.f32 %v1457, %v2603
        %2605 = vmatmul.bf16.gmra.mxu0 %v1264
        %v2606 = vpop.f32.mrf.mxu0
        %v2607 = vadd.f32 %v1457, %v2606
        %v2608 = vpop.f32.mrf.mxu0
        %v2609 = vadd.f32 %v1457, %v2608
        %2610 = vmatmul.bf16.gmra.mxu0 %v1269
        %v2611 = vpop.f32.mrf.mxu0
        %v2612 = vadd.f32 %v1457, %v2611
        %v2613 = vpop.f32.mrf.mxu0
        %v2614 = vadd.f32 %v1457, %v2613
        %2615 = vmatmul.bf16.gmra.mxu0 %v1274
        %v2616 = vpop.f32.mrf.mxu0
        %v2617 = vadd.f32 %v1457, %v2616
        %v2618 = vpop.f32.mrf.mxu0
        %v2619 = vadd.f32 %v1457, %v2618
        %2620 = vmatmul.bf16.gmra.mxu0 %v1279
        %v2621 = vpop.f32.mrf.mxu0
        %v2622 = vadd.f32 %v1457, %v2621
        %v2623 = vpop.f32.mrf.mxu0
        %v2624 = vadd.f32 %v1457, %v2623
        %2625 = vmatmul.bf16.gmra.mxu0 %v1284
        %v2626 = vpop.f32.mrf.mxu0
        %v2627 = vadd.f32 %v1457, %v2626
        %v2628 = vpop.f32.mrf.mxu0
        %v2629 = vadd.f32 %v1457, %v2628
        %2630 = vmatmul.bf16.gmra.mxu0 %v1289
        %v2631 = vpop.f32.mrf.mxu0
        %v2632 = vadd.f32 %v1457, %v2631
        %v2633 = vpop.f32.mrf.mxu0
        %v2634 = vadd.f32 %v1457, %v2633
        %2635 = vdwg.mxu0
        %2636 = vmatpush.bf16.msra.mxu0 %v1908
        %2637 = vmatpush.bf16.msra.mxu0 %v1905
        %2638 = vmatpush.bf16.msra.mxu0 %v1902
        %2639 = vmatpush.bf16.msra.mxu0 %v1899
        %2640 = vmatpush.bf16.msra.mxu0 %v1896
        %2641 = vmatpush.bf16.msra.mxu0 %v1893
        %2642 = vmatpush.bf16.msra.mxu0 %v1890
        %2643 = vmatpush.bf16.msra.mxu0 %v1887
        %2644 = vmatmul.bf16.gmra.mxu0 %v1215
        %v2645 = vpop.f32.mrf.mxu0
        %v2646 = vadd.f32 %v2557, %v2645
        %v2647 = vpop.f32.mrf.mxu0
        %v2648 = vadd.f32 %v2559, %v2647
        %2649 = vmatmul.bf16.gmra.mxu0 %v1220
        %v2650 = vpop.f32.mrf.mxu0
        %v2651 = vadd.f32 %v2562, %v2650
        %v2652 = vpop.f32.mrf.mxu0
        %v2653 = vadd.f32 %v2564, %v2652
        %2654 = vmatmul.bf16.gmra.mxu0 %v1225
        %v2655 = vpop.f32.mrf.mxu0
        %v2656 = vadd.f32 %v2567, %v2655
        %v2657 = vpop.f32.mrf.mxu0
        %v2658 = vadd.f32 %v2569, %v2657
        %2659 = vmatmul.bf16.gmra.mxu0 %v1230
        %v2660 = vpop.f32.mrf.mxu0
        %v2661 = vadd.f32 %v2572, %v2660
        %v2662 = vpop.f32.mrf.mxu0
        %v2663 = vadd.f32 %v2574, %v2662
        %2664 = vmatmul.bf16.gmra.mxu0 %v1235
        %v2665 = vpop.f32.mrf.mxu0
        %v2666 = vadd.f32 %v2577, %v2665
        %v2667 = vpop.f32.mrf.mxu0
        %v2668 = vadd.f32 %v2579, %v2667
        %2669 = vmatmul.bf16.gmra.mxu0 %v1240
        %v2670 = vpop.f32.mrf.mxu0
        %v2671 = vadd.f32 %v2582, %v2670
        %v2672 = vpop.f32.mrf.mxu0
        %v2673 = vadd.f32 %v2584, %v2672
        %2674 = vmatmul.bf16.gmra.mxu0 %v1245
        %v2675 = vpop.f32.mrf.mxu0
        %v2676 = vadd.f32 %v2587, %v2675
        %v2677 = vpop.f32.mrf.mxu0
        %v2678 = vadd.f32 %v2589, %v2677
        %2679 = vmatmul.bf16.gmra.mxu0 %v1250
        %v2680 = vpop.f32.mrf.mxu0
        %v2681 = vadd.f32 %v2592, %v2680
        %v2682 = vpop.f32.mrf.mxu0
        %v2683 = vadd.f32 %v2594, %v2682
        %2684 = vmatmul.bf16.gmra.mxu0 %v1255
        %v2685 = vpop.f32.mrf.mxu0
        %v2686 = vadd.f32 %v2597, %v2685
        %v2687 = vpop.f32.mrf.mxu0
        %v2688 = vadd.f32 %v2599, %v2687
        %2689 = vmatmul.bf16.gmra.mxu0 %v1260
        %v2690 = vpop.f32.mrf.mxu0
        %v2691 = vadd.f32 %v2602, %v2690
        %v2692 = vpop.f32.mrf.mxu0
        %v2693 = vadd.f32 %v2604, %v2692
        %2694 = vmatmul.bf16.gmra.mxu0 %v1265
        %v2695 = vpop.f32.mrf.mxu0
        %v2696 = vadd.f32 %v2607, %v2695
        %v2697 = vpop.f32.mrf.mxu0
        %v2698 = vadd.f32 %v2609, %v2697
        %2699 = vmatmul.bf16.gmra.mxu0 %v1270
        %v2700 = vpop.f32.mrf.mxu0
        %v2701 = vadd.f32 %v2612, %v2700
        %v2702 = vpop.f32.mrf.mxu0
        %v2703 = vadd.f32 %v2614, %v2702
        %2704 = vmatmul.bf16.gmra.mxu0 %v1275
        %v2705 = vpop.f32.mrf.mxu0
        %v2706 = vadd.f32 %v2617, %v2705
        %v2707 = vpop.f32.mrf.mxu0
        %v2708 = vadd.f32 %v2619, %v2707
        %2709 = vmatmul.bf16.gmra.mxu0 %v1280
        %v2710 = vpop.f32.mrf.mxu0
        %v2711 = vadd.f32 %v2622, %v2710
        %v2712 = vpop.f32.mrf.mxu0
        %v2713 = vadd.f32 %v2624, %v2712
        %2714 = vmatmul.bf16.gmra.mxu0 %v1285
        %v2715 = vpop.f32.mrf.mxu0
        %v2716 = vadd.f32 %v2627, %v2715
        %v2717 = vpop.f32.mrf.mxu0
        %v2718 = vadd.f32 %v2629, %v2717
        %2719 = vmatmul.bf16.gmra.mxu0 %v1290
        %v2720 = vpop.f32.mrf.mxu0
        %v2721 = vadd.f32 %v2632, %v2720
        %v2722 = vpop.f32.mrf.mxu0
        %v2723 = vadd.f32 %v2634, %v2722
        %2724 = vdwg.mxu0
        %2725 = vmatpush.bf16.msra.mxu0 %v1932
        %2726 = vmatpush.bf16.msra.mxu0 %v1929
        %2727 = vmatpush.bf16.msra.mxu0 %v1926
        %2728 = vmatpush.bf16.msra.mxu0 %v1923
        %2729 = vmatpush.bf16.msra.mxu0 %v1920
        %2730 = vmatpush.bf16.msra.mxu0 %v1917
        %2731 = vmatpush.bf16.msra.mxu0 %v1914
        %2732 = vmatpush.bf16.msra.mxu0 %v1911
        %2733 = vmatmul.bf16.gmra.mxu0 %v1216
        %v2734 = vpop.f32.mrf.mxu0
        %v2735 = vadd.f32 %v2646, %v2734
        %v2736 = vpop.f32.mrf.mxu0
        %v2737 = vadd.f32 %v2648, %v2736
        %2738 = vmatmul.bf16.gmra.mxu0 %v1221
        %v2739 = vpop.f32.mrf.mxu0
        %v2740 = vadd.f32 %v2651, %v2739
        %v2741 = vpop.f32.mrf.mxu0
        %v2742 = vadd.f32 %v2653, %v2741
        %2743 = vmatmul.bf16.gmra.mxu0 %v1226
        %v2744 = vpop.f32.mrf.mxu0
        %v2745 = vadd.f32 %v2656, %v2744
        %v2746 = vpop.f32.mrf.mxu0
        %v2747 = vadd.f32 %v2658, %v2746
        %2748 = vmatmul.bf16.gmra.mxu0 %v1231
        %v2749 = vpop.f32.mrf.mxu0
        %v2750 = vadd.f32 %v2661, %v2749
        %v2751 = vpop.f32.mrf.mxu0
        %v2752 = vadd.f32 %v2663, %v2751
        %2753 = vmatmul.bf16.gmra.mxu0 %v1236
        %v2754 = vpop.f32.mrf.mxu0
        %v2755 = vadd.f32 %v2666, %v2754
        %v2756 = vpop.f32.mrf.mxu0
        %v2757 = vadd.f32 %v2668, %v2756
        %2758 = vmatmul.bf16.gmra.mxu0 %v1241
        %v2759 = vpop.f32.mrf.mxu0
        %v2760 = vadd.f32 %v2671, %v2759
        %v2761 = vpop.f32.mrf.mxu0
        %v2762 = vadd.f32 %v2673, %v2761
        %2763 = vmatmul.bf16.gmra.mxu0 %v1246
        %v2764 = vpop.f32.mrf.mxu0
        %v2765 = vadd.f32 %v2676, %v2764
        %v2766 = vpop.f32.mrf.mxu0
        %v2767 = vadd.f32 %v2678, %v2766
        %2768 = vmatmul.bf16.gmra.mxu0 %v1251
        %v2769 = vpop.f32.mrf.mxu0
        %v2770 = vadd.f32 %v2681, %v2769
        %v2771 = vpop.f32.mrf.mxu0
        %v2772 = vadd.f32 %v2683, %v2771
        %2773 = vmatmul.bf16.gmra.mxu0 %v1256
        %v2774 = vpop.f32.mrf.mxu0
        %v2775 = vadd.f32 %v2686, %v2774
        %v2776 = vpop.f32.mrf.mxu0
        %v2777 = vadd.f32 %v2688, %v2776
        %2778 = vmatmul.bf16.gmra.mxu0 %v1261
        %v2779 = vpop.f32.mrf.mxu0
        %v2780 = vadd.f32 %v2691, %v2779
        %v2781 = vpop.f32.mrf.mxu0
        %v2782 = vadd.f32 %v2693, %v2781
        %2783 = vmatmul.bf16.gmra.mxu0 %v1266
        %v2784 = vpop.f32.mrf.mxu0
        %v2785 = vadd.f32 %v2696, %v2784
        %v2786 = vpop.f32.mrf.mxu0
        %v2787 = vadd.f32 %v2698, %v2786
        %2788 = vmatmul.bf16.gmra.mxu0 %v1271
        %v2789 = vpop.f32.mrf.mxu0
        %v2790 = vadd.f32 %v2701, %v2789
        %v2791 = vpop.f32.mrf.mxu0
        %v2792 = vadd.f32 %v2703, %v2791
        %2793 = vmatmul.bf16.gmra.mxu0 %v1276
        %v2794 = vpop.f32.mrf.mxu0
        %v2795 = vadd.f32 %v2706, %v2794
        %v2796 = vpop.f32.mrf.mxu0
        %v2797 = vadd.f32 %v2708, %v2796
        %2798 = vmatmul.bf16.gmra.mxu0 %v1281
        %v2799 = vpop.f32.mrf.mxu0
        %v2800 = vadd.f32 %v2711, %v2799
        %v2801 = vpop.f32.mrf.mxu0
        %v2802 = vadd.f32 %v2713, %v2801
        %2803 = vmatmul.bf16.gmra.mxu0 %v1286
        %v2804 = vpop.f32.mrf.mxu0
        %v2805 = vadd.f32 %v2716, %v2804
        %v2806 = vpop.f32.mrf.mxu0
        %v2807 = vadd.f32 %v2718, %v2806
        %2808 = vmatmul.bf16.gmra.mxu0 %v1291
        %v2809 = vpop.f32.mrf.mxu0
        %v2810 = vadd.f32 %v2721, %v2809
        %v2811 = vpop.f32.mrf.mxu0
        %v2812 = vadd.f32 %v2723, %v2811
        %2813 = vdwg.mxu0
        %2814 = vmatpush.bf16.msra.mxu0 %v1956
        %2815 = vmatpush.bf16.msra.mxu0 %v1953
        %2816 = vmatpush.bf16.msra.mxu0 %v1950
        %2817 = vmatpush.bf16.msra.mxu0 %v1947
        %2818 = vmatpush.bf16.msra.mxu0 %v1944
        %2819 = vmatpush.bf16.msra.mxu0 %v1941
        %2820 = vmatpush.bf16.msra.mxu0 %v1938
        %2821 = vmatpush.bf16.msra.mxu0 %v1935
        %2822 = vmatmul.bf16.gmra.mxu0 %v1217
        %v2823 = vpop.f32.mrf.mxu0
        %v2824 = vadd.f32 %v2735, %v2823
        %v2825 = vpop.f32.mrf.mxu0
        %v2826 = vadd.f32 %v2737, %v2825
        %2827 = vmatmul.bf16.gmra.mxu0 %v1222
        %v2828 = vpop.f32.mrf.mxu0
        %v2829 = vadd.f32 %v2740, %v2828
        %v2830 = vpop.f32.mrf.mxu0
        %v2831 = vadd.f32 %v2742, %v2830
        %2832 = vmatmul.bf16.gmra.mxu0 %v1227
        %v2833 = vpop.f32.mrf.mxu0
        %v2834 = vadd.f32 %v2745, %v2833
        %v2835 = vpop.f32.mrf.mxu0
        %v2836 = vadd.f32 %v2747, %v2835
        %2837 = vmatmul.bf16.gmra.mxu0 %v1232
        %v2838 = vpop.f32.mrf.mxu0
        %v2839 = vadd.f32 %v2750, %v2838
        %v2840 = vpop.f32.mrf.mxu0
        %v2841 = vadd.f32 %v2752, %v2840
        %2842 = vmatmul.bf16.gmra.mxu0 %v1237
        %v2843 = vpop.f32.mrf.mxu0
        %v2844 = vadd.f32 %v2755, %v2843
        %v2845 = vpop.f32.mrf.mxu0
        %v2846 = vadd.f32 %v2757, %v2845
        %2847 = vmatmul.bf16.gmra.mxu0 %v1242
        %v2848 = vpop.f32.mrf.mxu0
        %v2849 = vadd.f32 %v2760, %v2848
        %v2850 = vpop.f32.mrf.mxu0
        %v2851 = vadd.f32 %v2762, %v2850
        %2852 = vmatmul.bf16.gmra.mxu0 %v1247
        %v2853 = vpop.f32.mrf.mxu0
        %v2854 = vadd.f32 %v2765, %v2853
        %v2855 = vpop.f32.mrf.mxu0
        %v2856 = vadd.f32 %v2767, %v2855
        %2857 = vmatmul.bf16.gmra.mxu0 %v1252
        %v2858 = vpop.f32.mrf.mxu0
        %v2859 = vadd.f32 %v2770, %v2858
        %v2860 = vpop.f32.mrf.mxu0
        %v2861 = vadd.f32 %v2772, %v2860
        %2862 = vmatmul.bf16.gmra.mxu0 %v1257
        %v2863 = vpop.f32.mrf.mxu0
        %v2864 = vadd.f32 %v2775, %v2863
        %v2865 = vpop.f32.mrf.mxu0
        %v2866 = vadd.f32 %v2777, %v2865
        %2867 = vmatmul.bf16.gmra.mxu0 %v1262
        %v2868 = vpop.f32.mrf.mxu0
        %v2869 = vadd.f32 %v2780, %v2868
        %v2870 = vpop.f32.mrf.mxu0
        %v2871 = vadd.f32 %v2782, %v2870
        %2872 = vmatmul.bf16.gmra.mxu0 %v1267
        %v2873 = vpop.f32.mrf.mxu0
        %v2874 = vadd.f32 %v2785, %v2873
        %v2875 = vpop.f32.mrf.mxu0
        %v2876 = vadd.f32 %v2787, %v2875
        %2877 = vmatmul.bf16.gmra.mxu0 %v1272
        %v2878 = vpop.f32.mrf.mxu0
        %v2879 = vadd.f32 %v2790, %v2878
        %v2880 = vpop.f32.mrf.mxu0
        %v2881 = vadd.f32 %v2792, %v2880
        %2882 = vmatmul.bf16.gmra.mxu0 %v1277
        %v2883 = vpop.f32.mrf.mxu0
        %v2884 = vadd.f32 %v2795, %v2883
        %v2885 = vpop.f32.mrf.mxu0
        %v2886 = vadd.f32 %v2797, %v2885
        %2887 = vmatmul.bf16.gmra.mxu0 %v1282
        %v2888 = vpop.f32.mrf.mxu0
        %v2889 = vadd.f32 %v2800, %v2888
        %v2890 = vpop.f32.mrf.mxu0
        %v2891 = vadd.f32 %v2802, %v2890
        %2892 = vmatmul.bf16.gmra.mxu0 %v1287
        %v2893 = vpop.f32.mrf.mxu0
        %v2894 = vadd.f32 %v2805, %v2893
        %v2895 = vpop.f32.mrf.mxu0
        %v2896 = vadd.f32 %v2807, %v2895
        %2897 = vmatmul.bf16.gmra.mxu0 %v1292
        %v2898 = vpop.f32.mrf.mxu0
        %v2899 = vadd.f32 %v2810, %v2898
        %v2900 = vpop.f32.mrf.mxu0
        %v2901 = vadd.f32 %v2812, %v2900
        %2902 = vdwg.mxu0
        %2903 = vmatpush.bf16.msra.mxu0 %v1980
        %2904 = vmatpush.bf16.msra.mxu0 %v1977
        %2905 = vmatpush.bf16.msra.mxu0 %v1974
        %2906 = vmatpush.bf16.msra.mxu0 %v1971
        %2907 = vmatpush.bf16.msra.mxu0 %v1968
        %2908 = vmatpush.bf16.msra.mxu0 %v1965
        %2909 = vmatpush.bf16.msra.mxu0 %v1962
        %2910 = vmatpush.bf16.msra.mxu0 %v1959
        %2911 = vmatmul.bf16.gmra.mxu0 %v1218
        %v2912 = vpop.f32.mrf.mxu0
        %v2913 = vadd.f32 %v2824, %v2912
        %v2914 = vpop.f32.mrf.mxu0
        %v2915 = vadd.f32 %v2826, %v2914
        %2916 = vmatmul.bf16.gmra.mxu0 %v1223
        %v2917 = vpop.f32.mrf.mxu0
        %v2918 = vadd.f32 %v2829, %v2917
        %v2919 = vpop.f32.mrf.mxu0
        %v2920 = vadd.f32 %v2831, %v2919
        %2921 = vmatmul.bf16.gmra.mxu0 %v1228
        %v2922 = vpop.f32.mrf.mxu0
        %v2923 = vadd.f32 %v2834, %v2922
        %v2924 = vpop.f32.mrf.mxu0
        %v2925 = vadd.f32 %v2836, %v2924
        %2926 = vmatmul.bf16.gmra.mxu0 %v1233
        %v2927 = vpop.f32.mrf.mxu0
        %v2928 = vadd.f32 %v2839, %v2927
        %v2929 = vpop.f32.mrf.mxu0
        %v2930 = vadd.f32 %v2841, %v2929
        %2931 = vmatmul.bf16.gmra.mxu0 %v1238
        %v2932 = vpop.f32.mrf.mxu0
        %v2933 = vadd.f32 %v2844, %v2932
        %v2934 = vpop.f32.mrf.mxu0
        %v2935 = vadd.f32 %v2846, %v2934
        %2936 = vmatmul.bf16.gmra.mxu0 %v1243
        %v2937 = vpop.f32.mrf.mxu0
        %v2938 = vadd.f32 %v2849, %v2937
        %v2939 = vpop.f32.mrf.mxu0
        %v2940 = vadd.f32 %v2851, %v2939
        %2941 = vmatmul.bf16.gmra.mxu0 %v1248
        %v2942 = vpop.f32.mrf.mxu0
        %v2943 = vadd.f32 %v2854, %v2942
        %v2944 = vpop.f32.mrf.mxu0
        %v2945 = vadd.f32 %v2856, %v2944
        %2946 = vmatmul.bf16.gmra.mxu0 %v1253
        %v2947 = vpop.f32.mrf.mxu0
        %v2948 = vadd.f32 %v2859, %v2947
        %v2949 = vpop.f32.mrf.mxu0
        %v2950 = vadd.f32 %v2861, %v2949
        %2951 = vmatmul.bf16.gmra.mxu0 %v1258
        %v2952 = vpop.f32.mrf.mxu0
        %v2953 = vadd.f32 %v2864, %v2952
        %v2954 = vpop.f32.mrf.mxu0
        %v2955 = vadd.f32 %v2866, %v2954
        %2956 = vmatmul.bf16.gmra.mxu0 %v1263
        %v2957 = vpop.f32.mrf.mxu0
        %v2958 = vadd.f32 %v2869, %v2957
        %v2959 = vpop.f32.mrf.mxu0
        %v2960 = vadd.f32 %v2871, %v2959
        %2961 = vmatmul.bf16.gmra.mxu0 %v1268
        %v2962 = vpop.f32.mrf.mxu0
        %v2963 = vadd.f32 %v2874, %v2962
        %v2964 = vpop.f32.mrf.mxu0
        %v2965 = vadd.f32 %v2876, %v2964
        %2966 = vmatmul.bf16.gmra.mxu0 %v1273
        %v2967 = vpop.f32.mrf.mxu0
        %v2968 = vadd.f32 %v2879, %v2967
        %v2969 = vpop.f32.mrf.mxu0
        %v2970 = vadd.f32 %v2881, %v2969
        %2971 = vmatmul.bf16.gmra.mxu0 %v1278
        %v2972 = vpop.f32.mrf.mxu0
        %v2973 = vadd.f32 %v2884, %v2972
        %v2974 = vpop.f32.mrf.mxu0
        %v2975 = vadd.f32 %v2886, %v2974
        %2976 = vmatmul.bf16.gmra.mxu0 %v1283
        %v2977 = vpop.f32.mrf.mxu0
        %v2978 = vadd.f32 %v2889, %v2977
        %v2979 = vpop.f32.mrf.mxu0
        %v2980 = vadd.f32 %v2891, %v2979
        %2981 = vmatmul.bf16.gmra.mxu0 %v1288
        %v2982 = vpop.f32.mrf.mxu0
        %v2983 = vadd.f32 %v2894, %v2982
        %v2984 = vpop.f32.mrf.mxu0
        %v2985 = vadd.f32 %v2896, %v2984
        %2986 = vmatmul.bf16.gmra.mxu0 %v1293
        %v2987 = vpop.f32.mrf.mxu0
        %v2988 = vadd.f32 %v2899, %v2987
        %v2989 = vpop.f32.mrf.mxu0
        %v2990 = vadd.f32 %v2901, %v2989
        %2991 = vdwg.mxu0
        %2992 = vmatpush.bf16.msra.mxu0 %v1885
        %2993 = vmatpush.bf16.msra.mxu0 %v1882
        %2994 = vmatpush.bf16.msra.mxu0 %v1879
        %2995 = vmatpush.bf16.msra.mxu0 %v1876
        %2996 = vmatpush.bf16.msra.mxu0 %v1873
        %2997 = vmatpush.bf16.msra.mxu0 %v1870
        %2998 = vmatpush.bf16.msra.mxu0 %v1867
        %2999 = vmatpush.bf16.msra.mxu0 %v1864
        %3000 = vmatmul.bf16.gmra.mxu0 %v1214
        %v3001 = vpop.f32.mrf.mxu0
        %v3002 = vadd.f32 %v1458, %v3001
        %v3003 = vpop.f32.mrf.mxu0
        %v3004 = vadd.f32 %v1458, %v3003
        %3005 = vmatmul.bf16.gmra.mxu0 %v1219
        %v3006 = vpop.f32.mrf.mxu0
        %v3007 = vadd.f32 %v1458, %v3006
        %v3008 = vpop.f32.mrf.mxu0
        %v3009 = vadd.f32 %v1458, %v3008
        %3010 = vmatmul.bf16.gmra.mxu0 %v1224
        %v3011 = vpop.f32.mrf.mxu0
        %v3012 = vadd.f32 %v1458, %v3011
        %v3013 = vpop.f32.mrf.mxu0
        %v3014 = vadd.f32 %v1458, %v3013
        %3015 = vmatmul.bf16.gmra.mxu0 %v1229
        %v3016 = vpop.f32.mrf.mxu0
        %v3017 = vadd.f32 %v1458, %v3016
        %v3018 = vpop.f32.mrf.mxu0
        %v3019 = vadd.f32 %v1458, %v3018
        %3020 = vmatmul.bf16.gmra.mxu0 %v1234
        %v3021 = vpop.f32.mrf.mxu0
        %v3022 = vadd.f32 %v1458, %v3021
        %v3023 = vpop.f32.mrf.mxu0
        %v3024 = vadd.f32 %v1458, %v3023
        %3025 = vmatmul.bf16.gmra.mxu0 %v1239
        %v3026 = vpop.f32.mrf.mxu0
        %v3027 = vadd.f32 %v1458, %v3026
        %v3028 = vpop.f32.mrf.mxu0
        %v3029 = vadd.f32 %v1458, %v3028
        %3030 = vmatmul.bf16.gmra.mxu0 %v1244
        %v3031 = vpop.f32.mrf.mxu0
        %v3032 = vadd.f32 %v1458, %v3031
        %v3033 = vpop.f32.mrf.mxu0
        %v3034 = vadd.f32 %v1458, %v3033
        %3035 = vmatmul.bf16.gmra.mxu0 %v1249
        %v3036 = vpop.f32.mrf.mxu0
        %v3037 = vadd.f32 %v1458, %v3036
        %v3038 = vpop.f32.mrf.mxu0
        %v3039 = vadd.f32 %v1458, %v3038
        %3040 = vmatmul.bf16.gmra.mxu0 %v1254
        %v3041 = vpop.f32.mrf.mxu0
        %v3042 = vadd.f32 %v1458, %v3041
        %v3043 = vpop.f32.mrf.mxu0
        %v3044 = vadd.f32 %v1458, %v3043
        %3045 = vmatmul.bf16.gmra.mxu0 %v1259
        %v3046 = vpop.f32.mrf.mxu0
        %v3047 = vadd.f32 %v1458, %v3046
        %v3048 = vpop.f32.mrf.mxu0
        %v3049 = vadd.f32 %v1458, %v3048
        %3050 = vmatmul.bf16.gmra.mxu0 %v1264
        %v3051 = vpop.f32.mrf.mxu0
        %v3052 = vadd.f32 %v1458, %v3051
        %v3053 = vpop.f32.mrf.mxu0
        %v3054 = vadd.f32 %v1458, %v3053
        %3055 = vmatmul.bf16.gmra.mxu0 %v1269
        %v3056 = vpop.f32.mrf.mxu0
        %v3057 = vadd.f32 %v1458, %v3056
        %v3058 = vpop.f32.mrf.mxu0
        %v3059 = vadd.f32 %v1458, %v3058
        %3060 = vmatmul.bf16.gmra.mxu0 %v1274
        %v3061 = vpop.f32.mrf.mxu0
        %v3062 = vadd.f32 %v1458, %v3061
        %v3063 = vpop.f32.mrf.mxu0
        %v3064 = vadd.f32 %v1458, %v3063
        %3065 = vmatmul.bf16.gmra.mxu0 %v1279
        %v3066 = vpop.f32.mrf.mxu0
        %v3067 = vadd.f32 %v1458, %v3066
        %v3068 = vpop.f32.mrf.mxu0
        %v3069 = vadd.f32 %v1458, %v3068
        %3070 = vmatmul.bf16.gmra.mxu0 %v1284
        %v3071 = vpop.f32.mrf.mxu0
        %v3072 = vadd.f32 %v1458, %v3071
        %v3073 = vpop.f32.mrf.mxu0
        %v3074 = vadd.f32 %v1458, %v3073
        %3075 = vmatmul.bf16.gmra.mxu0 %v1289
        %v3076 = vpop.f32.mrf.mxu0
        %v3077 = vadd.f32 %v1458, %v3076
        %v3078 = vpop.f32.mrf.mxu0
        %v3079 = vadd.f32 %v1458, %v3078
        %3080 = vdwg.mxu0
        %3081 = vmatpush.bf16.msra.mxu0 %v1909
        %3082 = vmatpush.bf16.msra.mxu0 %v1906
        %3083 = vmatpush.bf16.msra.mxu0 %v1903
        %3084 = vmatpush.bf16.msra.mxu0 %v1900
        %3085 = vmatpush.bf16.msra.mxu0 %v1897
        %3086 = vmatpush.bf16.msra.mxu0 %v1894
        %3087 = vmatpush.bf16.msra.mxu0 %v1891
        %3088 = vmatpush.bf16.msra.mxu0 %v1888
        %3089 = vmatmul.bf16.gmra.mxu0 %v1215
        %v3090 = vpop.f32.mrf.mxu0
        %v3091 = vadd.f32 %v3002, %v3090
        %v3092 = vpop.f32.mrf.mxu0
        %v3093 = vadd.f32 %v3004, %v3092
        %3094 = vmatmul.bf16.gmra.mxu0 %v1220
        %v3095 = vpop.f32.mrf.mxu0
        %v3096 = vadd.f32 %v3007, %v3095
        %v3097 = vpop.f32.mrf.mxu0
        %v3098 = vadd.f32 %v3009, %v3097
        %3099 = vmatmul.bf16.gmra.mxu0 %v1225
        %v3100 = vpop.f32.mrf.mxu0
        %v3101 = vadd.f32 %v3012, %v3100
        %v3102 = vpop.f32.mrf.mxu0
        %v3103 = vadd.f32 %v3014, %v3102
        %3104 = vmatmul.bf16.gmra.mxu0 %v1230
        %v3105 = vpop.f32.mrf.mxu0
        %v3106 = vadd.f32 %v3017, %v3105
        %v3107 = vpop.f32.mrf.mxu0
        %v3108 = vadd.f32 %v3019, %v3107
        %3109 = vmatmul.bf16.gmra.mxu0 %v1235
        %v3110 = vpop.f32.mrf.mxu0
        %v3111 = vadd.f32 %v3022, %v3110
        %v3112 = vpop.f32.mrf.mxu0
        %v3113 = vadd.f32 %v3024, %v3112
        %3114 = vmatmul.bf16.gmra.mxu0 %v1240
        %v3115 = vpop.f32.mrf.mxu0
        %v3116 = vadd.f32 %v3027, %v3115
        %v3117 = vpop.f32.mrf.mxu0
        %v3118 = vadd.f32 %v3029, %v3117
        %3119 = vmatmul.bf16.gmra.mxu0 %v1245
        %v3120 = vpop.f32.mrf.mxu0
        %v3121 = vadd.f32 %v3032, %v3120
        %v3122 = vpop.f32.mrf.mxu0
        %v3123 = vadd.f32 %v3034, %v3122
        %3124 = vmatmul.bf16.gmra.mxu0 %v1250
        %v3125 = vpop.f32.mrf.mxu0
        %v3126 = vadd.f32 %v3037, %v3125
        %v3127 = vpop.f32.mrf.mxu0
        %v3128 = vadd.f32 %v3039, %v3127
        %3129 = vmatmul.bf16.gmra.mxu0 %v1255
        %v3130 = vpop.f32.mrf.mxu0
        %v3131 = vadd.f32 %v3042, %v3130
        %v3132 = vpop.f32.mrf.mxu0
        %v3133 = vadd.f32 %v3044, %v3132
        %3134 = vmatmul.bf16.gmra.mxu0 %v1260
        %v3135 = vpop.f32.mrf.mxu0
        %v3136 = vadd.f32 %v3047, %v3135
        %v3137 = vpop.f32.mrf.mxu0
        %v3138 = vadd.f32 %v3049, %v3137
        %3139 = vmatmul.bf16.gmra.mxu0 %v1265
        %v3140 = vpop.f32.mrf.mxu0
        %v3141 = vadd.f32 %v3052, %v3140
        %v3142 = vpop.f32.mrf.mxu0
        %v3143 = vadd.f32 %v3054, %v3142
        %3144 = vmatmul.bf16.gmra.mxu0 %v1270
        %v3145 = vpop.f32.mrf.mxu0
        %v3146 = vadd.f32 %v3057, %v3145
        %v3147 = vpop.f32.mrf.mxu0
        %v3148 = vadd.f32 %v3059, %v3147
        %3149 = vmatmul.bf16.gmra.mxu0 %v1275
        %v3150 = vpop.f32.mrf.mxu0
        %v3151 = vadd.f32 %v3062, %v3150
        %v3152 = vpop.f32.mrf.mxu0
        %v3153 = vadd.f32 %v3064, %v3152
        %3154 = vmatmul.bf16.gmra.mxu0 %v1280
        %v3155 = vpop.f32.mrf.mxu0
        %v3156 = vadd.f32 %v3067, %v3155
        %v3157 = vpop.f32.mrf.mxu0
        %v3158 = vadd.f32 %v3069, %v3157
        %3159 = vmatmul.bf16.gmra.mxu0 %v1285
        %v3160 = vpop.f32.mrf.mxu0
        %v3161 = vadd.f32 %v3072, %v3160
        %v3162 = vpop.f32.mrf.mxu0
        %v3163 = vadd.f32 %v3074, %v3162
        %3164 = vmatmul.bf16.gmra.mxu0 %v1290
        %v3165 = vpop.f32.mrf.mxu0
        %v3166 = vadd.f32 %v3077, %v3165
        %v3167 = vpop.f32.mrf.mxu0
        %v3168 = vadd.f32 %v3079, %v3167
        %3169 = vdwg.mxu0
        %3170 = vmatpush.bf16.msra.mxu0 %v1933
        %3171 = vmatpush.bf16.msra.mxu0 %v1930
        %3172 = vmatpush.bf16.msra.mxu0 %v1927
        %3173 = vmatpush.bf16.msra.mxu0 %v1924
        %3174 = vmatpush.bf16.msra.mxu0 %v1921
        %3175 = vmatpush.bf16.msra.mxu0 %v1918
        %3176 = vmatpush.bf16.msra.mxu0 %v1915
        %3177 = vmatpush.bf16.msra.mxu0 %v1912
        %3178 = vmatmul.bf16.gmra.mxu0 %v1216
        %v3179 = vpop.f32.mrf.mxu0
        %v3180 = vadd.f32 %v3091, %v3179
        %v3181 = vpop.f32.mrf.mxu0
        %v3182 = vadd.f32 %v3093, %v3181
        %3183 = vmatmul.bf16.gmra.mxu0 %v1221
        %v3184 = vpop.f32.mrf.mxu0
        %v3185 = vadd.f32 %v3096, %v3184
        %v3186 = vpop.f32.mrf.mxu0
        %v3187 = vadd.f32 %v3098, %v3186
        %3188 = vmatmul.bf16.gmra.mxu0 %v1226
        %v3189 = vpop.f32.mrf.mxu0
        %v3190 = vadd.f32 %v3101, %v3189
        %v3191 = vpop.f32.mrf.mxu0
        %v3192 = vadd.f32 %v3103, %v3191
        %3193 = vmatmul.bf16.gmra.mxu0 %v1231
        %v3194 = vpop.f32.mrf.mxu0
        %v3195 = vadd.f32 %v3106, %v3194
        %v3196 = vpop.f32.mrf.mxu0
        %v3197 = vadd.f32 %v3108, %v3196
        %3198 = vmatmul.bf16.gmra.mxu0 %v1236
        %v3199 = vpop.f32.mrf.mxu0
        %v3200 = vadd.f32 %v3111, %v3199
        %v3201 = vpop.f32.mrf.mxu0
        %v3202 = vadd.f32 %v3113, %v3201
        %3203 = vmatmul.bf16.gmra.mxu0 %v1241
        %v3204 = vpop.f32.mrf.mxu0
        %v3205 = vadd.f32 %v3116, %v3204
        %v3206 = vpop.f32.mrf.mxu0
        %v3207 = vadd.f32 %v3118, %v3206
        %3208 = vmatmul.bf16.gmra.mxu0 %v1246
        %v3209 = vpop.f32.mrf.mxu0
        %v3210 = vadd.f32 %v3121, %v3209
        %v3211 = vpop.f32.mrf.mxu0
        %v3212 = vadd.f32 %v3123, %v3211
        %3213 = vmatmul.bf16.gmra.mxu0 %v1251
        %v3214 = vpop.f32.mrf.mxu0
        %v3215 = vadd.f32 %v3126, %v3214
        %v3216 = vpop.f32.mrf.mxu0
        %v3217 = vadd.f32 %v3128, %v3216
        %3218 = vmatmul.bf16.gmra.mxu0 %v1256
        %v3219 = vpop.f32.mrf.mxu0
        %v3220 = vadd.f32 %v3131, %v3219
        %v3221 = vpop.f32.mrf.mxu0
        %v3222 = vadd.f32 %v3133, %v3221
        %3223 = vmatmul.bf16.gmra.mxu0 %v1261
        %v3224 = vpop.f32.mrf.mxu0
        %v3225 = vadd.f32 %v3136, %v3224
        %v3226 = vpop.f32.mrf.mxu0
        %v3227 = vadd.f32 %v3138, %v3226
        %3228 = vmatmul.bf16.gmra.mxu0 %v1266
        %v3229 = vpop.f32.mrf.mxu0
        %v3230 = vadd.f32 %v3141, %v3229
        %v3231 = vpop.f32.mrf.mxu0
        %v3232 = vadd.f32 %v3143, %v3231
        %3233 = vmatmul.bf16.gmra.mxu0 %v1271
        %v3234 = vpop.f32.mrf.mxu0
        %v3235 = vadd.f32 %v3146, %v3234
        %v3236 = vpop.f32.mrf.mxu0
        %v3237 = vadd.f32 %v3148, %v3236
        %3238 = vmatmul.bf16.gmra.mxu0 %v1276
        %v3239 = vpop.f32.mrf.mxu0
        %v3240 = vadd.f32 %v3151, %v3239
        %v3241 = vpop.f32.mrf.mxu0
        %v3242 = vadd.f32 %v3153, %v3241
        %3243 = vmatmul.bf16.gmra.mxu0 %v1281
        %v3244 = vpop.f32.mrf.mxu0
        %v3245 = vadd.f32 %v3156, %v3244
        %v3246 = vpop.f32.mrf.mxu0
        %v3247 = vadd.f32 %v3158, %v3246
        %3248 = vmatmul.bf16.gmra.mxu0 %v1286
        %v3249 = vpop.f32.mrf.mxu0
        %v3250 = vadd.f32 %v3161, %v3249
        %v3251 = vpop.f32.mrf.mxu0
        %v3252 = vadd.f32 %v3163, %v3251
        %3253 = vmatmul.bf16.gmra.mxu0 %v1291
        %v3254 = vpop.f32.mrf.mxu0
        %v3255 = vadd.f32 %v3166, %v3254
        %v3256 = vpop.f32.mrf.mxu0
        %v3257 = vadd.f32 %v3168, %v3256
        %3258 = vdwg.mxu0
        %3259 = vmatpush.bf16.msra.mxu0 %v1957
        %3260 = vmatpush.bf16.msra.mxu0 %v1954
        %3261 = vmatpush.bf16.msra.mxu0 %v1951
        %3262 = vmatpush.bf16.msra.mxu0 %v1948
        %3263 = vmatpush.bf16.msra.mxu0 %v1945
        %3264 = vmatpush.bf16.msra.mxu0 %v1942
        %3265 = vmatpush.bf16.msra.mxu0 %v1939
        %3266 = vmatpush.bf16.msra.mxu0 %v1936
        %3267 = vmatmul.bf16.gmra.mxu0 %v1217
        %v3268 = vpop.f32.mrf.mxu0
        %v3269 = vadd.f32 %v3180, %v3268
        %v3270 = vpop.f32.mrf.mxu0
        %v3271 = vadd.f32 %v3182, %v3270
        %3272 = vmatmul.bf16.gmra.mxu0 %v1222
        %v3273 = vpop.f32.mrf.mxu0
        %v3274 = vadd.f32 %v3185, %v3273
        %v3275 = vpop.f32.mrf.mxu0
        %v3276 = vadd.f32 %v3187, %v3275
        %3277 = vmatmul.bf16.gmra.mxu0 %v1227
        %v3278 = vpop.f32.mrf.mxu0
        %v3279 = vadd.f32 %v3190, %v3278
        %v3280 = vpop.f32.mrf.mxu0
        %v3281 = vadd.f32 %v3192, %v3280
        %3282 = vmatmul.bf16.gmra.mxu0 %v1232
        %v3283 = vpop.f32.mrf.mxu0
        %v3284 = vadd.f32 %v3195, %v3283
        %v3285 = vpop.f32.mrf.mxu0
        %v3286 = vadd.f32 %v3197, %v3285
        %3287 = vmatmul.bf16.gmra.mxu0 %v1237
        %v3288 = vpop.f32.mrf.mxu0
        %v3289 = vadd.f32 %v3200, %v3288
        %v3290 = vpop.f32.mrf.mxu0
        %v3291 = vadd.f32 %v3202, %v3290
        %3292 = vmatmul.bf16.gmra.mxu0 %v1242
        %v3293 = vpop.f32.mrf.mxu0
        %v3294 = vadd.f32 %v3205, %v3293
        %v3295 = vpop.f32.mrf.mxu0
        %v3296 = vadd.f32 %v3207, %v3295
        %3297 = vmatmul.bf16.gmra.mxu0 %v1247
        %v3298 = vpop.f32.mrf.mxu0
        %v3299 = vadd.f32 %v3210, %v3298
        %v3300 = vpop.f32.mrf.mxu0
        %v3301 = vadd.f32 %v3212, %v3300
        %3302 = vmatmul.bf16.gmra.mxu0 %v1252
        %v3303 = vpop.f32.mrf.mxu0
        %v3304 = vadd.f32 %v3215, %v3303
        %v3305 = vpop.f32.mrf.mxu0
        %v3306 = vadd.f32 %v3217, %v3305
        %3307 = vmatmul.bf16.gmra.mxu0 %v1257
        %v3308 = vpop.f32.mrf.mxu0
        %v3309 = vadd.f32 %v3220, %v3308
        %v3310 = vpop.f32.mrf.mxu0
        %v3311 = vadd.f32 %v3222, %v3310
        %3312 = vmatmul.bf16.gmra.mxu0 %v1262
        %v3313 = vpop.f32.mrf.mxu0
        %v3314 = vadd.f32 %v3225, %v3313
        %v3315 = vpop.f32.mrf.mxu0
        %v3316 = vadd.f32 %v3227, %v3315
        %3317 = vmatmul.bf16.gmra.mxu0 %v1267
        %v3318 = vpop.f32.mrf.mxu0
        %v3319 = vadd.f32 %v3230, %v3318
        %v3320 = vpop.f32.mrf.mxu0
        %v3321 = vadd.f32 %v3232, %v3320
        %3322 = vmatmul.bf16.gmra.mxu0 %v1272
        %v3323 = vpop.f32.mrf.mxu0
        %v3324 = vadd.f32 %v3235, %v3323
        %v3325 = vpop.f32.mrf.mxu0
        %v3326 = vadd.f32 %v3237, %v3325
        %3327 = vmatmul.bf16.gmra.mxu0 %v1277
        %v3328 = vpop.f32.mrf.mxu0
        %v3329 = vadd.f32 %v3240, %v3328
        %v3330 = vpop.f32.mrf.mxu0
        %v3331 = vadd.f32 %v3242, %v3330
        %3332 = vmatmul.bf16.gmra.mxu0 %v1282
        %v3333 = vpop.f32.mrf.mxu0
        %v3334 = vadd.f32 %v3245, %v3333
        %v3335 = vpop.f32.mrf.mxu0
        %v3336 = vadd.f32 %v3247, %v3335
        %3337 = vmatmul.bf16.gmra.mxu0 %v1287
        %v3338 = vpop.f32.mrf.mxu0
        %v3339 = vadd.f32 %v3250, %v3338
        %v3340 = vpop.f32.mrf.mxu0
        %v3341 = vadd.f32 %v3252, %v3340
        %3342 = vmatmul.bf16.gmra.mxu0 %v1292
        %v3343 = vpop.f32.mrf.mxu0
        %v3344 = vadd.f32 %v3255, %v3343
        %v3345 = vpop.f32.mrf.mxu0
        %v3346 = vadd.f32 %v3257, %v3345
        %3347 = vdwg.mxu0
        %3348 = vmatpush.bf16.msra.mxu0 %v1981
        %3349 = vmatpush.bf16.msra.mxu0 %v1978
        %3350 = vmatpush.bf16.msra.mxu0 %v1975
        %3351 = vmatpush.bf16.msra.mxu0 %v1972
        %3352 = vmatpush.bf16.msra.mxu0 %v1969
        %3353 = vmatpush.bf16.msra.mxu0 %v1966
        %3354 = vmatpush.bf16.msra.mxu0 %v1963
        %3355 = vmatpush.bf16.msra.mxu0 %v1960
        %3356 = vmatmul.bf16.gmra.mxu0 %v1218
        %v3357 = vpop.f32.mrf.mxu0
        %v3358 = vadd.f32 %v3269, %v3357
        %v3359 = vpop.f32.mrf.mxu0
        %v3360 = vadd.f32 %v3271, %v3359
        %3361 = vmatmul.bf16.gmra.mxu0 %v1223
        %v3362 = vpop.f32.mrf.mxu0
        %v3363 = vadd.f32 %v3274, %v3362
        %v3364 = vpop.f32.mrf.mxu0
        %v3365 = vadd.f32 %v3276, %v3364
        %3366 = vmatmul.bf16.gmra.mxu0 %v1228
        %v3367 = vpop.f32.mrf.mxu0
        %v3368 = vadd.f32 %v3279, %v3367
        %v3369 = vpop.f32.mrf.mxu0
        %v3370 = vadd.f32 %v3281, %v3369
        %3371 = vmatmul.bf16.gmra.mxu0 %v1233
        %v3372 = vpop.f32.mrf.mxu0
        %v3373 = vadd.f32 %v3284, %v3372
        %v3374 = vpop.f32.mrf.mxu0
        %v3375 = vadd.f32 %v3286, %v3374
        %3376 = vmatmul.bf16.gmra.mxu0 %v1238
        %v3377 = vpop.f32.mrf.mxu0
        %v3378 = vadd.f32 %v3289, %v3377
        %v3379 = vpop.f32.mrf.mxu0
        %v3380 = vadd.f32 %v3291, %v3379
        %3381 = vmatmul.bf16.gmra.mxu0 %v1243
        %v3382 = vpop.f32.mrf.mxu0
        %v3383 = vadd.f32 %v3294, %v3382
        %v3384 = vpop.f32.mrf.mxu0
        %v3385 = vadd.f32 %v3296, %v3384
        %3386 = vmatmul.bf16.gmra.mxu0 %v1248
        %v3387 = vpop.f32.mrf.mxu0
        %v3388 = vadd.f32 %v3299, %v3387
        %v3389 = vpop.f32.mrf.mxu0
        %v3390 = vadd.f32 %v3301, %v3389
        %3391 = vmatmul.bf16.gmra.mxu0 %v1253
        %v3392 = vpop.f32.mrf.mxu0
        %v3393 = vadd.f32 %v3304, %v3392
        %v3394 = vpop.f32.mrf.mxu0
        %v3395 = vadd.f32 %v3306, %v3394
        %3396 = vmatmul.bf16.gmra.mxu0 %v1258
        %v3397 = vpop.f32.mrf.mxu0
        %v3398 = vadd.f32 %v3309, %v3397
        %v3399 = vpop.f32.mrf.mxu0
        %v3400 = vadd.f32 %v3311, %v3399
        %3401 = vmatmul.bf16.gmra.mxu0 %v1263
        %v3402 = vpop.f32.mrf.mxu0
        %v3403 = vadd.f32 %v3314, %v3402
        %v3404 = vpop.f32.mrf.mxu0
        %v3405 = vadd.f32 %v3316, %v3404
        %3406 = vmatmul.bf16.gmra.mxu0 %v1268
        %v3407 = vpop.f32.mrf.mxu0
        %v3408 = vadd.f32 %v3319, %v3407
        %v3409 = vpop.f32.mrf.mxu0
        %v3410 = vadd.f32 %v3321, %v3409
        %3411 = vmatmul.bf16.gmra.mxu0 %v1273
        %v3412 = vpop.f32.mrf.mxu0
        %v3413 = vadd.f32 %v3324, %v3412
        %v3414 = vpop.f32.mrf.mxu0
        %v3415 = vadd.f32 %v3326, %v3414
        %3416 = vmatmul.bf16.gmra.mxu0 %v1278
        %v3417 = vpop.f32.mrf.mxu0
        %v3418 = vadd.f32 %v3329, %v3417
        %v3419 = vpop.f32.mrf.mxu0
        %v3420 = vadd.f32 %v3331, %v3419
        %3421 = vmatmul.bf16.gmra.mxu0 %v1283
        %v3422 = vpop.f32.mrf.mxu0
        %v3423 = vadd.f32 %v3334, %v3422
        %v3424 = vpop.f32.mrf.mxu0
        %v3425 = vadd.f32 %v3336, %v3424
        %3426 = vmatmul.bf16.gmra.mxu0 %v1288
        %v3427 = vpop.f32.mrf.mxu0
        %v3428 = vadd.f32 %v3339, %v3427
        %v3429 = vpop.f32.mrf.mxu0
        %v3430 = vadd.f32 %v3341, %v3429
        %3431 = vmatmul.bf16.gmra.mxu0 %v1293
        %v3432 = vpop.f32.mrf.mxu0
        %v3433 = vadd.f32 %v3344, %v3432
        %v3434 = vpop.f32.mrf.mxu0
        %v3435 = vadd.f32 %v3346, %v3434
        %3436 = vdwg.mxu0
        %v3437 = vmax.f32 %v2468, 0.0
        %v3438 = vmax.f32 %v2913, 0.0
        %v3439 = vmax.f32 %v3358, 0.0
        %v3440 = vmax.f32 %v2470, 0.0
        %v3441 = vmax.f32 %v2915, 0.0
        %v3442 = vmax.f32 %v3360, 0.0
        %v3443 = vmax.f32 %v2473, 0.0
        %v3444 = vmax.f32 %v2918, 0.0
        %v3445 = vmax.f32 %v3363, 0.0
        %v3446 = vmax.f32 %v2475, 0.0
        %v3447 = vmax.f32 %v2920, 0.0
        %v3448 = vmax.f32 %v3365, 0.0
        %v3449 = vmax.f32 %v2478, 0.0
        %v3450 = vmax.f32 %v2923, 0.0
        %v3451 = vmax.f32 %v3368, 0.0
        %v3452 = vmax.f32 %v2480, 0.0
        %v3453 = vmax.f32 %v2925, 0.0
        %v3454 = vmax.f32 %v3370, 0.0
        %v3455 = vmax.f32 %v2483, 0.0
        %v3456 = vmax.f32 %v2928, 0.0
        %v3457 = vmax.f32 %v3373, 0.0
        %v3458 = vmax.f32 %v2485, 0.0
        %v3459 = vmax.f32 %v2930, 0.0
        %v3460 = vmax.f32 %v3375, 0.0
        %v3461 = vmax.f32 %v2488, 0.0
        %v3462 = vmax.f32 %v2933, 0.0
        %v3463 = vmax.f32 %v3378, 0.0
        %v3464 = vmax.f32 %v2490, 0.0
        %v3465 = vmax.f32 %v2935, 0.0
        %v3466 = vmax.f32 %v3380, 0.0
        %v3467 = vmax.f32 %v2493, 0.0
        %v3468 = vmax.f32 %v2938, 0.0
        %v3469 = vmax.f32 %v3383, 0.0
        %v3470 = vmax.f32 %v2495, 0.0
        %v3471 = vmax.f32 %v2940, 0.0
        %v3472 = vmax.f32 %v3385, 0.0
        %v3473 = vmax.f32 %v2498, 0.0
        %v3474 = vmax.f32 %v2943, 0.0
        %v3475 = vmax.f32 %v3388, 0.0
        %v3476 = vmax.f32 %v2500, 0.0
        %v3477 = vmax.f32 %v2945, 0.0
        %v3478 = vmax.f32 %v3390, 0.0
        %v3479 = vmax.f32 %v2503, 0.0
        %v3480 = vmax.f32 %v2948, 0.0
        %v3481 = vmax.f32 %v3393, 0.0
        %v3482 = vmax.f32 %v2505, 0.0
        %v3483 = vmax.f32 %v2950, 0.0
        %v3484 = vmax.f32 %v3395, 0.0
        %v3485 = vmax.f32 %v2508, 0.0
        %v3486 = vmax.f32 %v2953, 0.0
        %v3487 = vmax.f32 %v3398, 0.0
        %v3488 = vmax.f32 %v2510, 0.0
        %v3489 = vmax.f32 %v2955, 0.0
        %v3490 = vmax.f32 %v3400, 0.0
        %v3491 = vmax.f32 %v2513, 0.0
        %v3492 = vmax.f32 %v2958, 0.0
        %v3493 = vmax.f32 %v3403, 0.0
        %v3494 = vmax.f32 %v2515, 0.0
        %v3495 = vmax.f32 %v2960, 0.0
        %v3496 = vmax.f32 %v3405, 0.0
        %v3497 = vmax.f32 %v2518, 0.0
        %v3498 = vmax.f32 %v2963, 0.0
        %v3499 = vmax.f32 %v3408, 0.0
        %v3500 = vmax.f32 %v2520, 0.0
        %v3501 = vmax.f32 %v2965, 0.0
        %v3502 = vmax.f32 %v3410, 0.0
        %v3503 = vmax.f32 %v2523, 0.0
        %v3504 = vmax.f32 %v2968, 0.0
        %v3505 = vmax.f32 %v3413, 0.0
        %v3506 = vmax.f32 %v2525, 0.0
        %v3507 = vmax.f32 %v2970, 0.0
        %v3508 = vmax.f32 %v3415, 0.0
        %v3509 = vmax.f32 %v2528, 0.0
        %v3510 = vmax.f32 %v2973, 0.0
        %v3511 = vmax.f32 %v3418, 0.0
        %v3512 = vmax.f32 %v2530, 0.0
        %v3513 = vmax.f32 %v2975, 0.0
        %v3514 = vmax.f32 %v3420, 0.0
        %v3515 = vmax.f32 %v2533, 0.0
        %v3516 = vmax.f32 %v2978, 0.0
        %v3517 = vmax.f32 %v3423, 0.0
        %v3518 = vmax.f32 %v2535, 0.0
        %v3519 = vmax.f32 %v2980, 0.0
        %v3520 = vmax.f32 %v3425, 0.0
        %v3521 = vmax.f32 %v2538, 0.0
        %v3522 = vmax.f32 %v2983, 0.0
        %v3523 = vmax.f32 %v3428, 0.0
        %v3524 = vmax.f32 %v2540, 0.0
        %v3525 = vmax.f32 %v2985, 0.0
        %v3526 = vmax.f32 %v3430, 0.0
        %v3527 = vmax.f32 %v2543, 0.0
        %v3528 = vmax.f32 %v2988, 0.0
        %v3529 = vmax.f32 %v3433, 0.0
        %v3530 = vmax.f32 %v2545, 0.0
        %v3531 = vmax.f32 %v2990, 0.0
        %v3532 = vmax.f32 %v3435, 0.0
        %v3533 = vpack.c.bf16 %v3440, %v3437
        %v3534 = vpack.c.bf16 %v3441, %v3438
        %v3535 = vpack.c.bf16 %v3442, %v3439
        %v3536 = vpack.c.bf16 %v3446, %v3443
        %v3537 = vpack.c.bf16 %v3447, %v3444
        %v3538 = vpack.c.bf16 %v3448, %v3445
        %v3539 = vpack.c.bf16 %v3452, %v3449
        %v3540 = vpack.c.bf16 %v3453, %v3450
        %v3541 = vpack.c.bf16 %v3454, %v3451
        %v3542 = vpack.c.bf16 %v3458, %v3455
        %v3543 = vpack.c.bf16 %v3459, %v3456
        %v3544 = vpack.c.bf16 %v3460, %v3457
        %v3545 = vpack.c.bf16 %v3464, %v3461
        %v3546 = vpack.c.bf16 %v3465, %v3462
        %v3547 = vpack.c.bf16 %v3466, %v3463
        %v3548 = vpack.c.bf16 %v3470, %v3467
        %v3549 = vpack.c.bf16 %v3471, %v3468
        %v3550 = vpack.c.bf16 %v3472, %v3469
        %v3551 = vpack.c.bf16 %v3476, %v3473
        %v3552 = vpack.c.bf16 %v3477, %v3474
        %v3553 = vpack.c.bf16 %v3478, %v3475
        %v3554 = vpack.c.bf16 %v3482, %v3479
        %v3555 = vpack.c.bf16 %v3483, %v3480
        %v3556 = vpack.c.bf16 %v3484, %v3481
        %v3557 = vpack.c.bf16 %v3488, %v3485
        %v3558 = vpack.c.bf16 %v3489, %v3486
        %v3559 = vpack.c.bf16 %v3490, %v3487
        %v3560 = vpack.c.bf16 %v3494, %v3491
        %v3561 = vpack.c.bf16 %v3495, %v3492
        %v3562 = vpack.c.bf16 %v3496, %v3493
        %v3563 = vpack.c.bf16 %v3500, %v3497
        %v3564 = vpack.c.bf16 %v3501, %v3498
        %v3565 = vpack.c.bf16 %v3502, %v3499
        %v3566 = vpack.c.bf16 %v3506, %v3503
        %v3567 = vpack.c.bf16 %v3507, %v3504
        %v3568 = vpack.c.bf16 %v3508, %v3505
        %v3569 = vpack.c.bf16 %v3512, %v3509
        %v3570 = vpack.c.bf16 %v3513, %v3510
        %v3571 = vpack.c.bf16 %v3514, %v3511
        %v3572 = vpack.c.bf16 %v3518, %v3515
        %v3573 = vpack.c.bf16 %v3519, %v3516
        %v3574 = vpack.c.bf16 %v3520, %v3517
        %v3575 = vpack.c.bf16 %v3524, %v3521
        %v3576 = vpack.c.bf16 %v3525, %v3522
        %v3577 = vpack.c.bf16 %v3526, %v3523
        %v3578 = vpack.c.bf16 %v3530, %v3527
        %v3579 = vpack.c.bf16 %v3531, %v3528
        %v3580 = vpack.c.bf16 %v3532, %v3529
        %v3581 = vld [vmem:[%s3] sm:$0xff]
        %v3582 = vld [vmem:[%s3 + $0x8] sm:$0xff]
        %v3583 = vld [vmem:[%s3 + $0x10] sm:$0xff]
        %v3584 = vld [vmem:[%s3 + $0x18] sm:$0xff]
        %v3585 = vld [vmem:[%s3 + $0x20] sm:$0xff]
        %v3586 = vld [vmem:[%s3 + $0x28] sm:$0xff]
        %v3587 = vld [vmem:[%s3 + $0x30] sm:$0xff]
        %v3588 = vld [vmem:[%s3 + $0x38] sm:$0xff]
        %v3589 = vld [vmem:[%s3 + $0x40] sm:$0xff]
        %v3590 = vld [vmem:[%s3 + $0x48] sm:$0xff]
        %v3591 = vld [vmem:[%s3 + $0x50] sm:$0xff]
        %v3592 = vld [vmem:[%s3 + $0x58] sm:$0xff]
        %v3593 = vld [vmem:[%s3 + $0x60] sm:$0xff]
        %v3594 = vld [vmem:[%s3 + $0x68] sm:$0xff]
        %v3595 = vld [vmem:[%s3 + $0x70] sm:$0xff]
        %v3596 = vld [vmem:[%s3 + $0x78] sm:$0xff]
        %v3613 = vunpack.c.l.b16 %v3581
        %v3614 = vunpack.c.h.b16 %v3581
        %v3615 = vunpack.c.l.b16 %v3582
        %v3616 = vunpack.c.h.b16 %v3582
        %v3617 = vunpack.c.l.b16 %v3583
        %v3618 = vunpack.c.h.b16 %v3583
        %v3619 = vunpack.c.l.b16 %v3584
        %v3620 = vunpack.c.h.b16 %v3584
        %v3621 = vunpack.c.l.b16 %v3585
        %v3622 = vunpack.c.h.b16 %v3585
        %v3623 = vunpack.c.l.b16 %v3586
        %v3624 = vunpack.c.h.b16 %v3586
        %v3625 = vunpack.c.l.b16 %v3587
        %v3626 = vunpack.c.h.b16 %v3587
        %v3627 = vunpack.c.l.b16 %v3588
        %v3628 = vunpack.c.h.b16 %v3588
        %v3629 = vunpack.c.l.b16 %v3589
        %v3630 = vunpack.c.h.b16 %v3589
        %v3631 = vunpack.c.l.b16 %v3590
        %v3632 = vunpack.c.h.b16 %v3590
        %v3633 = vunpack.c.l.b16 %v3591
        %v3634 = vunpack.c.h.b16 %v3591
        %v3635 = vunpack.c.l.b16 %v3592
        %v3636 = vunpack.c.h.b16 %v3592
        %v3637 = vunpack.c.l.b16 %v3593
        %v3638 = vunpack.c.h.b16 %v3593
        %v3639 = vunpack.c.l.b16 %v3594
        %v3640 = vunpack.c.h.b16 %v3594
        %v3641 = vunpack.c.l.b16 %v3595
        %v3642 = vunpack.c.h.b16 %v3595
        %v3643 = vunpack.c.l.b16 %v3596
        %v3644 = vunpack.c.h.b16 %v3596
        %v3645 = vpack.c.b16 %v3615, %v3613
        %v3646 = vpack.c.b16 %v3616, %v3614
        %v3647 = vpack.c.b16 %v3619, %v3617
        %v3648 = vpack.c.b16 %v3620, %v3618
        %v3649 = vpack.c.b16 %v3623, %v3621
        %v3650 = vpack.c.b16 %v3624, %v3622
        %v3651 = vpack.c.b16 %v3627, %v3625
        %v3652 = vpack.c.b16 %v3628, %v3626
        %v3653 = vpack.c.b16 %v3631, %v3629
        %v3654 = vpack.c.b16 %v3632, %v3630
        %v3655 = vpack.c.b16 %v3635, %v3633
        %v3656 = vpack.c.b16 %v3636, %v3634
        %v3657 = vpack.c.b16 %v3639, %v3637
        %v3658 = vpack.c.b16 %v3640, %v3638
        %v3659 = vpack.c.b16 %v3643, %v3641
        %v3660 = vpack.c.b16 %v3644, %v3642
        %vm3669 = vcmask 1014784
        %v3671 = vsel %vm3669, %v3646, 0
        %v3674 = vsel %vm3669, %v3648, 0
        %v3677 = vsel %vm3669, %v3650, 0
        %v3680 = vsel %vm3669, %v3652, 0
        %v3683 = vsel %vm3669, %v3654, 0
        %v3686 = vsel %vm3669, %v3656, 0
        %v3689 = vsel %vm3669, %v3658, 0
        %v3692 = vsel %vm3669, %v3660, 0
        %v3695 = vsel %vm926, %v3578, 0
        %v3698 = vsel %vm926, %v3579, 0
        %v3701 = vsel %vm926, %v3580, 0
        %3703 = vmatpush.bf16.msra.mxu0 %v3554
        %3704 = vmatpush.bf16.msra.mxu0 %v3551
        %3705 = vmatpush.bf16.msra.mxu0 %v3548
        %3706 = vmatpush.bf16.msra.mxu0 %v3545
        %3707 = vmatpush.bf16.msra.mxu0 %v3542
        %3708 = vmatpush.bf16.msra.mxu0 %v3539
        %3709 = vmatpush.bf16.msra.mxu0 %v3536
        %3710 = vmatpush.bf16.msra.mxu0 %v3533
        %3711 = vmatmul.bf16.gmra.mxu0 %v3645
        %v3712 = vpop.f32.mrf.mxu0
        %v3713 = vadd.f32 0.0, %v3712
        %v3714 = vpop.f32.mrf.mxu0
        %v3715 = vadd.f32 0.0, %v3714
        %3716 = vmatmul.bf16.gmra.mxu0 %v3647
        %v3717 = vpop.f32.mrf.mxu0
        %v3718 = vadd.f32 0.0, %v3717
        %v3719 = vpop.f32.mrf.mxu0
        %v3720 = vadd.f32 0.0, %v3719
        %3721 = vmatmul.bf16.gmra.mxu0 %v3649
        %v3722 = vpop.f32.mrf.mxu0
        %v3723 = vadd.f32 0.0, %v3722
        %v3724 = vpop.f32.mrf.mxu0
        %v3725 = vadd.f32 0.0, %v3724
        %3726 = vmatmul.bf16.gmra.mxu0 %v3651
        %v3727 = vpop.f32.mrf.mxu0
        %v3728 = vadd.f32 0.0, %v3727
        %v3729 = vpop.f32.mrf.mxu0
        %v3730 = vadd.f32 0.0, %v3729
        %3731 = vmatmul.bf16.gmra.mxu0 %v3653
        %v3732 = vpop.f32.mrf.mxu0
        %v3733 = vadd.f32 0.0, %v3732
        %v3734 = vpop.f32.mrf.mxu0
        %v3735 = vadd.f32 0.0, %v3734
        %3736 = vmatmul.bf16.gmra.mxu0 %v3655
        %v3737 = vpop.f32.mrf.mxu0
        %v3738 = vadd.f32 0.0, %v3737
        %v3739 = vpop.f32.mrf.mxu0
        %v3740 = vadd.f32 0.0, %v3739
        %3741 = vmatmul.bf16.gmra.mxu0 %v3657
        %v3742 = vpop.f32.mrf.mxu0
        %v3743 = vadd.f32 0.0, %v3742
        %v3744 = vpop.f32.mrf.mxu0
        %v3745 = vadd.f32 0.0, %v3744
        %3746 = vmatmul.bf16.gmra.mxu0 %v3659
        %v3747 = vpop.f32.mrf.mxu0
        %v3748 = vadd.f32 0.0, %v3747
        %v3749 = vpop.f32.mrf.mxu0
        %v3750 = vadd.f32 0.0, %v3749
        %3751 = vdwg.mxu0
        %3752 = vmatpush.bf16.msra.mxu0 %v3695
        %3753 = vmatpush.bf16.msra.mxu0 %v3575
        %3754 = vmatpush.bf16.msra.mxu0 %v3572
        %3755 = vmatpush.bf16.msra.mxu0 %v3569
        %3756 = vmatpush.bf16.msra.mxu0 %v3566
        %3757 = vmatpush.bf16.msra.mxu0 %v3563
        %3758 = vmatpush.bf16.msra.mxu0 %v3560
        %3759 = vmatpush.bf16.msra.mxu0 %v3557
        %3760 = vmatmul.bf16.gmra.mxu0 %v3671
        %v3761 = vpop.f32.mrf.mxu0
        %v3762 = vadd.f32 %v3713, %v3761
        %v3763 = vpop.f32.mrf.mxu0
        %v3764 = vadd.f32 %v3715, %v3763
        %3765 = vmatmul.bf16.gmra.mxu0 %v3674
        %v3766 = vpop.f32.mrf.mxu0
        %v3767 = vadd.f32 %v3718, %v3766
        %v3768 = vpop.f32.mrf.mxu0
        %v3769 = vadd.f32 %v3720, %v3768
        %3770 = vmatmul.bf16.gmra.mxu0 %v3677
        %v3771 = vpop.f32.mrf.mxu0
        %v3772 = vadd.f32 %v3723, %v3771
        %v3773 = vpop.f32.mrf.mxu0
        %v3774 = vadd.f32 %v3725, %v3773
        %3775 = vmatmul.bf16.gmra.mxu0 %v3680
        %v3776 = vpop.f32.mrf.mxu0
        %v3777 = vadd.f32 %v3728, %v3776
        %v3778 = vpop.f32.mrf.mxu0
        %v3779 = vadd.f32 %v3730, %v3778
        %3780 = vmatmul.bf16.gmra.mxu0 %v3683
        %v3781 = vpop.f32.mrf.mxu0
        %v3782 = vadd.f32 %v3733, %v3781
        %v3783 = vpop.f32.mrf.mxu0
        %v3784 = vadd.f32 %v3735, %v3783
        %3785 = vmatmul.bf16.gmra.mxu0 %v3686
        %v3786 = vpop.f32.mrf.mxu0
        %v3787 = vadd.f32 %v3738, %v3786
        %v3788 = vpop.f32.mrf.mxu0
        %v3789 = vadd.f32 %v3740, %v3788
        %3790 = vmatmul.bf16.gmra.mxu0 %v3689
        %v3791 = vpop.f32.mrf.mxu0
        %v3792 = vadd.f32 %v3743, %v3791
        %v3793 = vpop.f32.mrf.mxu0
        %v3794 = vadd.f32 %v3745, %v3793
        %3795 = vmatmul.bf16.gmra.mxu0 %v3692
        %v3796 = vpop.f32.mrf.mxu0
        %v3797 = vadd.f32 %v3748, %v3796
        %v3798 = vpop.f32.mrf.mxu0
        %v3799 = vadd.f32 %v3750, %v3798
        %3800 = vdwg.mxu0
        %3801 = vmatpush.bf16.msra.mxu0 %v3555
        %3802 = vmatpush.bf16.msra.mxu0 %v3552
        %3803 = vmatpush.bf16.msra.mxu0 %v3549
        %3804 = vmatpush.bf16.msra.mxu0 %v3546
        %3805 = vmatpush.bf16.msra.mxu0 %v3543
        %3806 = vmatpush.bf16.msra.mxu0 %v3540
        %3807 = vmatpush.bf16.msra.mxu0 %v3537
        %3808 = vmatpush.bf16.msra.mxu0 %v3534
        %3809 = vmatmul.bf16.gmra.mxu0 %v3645
        %v3810 = vpop.f32.mrf.mxu0
        %v3811 = vadd.f32 0.0, %v3810
        %v3812 = vpop.f32.mrf.mxu0
        %v3813 = vadd.f32 0.0, %v3812
        %3814 = vmatmul.bf16.gmra.mxu0 %v3647
        %v3815 = vpop.f32.mrf.mxu0
        %v3816 = vadd.f32 0.0, %v3815
        %v3817 = vpop.f32.mrf.mxu0
        %v3818 = vadd.f32 0.0, %v3817
        %3819 = vmatmul.bf16.gmra.mxu0 %v3649
        %v3820 = vpop.f32.mrf.mxu0
        %v3821 = vadd.f32 0.0, %v3820
        %v3822 = vpop.f32.mrf.mxu0
        %v3823 = vadd.f32 0.0, %v3822
        %3824 = vmatmul.bf16.gmra.mxu0 %v3651
        %v3825 = vpop.f32.mrf.mxu0
        %v3826 = vadd.f32 0.0, %v3825
        %v3827 = vpop.f32.mrf.mxu0
        %v3828 = vadd.f32 0.0, %v3827
        %3829 = vmatmul.bf16.gmra.mxu0 %v3653
        %v3830 = vpop.f32.mrf.mxu0
        %v3831 = vadd.f32 0.0, %v3830
        %v3832 = vpop.f32.mrf.mxu0
        %v3833 = vadd.f32 0.0, %v3832
        %3834 = vmatmul.bf16.gmra.mxu0 %v3655
        %v3835 = vpop.f32.mrf.mxu0
        %v3836 = vadd.f32 0.0, %v3835
        %v3837 = vpop.f32.mrf.mxu0
        %v3838 = vadd.f32 0.0, %v3837
        %3839 = vmatmul.bf16.gmra.mxu0 %v3657
        %v3840 = vpop.f32.mrf.mxu0
        %v3841 = vadd.f32 0.0, %v3840
        %v3842 = vpop.f32.mrf.mxu0
        %v3843 = vadd.f32 0.0, %v3842
        %3844 = vmatmul.bf16.gmra.mxu0 %v3659
        %v3845 = vpop.f32.mrf.mxu0
        %v3846 = vadd.f32 0.0, %v3845
        %v3847 = vpop.f32.mrf.mxu0
        %v3848 = vadd.f32 0.0, %v3847
        %3849 = vdwg.mxu0
        %3850 = vmatpush.bf16.msra.mxu0 %v3698
        %3851 = vmatpush.bf16.msra.mxu0 %v3576
        %3852 = vmatpush.bf16.msra.mxu0 %v3573
        %3853 = vmatpush.bf16.msra.mxu0 %v3570
        %3854 = vmatpush.bf16.msra.mxu0 %v3567
        %3855 = vmatpush.bf16.msra.mxu0 %v3564
        %3856 = vmatpush.bf16.msra.mxu0 %v3561
        %3857 = vmatpush.bf16.msra.mxu0 %v3558
        %3858 = vmatmul.bf16.gmra.mxu0 %v3671
        %v3859 = vpop.f32.mrf.mxu0
        %v3860 = vadd.f32 %v3811, %v3859
        %v3861 = vpop.f32.mrf.mxu0
        %v3862 = vadd.f32 %v3813, %v3861
        %3863 = vmatmul.bf16.gmra.mxu0 %v3674
        %v3864 = vpop.f32.mrf.mxu0
        %v3865 = vadd.f32 %v3816, %v3864
        %v3866 = vpop.f32.mrf.mxu0
        %v3867 = vadd.f32 %v3818, %v3866
        %3868 = vmatmul.bf16.gmra.mxu0 %v3677
        %v3869 = vpop.f32.mrf.mxu0
        %v3870 = vadd.f32 %v3821, %v3869
        %v3871 = vpop.f32.mrf.mxu0
        %v3872 = vadd.f32 %v3823, %v3871
        %3873 = vmatmul.bf16.gmra.mxu0 %v3680
        %v3874 = vpop.f32.mrf.mxu0
        %v3875 = vadd.f32 %v3826, %v3874
        %v3876 = vpop.f32.mrf.mxu0
        %v3877 = vadd.f32 %v3828, %v3876
        %3878 = vmatmul.bf16.gmra.mxu0 %v3683
        %v3879 = vpop.f32.mrf.mxu0
        %v3880 = vadd.f32 %v3831, %v3879
        %v3881 = vpop.f32.mrf.mxu0
        %v3882 = vadd.f32 %v3833, %v3881
        %3883 = vmatmul.bf16.gmra.mxu0 %v3686
        %v3884 = vpop.f32.mrf.mxu0
        %v3885 = vadd.f32 %v3836, %v3884
        %v3886 = vpop.f32.mrf.mxu0
        %v3887 = vadd.f32 %v3838, %v3886
        %3888 = vmatmul.bf16.gmra.mxu0 %v3689
        %v3889 = vpop.f32.mrf.mxu0
        %v3890 = vadd.f32 %v3841, %v3889
        %v3891 = vpop.f32.mrf.mxu0
        %v3892 = vadd.f32 %v3843, %v3891
        %3893 = vmatmul.bf16.gmra.mxu0 %v3692
        %v3894 = vpop.f32.mrf.mxu0
        %v3895 = vadd.f32 %v3846, %v3894
        %v3896 = vpop.f32.mrf.mxu0
        %v3897 = vadd.f32 %v3848, %v3896
        %3898 = vdwg.mxu0
        %3899 = vmatpush.bf16.msra.mxu0 %v3556
        %3900 = vmatpush.bf16.msra.mxu0 %v3553
        %3901 = vmatpush.bf16.msra.mxu0 %v3550
        %3902 = vmatpush.bf16.msra.mxu0 %v3547
        %3903 = vmatpush.bf16.msra.mxu0 %v3544
        %3904 = vmatpush.bf16.msra.mxu0 %v3541
        %3905 = vmatpush.bf16.msra.mxu0 %v3538
        %3906 = vmatpush.bf16.msra.mxu0 %v3535
        %3907 = vmatmul.bf16.gmra.mxu0 %v3645
        %v3908 = vpop.f32.mrf.mxu0
        %v3909 = vadd.f32 0.0, %v3908
        %v3910 = vpop.f32.mrf.mxu0
        %v3911 = vadd.f32 0.0, %v3910
        %3912 = vmatmul.bf16.gmra.mxu0 %v3647
        %v3913 = vpop.f32.mrf.mxu0
        %v3914 = vadd.f32 0.0, %v3913
        %v3915 = vpop.f32.mrf.mxu0
        %v3916 = vadd.f32 0.0, %v3915
        %3917 = vmatmul.bf16.gmra.mxu0 %v3649
        %v3918 = vpop.f32.mrf.mxu0
        %v3919 = vadd.f32 0.0, %v3918
        %v3920 = vpop.f32.mrf.mxu0
        %v3921 = vadd.f32 0.0, %v3920
        %3922 = vmatmul.bf16.gmra.mxu0 %v3651
        %v3923 = vpop.f32.mrf.mxu0
        %v3924 = vadd.f32 0.0, %v3923
        %v3925 = vpop.f32.mrf.mxu0
        %v3926 = vadd.f32 0.0, %v3925
        %3927 = vmatmul.bf16.gmra.mxu0 %v3653
        %v3928 = vpop.f32.mrf.mxu0
        %v3929 = vadd.f32 0.0, %v3928
        %v3930 = vpop.f32.mrf.mxu0
        %v3931 = vadd.f32 0.0, %v3930
        %3932 = vmatmul.bf16.gmra.mxu0 %v3655
        %v3933 = vpop.f32.mrf.mxu0
        %v3934 = vadd.f32 0.0, %v3933
        %v3935 = vpop.f32.mrf.mxu0
        %v3936 = vadd.f32 0.0, %v3935
        %3937 = vmatmul.bf16.gmra.mxu0 %v3657
        %v3938 = vpop.f32.mrf.mxu0
        %v3939 = vadd.f32 0.0, %v3938
        %v3940 = vpop.f32.mrf.mxu0
        %v3941 = vadd.f32 0.0, %v3940
        %3942 = vmatmul.bf16.gmra.mxu0 %v3659
        %v3943 = vpop.f32.mrf.mxu0
        %v3944 = vadd.f32 0.0, %v3943
        %v3945 = vpop.f32.mrf.mxu0
        %v3946 = vadd.f32 0.0, %v3945
        %3947 = vdwg.mxu0
        %3948 = vmatpush.bf16.msra.mxu0 %v3701
        %3949 = vmatpush.bf16.msra.mxu0 %v3577
        %3950 = vmatpush.bf16.msra.mxu0 %v3574
        %3951 = vmatpush.bf16.msra.mxu0 %v3571
        %3952 = vmatpush.bf16.msra.mxu0 %v3568
        %3953 = vmatpush.bf16.msra.mxu0 %v3565
        %3954 = vmatpush.bf16.msra.mxu0 %v3562
        %3955 = vmatpush.bf16.msra.mxu0 %v3559
        %3956 = vmatmul.bf16.gmra.mxu0 %v3671
        %v3957 = vpop.f32.mrf.mxu0
        %v3958 = vadd.f32 %v3909, %v3957
        %v3959 = vpop.f32.mrf.mxu0
        %v3960 = vadd.f32 %v3911, %v3959
        %3961 = vmatmul.bf16.gmra.mxu0 %v3674
        %v3962 = vpop.f32.mrf.mxu0
        %v3963 = vadd.f32 %v3914, %v3962
        %v3964 = vpop.f32.mrf.mxu0
        %v3965 = vadd.f32 %v3916, %v3964
        %3966 = vmatmul.bf16.gmra.mxu0 %v3677
        %v3967 = vpop.f32.mrf.mxu0
        %v3968 = vadd.f32 %v3919, %v3967
        %v3969 = vpop.f32.mrf.mxu0
        %v3970 = vadd.f32 %v3921, %v3969
        %3971 = vmatmul.bf16.gmra.mxu0 %v3680
        %v3972 = vpop.f32.mrf.mxu0
        %v3973 = vadd.f32 %v3924, %v3972
        %v3974 = vpop.f32.mrf.mxu0
        %v3975 = vadd.f32 %v3926, %v3974
        %3976 = vmatmul.bf16.gmra.mxu0 %v3683
        %v3977 = vpop.f32.mrf.mxu0
        %v3978 = vadd.f32 %v3929, %v3977
        %v3979 = vpop.f32.mrf.mxu0
        %v3980 = vadd.f32 %v3931, %v3979
        %3981 = vmatmul.bf16.gmra.mxu0 %v3686
        %v3982 = vpop.f32.mrf.mxu0
        %v3983 = vadd.f32 %v3934, %v3982
        %v3984 = vpop.f32.mrf.mxu0
        %v3985 = vadd.f32 %v3936, %v3984
        %3986 = vmatmul.bf16.gmra.mxu0 %v3689
        %v3987 = vpop.f32.mrf.mxu0
        %v3988 = vadd.f32 %v3939, %v3987
        %v3989 = vpop.f32.mrf.mxu0
        %v3990 = vadd.f32 %v3941, %v3989
        %3991 = vmatmul.bf16.gmra.mxu0 %v3692
        %v3992 = vpop.f32.mrf.mxu0
        %v3993 = vadd.f32 %v3944, %v3992
        %v3994 = vpop.f32.mrf.mxu0
        %v3995 = vadd.f32 %v3946, %v3994
        %3996 = vdwg.mxu0
        %v3997 = vld [vmem:[%s4] sm:$0xff]
        %v3998 = vld [vmem:[%s4 + $0x8] sm:$0xff]
        %v3999 = vld [vmem:[%s4 + $0x10] sm:$0xff]
        %v4000 = vld [vmem:[%s4 + $0x18] sm:$0xff]
        %v4001 = vld [vmem:[%s4 + $0x20] sm:$0xff]
        %v4002 = vld [vmem:[%s4 + $0x28] sm:$0xff]
        %v4003 = vld [vmem:[%s4 + $0x30] sm:$0xff]
        %v4004 = vld [vmem:[%s4 + $0x38] sm:$0xff]
        %v4005 = vld [vmem:[%s4 + $0x40] sm:$0xff]
        %v4006 = vld [vmem:[%s4 + $0x48] sm:$0xff]
        %v4007 = vld [vmem:[%s4 + $0x50] sm:$0xff]
        %v4008 = vld [vmem:[%s4 + $0x58] sm:$0xff]
        %v4009 = vld [vmem:[%s4 + $0x60] sm:$0xff]
        %v4010 = vld [vmem:[%s4 + $0x68] sm:$0xff]
        %v4011 = vld [vmem:[%s4 + $0x70] sm:$0xff]
        %v4012 = vld [vmem:[%s4 + $0x78] sm:$0xff]
        %v4029 = vunpack.c.l.b16 %v3997
        %v4030 = vunpack.c.h.b16 %v3997
        %v4031 = vunpack.c.l.b16 %v3998
        %v4032 = vunpack.c.h.b16 %v3998
        %v4033 = vunpack.c.l.b16 %v3999
        %v4034 = vunpack.c.h.b16 %v3999
        %v4035 = vunpack.c.l.b16 %v4000
        %v4036 = vunpack.c.h.b16 %v4000
        %v4037 = vunpack.c.l.b16 %v4001
        %v4038 = vunpack.c.h.b16 %v4001
        %v4039 = vunpack.c.l.b16 %v4002
        %v4040 = vunpack.c.h.b16 %v4002
        %v4041 = vunpack.c.l.b16 %v4003
        %v4042 = vunpack.c.h.b16 %v4003
        %v4043 = vunpack.c.l.b16 %v4004
        %v4044 = vunpack.c.h.b16 %v4004
        %v4045 = vunpack.c.l.b16 %v4005
        %v4046 = vunpack.c.h.b16 %v4005
        %v4047 = vunpack.c.l.b16 %v4006
        %v4048 = vunpack.c.h.b16 %v4006
        %v4049 = vunpack.c.l.b16 %v4007
        %v4050 = vunpack.c.h.b16 %v4007
        %v4051 = vunpack.c.l.b16 %v4008
        %v4052 = vunpack.c.h.b16 %v4008
        %v4053 = vunpack.c.l.b16 %v4009
        %v4054 = vunpack.c.h.b16 %v4009
        %v4055 = vunpack.c.l.b16 %v4010
        %v4056 = vunpack.c.h.b16 %v4010
        %v4057 = vunpack.c.l.b16 %v4011
        %v4058 = vunpack.c.h.b16 %v4011
        %v4059 = vunpack.c.l.b16 %v4012
        %v4060 = vunpack.c.h.b16 %v4012
        %v4061 = vpack.c.b16 %v4031, %v4029
        %v4062 = vpack.c.b16 %v4032, %v4030
        %v4063 = vpack.c.b16 %v4035, %v4033
        %v4064 = vpack.c.b16 %v4036, %v4034
        %v4065 = vpack.c.b16 %v4039, %v4037
        %v4066 = vpack.c.b16 %v4040, %v4038
        %v4067 = vpack.c.b16 %v4043, %v4041
        %v4068 = vpack.c.b16 %v4044, %v4042
        %v4069 = vpack.c.b16 %v4047, %v4045
        %v4070 = vpack.c.b16 %v4048, %v4046
        %v4071 = vpack.c.b16 %v4051, %v4049
        %v4072 = vpack.c.b16 %v4052, %v4050
        %v4073 = vpack.c.b16 %v4055, %v4053
        %v4074 = vpack.c.b16 %v4056, %v4054
        %v4075 = vpack.c.b16 %v4059, %v4057
        %v4076 = vpack.c.b16 %v4060, %v4058
        %v4086 = vsel %vm3669, %v4062, 0
        %v4089 = vsel %vm3669, %v4064, 0
        %v4092 = vsel %vm3669, %v4066, 0
        %v4095 = vsel %vm3669, %v4068, 0
        %v4098 = vsel %vm3669, %v4070, 0
        %v4101 = vsel %vm3669, %v4072, 0
        %v4104 = vsel %vm3669, %v4074, 0
        %v4107 = vsel %vm3669, %v4076, 0
        %4109 = vmatpush.bf16.msra.mxu0 %v3554
        %4110 = vmatpush.bf16.msra.mxu0 %v3551
        %4111 = vmatpush.bf16.msra.mxu0 %v3548
        %4112 = vmatpush.bf16.msra.mxu0 %v3545
        %4113 = vmatpush.bf16.msra.mxu0 %v3542
        %4114 = vmatpush.bf16.msra.mxu0 %v3539
        %4115 = vmatpush.bf16.msra.mxu0 %v3536
        %4116 = vmatpush.bf16.msra.mxu0 %v3533
        %4117 = vmatmul.bf16.gmra.mxu0 %v4061
        %v4118 = vpop.f32.mrf.mxu0
        %v4119 = vadd.f32 0.0, %v4118
        %v4120 = vpop.f32.mrf.mxu0
        %v4121 = vadd.f32 0.0, %v4120
        %4122 = vmatmul.bf16.gmra.mxu0 %v4063
        %v4123 = vpop.f32.mrf.mxu0
        %v4124 = vadd.f32 0.0, %v4123
        %v4125 = vpop.f32.mrf.mxu0
        %v4126 = vadd.f32 0.0, %v4125
        %4127 = vmatmul.bf16.gmra.mxu0 %v4065
        %v4128 = vpop.f32.mrf.mxu0
        %v4129 = vadd.f32 0.0, %v4128
        %v4130 = vpop.f32.mrf.mxu0
        %v4131 = vadd.f32 0.0, %v4130
        %4132 = vmatmul.bf16.gmra.mxu0 %v4067
        %v4133 = vpop.f32.mrf.mxu0
        %v4134 = vadd.f32 0.0, %v4133
        %v4135 = vpop.f32.mrf.mxu0
        %v4136 = vadd.f32 0.0, %v4135
        %4137 = vmatmul.bf16.gmra.mxu0 %v4069
        %v4138 = vpop.f32.mrf.mxu0
        %v4139 = vadd.f32 0.0, %v4138
        %v4140 = vpop.f32.mrf.mxu0
        %v4141 = vadd.f32 0.0, %v4140
        %4142 = vmatmul.bf16.gmra.mxu0 %v4071
        %v4143 = vpop.f32.mrf.mxu0
        %v4144 = vadd.f32 0.0, %v4143
        %v4145 = vpop.f32.mrf.mxu0
        %v4146 = vadd.f32 0.0, %v4145
        %4147 = vmatmul.bf16.gmra.mxu0 %v4073
        %v4148 = vpop.f32.mrf.mxu0
        %v4149 = vadd.f32 0.0, %v4148
        %v4150 = vpop.f32.mrf.mxu0
        %v4151 = vadd.f32 0.0, %v4150
        %4152 = vmatmul.bf16.gmra.mxu0 %v4075
        %v4153 = vpop.f32.mrf.mxu0
        %v4154 = vadd.f32 0.0, %v4153
        %v4155 = vpop.f32.mrf.mxu0
        %v4156 = vadd.f32 0.0, %v4155
        %4157 = vdwg.mxu0
        %4158 = vmatpush.bf16.msra.mxu0 %v3695
        %4159 = vmatpush.bf16.msra.mxu0 %v3575
        %4160 = vmatpush.bf16.msra.mxu0 %v3572
        %4161 = vmatpush.bf16.msra.mxu0 %v3569
        %4162 = vmatpush.bf16.msra.mxu0 %v3566
        %4163 = vmatpush.bf16.msra.mxu0 %v3563
        %4164 = vmatpush.bf16.msra.mxu0 %v3560
        %4165 = vmatpush.bf16.msra.mxu0 %v3557
        %4166 = vmatmul.bf16.gmra.mxu0 %v4086
        %v4167 = vpop.f32.mrf.mxu0
        %v4168 = vadd.f32 %v4119, %v4167
        %v4169 = vpop.f32.mrf.mxu0
        %v4170 = vadd.f32 %v4121, %v4169
        %4171 = vmatmul.bf16.gmra.mxu0 %v4089
        %v4172 = vpop.f32.mrf.mxu0
        %v4173 = vadd.f32 %v4124, %v4172
        %v4174 = vpop.f32.mrf.mxu0
        %v4175 = vadd.f32 %v4126, %v4174
        %4176 = vmatmul.bf16.gmra.mxu0 %v4092
        %v4177 = vpop.f32.mrf.mxu0
        %v4178 = vadd.f32 %v4129, %v4177
        %v4179 = vpop.f32.mrf.mxu0
        %v4180 = vadd.f32 %v4131, %v4179
        %4181 = vmatmul.bf16.gmra.mxu0 %v4095
        %v4182 = vpop.f32.mrf.mxu0
        %v4183 = vadd.f32 %v4134, %v4182
        %v4184 = vpop.f32.mrf.mxu0
        %v4185 = vadd.f32 %v4136, %v4184
        %4186 = vmatmul.bf16.gmra.mxu0 %v4098
        %v4187 = vpop.f32.mrf.mxu0
        %v4188 = vadd.f32 %v4139, %v4187
        %v4189 = vpop.f32.mrf.mxu0
        %v4190 = vadd.f32 %v4141, %v4189
        %4191 = vmatmul.bf16.gmra.mxu0 %v4101
        %v4192 = vpop.f32.mrf.mxu0
        %v4193 = vadd.f32 %v4144, %v4192
        %v4194 = vpop.f32.mrf.mxu0
        %v4195 = vadd.f32 %v4146, %v4194
        %4196 = vmatmul.bf16.gmra.mxu0 %v4104
        %v4197 = vpop.f32.mrf.mxu0
        %v4198 = vadd.f32 %v4149, %v4197
        %v4199 = vpop.f32.mrf.mxu0
        %v4200 = vadd.f32 %v4151, %v4199
        %4201 = vmatmul.bf16.gmra.mxu0 %v4107
        %v4202 = vpop.f32.mrf.mxu0
        %v4203 = vadd.f32 %v4154, %v4202
        %v4204 = vpop.f32.mrf.mxu0
        %v4205 = vadd.f32 %v4156, %v4204
        %4206 = vdwg.mxu0
        %4207 = vmatpush.bf16.msra.mxu0 %v3555
        %4208 = vmatpush.bf16.msra.mxu0 %v3552
        %4209 = vmatpush.bf16.msra.mxu0 %v3549
        %4210 = vmatpush.bf16.msra.mxu0 %v3546
        %4211 = vmatpush.bf16.msra.mxu0 %v3543
        %4212 = vmatpush.bf16.msra.mxu0 %v3540
        %4213 = vmatpush.bf16.msra.mxu0 %v3537
        %4214 = vmatpush.bf16.msra.mxu0 %v3534
        %4215 = vmatmul.bf16.gmra.mxu0 %v4061
        %v4216 = vpop.f32.mrf.mxu0
        %v4217 = vadd.f32 0.0, %v4216
        %v4218 = vpop.f32.mrf.mxu0
        %v4219 = vadd.f32 0.0, %v4218
        %4220 = vmatmul.bf16.gmra.mxu0 %v4063
        %v4221 = vpop.f32.mrf.mxu0
        %v4222 = vadd.f32 0.0, %v4221
        %v4223 = vpop.f32.mrf.mxu0
        %v4224 = vadd.f32 0.0, %v4223
        %4225 = vmatmul.bf16.gmra.mxu0 %v4065
        %v4226 = vpop.f32.mrf.mxu0
        %v4227 = vadd.f32 0.0, %v4226
        %v4228 = vpop.f32.mrf.mxu0
        %v4229 = vadd.f32 0.0, %v4228
        %4230 = vmatmul.bf16.gmra.mxu0 %v4067
        %v4231 = vpop.f32.mrf.mxu0
        %v4232 = vadd.f32 0.0, %v4231
        %v4233 = vpop.f32.mrf.mxu0
        %v4234 = vadd.f32 0.0, %v4233
        %4235 = vmatmul.bf16.gmra.mxu0 %v4069
        %v4236 = vpop.f32.mrf.mxu0
        %v4237 = vadd.f32 0.0, %v4236
        %v4238 = vpop.f32.mrf.mxu0
        %v4239 = vadd.f32 0.0, %v4238
        %4240 = vmatmul.bf16.gmra.mxu0 %v4071
        %v4241 = vpop.f32.mrf.mxu0
        %v4242 = vadd.f32 0.0, %v4241
        %v4243 = vpop.f32.mrf.mxu0
        %v4244 = vadd.f32 0.0, %v4243
        %4245 = vmatmul.bf16.gmra.mxu0 %v4073
        %v4246 = vpop.f32.mrf.mxu0
        %v4247 = vadd.f32 0.0, %v4246
        %v4248 = vpop.f32.mrf.mxu0
        %v4249 = vadd.f32 0.0, %v4248
        %4250 = vmatmul.bf16.gmra.mxu0 %v4075
        %v4251 = vpop.f32.mrf.mxu0
        %v4252 = vadd.f32 0.0, %v4251
        %v4253 = vpop.f32.mrf.mxu0
        %v4254 = vadd.f32 0.0, %v4253
        %4255 = vdwg.mxu0
        %4256 = vmatpush.bf16.msra.mxu0 %v3698
        %4257 = vmatpush.bf16.msra.mxu0 %v3576
        %4258 = vmatpush.bf16.msra.mxu0 %v3573
        %4259 = vmatpush.bf16.msra.mxu0 %v3570
        %4260 = vmatpush.bf16.msra.mxu0 %v3567
        %4261 = vmatpush.bf16.msra.mxu0 %v3564
        %4262 = vmatpush.bf16.msra.mxu0 %v3561
        %4263 = vmatpush.bf16.msra.mxu0 %v3558
        %4264 = vmatmul.bf16.gmra.mxu0 %v4086
        %v4265 = vpop.f32.mrf.mxu0
        %v4266 = vadd.f32 %v4217, %v4265
        %v4267 = vpop.f32.mrf.mxu0
        %v4268 = vadd.f32 %v4219, %v4267
        %4269 = vmatmul.bf16.gmra.mxu0 %v4089
        %v4270 = vpop.f32.mrf.mxu0
        %v4271 = vadd.f32 %v4222, %v4270
        %v4272 = vpop.f32.mrf.mxu0
        %v4273 = vadd.f32 %v4224, %v4272
        %4274 = vmatmul.bf16.gmra.mxu0 %v4092
        %v4275 = vpop.f32.mrf.mxu0
        %v4276 = vadd.f32 %v4227, %v4275
        %v4277 = vpop.f32.mrf.mxu0
        %v4278 = vadd.f32 %v4229, %v4277
        %4279 = vmatmul.bf16.gmra.mxu0 %v4095
        %v4280 = vpop.f32.mrf.mxu0
        %v4281 = vadd.f32 %v4232, %v4280
        %v4282 = vpop.f32.mrf.mxu0
        %v4283 = vadd.f32 %v4234, %v4282
        %4284 = vmatmul.bf16.gmra.mxu0 %v4098
        %v4285 = vpop.f32.mrf.mxu0
        %v4286 = vadd.f32 %v4237, %v4285
        %v4287 = vpop.f32.mrf.mxu0
        %v4288 = vadd.f32 %v4239, %v4287
        %4289 = vmatmul.bf16.gmra.mxu0 %v4101
        %v4290 = vpop.f32.mrf.mxu0
        %v4291 = vadd.f32 %v4242, %v4290
        %v4292 = vpop.f32.mrf.mxu0
        %v4293 = vadd.f32 %v4244, %v4292
        %4294 = vmatmul.bf16.gmra.mxu0 %v4104
        %v4295 = vpop.f32.mrf.mxu0
        %v4296 = vadd.f32 %v4247, %v4295
        %v4297 = vpop.f32.mrf.mxu0
        %v4298 = vadd.f32 %v4249, %v4297
        %4299 = vmatmul.bf16.gmra.mxu0 %v4107
        %v4300 = vpop.f32.mrf.mxu0
        %v4301 = vadd.f32 %v4252, %v4300
        %v4302 = vpop.f32.mrf.mxu0
        %v4303 = vadd.f32 %v4254, %v4302
        %4304 = vdwg.mxu0
        %4305 = vmatpush.bf16.msra.mxu0 %v3556
        %4306 = vmatpush.bf16.msra.mxu0 %v3553
        %4307 = vmatpush.bf16.msra.mxu0 %v3550
        %4308 = vmatpush.bf16.msra.mxu0 %v3547
        %4309 = vmatpush.bf16.msra.mxu0 %v3544
        %4310 = vmatpush.bf16.msra.mxu0 %v3541
        %4311 = vmatpush.bf16.msra.mxu0 %v3538
        %4312 = vmatpush.bf16.msra.mxu0 %v3535
        %4313 = vmatmul.bf16.gmra.mxu0 %v4061
        %v4314 = vpop.f32.mrf.mxu0
        %v4315 = vadd.f32 0.0, %v4314
        %v4316 = vpop.f32.mrf.mxu0
        %v4317 = vadd.f32 0.0, %v4316
        %4318 = vmatmul.bf16.gmra.mxu0 %v4063
        %v4319 = vpop.f32.mrf.mxu0
        %v4320 = vadd.f32 0.0, %v4319
        %v4321 = vpop.f32.mrf.mxu0
        %v4322 = vadd.f32 0.0, %v4321
        %4323 = vmatmul.bf16.gmra.mxu0 %v4065
        %v4324 = vpop.f32.mrf.mxu0
        %v4325 = vadd.f32 0.0, %v4324
        %v4326 = vpop.f32.mrf.mxu0
        %v4327 = vadd.f32 0.0, %v4326
        %4328 = vmatmul.bf16.gmra.mxu0 %v4067
        %v4329 = vpop.f32.mrf.mxu0
        %v4330 = vadd.f32 0.0, %v4329
        %v4331 = vpop.f32.mrf.mxu0
        %v4332 = vadd.f32 0.0, %v4331
        %4333 = vmatmul.bf16.gmra.mxu0 %v4069
        %v4334 = vpop.f32.mrf.mxu0
        %v4335 = vadd.f32 0.0, %v4334
        %v4336 = vpop.f32.mrf.mxu0
        %v4337 = vadd.f32 0.0, %v4336
        %4338 = vmatmul.bf16.gmra.mxu0 %v4071
        %v4339 = vpop.f32.mrf.mxu0
        %v4340 = vadd.f32 0.0, %v4339
        %v4341 = vpop.f32.mrf.mxu0
        %v4342 = vadd.f32 0.0, %v4341
        %4343 = vmatmul.bf16.gmra.mxu0 %v4073
        %v4344 = vpop.f32.mrf.mxu0
        %v4345 = vadd.f32 0.0, %v4344
        %v4346 = vpop.f32.mrf.mxu0
        %v4347 = vadd.f32 0.0, %v4346
        %4348 = vmatmul.bf16.gmra.mxu0 %v4075
        %v4349 = vpop.f32.mrf.mxu0
        %v4350 = vadd.f32 0.0, %v4349
        %v4351 = vpop.f32.mrf.mxu0
        %v4352 = vadd.f32 0.0, %v4351
        %4353 = vdwg.mxu0
        %4354 = vmatpush.bf16.msra.mxu0 %v3701
        %4355 = vmatpush.bf16.msra.mxu0 %v3577
        %4356 = vmatpush.bf16.msra.mxu0 %v3574
        %4357 = vmatpush.bf16.msra.mxu0 %v3571
        %4358 = vmatpush.bf16.msra.mxu0 %v3568
        %4359 = vmatpush.bf16.msra.mxu0 %v3565
        %4360 = vmatpush.bf16.msra.mxu0 %v3562
        %4361 = vmatpush.bf16.msra.mxu0 %v3559
        %4362 = vmatmul.bf16.gmra.mxu0 %v4086
        %v4363 = vpop.f32.mrf.mxu0
        %v4364 = vadd.f32 %v4315, %v4363
        %v4365 = vpop.f32.mrf.mxu0
        %v4366 = vadd.f32 %v4317, %v4365
        %4367 = vmatmul.bf16.gmra.mxu0 %v4089
        %v4368 = vpop.f32.mrf.mxu0
        %v4369 = vadd.f32 %v4320, %v4368
        %v4370 = vpop.f32.mrf.mxu0
        %v4371 = vadd.f32 %v4322, %v4370
        %4372 = vmatmul.bf16.gmra.mxu0 %v4092
        %v4373 = vpop.f32.mrf.mxu0
        %v4374 = vadd.f32 %v4325, %v4373
        %v4375 = vpop.f32.mrf.mxu0
        %v4376 = vadd.f32 %v4327, %v4375
        %4377 = vmatmul.bf16.gmra.mxu0 %v4095
        %v4378 = vpop.f32.mrf.mxu0
        %v4379 = vadd.f32 %v4330, %v4378
        %v4380 = vpop.f32.mrf.mxu0
        %v4381 = vadd.f32 %v4332, %v4380
        %4382 = vmatmul.bf16.gmra.mxu0 %v4098
        %v4383 = vpop.f32.mrf.mxu0
        %v4384 = vadd.f32 %v4335, %v4383
        %v4385 = vpop.f32.mrf.mxu0
        %v4386 = vadd.f32 %v4337, %v4385
        %4387 = vmatmul.bf16.gmra.mxu0 %v4101
        %v4388 = vpop.f32.mrf.mxu0
        %v4389 = vadd.f32 %v4340, %v4388
        %v4390 = vpop.f32.mrf.mxu0
        %v4391 = vadd.f32 %v4342, %v4390
        %4392 = vmatmul.bf16.gmra.mxu0 %v4104
        %v4393 = vpop.f32.mrf.mxu0
        %v4394 = vadd.f32 %v4345, %v4393
        %v4395 = vpop.f32.mrf.mxu0
        %v4396 = vadd.f32 %v4347, %v4395
        %4397 = vmatmul.bf16.gmra.mxu0 %v4107
        %v4398 = vpop.f32.mrf.mxu0
        %v4399 = vadd.f32 %v4350, %v4398
        %v4400 = vpop.f32.mrf.mxu0
        %v4401 = vadd.f32 %v4352, %v4400
        %4402 = vdwg.mxu0
        %v4403 = vmax.f32 %v3762, %v4168
        %v4404 = vmax.f32 %v3860, %v4266
        %v4405 = vmax.f32 %v3958, %v4364
        %v4406 = vmax.f32 %v3764, %v4170
        %v4407 = vmax.f32 %v3862, %v4268
        %v4408 = vmax.f32 %v3960, %v4366
        %v4409 = vmax.f32 %v3767, %v4173
        %v4410 = vmax.f32 %v3865, %v4271
        %v4411 = vmax.f32 %v3963, %v4369
        %v4412 = vmax.f32 %v3769, %v4175
        %v4413 = vmax.f32 %v3867, %v4273
        %v4414 = vmax.f32 %v3965, %v4371
        %v4415 = vmax.f32 %v3772, %v4178
        %v4416 = vmax.f32 %v3870, %v4276
        %v4417 = vmax.f32 %v3968, %v4374
        %v4418 = vmax.f32 %v3774, %v4180
        %v4419 = vmax.f32 %v3872, %v4278
        %v4420 = vmax.f32 %v3970, %v4376
        %v4421 = vmax.f32 %v3777, %v4183
        %v4422 = vmax.f32 %v3875, %v4281
        %v4423 = vmax.f32 %v3973, %v4379
        %v4424 = vmax.f32 %v3779, %v4185
        %v4425 = vmax.f32 %v3877, %v4283
        %v4426 = vmax.f32 %v3975, %v4381
        %v4427 = vmax.f32 %v3782, %v4188
        %v4428 = vmax.f32 %v3880, %v4286
        %v4429 = vmax.f32 %v3978, %v4384
        %v4430 = vmax.f32 %v3784, %v4190
        %v4431 = vmax.f32 %v3882, %v4288
        %v4432 = vmax.f32 %v3980, %v4386
        %v4433 = vmax.f32 %v3787, %v4193
        %v4434 = vmax.f32 %v3885, %v4291
        %v4435 = vmax.f32 %v3983, %v4389
        %v4436 = vmax.f32 %v3789, %v4195
        %v4437 = vmax.f32 %v3887, %v4293
        %v4438 = vmax.f32 %v3985, %v4391
        %v4439 = vmax.f32 %v3792, %v4198
        %v4440 = vmax.f32 %v3890, %v4296
        %v4441 = vmax.f32 %v3988, %v4394
        %v4442 = vmax.f32 %v3794, %v4200
        %v4443 = vmax.f32 %v3892, %v4298
        %v4444 = vmax.f32 %v3990, %v4396
        %v4445 = vmax.f32 %v3797, %v4203
        %v4446 = vmax.f32 %v3895, %v4301
        %v4447 = vmax.f32 %v3993, %v4399
        %v4448 = vmax.f32 %v3799, %v4205
        %v4449 = vmax.f32 %v3897, %v4303
        %v4450 = vmax.f32 %v3995, %v4401
        %v4451 = vpack.c.bf16 %v4406, %v4403
        %v4452 = vpack.c.bf16 %v4407, %v4404
        %v4453 = vpack.c.bf16 %v4408, %v4405
        %v4454 = vpack.c.bf16 %v4412, %v4409
        %v4455 = vpack.c.bf16 %v4413, %v4410
        %v4456 = vpack.c.bf16 %v4414, %v4411
        %v4457 = vpack.c.bf16 %v4418, %v4415
        %v4458 = vpack.c.bf16 %v4419, %v4416
        %v4459 = vpack.c.bf16 %v4420, %v4417
        %v4460 = vpack.c.bf16 %v4424, %v4421
        %v4461 = vpack.c.bf16 %v4425, %v4422
        %v4462 = vpack.c.bf16 %v4426, %v4423
        %v4463 = vpack.c.bf16 %v4430, %v4427
        %v4464 = vpack.c.bf16 %v4431, %v4428
        %v4465 = vpack.c.bf16 %v4432, %v4429
        %v4466 = vpack.c.bf16 %v4436, %v4433
        %v4467 = vpack.c.bf16 %v4437, %v4434
        %v4468 = vpack.c.bf16 %v4438, %v4435
        %v4469 = vpack.c.bf16 %v4442, %v4439
        %v4470 = vpack.c.bf16 %v4443, %v4440
        %v4471 = vpack.c.bf16 %v4444, %v4441
        %v4472 = vpack.c.bf16 %v4448, %v4445
        %v4473 = vpack.c.bf16 %v4449, %v4446
        %v4474 = vpack.c.bf16 %v4450, %v4447
        %v4475 = vld [vmem:[%s5] sm:$0xff]
        %v4476 = vld [vmem:[%s5 + $0x8] sm:$0xff]
        %v4477 = vld [vmem:[%s5 + $0x10] sm:$0xff]
        %v4478 = vld [vmem:[%s5 + $0x18] sm:$0xff]
        %v4479 = vld [vmem:[%s5 + $0x20] sm:$0xff]
        %v4480 = vld [vmem:[%s5 + $0x28] sm:$0xff]
        %v4481 = vld [vmem:[%s5 + $0x30] sm:$0xff]
        %v4482 = vld [vmem:[%s5 + $0x38] sm:$0xff]
        %v4483 = vld [vmem:[%s5 + $0x40] sm:$0xff]
        %v4484 = vld [vmem:[%s5 + $0x48] sm:$0xff]
        %v4485 = vld [vmem:[%s5 + $0x50] sm:$0xff]
        %v4486 = vld [vmem:[%s5 + $0x58] sm:$0xff]
        %v4487 = vld [vmem:[%s5 + $0x60] sm:$0xff]
        %v4488 = vld [vmem:[%s5 + $0x68] sm:$0xff]
        %v4489 = vld [vmem:[%s5 + $0x70] sm:$0xff]
        %v4490 = vld [vmem:[%s5 + $0x78] sm:$0xff]
        %v4491 = vld [vmem:[%s5 + $0x80] sm:$0xff]
        %v4492 = vld [vmem:[%s5 + $0x88] sm:$0xff]
        %v4493 = vld [vmem:[%s5 + $0x90] sm:$0xff]
        %v4494 = vld [vmem:[%s5 + $0x98] sm:$0xff]
        %v4495 = vld [vmem:[%s5 + $0xa0] sm:$0xff]
        %v4496 = vld [vmem:[%s5 + $0xa8] sm:$0xff]
        %v4497 = vld [vmem:[%s5 + $0xb0] sm:$0xff]
        %v4498 = vld [vmem:[%s5 + $0xb8] sm:$0xff]
        %v4499 = vld [vmem:[%s5 + $0xc0] sm:$0xff]
        %v4500 = vld [vmem:[%s5 + $0xc8] sm:$0xff]
        %v4501 = vld [vmem:[%s5 + $0xd0] sm:$0xff]
        %v4502 = vld [vmem:[%s5 + $0xd8] sm:$0xff]
        %v4503 = vld [vmem:[%s5 + $0xe0] sm:$0xff]
        %v4504 = vld [vmem:[%s5 + $0xe8] sm:$0xff]
        %v4505 = vld [vmem:[%s5 + $0xf0] sm:$0xff]
        %v4506 = vld [vmem:[%s5 + $0xf8] sm:$0xff]
        %v4507 = vld [vmem:[%s5 + $0x100] sm:$0xff]
        %v4508 = vld [vmem:[%s5 + $0x108] sm:$0xff]
        %v4509 = vld [vmem:[%s5 + $0x110] sm:$0xff]
        %v4545 = vunpack.c.l.b16 %v4475
        %v4546 = vunpack.c.h.b16 %v4475
        %v4547 = vunpack.c.l.b16 %v4476
        %v4548 = vunpack.c.h.b16 %v4476
        %v4549 = vunpack.c.l.b16 %v4477
        %v4550 = vunpack.c.h.b16 %v4477
        %v4551 = vunpack.c.l.b16 %v4478
        %v4552 = vunpack.c.h.b16 %v4478
        %v4553 = vunpack.c.l.b16 %v4479
        %v4554 = vunpack.c.h.b16 %v4479
        %v4555 = vunpack.c.l.b16 %v4480
        %v4556 = vunpack.c.h.b16 %v4480
        %v4557 = vunpack.c.l.b16 %v4481
        %v4558 = vunpack.c.h.b16 %v4481
        %v4559 = vunpack.c.l.b16 %v4482
        %v4560 = vunpack.c.h.b16 %v4482
        %v4561 = vunpack.c.l.b16 %v4483
        %v4562 = vunpack.c.h.b16 %v4483
        %v4563 = vunpack.c.l.b16 %v4484
        %v4564 = vunpack.c.h.b16 %v4484
        %v4565 = vunpack.c.l.b16 %v4485
        %v4566 = vunpack.c.h.b16 %v4485
        %v4567 = vunpack.c.l.b16 %v4486
        %v4568 = vunpack.c.h.b16 %v4486
        %v4569 = vunpack.c.l.b16 %v4487
        %v4570 = vunpack.c.h.b16 %v4487
        %v4571 = vunpack.c.l.b16 %v4488
        %v4572 = vunpack.c.h.b16 %v4488
        %v4573 = vunpack.c.l.b16 %v4489
        %v4574 = vunpack.c.h.b16 %v4489
        %v4575 = vunpack.c.l.b16 %v4490
        %v4576 = vunpack.c.h.b16 %v4490
        %v4577 = vunpack.c.l.b16 %v4491
        %v4578 = vunpack.c.h.b16 %v4491
        %v4579 = vunpack.c.l.b16 %v4492
        %v4580 = vunpack.c.h.b16 %v4492
        %v4581 = vunpack.c.l.b16 %v4493
        %v4582 = vunpack.c.h.b16 %v4493
        %v4583 = vunpack.c.l.b16 %v4494
        %v4584 = vunpack.c.h.b16 %v4494
        %v4585 = vunpack.c.l.b16 %v4495
        %v4586 = vunpack.c.h.b16 %v4495
        %v4587 = vunpack.c.l.b16 %v4496
        %v4588 = vunpack.c.h.b16 %v4496
        %v4589 = vunpack.c.l.b16 %v4497
        %v4590 = vunpack.c.h.b16 %v4497
        %v4591 = vunpack.c.l.b16 %v4498
        %v4592 = vunpack.c.h.b16 %v4498
        %v4593 = vunpack.c.l.b16 %v4499
        %v4594 = vunpack.c.h.b16 %v4499
        %v4595 = vunpack.c.l.b16 %v4500
        %v4596 = vunpack.c.h.b16 %v4500
        %v4597 = vunpack.c.l.b16 %v4501
        %v4598 = vunpack.c.h.b16 %v4501
        %v4599 = vunpack.c.l.b16 %v4502
        %v4600 = vunpack.c.h.b16 %v4502
        %v4601 = vunpack.c.l.b16 %v4503
        %v4602 = vunpack.c.h.b16 %v4503
        %v4603 = vunpack.c.l.b16 %v4504
        %v4604 = vunpack.c.h.b16 %v4504
        %v4605 = vunpack.c.l.b16 %v4505
        %v4606 = vunpack.c.h.b16 %v4505
        %v4607 = vunpack.c.l.b16 %v4506
        %v4608 = vunpack.c.h.b16 %v4506
        %v4609 = vunpack.c.l.b16 %v4507
        %v4610 = vunpack.c.h.b16 %v4507
        %v4611 = vunpack.c.l.b16 %v4508
        %v4612 = vunpack.c.h.b16 %v4508
        %v4613 = vunpack.c.l.b16 %v4509
        %v4614 = vunpack.c.h.b16 %v4509
        %v4615 = vpack.c.b16 %v4547, %v4545
        %v4616 = vpack.c.b16 %v4548, %v4546
        %v4617 = vpack.c.b16 %v4551, %v4549
        %v4618 = vpack.c.b16 %v4552, %v4550
        %v4619 = vpack.c.b16 %v4555, %v4553
        %v4620 = vpack.c.b16 %v4556, %v4554
        %v4621 = vpack.c.b16 %v4559, %v4557
        %v4622 = vpack.c.b16 %v4560, %v4558
        %v4623 = vpack.c.b16 %v4563, %v4561
        %v4624 = vpack.c.b16 %v4564, %v4562
        %v4625 = vpack.c.b16 %v4567, %v4565
        %v4626 = vpack.c.b16 %v4568, %v4566
        %v4627 = vpack.c.b16 %v4571, %v4569
        %v4628 = vpack.c.b16 %v4572, %v4570
        %v4629 = vpack.c.b16 %v4575, %v4573
        %v4630 = vpack.c.b16 %v4576, %v4574
        %v4631 = vpack.c.b16 %v4579, %v4577
        %v4632 = vpack.c.b16 %v4580, %v4578
        %v4633 = vpack.c.b16 %v4583, %v4581
        %v4634 = vpack.c.b16 %v4584, %v4582
        %v4635 = vpack.c.b16 %v4587, %v4585
        %v4636 = vpack.c.b16 %v4588, %v4586
        %v4637 = vpack.c.b16 %v4591, %v4589
        %v4638 = vpack.c.b16 %v4592, %v4590
        %v4639 = vpack.c.b16 %v4595, %v4593
        %v4640 = vpack.c.b16 %v4596, %v4594
        %v4641 = vpack.c.b16 %v4599, %v4597
        %v4642 = vpack.c.b16 %v4600, %v4598
        %v4643 = vpack.c.b16 %v4603, %v4601
        %v4644 = vpack.c.b16 %v4604, %v4602
        %v4645 = vpack.c.b16 %v4607, %v4605
        %v4646 = vpack.c.b16 %v4608, %v4606
        %v4647 = vpack.c.b16 %v4611, %v4609
        %v4648 = vpack.c.b16 %v4612, %v4610
        %v4649 = vpack.c.b16 %v4613, %v4613
        %v4650 = vpack.c.b16 %v4614, %v4614
        %vm4685 = vcmask 195584
        %v4687 = vsel %vm4685, %v4453, 0
        %v4690 = vsel %vm4685, %v4456, 0
        %v4693 = vsel %vm4685, %v4459, 0
        %v4696 = vsel %vm4685, %v4462, 0
        %v4699 = vsel %vm4685, %v4465, 0
        %v4702 = vsel %vm4685, %v4468, 0
        %v4705 = vsel %vm4685, %v4471, 0
        %v4708 = vsel %vm4685, %v4474, 0
        %v4711 = vsel %vm1118, %v4649, 0
        %v4714 = vsel %vm1118, %v4650, 0
        %4716 = vmatpush.bf16.msra.mxu0 %v4629
        %4717 = vmatpush.bf16.msra.mxu0 %v4627
        %4718 = vmatpush.bf16.msra.mxu0 %v4625
        %4719 = vmatpush.bf16.msra.mxu0 %v4623
        %4720 = vmatpush.bf16.msra.mxu0 %v4621
        %4721 = vmatpush.bf16.msra.mxu0 %v4619
        %4722 = vmatpush.bf16.msra.mxu0 %v4617
        %4723 = vmatpush.bf16.msra.mxu0 %v4615
        %4724 = vmatmul.bf16.gmra.mxu0 %v4451
        %v4725 = vpop.f32.mrf.mxu0
        %v4726 = vadd.f32 0.0, %v4725
        %v4727 = vpop.f32.mrf.mxu0
        %v4728 = vadd.f32 0.0, %v4727
        %4729 = vmatmul.bf16.gmra.mxu0 %v4454
        %v4730 = vpop.f32.mrf.mxu0
        %v4731 = vadd.f32 0.0, %v4730
        %v4732 = vpop.f32.mrf.mxu0
        %v4733 = vadd.f32 0.0, %v4732
        %4734 = vmatmul.bf16.gmra.mxu0 %v4457
        %v4735 = vpop.f32.mrf.mxu0
        %v4736 = vadd.f32 0.0, %v4735
        %v4737 = vpop.f32.mrf.mxu0
        %v4738 = vadd.f32 0.0, %v4737
        %4739 = vmatmul.bf16.gmra.mxu0 %v4460
        %v4740 = vpop.f32.mrf.mxu0
        %v4741 = vadd.f32 0.0, %v4740
        %v4742 = vpop.f32.mrf.mxu0
        %v4743 = vadd.f32 0.0, %v4742
        %4744 = vmatmul.bf16.gmra.mxu0 %v4463
        %v4745 = vpop.f32.mrf.mxu0
        %v4746 = vadd.f32 0.0, %v4745
        %v4747 = vpop.f32.mrf.mxu0
        %v4748 = vadd.f32 0.0, %v4747
        %4749 = vmatmul.bf16.gmra.mxu0 %v4466
        %v4750 = vpop.f32.mrf.mxu0
        %v4751 = vadd.f32 0.0, %v4750
        %v4752 = vpop.f32.mrf.mxu0
        %v4753 = vadd.f32 0.0, %v4752
        %4754 = vmatmul.bf16.gmra.mxu0 %v4469
        %v4755 = vpop.f32.mrf.mxu0
        %v4756 = vadd.f32 0.0, %v4755
        %v4757 = vpop.f32.mrf.mxu0
        %v4758 = vadd.f32 0.0, %v4757
        %4759 = vmatmul.bf16.gmra.mxu0 %v4472
        %v4760 = vpop.f32.mrf.mxu0
        %v4761 = vadd.f32 0.0, %v4760
        %v4762 = vpop.f32.mrf.mxu0
        %v4763 = vadd.f32 0.0, %v4762
        %4764 = vdwg.mxu0
        %4765 = vmatpush.bf16.msra.mxu0 %v4645
        %4766 = vmatpush.bf16.msra.mxu0 %v4643
        %4767 = vmatpush.bf16.msra.mxu0 %v4641
        %4768 = vmatpush.bf16.msra.mxu0 %v4639
        %4769 = vmatpush.bf16.msra.mxu0 %v4637
        %4770 = vmatpush.bf16.msra.mxu0 %v4635
        %4771 = vmatpush.bf16.msra.mxu0 %v4633
        %4772 = vmatpush.bf16.msra.mxu0 %v4631
        %4773 = vmatmul.bf16.gmra.mxu0 %v4452
        %v4774 = vpop.f32.mrf.mxu0
        %v4775 = vadd.f32 %v4726, %v4774
        %v4776 = vpop.f32.mrf.mxu0
        %v4777 = vadd.f32 %v4728, %v4776
        %4778 = vmatmul.bf16.gmra.mxu0 %v4455
        %v4779 = vpop.f32.mrf.mxu0
        %v4780 = vadd.f32 %v4731, %v4779
        %v4781 = vpop.f32.mrf.mxu0
        %v4782 = vadd.f32 %v4733, %v4781
        %4783 = vmatmul.bf16.gmra.mxu0 %v4458
        %v4784 = vpop.f32.mrf.mxu0
        %v4785 = vadd.f32 %v4736, %v4784
        %v4786 = vpop.f32.mrf.mxu0
        %v4787 = vadd.f32 %v4738, %v4786
        %4788 = vmatmul.bf16.gmra.mxu0 %v4461
        %v4789 = vpop.f32.mrf.mxu0
        %v4790 = vadd.f32 %v4741, %v4789
        %v4791 = vpop.f32.mrf.mxu0
        %v4792 = vadd.f32 %v4743, %v4791
        %4793 = vmatmul.bf16.gmra.mxu0 %v4464
        %v4794 = vpop.f32.mrf.mxu0
        %v4795 = vadd.f32 %v4746, %v4794
        %v4796 = vpop.f32.mrf.mxu0
        %v4797 = vadd.f32 %v4748, %v4796
        %4798 = vmatmul.bf16.gmra.mxu0 %v4467
        %v4799 = vpop.f32.mrf.mxu0
        %v4800 = vadd.f32 %v4751, %v4799
        %v4801 = vpop.f32.mrf.mxu0
        %v4802 = vadd.f32 %v4753, %v4801
        %4803 = vmatmul.bf16.gmra.mxu0 %v4470
        %v4804 = vpop.f32.mrf.mxu0
        %v4805 = vadd.f32 %v4756, %v4804
        %v4806 = vpop.f32.mrf.mxu0
        %v4807 = vadd.f32 %v4758, %v4806
        %4808 = vmatmul.bf16.gmra.mxu0 %v4473
        %v4809 = vpop.f32.mrf.mxu0
        %v4810 = vadd.f32 %v4761, %v4809
        %v4811 = vpop.f32.mrf.mxu0
        %v4812 = vadd.f32 %v4763, %v4811
        %4813 = vdwg.mxu0
        %4814 = vmatpush.bf16.msra.mxu0 0
        %4815 = vmatpush.bf16.msra.mxu0 0
        %4816 = vmatpush.bf16.msra.mxu0 0
        %4817 = vmatpush.bf16.msra.mxu0 0
        %4818 = vmatpush.bf16.msra.mxu0 0
        %4819 = vmatpush.bf16.msra.mxu0 0
        %4820 = vmatpush.bf16.msra.mxu0 %v4711
        %4821 = vmatpush.bf16.msra.mxu0 %v4647
        %4822 = vmatmul.bf16.gmra.mxu0 %v4687
        %v4823 = vpop.f32.mrf.mxu0
        %v4824 = vadd.f32 %v4775, %v4823
        %v4825 = vpop.f32.mrf.mxu0
        %v4826 = vadd.f32 %v4777, %v4825
        %4827 = vmatmul.bf16.gmra.mxu0 %v4690
        %v4828 = vpop.f32.mrf.mxu0
        %v4829 = vadd.f32 %v4780, %v4828
        %v4830 = vpop.f32.mrf.mxu0
        %v4831 = vadd.f32 %v4782, %v4830
        %4832 = vmatmul.bf16.gmra.mxu0 %v4693
        %v4833 = vpop.f32.mrf.mxu0
        %v4834 = vadd.f32 %v4785, %v4833
        %v4835 = vpop.f32.mrf.mxu0
        %v4836 = vadd.f32 %v4787, %v4835
        %4837 = vmatmul.bf16.gmra.mxu0 %v4696
        %v4838 = vpop.f32.mrf.mxu0
        %v4839 = vadd.f32 %v4790, %v4838
        %v4840 = vpop.f32.mrf.mxu0
        %v4841 = vadd.f32 %v4792, %v4840
        %4842 = vmatmul.bf16.gmra.mxu0 %v4699
        %v4843 = vpop.f32.mrf.mxu0
        %v4844 = vadd.f32 %v4795, %v4843
        %v4845 = vpop.f32.mrf.mxu0
        %v4846 = vadd.f32 %v4797, %v4845
        %4847 = vmatmul.bf16.gmra.mxu0 %v4702
        %v4848 = vpop.f32.mrf.mxu0
        %v4849 = vadd.f32 %v4800, %v4848
        %v4850 = vpop.f32.mrf.mxu0
        %v4851 = vadd.f32 %v4802, %v4850
        %4852 = vmatmul.bf16.gmra.mxu0 %v4705
        %v4853 = vpop.f32.mrf.mxu0
        %v4854 = vadd.f32 %v4805, %v4853
        %v4855 = vpop.f32.mrf.mxu0
        %v4856 = vadd.f32 %v4807, %v4855
        %4857 = vmatmul.bf16.gmra.mxu0 %v4708
        %v4858 = vpop.f32.mrf.mxu0
        %v4859 = vadd.f32 %v4810, %v4858
        %v4860 = vpop.f32.mrf.mxu0
        %v4861 = vadd.f32 %v4812, %v4860
        %4862 = vdwg.mxu0
        %4863 = vmatpush.bf16.msra.mxu0 %v4630
        %4864 = vmatpush.bf16.msra.mxu0 %v4628
        %4865 = vmatpush.bf16.msra.mxu0 %v4626
        %4866 = vmatpush.bf16.msra.mxu0 %v4624
        %4867 = vmatpush.bf16.msra.mxu0 %v4622
        %4868 = vmatpush.bf16.msra.mxu0 %v4620
        %4869 = vmatpush.bf16.msra.mxu0 %v4618
        %4870 = vmatpush.bf16.msra.mxu0 %v4616
        %4871 = vmatmul.bf16.gmra.mxu0 %v4451
        %v4872 = vpop.f32.mrf.mxu0
        %v4873 = vadd.f32 0.0, %v4872
        %v4874 = vpop.f32.mrf.mxu0
        %v4875 = vadd.f32 0.0, %v4874
        %4876 = vmatmul.bf16.gmra.mxu0 %v4454
        %v4877 = vpop.f32.mrf.mxu0
        %v4878 = vadd.f32 0.0, %v4877
        %v4879 = vpop.f32.mrf.mxu0
        %v4880 = vadd.f32 0.0, %v4879
        %4881 = vmatmul.bf16.gmra.mxu0 %v4457
        %v4882 = vpop.f32.mrf.mxu0
        %v4883 = vadd.f32 0.0, %v4882
        %v4884 = vpop.f32.mrf.mxu0
        %v4885 = vadd.f32 0.0, %v4884
        %4886 = vmatmul.bf16.gmra.mxu0 %v4460
        %v4887 = vpop.f32.mrf.mxu0
        %v4888 = vadd.f32 0.0, %v4887
        %v4889 = vpop.f32.mrf.mxu0
        %v4890 = vadd.f32 0.0, %v4889
        %4891 = vmatmul.bf16.gmra.mxu0 %v4463
        %v4892 = vpop.f32.mrf.mxu0
        %v4893 = vadd.f32 0.0, %v4892
        %v4894 = vpop.f32.mrf.mxu0
        %v4895 = vadd.f32 0.0, %v4894
        %4896 = vmatmul.bf16.gmra.mxu0 %v4466
        %v4897 = vpop.f32.mrf.mxu0
        %v4898 = vadd.f32 0.0, %v4897
        %v4899 = vpop.f32.mrf.mxu0
        %v4900 = vadd.f32 0.0, %v4899
        %4901 = vmatmul.bf16.gmra.mxu0 %v4469
        %v4902 = vpop.f32.mrf.mxu0
        %v4903 = vadd.f32 0.0, %v4902
        %v4904 = vpop.f32.mrf.mxu0
        %v4905 = vadd.f32 0.0, %v4904
        %4906 = vmatmul.bf16.gmra.mxu0 %v4472
        %v4907 = vpop.f32.mrf.mxu0
        %v4908 = vadd.f32 0.0, %v4907
        %v4909 = vpop.f32.mrf.mxu0
        %v4910 = vadd.f32 0.0, %v4909
        %4911 = vdwg.mxu0
        %4912 = vmatpush.bf16.msra.mxu0 %v4646
        %4913 = vmatpush.bf16.msra.mxu0 %v4644
        %4914 = vmatpush.bf16.msra.mxu0 %v4642
        %4915 = vmatpush.bf16.msra.mxu0 %v4640
        %4916 = vmatpush.bf16.msra.mxu0 %v4638
        %4917 = vmatpush.bf16.msra.mxu0 %v4636
        %4918 = vmatpush.bf16.msra.mxu0 %v4634
        %4919 = vmatpush.bf16.msra.mxu0 %v4632
        %4920 = vmatmul.bf16.gmra.mxu0 %v4452
        %v4921 = vpop.f32.mrf.mxu0
        %v4922 = vadd.f32 %v4873, %v4921
        %v4923 = vpop.f32.mrf.mxu0
        %v4924 = vadd.f32 %v4875, %v4923
        %4925 = vmatmul.bf16.gmra.mxu0 %v4455
        %v4926 = vpop.f32.mrf.mxu0
        %v4927 = vadd.f32 %v4878, %v4926
        %v4928 = vpop.f32.mrf.mxu0
        %v4929 = vadd.f32 %v4880, %v4928
        %4930 = vmatmul.bf16.gmra.mxu0 %v4458
        %v4931 = vpop.f32.mrf.mxu0
        %v4932 = vadd.f32 %v4883, %v4931
        %v4933 = vpop.f32.mrf.mxu0
        %v4934 = vadd.f32 %v4885, %v4933
        %4935 = vmatmul.bf16.gmra.mxu0 %v4461
        %v4936 = vpop.f32.mrf.mxu0
        %v4937 = vadd.f32 %v4888, %v4936
        %v4938 = vpop.f32.mrf.mxu0
        %v4939 = vadd.f32 %v4890, %v4938
        %4940 = vmatmul.bf16.gmra.mxu0 %v4464
        %v4941 = vpop.f32.mrf.mxu0
        %v4942 = vadd.f32 %v4893, %v4941
        %v4943 = vpop.f32.mrf.mxu0
        %v4944 = vadd.f32 %v4895, %v4943
        %4945 = vmatmul.bf16.gmra.mxu0 %v4467
        %v4946 = vpop.f32.mrf.mxu0
        %v4947 = vadd.f32 %v4898, %v4946
        %v4948 = vpop.f32.mrf.mxu0
        %v4949 = vadd.f32 %v4900, %v4948
        %4950 = vmatmul.bf16.gmra.mxu0 %v4470
        %v4951 = vpop.f32.mrf.mxu0
        %v4952 = vadd.f32 %v4903, %v4951
        %v4953 = vpop.f32.mrf.mxu0
        %v4954 = vadd.f32 %v4905, %v4953
        %4955 = vmatmul.bf16.gmra.mxu0 %v4473
        %v4956 = vpop.f32.mrf.mxu0
        %v4957 = vadd.f32 %v4908, %v4956
        %v4958 = vpop.f32.mrf.mxu0
        %v4959 = vadd.f32 %v4910, %v4958
        %4960 = vdwg.mxu0
        %4961 = vmatpush.bf16.msra.mxu0 0
        %4962 = vmatpush.bf16.msra.mxu0 0
        %4963 = vmatpush.bf16.msra.mxu0 0
        %4964 = vmatpush.bf16.msra.mxu0 0
        %4965 = vmatpush.bf16.msra.mxu0 0
        %4966 = vmatpush.bf16.msra.mxu0 0
        %4967 = vmatpush.bf16.msra.mxu0 %v4714
        %4968 = vmatpush.bf16.msra.mxu0 %v4648
        %4969 = vmatmul.bf16.gmra.mxu0 %v4687
        %v4970 = vpop.f32.mrf.mxu0
        %v4971 = vadd.f32 %v4922, %v4970
        %v4972 = vpop.f32.mrf.mxu0
        %v4973 = vadd.f32 %v4924, %v4972
        %4974 = vmatmul.bf16.gmra.mxu0 %v4690
        %v4975 = vpop.f32.mrf.mxu0
        %v4976 = vadd.f32 %v4927, %v4975
        %v4977 = vpop.f32.mrf.mxu0
        %v4978 = vadd.f32 %v4929, %v4977
        %4979 = vmatmul.bf16.gmra.mxu0 %v4693
        %v4980 = vpop.f32.mrf.mxu0
        %v4981 = vadd.f32 %v4932, %v4980
        %v4982 = vpop.f32.mrf.mxu0
        %v4983 = vadd.f32 %v4934, %v4982
        %4984 = vmatmul.bf16.gmra.mxu0 %v4696
        %v4985 = vpop.f32.mrf.mxu0
        %v4986 = vadd.f32 %v4937, %v4985
        %v4987 = vpop.f32.mrf.mxu0
        %v4988 = vadd.f32 %v4939, %v4987
        %4989 = vmatmul.bf16.gmra.mxu0 %v4699
        %v4990 = vpop.f32.mrf.mxu0
        %v4991 = vadd.f32 %v4942, %v4990
        %v4992 = vpop.f32.mrf.mxu0
        %v4993 = vadd.f32 %v4944, %v4992
        %4994 = vmatmul.bf16.gmra.mxu0 %v4702
        %v4995 = vpop.f32.mrf.mxu0
        %v4996 = vadd.f32 %v4947, %v4995
        %v4997 = vpop.f32.mrf.mxu0
        %v4998 = vadd.f32 %v4949, %v4997
        %4999 = vmatmul.bf16.gmra.mxu0 %v4705
        %v5000 = vpop.f32.mrf.mxu0
        %v5001 = vadd.f32 %v4952, %v5000
        %v5002 = vpop.f32.mrf.mxu0
        %v5003 = vadd.f32 %v4954, %v5002
        %5004 = vmatmul.bf16.gmra.mxu0 %v4708
        %v5005 = vpop.f32.mrf.mxu0
        %v5006 = vadd.f32 %v4957, %v5005
        %v5007 = vpop.f32.mrf.mxu0
        %v5008 = vadd.f32 %v4959, %v5007
        %5009 = vdwg.mxu0
        %v5010 = vld [vmem:[%s6] sm:$0xff]
        %v5011 = vld [vmem:[%s6 + $0x8] sm:$0xff]
        %v5012 = vld [vmem:[%s6 + $0x10] sm:$0xff]
        %v5013 = vld [vmem:[%s6 + $0x18] sm:$0xff]
        %v5014 = vld [vmem:[%s6 + $0x20] sm:$0xff]
        %v5015 = vld [vmem:[%s6 + $0x28] sm:$0xff]
        %v5016 = vld [vmem:[%s6 + $0x30] sm:$0xff]
        %v5017 = vld [vmem:[%s6 + $0x38] sm:$0xff]
        %v5018 = vld [vmem:[%s6 + $0x40] sm:$0xff]
        %v5019 = vld [vmem:[%s6 + $0x48] sm:$0xff]
        %v5020 = vld [vmem:[%s6 + $0x50] sm:$0xff]
        %v5021 = vld [vmem:[%s6 + $0x58] sm:$0xff]
        %v5022 = vld [vmem:[%s6 + $0x60] sm:$0xff]
        %v5023 = vld [vmem:[%s6 + $0x68] sm:$0xff]
        %v5024 = vld [vmem:[%s6 + $0x70] sm:$0xff]
        %v5025 = vld [vmem:[%s6 + $0x78] sm:$0xff]
        %v5026 = vld [vmem:[%s6 + $0x80] sm:$0xff]
        %v5027 = vld [vmem:[%s6 + $0x88] sm:$0xff]
        %v5028 = vld [vmem:[%s6 + $0x90] sm:$0xff]
        %v5029 = vld [vmem:[%s6 + $0x98] sm:$0xff]
        %v5030 = vld [vmem:[%s6 + $0xa0] sm:$0xff]
        %v5031 = vld [vmem:[%s6 + $0xa8] sm:$0xff]
        %v5032 = vld [vmem:[%s6 + $0xb0] sm:$0xff]
        %v5033 = vld [vmem:[%s6 + $0xb8] sm:$0xff]
        %v5034 = vld [vmem:[%s6 + $0xc0] sm:$0xff]
        %v5035 = vld [vmem:[%s6 + $0xc8] sm:$0xff]
        %v5036 = vld [vmem:[%s6 + $0xd0] sm:$0xff]
        %v5037 = vld [vmem:[%s6 + $0xd8] sm:$0xff]
        %v5038 = vld [vmem:[%s6 + $0xe0] sm:$0xff]
        %v5039 = vld [vmem:[%s6 + $0xe8] sm:$0xff]
        %v5040 = vld [vmem:[%s6 + $0xf0] sm:$0xff]
        %v5041 = vld [vmem:[%s6 + $0xf8] sm:$0xff]
        %v5042 = vld [vmem:[%s6 + $0x100] sm:$0xff]
        %v5043 = vld [vmem:[%s6 + $0x108] sm:$0xff]
        %v5044 = vld [vmem:[%s6 + $0x110] sm:$0xff]
        %v5080 = vunpack.c.l.b16 %v5010
        %v5081 = vunpack.c.h.b16 %v5010
        %v5082 = vunpack.c.l.b16 %v5011
        %v5083 = vunpack.c.h.b16 %v5011
        %v5084 = vunpack.c.l.b16 %v5012
        %v5085 = vunpack.c.h.b16 %v5012
        %v5086 = vunpack.c.l.b16 %v5013
        %v5087 = vunpack.c.h.b16 %v5013
        %v5088 = vunpack.c.l.b16 %v5014
        %v5089 = vunpack.c.h.b16 %v5014
        %v5090 = vunpack.c.l.b16 %v5015
        %v5091 = vunpack.c.h.b16 %v5015
        %v5092 = vunpack.c.l.b16 %v5016
        %v5093 = vunpack.c.h.b16 %v5016
        %v5094 = vunpack.c.l.b16 %v5017
        %v5095 = vunpack.c.h.b16 %v5017
        %v5096 = vunpack.c.l.b16 %v5018
        %v5097 = vunpack.c.h.b16 %v5018
        %v5098 = vunpack.c.l.b16 %v5019
        %v5099 = vunpack.c.h.b16 %v5019
        %v5100 = vunpack.c.l.b16 %v5020
        %v5101 = vunpack.c.h.b16 %v5020
        %v5102 = vunpack.c.l.b16 %v5021
        %v5103 = vunpack.c.h.b16 %v5021
        %v5104 = vunpack.c.l.b16 %v5022
        %v5105 = vunpack.c.h.b16 %v5022
        %v5106 = vunpack.c.l.b16 %v5023
        %v5107 = vunpack.c.h.b16 %v5023
        %v5108 = vunpack.c.l.b16 %v5024
        %v5109 = vunpack.c.h.b16 %v5024
        %v5110 = vunpack.c.l.b16 %v5025
        %v5111 = vunpack.c.h.b16 %v5025
        %v5112 = vunpack.c.l.b16 %v5026
        %v5113 = vunpack.c.h.b16 %v5026
        %v5114 = vunpack.c.l.b16 %v5027
        %v5115 = vunpack.c.h.b16 %v5027
        %v5116 = vunpack.c.l.b16 %v5028
        %v5117 = vunpack.c.h.b16 %v5028
        %v5118 = vunpack.c.l.b16 %v5029
        %v5119 = vunpack.c.h.b16 %v5029
        %v5120 = vunpack.c.l.b16 %v5030
        %v5121 = vunpack.c.h.b16 %v5030
        %v5122 = vunpack.c.l.b16 %v5031
        %v5123 = vunpack.c.h.b16 %v5031
        %v5124 = vunpack.c.l.b16 %v5032
        %v5125 = vunpack.c.h.b16 %v5032
        %v5126 = vunpack.c.l.b16 %v5033
        %v5127 = vunpack.c.h.b16 %v5033
        %v5128 = vunpack.c.l.b16 %v5034
        %v5129 = vunpack.c.h.b16 %v5034
        %v5130 = vunpack.c.l.b16 %v5035
        %v5131 = vunpack.c.h.b16 %v5035
        %v5132 = vunpack.c.l.b16 %v5036
        %v5133 = vunpack.c.h.b16 %v5036
        %v5134 = vunpack.c.l.b16 %v5037
        %v5135 = vunpack.c.h.b16 %v5037
        %v5136 = vunpack.c.l.b16 %v5038
        %v5137 = vunpack.c.h.b16 %v5038
        %v5138 = vunpack.c.l.b16 %v5039
        %v5139 = vunpack.c.h.b16 %v5039
        %v5140 = vunpack.c.l.b16 %v5040
        %v5141 = vunpack.c.h.b16 %v5040
        %v5142 = vunpack.c.l.b16 %v5041
        %v5143 = vunpack.c.h.b16 %v5041
        %v5144 = vunpack.c.l.b16 %v5042
        %v5145 = vunpack.c.h.b16 %v5042
        %v5146 = vunpack.c.l.b16 %v5043
        %v5147 = vunpack.c.h.b16 %v5043
        %v5148 = vunpack.c.l.b16 %v5044
        %v5149 = vunpack.c.h.b16 %v5044
        %v5150 = vpack.c.b16 %v5082, %v5080
        %v5151 = vpack.c.b16 %v5083, %v5081
        %v5152 = vpack.c.b16 %v5086, %v5084
        %v5153 = vpack.c.b16 %v5087, %v5085
        %v5154 = vpack.c.b16 %v5090, %v5088
        %v5155 = vpack.c.b16 %v5091, %v5089
        %v5156 = vpack.c.b16 %v5094, %v5092
        %v5157 = vpack.c.b16 %v5095, %v5093
        %v5158 = vpack.c.b16 %v5098, %v5096
        %v5159 = vpack.c.b16 %v5099, %v5097
        %v5160 = vpack.c.b16 %v5102, %v5100
        %v5161 = vpack.c.b16 %v5103, %v5101
        %v5162 = vpack.c.b16 %v5106, %v5104
        %v5163 = vpack.c.b16 %v5107, %v5105
        %v5164 = vpack.c.b16 %v5110, %v5108
        %v5165 = vpack.c.b16 %v5111, %v5109
        %v5166 = vpack.c.b16 %v5114, %v5112
        %v5167 = vpack.c.b16 %v5115, %v5113
        %v5168 = vpack.c.b16 %v5118, %v5116
        %v5169 = vpack.c.b16 %v5119, %v5117
        %v5170 = vpack.c.b16 %v5122, %v5120
        %v5171 = vpack.c.b16 %v5123, %v5121
        %v5172 = vpack.c.b16 %v5126, %v5124
        %v5173 = vpack.c.b16 %v5127, %v5125
        %v5174 = vpack.c.b16 %v5130, %v5128
        %v5175 = vpack.c.b16 %v5131, %v5129
        %v5176 = vpack.c.b16 %v5134, %v5132
        %v5177 = vpack.c.b16 %v5135, %v5133
        %v5178 = vpack.c.b16 %v5138, %v5136
        %v5179 = vpack.c.b16 %v5139, %v5137
        %v5180 = vpack.c.b16 %v5142, %v5140
        %v5181 = vpack.c.b16 %v5143, %v5141
        %v5182 = vpack.c.b16 %v5146, %v5144
        %v5183 = vpack.c.b16 %v5147, %v5145
        %v5184 = vpack.c.b16 %v5148, %v5148
        %v5185 = vpack.c.b16 %v5149, %v5149
        %v5221 = vsel %vm1118, %v5184, 0
        %v5224 = vsel %vm1118, %v5185, 0
        %5226 = vmatpush.bf16.msra.mxu0 %v5164
        %5227 = vmatpush.bf16.msra.mxu0 %v5162
        %5228 = vmatpush.bf16.msra.mxu0 %v5160
        %5229 = vmatpush.bf16.msra.mxu0 %v5158
        %5230 = vmatpush.bf16.msra.mxu0 %v5156
        %5231 = vmatpush.bf16.msra.mxu0 %v5154
        %5232 = vmatpush.bf16.msra.mxu0 %v5152
        %5233 = vmatpush.bf16.msra.mxu0 %v5150
        %5234 = vmatmul.bf16.gmra.mxu0 %v4451
        %v5235 = vpop.f32.mrf.mxu0
        %v5236 = vadd.f32 0.0, %v5235
        %v5237 = vpop.f32.mrf.mxu0
        %v5238 = vadd.f32 0.0, %v5237
        %5239 = vmatmul.bf16.gmra.mxu0 %v4454
        %v5240 = vpop.f32.mrf.mxu0
        %v5241 = vadd.f32 0.0, %v5240
        %v5242 = vpop.f32.mrf.mxu0
        %v5243 = vadd.f32 0.0, %v5242
        %5244 = vmatmul.bf16.gmra.mxu0 %v4457
        %v5245 = vpop.f32.mrf.mxu0
        %v5246 = vadd.f32 0.0, %v5245
        %v5247 = vpop.f32.mrf.mxu0
        %v5248 = vadd.f32 0.0, %v5247
        %5249 = vmatmul.bf16.gmra.mxu0 %v4460
        %v5250 = vpop.f32.mrf.mxu0
        %v5251 = vadd.f32 0.0, %v5250
        %v5252 = vpop.f32.mrf.mxu0
        %v5253 = vadd.f32 0.0, %v5252
        %5254 = vmatmul.bf16.gmra.mxu0 %v4463
        %v5255 = vpop.f32.mrf.mxu0
        %v5256 = vadd.f32 0.0, %v5255
        %v5257 = vpop.f32.mrf.mxu0
        %v5258 = vadd.f32 0.0, %v5257
        %5259 = vmatmul.bf16.gmra.mxu0 %v4466
        %v5260 = vpop.f32.mrf.mxu0
        %v5261 = vadd.f32 0.0, %v5260
        %v5262 = vpop.f32.mrf.mxu0
        %v5263 = vadd.f32 0.0, %v5262
        %5264 = vmatmul.bf16.gmra.mxu0 %v4469
        %v5265 = vpop.f32.mrf.mxu0
        %v5266 = vadd.f32 0.0, %v5265
        %v5267 = vpop.f32.mrf.mxu0
        %v5268 = vadd.f32 0.0, %v5267
        %5269 = vmatmul.bf16.gmra.mxu0 %v4472
        %v5270 = vpop.f32.mrf.mxu0
        %v5271 = vadd.f32 0.0, %v5270
        %v5272 = vpop.f32.mrf.mxu0
        %v5273 = vadd.f32 0.0, %v5272
        %5274 = vdwg.mxu0
        %5275 = vmatpush.bf16.msra.mxu0 %v5180
        %5276 = vmatpush.bf16.msra.mxu0 %v5178
        %5277 = vmatpush.bf16.msra.mxu0 %v5176
        %5278 = vmatpush.bf16.msra.mxu0 %v5174
        %5279 = vmatpush.bf16.msra.mxu0 %v5172
        %5280 = vmatpush.bf16.msra.mxu0 %v5170
        %5281 = vmatpush.bf16.msra.mxu0 %v5168
        %5282 = vmatpush.bf16.msra.mxu0 %v5166
        %5283 = vmatmul.bf16.gmra.mxu0 %v4452
        %v5284 = vpop.f32.mrf.mxu0
        %v5285 = vadd.f32 %v5236, %v5284
        %v5286 = vpop.f32.mrf.mxu0
        %v5287 = vadd.f32 %v5238, %v5286
        %5288 = vmatmul.bf16.gmra.mxu0 %v4455
        %v5289 = vpop.f32.mrf.mxu0
        %v5290 = vadd.f32 %v5241, %v5289
        %v5291 = vpop.f32.mrf.mxu0
        %v5292 = vadd.f32 %v5243, %v5291
        %5293 = vmatmul.bf16.gmra.mxu0 %v4458
        %v5294 = vpop.f32.mrf.mxu0
        %v5295 = vadd.f32 %v5246, %v5294
        %v5296 = vpop.f32.mrf.mxu0
        %v5297 = vadd.f32 %v5248, %v5296
        %5298 = vmatmul.bf16.gmra.mxu0 %v4461
        %v5299 = vpop.f32.mrf.mxu0
        %v5300 = vadd.f32 %v5251, %v5299
        %v5301 = vpop.f32.mrf.mxu0
        %v5302 = vadd.f32 %v5253, %v5301
        %5303 = vmatmul.bf16.gmra.mxu0 %v4464
        %v5304 = vpop.f32.mrf.mxu0
        %v5305 = vadd.f32 %v5256, %v5304
        %v5306 = vpop.f32.mrf.mxu0
        %v5307 = vadd.f32 %v5258, %v5306
        %5308 = vmatmul.bf16.gmra.mxu0 %v4467
        %v5309 = vpop.f32.mrf.mxu0
        %v5310 = vadd.f32 %v5261, %v5309
        %v5311 = vpop.f32.mrf.mxu0
        %v5312 = vadd.f32 %v5263, %v5311
        %5313 = vmatmul.bf16.gmra.mxu0 %v4470
        %v5314 = vpop.f32.mrf.mxu0
        %v5315 = vadd.f32 %v5266, %v5314
        %v5316 = vpop.f32.mrf.mxu0
        %v5317 = vadd.f32 %v5268, %v5316
        %5318 = vmatmul.bf16.gmra.mxu0 %v4473
        %v5319 = vpop.f32.mrf.mxu0
        %v5320 = vadd.f32 %v5271, %v5319
        %v5321 = vpop.f32.mrf.mxu0
        %v5322 = vadd.f32 %v5273, %v5321
        %5323 = vdwg.mxu0
        %5324 = vmatpush.bf16.msra.mxu0 0
        %5325 = vmatpush.bf16.msra.mxu0 0
        %5326 = vmatpush.bf16.msra.mxu0 0
        %5327 = vmatpush.bf16.msra.mxu0 0
        %5328 = vmatpush.bf16.msra.mxu0 0
        %5329 = vmatpush.bf16.msra.mxu0 0
        %5330 = vmatpush.bf16.msra.mxu0 %v5221
        %5331 = vmatpush.bf16.msra.mxu0 %v5182
        %5332 = vmatmul.bf16.gmra.mxu0 %v4687
        %v5333 = vpop.f32.mrf.mxu0
        %v5334 = vadd.f32 %v5285, %v5333
        %v5335 = vpop.f32.mrf.mxu0
        %v5336 = vadd.f32 %v5287, %v5335
        %5337 = vmatmul.bf16.gmra.mxu0 %v4690
        %v5338 = vpop.f32.mrf.mxu0
        %v5339 = vadd.f32 %v5290, %v5338
        %v5340 = vpop.f32.mrf.mxu0
        %v5341 = vadd.f32 %v5292, %v5340
        %5342 = vmatmul.bf16.gmra.mxu0 %v4693
        %v5343 = vpop.f32.mrf.mxu0
        %v5344 = vadd.f32 %v5295, %v5343
        %v5345 = vpop.f32.mrf.mxu0
        %v5346 = vadd.f32 %v5297, %v5345
        %5347 = vmatmul.bf16.gmra.mxu0 %v4696
        %v5348 = vpop.f32.mrf.mxu0
        %v5349 = vadd.f32 %v5300, %v5348
        %v5350 = vpop.f32.mrf.mxu0
        %v5351 = vadd.f32 %v5302, %v5350
        %5352 = vmatmul.bf16.gmra.mxu0 %v4699
        %v5353 = vpop.f32.mrf.mxu0
        %v5354 = vadd.f32 %v5305, %v5353
        %v5355 = vpop.f32.mrf.mxu0
        %v5356 = vadd.f32 %v5307, %v5355
        %5357 = vmatmul.bf16.gmra.mxu0 %v4702
        %v5358 = vpop.f32.mrf.mxu0
        %v5359 = vadd.f32 %v5310, %v5358
        %v5360 = vpop.f32.mrf.mxu0
        %v5361 = vadd.f32 %v5312, %v5360
        %5362 = vmatmul.bf16.gmra.mxu0 %v4705
        %v5363 = vpop.f32.mrf.mxu0
        %v5364 = vadd.f32 %v5315, %v5363
        %v5365 = vpop.f32.mrf.mxu0
        %v5366 = vadd.f32 %v5317, %v5365
        %5367 = vmatmul.bf16.gmra.mxu0 %v4708
        %v5368 = vpop.f32.mrf.mxu0
        %v5369 = vadd.f32 %v5320, %v5368
        %v5370 = vpop.f32.mrf.mxu0
        %v5371 = vadd.f32 %v5322, %v5370
        %5372 = vdwg.mxu0
        %5373 = vmatpush.bf16.msra.mxu0 %v5165
        %5374 = vmatpush.bf16.msra.mxu0 %v5163
        %5375 = vmatpush.bf16.msra.mxu0 %v5161
        %5376 = vmatpush.bf16.msra.mxu0 %v5159
        %5377 = vmatpush.bf16.msra.mxu0 %v5157
        %5378 = vmatpush.bf16.msra.mxu0 %v5155
        %5379 = vmatpush.bf16.msra.mxu0 %v5153
        %5380 = vmatpush.bf16.msra.mxu0 %v5151
        %5381 = vmatmul.bf16.gmra.mxu0 %v4451
        %v5382 = vpop.f32.mrf.mxu0
        %v5383 = vadd.f32 0.0, %v5382
        %v5384 = vpop.f32.mrf.mxu0
        %v5385 = vadd.f32 0.0, %v5384
        %5386 = vmatmul.bf16.gmra.mxu0 %v4454
        %v5387 = vpop.f32.mrf.mxu0
        %v5388 = vadd.f32 0.0, %v5387
        %v5389 = vpop.f32.mrf.mxu0
        %v5390 = vadd.f32 0.0, %v5389
        %5391 = vmatmul.bf16.gmra.mxu0 %v4457
        %v5392 = vpop.f32.mrf.mxu0
        %v5393 = vadd.f32 0.0, %v5392
        %v5394 = vpop.f32.mrf.mxu0
        %v5395 = vadd.f32 0.0, %v5394
        %5396 = vmatmul.bf16.gmra.mxu0 %v4460
        %v5397 = vpop.f32.mrf.mxu0
        %v5398 = vadd.f32 0.0, %v5397
        %v5399 = vpop.f32.mrf.mxu0
        %v5400 = vadd.f32 0.0, %v5399
        %5401 = vmatmul.bf16.gmra.mxu0 %v4463
        %v5402 = vpop.f32.mrf.mxu0
        %v5403 = vadd.f32 0.0, %v5402
        %v5404 = vpop.f32.mrf.mxu0
        %v5405 = vadd.f32 0.0, %v5404
        %5406 = vmatmul.bf16.gmra.mxu0 %v4466
        %v5407 = vpop.f32.mrf.mxu0
        %v5408 = vadd.f32 0.0, %v5407
        %v5409 = vpop.f32.mrf.mxu0
        %v5410 = vadd.f32 0.0, %v5409
        %5411 = vmatmul.bf16.gmra.mxu0 %v4469
        %v5412 = vpop.f32.mrf.mxu0
        %v5413 = vadd.f32 0.0, %v5412
        %v5414 = vpop.f32.mrf.mxu0
        %v5415 = vadd.f32 0.0, %v5414
        %5416 = vmatmul.bf16.gmra.mxu0 %v4472
        %v5417 = vpop.f32.mrf.mxu0
        %v5418 = vadd.f32 0.0, %v5417
        %v5419 = vpop.f32.mrf.mxu0
        %v5420 = vadd.f32 0.0, %v5419
        %5421 = vdwg.mxu0
        %5422 = vmatpush.bf16.msra.mxu0 %v5181
        %5423 = vmatpush.bf16.msra.mxu0 %v5179
        %5424 = vmatpush.bf16.msra.mxu0 %v5177
        %5425 = vmatpush.bf16.msra.mxu0 %v5175
        %5426 = vmatpush.bf16.msra.mxu0 %v5173
        %5427 = vmatpush.bf16.msra.mxu0 %v5171
        %5428 = vmatpush.bf16.msra.mxu0 %v5169
        %5429 = vmatpush.bf16.msra.mxu0 %v5167
        %5430 = vmatmul.bf16.gmra.mxu0 %v4452
        %v5431 = vpop.f32.mrf.mxu0
        %v5432 = vadd.f32 %v5383, %v5431
        %v5433 = vpop.f32.mrf.mxu0
        %v5434 = vadd.f32 %v5385, %v5433
        %5435 = vmatmul.bf16.gmra.mxu0 %v4455
        %v5436 = vpop.f32.mrf.mxu0
        %v5437 = vadd.f32 %v5388, %v5436
        %v5438 = vpop.f32.mrf.mxu0
        %v5439 = vadd.f32 %v5390, %v5438
        %5440 = vmatmul.bf16.gmra.mxu0 %v4458
        %v5441 = vpop.f32.mrf.mxu0
        %v5442 = vadd.f32 %v5393, %v5441
        %v5443 = vpop.f32.mrf.mxu0
        %v5444 = vadd.f32 %v5395, %v5443
        %5445 = vmatmul.bf16.gmra.mxu0 %v4461
        %v5446 = vpop.f32.mrf.mxu0
        %v5447 = vadd.f32 %v5398, %v5446
        %v5448 = vpop.f32.mrf.mxu0
        %v5449 = vadd.f32 %v5400, %v5448
        %5450 = vmatmul.bf16.gmra.mxu0 %v4464
        %v5451 = vpop.f32.mrf.mxu0
        %v5452 = vadd.f32 %v5403, %v5451
        %v5453 = vpop.f32.mrf.mxu0
        %v5454 = vadd.f32 %v5405, %v5453
        %5455 = vmatmul.bf16.gmra.mxu0 %v4467
        %v5456 = vpop.f32.mrf.mxu0
        %v5457 = vadd.f32 %v5408, %v5456
        %v5458 = vpop.f32.mrf.mxu0
        %v5459 = vadd.f32 %v5410, %v5458
        %5460 = vmatmul.bf16.gmra.mxu0 %v4470
        %v5461 = vpop.f32.mrf.mxu0
        %v5462 = vadd.f32 %v5413, %v5461
        %v5463 = vpop.f32.mrf.mxu0
        %v5464 = vadd.f32 %v5415, %v5463
        %5465 = vmatmul.bf16.gmra.mxu0 %v4473
        %v5466 = vpop.f32.mrf.mxu0
        %v5467 = vadd.f32 %v5418, %v5466
        %v5468 = vpop.f32.mrf.mxu0
        %v5469 = vadd.f32 %v5420, %v5468
        %5470 = vdwg.mxu0
        %5471 = vmatpush.bf16.msra.mxu0 0
        %5472 = vmatpush.bf16.msra.mxu0 0
        %5473 = vmatpush.bf16.msra.mxu0 0
        %5474 = vmatpush.bf16.msra.mxu0 0
        %5475 = vmatpush.bf16.msra.mxu0 0
        %5476 = vmatpush.bf16.msra.mxu0 0
        %5477 = vmatpush.bf16.msra.mxu0 %v5224
        %5478 = vmatpush.bf16.msra.mxu0 %v5183
        %5479 = vmatmul.bf16.gmra.mxu0 %v4687
        %v5480 = vpop.f32.mrf.mxu0
        %v5481 = vadd.f32 %v5432, %v5480
        %v5482 = vpop.f32.mrf.mxu0
        %v5483 = vadd.f32 %v5434, %v5482
        %5484 = vmatmul.bf16.gmra.mxu0 %v4690
        %v5485 = vpop.f32.mrf.mxu0
        %v5486 = vadd.f32 %v5437, %v5485
        %v5487 = vpop.f32.mrf.mxu0
        %v5488 = vadd.f32 %v5439, %v5487
        %5489 = vmatmul.bf16.gmra.mxu0 %v4693
        %v5490 = vpop.f32.mrf.mxu0
        %v5491 = vadd.f32 %v5442, %v5490
        %v5492 = vpop.f32.mrf.mxu0
        %v5493 = vadd.f32 %v5444, %v5492
        %5494 = vmatmul.bf16.gmra.mxu0 %v4696
        %v5495 = vpop.f32.mrf.mxu0
        %v5496 = vadd.f32 %v5447, %v5495
        %v5497 = vpop.f32.mrf.mxu0
        %v5498 = vadd.f32 %v5449, %v5497
        %5499 = vmatmul.bf16.gmra.mxu0 %v4699
        %v5500 = vpop.f32.mrf.mxu0
        %v5501 = vadd.f32 %v5452, %v5500
        %v5502 = vpop.f32.mrf.mxu0
        %v5503 = vadd.f32 %v5454, %v5502
        %5504 = vmatmul.bf16.gmra.mxu0 %v4702
        %v5505 = vpop.f32.mrf.mxu0
        %v5506 = vadd.f32 %v5457, %v5505
        %v5507 = vpop.f32.mrf.mxu0
        %v5508 = vadd.f32 %v5459, %v5507
        %5509 = vmatmul.bf16.gmra.mxu0 %v4705
        %v5510 = vpop.f32.mrf.mxu0
        %v5511 = vadd.f32 %v5462, %v5510
        %v5512 = vpop.f32.mrf.mxu0
        %v5513 = vadd.f32 %v5464, %v5512
        %5514 = vmatmul.bf16.gmra.mxu0 %v4708
        %v5515 = vpop.f32.mrf.mxu0
        %v5516 = vadd.f32 %v5467, %v5515
        %v5517 = vpop.f32.mrf.mxu0
        %v5518 = vadd.f32 %v5469, %v5517
        %5519 = vdwg.mxu0
        %v5520 = vmax.f32 %v4824, %v5334
        %v5521 = vmax.f32 %v4971, %v5481
        %v5522 = vmax.f32 %v4826, %v5336
        %v5523 = vmax.f32 %v4973, %v5483
        %v5524 = vmax.f32 %v4829, %v5339
        %v5525 = vmax.f32 %v4976, %v5486
        %v5526 = vmax.f32 %v4831, %v5341
        %v5527 = vmax.f32 %v4978, %v5488
        %v5528 = vmax.f32 %v4834, %v5344
        %v5529 = vmax.f32 %v4981, %v5491
        %v5530 = vmax.f32 %v4836, %v5346
        %v5531 = vmax.f32 %v4983, %v5493
        %v5532 = vmax.f32 %v4839, %v5349
        %v5533 = vmax.f32 %v4986, %v5496
        %v5534 = vmax.f32 %v4841, %v5351
        %v5535 = vmax.f32 %v4988, %v5498
        %v5536 = vmax.f32 %v4844, %v5354
        %v5537 = vmax.f32 %v4991, %v5501
        %v5538 = vmax.f32 %v4846, %v5356
        %v5539 = vmax.f32 %v4993, %v5503
        %v5540 = vmax.f32 %v4849, %v5359
        %v5541 = vmax.f32 %v4996, %v5506
        %v5542 = vmax.f32 %v4851, %v5361
        %v5543 = vmax.f32 %v4998, %v5508
        %v5544 = vmax.f32 %v4854, %v5364
        %v5545 = vmax.f32 %v5001, %v5511
        %v5546 = vmax.f32 %v4856, %v5366
        %v5547 = vmax.f32 %v5003, %v5513
        %v5548 = vmax.f32 %v4859, %v5369
        %v5549 = vmax.f32 %v5006, %v5516
        %v5550 = vmax.f32 %v4861, %v5371
        %v5551 = vmax.f32 %v5008, %v5518
        %v5584 = vrot.slane %v5520, 1
        %v5585 = vrot.slane %v5522, 1
        %v5586 = vsel %vm830, %v5584, %v5585
        %v5587 = vrot.slane %v5521, 1
        %v5588 = vrot.slane %v5523, 1
        %v5589 = vsel %vm830, %v5587, %v5588
        %v5590 = vrot.slane %v5524, 1
        %v5591 = vsel %vm830, %v5585, %v5590
        %v5592 = vrot.slane %v5525, 1
        %v5593 = vsel %vm830, %v5588, %v5592
        %v5594 = vrot.slane %v5526, 1
        %v5595 = vsel %vm830, %v5590, %v5594
        %v5596 = vrot.slane %v5527, 1
        %v5597 = vsel %vm830, %v5592, %v5596
        %v5598 = vrot.slane %v5528, 1
        %v5599 = vsel %vm830, %v5594, %v5598
        %v5600 = vrot.slane %v5529, 1
        %v5601 = vsel %vm830, %v5596, %v5600
        %v5602 = vrot.slane %v5530, 1
        %v5603 = vsel %vm830, %v5598, %v5602
        %v5604 = vrot.slane %v5531, 1
        %v5605 = vsel %vm830, %v5600, %v5604
        %v5606 = vrot.slane %v5532, 1
        %v5607 = vsel %vm830, %v5602, %v5606
        %v5608 = vrot.slane %v5533, 1
        %v5609 = vsel %vm830, %v5604, %v5608
        %v5610 = vrot.slane %v5534, 1
        %v5611 = vsel %vm830, %v5606, %v5610
        %v5612 = vrot.slane %v5535, 1
        %v5613 = vsel %vm830, %v5608, %v5612
        %v5614 = vrot.slane %v5536, 1
        %v5615 = vsel %vm830, %v5610, %v5614
        %v5616 = vrot.slane %v5537, 1
        %v5617 = vsel %vm830, %v5612, %v5616
        %v5618 = vrot.slane %v5538, 1
        %v5619 = vsel %vm830, %v5614, %v5618
        %v5620 = vrot.slane %v5539, 1
        %v5621 = vsel %vm830, %v5616, %v5620
        %v5622 = vrot.slane %v5540, 1
        %v5623 = vsel %vm830, %v5618, %v5622
        %v5624 = vrot.slane %v5541, 1
        %v5625 = vsel %vm830, %v5620, %v5624
        %v5626 = vrot.slane %v5542, 1
        %v5627 = vsel %vm830, %v5622, %v5626
        %v5628 = vrot.slane %v5543, 1
        %v5629 = vsel %vm830, %v5624, %v5628
        %v5630 = vrot.slane %v5544, 1
        %v5631 = vsel %vm830, %v5626, %v5630
        %v5632 = vrot.slane %v5545, 1
        %v5633 = vsel %vm830, %v5628, %v5632
        %v5634 = vrot.slane %v5546, 1
        %v5635 = vsel %vm830, %v5630, %v5634
        %v5636 = vrot.slane %v5547, 1
        %v5637 = vsel %vm830, %v5632, %v5636
        %v5638 = vrot.slane %v5548, 1
        %v5639 = vsel %vm830, %v5634, %v5638
        %v5640 = vrot.slane %v5549, 1
        %v5641 = vsel %vm830, %v5636, %v5640
        %v5642 = vrot.slane %v5550, 1
        %v5643 = vsel %vm830, %v5638, %v5642
        %v5644 = vrot.slane %v5551, 1
        %v5645 = vsel %vm830, %v5640, %v5644
        %v5678 = vrot.slane %v5520, 2
        %v5679 = vrot.slane %v5522, 2
        %v5680 = vsel %vm926, %v5678, %v5679
        %v5681 = vrot.slane %v5521, 2
        %v5682 = vrot.slane %v5523, 2
        %v5683 = vsel %vm926, %v5681, %v5682
        %v5684 = vrot.slane %v5524, 2
        %v5685 = vsel %vm926, %v5679, %v5684
        %v5686 = vrot.slane %v5525, 2
        %v5687 = vsel %vm926, %v5682, %v5686
        %v5688 = vrot.slane %v5526, 2
        %v5689 = vsel %vm926, %v5684, %v5688
        %v5690 = vrot.slane %v5527, 2
        %v5691 = vsel %vm926, %v5686, %v5690
        %v5692 = vrot.slane %v5528, 2
        %v5693 = vsel %vm926, %v5688, %v5692
        %v5694 = vrot.slane %v5529, 2
        %v5695 = vsel %vm926, %v5690, %v5694
        %v5696 = vrot.slane %v5530, 2
        %v5697 = vsel %vm926, %v5692, %v5696
        %v5698 = vrot.slane %v5531, 2
        %v5699 = vsel %vm926, %v5694, %v5698
        %v5700 = vrot.slane %v5532, 2
        %v5701 = vsel %vm926, %v5696, %v5700
        %v5702 = vrot.slane %v5533, 2
        %v5703 = vsel %vm926, %v5698, %v5702
        %v5704 = vrot.slane %v5534, 2
        %v5705 = vsel %vm926, %v5700, %v5704
        %v5706 = vrot.slane %v5535, 2
        %v5707 = vsel %vm926, %v5702, %v5706
        %v5708 = vrot.slane %v5536, 2
        %v5709 = vsel %vm926, %v5704, %v5708
        %v5710 = vrot.slane %v5537, 2
        %v5711 = vsel %vm926, %v5706, %v5710
        %v5712 = vrot.slane %v5538, 2
        %v5713 = vsel %vm926, %v5708, %v5712
        %v5714 = vrot.slane %v5539, 2
        %v5715 = vsel %vm926, %v5710, %v5714
        %v5716 = vrot.slane %v5540, 2
        %v5717 = vsel %vm926, %v5712, %v5716
        %v5718 = vrot.slane %v5541, 2
        %v5719 = vsel %vm926, %v5714, %v5718
        %v5720 = vrot.slane %v5542, 2
        %v5721 = vsel %vm926, %v5716, %v5720
        %v5722 = vrot.slane %v5543, 2
        %v5723 = vsel %vm926, %v5718, %v5722
        %v5724 = vrot.slane %v5544, 2
        %v5725 = vsel %vm926, %v5720, %v5724
        %v5726 = vrot.slane %v5545, 2
        %v5727 = vsel %vm926, %v5722, %v5726
        %v5728 = vrot.slane %v5546, 2
        %v5729 = vsel %vm926, %v5724, %v5728
        %v5730 = vrot.slane %v5547, 2
        %v5731 = vsel %vm926, %v5726, %v5730
        %v5732 = vrot.slane %v5548, 2
        %v5733 = vsel %vm926, %v5728, %v5732
        %v5734 = vrot.slane %v5549, 2
        %v5735 = vsel %vm926, %v5730, %v5734
        %v5736 = vrot.slane %v5550, 2
        %v5737 = vsel %vm926, %v5732, %v5736
        %v5738 = vrot.slane %v5551, 2
        %v5739 = vsel %vm926, %v5734, %v5738
        %v5772 = vrot.slane %v5520, 3
        %v5773 = vrot.slane %v5522, 3
        %v5774 = vsel %vm1022, %v5772, %v5773
        %v5775 = vrot.slane %v5521, 3
        %v5776 = vrot.slane %v5523, 3
        %v5777 = vsel %vm1022, %v5775, %v5776
        %v5778 = vrot.slane %v5524, 3
        %v5779 = vsel %vm1022, %v5773, %v5778
        %v5780 = vrot.slane %v5525, 3
        %v5781 = vsel %vm1022, %v5776, %v5780
        %v5782 = vrot.slane %v5526, 3
        %v5783 = vsel %vm1022, %v5778, %v5782
        %v5784 = vrot.slane %v5527, 3
        %v5785 = vsel %vm1022, %v5780, %v5784
        %v5786 = vrot.slane %v5528, 3
        %v5787 = vsel %vm1022, %v5782, %v5786
        %v5788 = vrot.slane %v5529, 3
        %v5789 = vsel %vm1022, %v5784, %v5788
        %v5790 = vrot.slane %v5530, 3
        %v5791 = vsel %vm1022, %v5786, %v5790
        %v5792 = vrot.slane %v5531, 3
        %v5793 = vsel %vm1022, %v5788, %v5792
        %v5794 = vrot.slane %v5532, 3
        %v5795 = vsel %vm1022, %v5790, %v5794
        %v5796 = vrot.slane %v5533, 3
        %v5797 = vsel %vm1022, %v5792, %v5796
        %v5798 = vrot.slane %v5534, 3
        %v5799 = vsel %vm1022, %v5794, %v5798
        %v5800 = vrot.slane %v5535, 3
        %v5801 = vsel %vm1022, %v5796, %v5800
        %v5802 = vrot.slane %v5536, 3
        %v5803 = vsel %vm1022, %v5798, %v5802
        %v5804 = vrot.slane %v5537, 3
        %v5805 = vsel %vm1022, %v5800, %v5804
        %v5806 = vrot.slane %v5538, 3
        %v5807 = vsel %vm1022, %v5802, %v5806
        %v5808 = vrot.slane %v5539, 3
        %v5809 = vsel %vm1022, %v5804, %v5808
        %v5810 = vrot.slane %v5540, 3
        %v5811 = vsel %vm1022, %v5806, %v5810
        %v5812 = vrot.slane %v5541, 3
        %v5813 = vsel %vm1022, %v5808, %v5812
        %v5814 = vrot.slane %v5542, 3
        %v5815 = vsel %vm1022, %v5810, %v5814
        %v5816 = vrot.slane %v5543, 3
        %v5817 = vsel %vm1022, %v5812, %v5816
        %v5818 = vrot.slane %v5544, 3
        %v5819 = vsel %vm1022, %v5814, %v5818
        %v5820 = vrot.slane %v5545, 3
        %v5821 = vsel %vm1022, %v5816, %v5820
        %v5822 = vrot.slane %v5546, 3
        %v5823 = vsel %vm1022, %v5818, %v5822
        %v5824 = vrot.slane %v5547, 3
        %v5825 = vsel %vm1022, %v5820, %v5824
        %v5826 = vrot.slane %v5548, 3
        %v5827 = vsel %vm1022, %v5822, %v5826
        %v5828 = vrot.slane %v5549, 3
        %v5829 = vsel %vm1022, %v5824, %v5828
        %v5830 = vrot.slane %v5550, 3
        %v5831 = vsel %vm1022, %v5826, %v5830
        %v5832 = vrot.slane %v5551, 3
        %v5833 = vsel %vm1022, %v5828, %v5832
        %v5866 = vrot.slane %v5520, 4
        %v5867 = vrot.slane %v5522, 4
        %v5868 = vsel %vm1118, %v5866, %v5867
        %v5869 = vrot.slane %v5521, 4
        %v5870 = vrot.slane %v5523, 4
        %v5871 = vsel %vm1118, %v5869, %v5870
        %v5872 = vrot.slane %v5524, 4
        %v5873 = vsel %vm1118, %v5867, %v5872
        %v5874 = vrot.slane %v5525, 4
        %v5875 = vsel %vm1118, %v5870, %v5874
        %v5876 = vrot.slane %v5526, 4
        %v5877 = vsel %vm1118, %v5872, %v5876
        %v5878 = vrot.slane %v5527, 4
        %v5879 = vsel %vm1118, %v5874, %v5878
        %v5880 = vrot.slane %v5528, 4
        %v5881 = vsel %vm1118, %v5876, %v5880
        %v5882 = vrot.slane %v5529, 4
        %v5883 = vsel %vm1118, %v5878, %v5882
        %v5884 = vrot.slane %v5530, 4
        %v5885 = vsel %vm1118, %v5880, %v5884
        %v5886 = vrot.slane %v5531, 4
        %v5887 = vsel %vm1118, %v5882, %v5886
        %v5888 = vrot.slane %v5532, 4
        %v5889 = vsel %vm1118, %v5884, %v5888
        %v5890 = vrot.slane %v5533, 4
        %v5891 = vsel %vm1118, %v5886, %v5890
        %v5892 = vrot.slane %v5534, 4
        %v5893 = vsel %vm1118, %v5888, %v5892
        %v5894 = vrot.slane %v5535, 4
        %v5895 = vsel %vm1118, %v5890, %v5894
        %v5896 = vrot.slane %v5536, 4
        %v5897 = vsel %vm1118, %v5892, %v5896
        %v5898 = vrot.slane %v5537, 4
        %v5899 = vsel %vm1118, %v5894, %v5898
        %v5900 = vrot.slane %v5538, 4
        %v5901 = vsel %vm1118, %v5896, %v5900
        %v5902 = vrot.slane %v5539, 4
        %v5903 = vsel %vm1118, %v5898, %v5902
        %v5904 = vrot.slane %v5540, 4
        %v5905 = vsel %vm1118, %v5900, %v5904
        %v5906 = vrot.slane %v5541, 4
        %v5907 = vsel %vm1118, %v5902, %v5906
        %v5908 = vrot.slane %v5542, 4
        %v5909 = vsel %vm1118, %v5904, %v5908
        %v5910 = vrot.slane %v5543, 4
        %v5911 = vsel %vm1118, %v5906, %v5910
        %v5912 = vrot.slane %v5544, 4
        %v5913 = vsel %vm1118, %v5908, %v5912
        %v5914 = vrot.slane %v5545, 4
        %v5915 = vsel %vm1118, %v5910, %v5914
        %v5916 = vrot.slane %v5546, 4
        %v5917 = vsel %vm1118, %v5912, %v5916
        %v5918 = vrot.slane %v5547, 4
        %v5919 = vsel %vm1118, %v5914, %v5918
        %v5920 = vrot.slane %v5548, 4
        %v5921 = vsel %vm1118, %v5916, %v5920
        %v5922 = vrot.slane %v5549, 4
        %v5923 = vsel %vm1118, %v5918, %v5922
        %v5924 = vrot.slane %v5550, 4
        %v5925 = vsel %vm1118, %v5920, %v5924
        %v5926 = vrot.slane %v5551, 4
        %v5927 = vsel %vm1118, %v5922, %v5926
        %v5960 = vpack.c.bf16 %v5522, %v5520
        %v5961 = vpack.c.bf16 %v5523, %v5521
        %v5962 = vpack.c.bf16 %v5591, %v5586
        %v5963 = vpack.c.bf16 %v5593, %v5589
        %v5964 = vpack.c.bf16 %v5685, %v5680
        %v5965 = vpack.c.bf16 %v5687, %v5683
        %v5966 = vpack.c.bf16 %v5779, %v5774
        %v5967 = vpack.c.bf16 %v5781, %v5777
        %v5968 = vpack.c.bf16 %v5873, %v5868
        %v5969 = vpack.c.bf16 %v5875, %v5871
        %v5970 = vpack.c.bf16 %v5526, %v5524
        %v5971 = vpack.c.bf16 %v5527, %v5525
        %v5972 = vpack.c.bf16 %v5599, %v5595
        %v5973 = vpack.c.bf16 %v5601, %v5597
        %v5974 = vpack.c.bf16 %v5693, %v5689
        %v5975 = vpack.c.bf16 %v5695, %v5691
        %v5976 = vpack.c.bf16 %v5787, %v5783
        %v5977 = vpack.c.bf16 %v5789, %v5785
        %v5978 = vpack.c.bf16 %v5881, %v5877
        %v5979 = vpack.c.bf16 %v5883, %v5879
        %v5980 = vpack.c.bf16 %v5530, %v5528
        %v5981 = vpack.c.bf16 %v5531, %v5529
        %v5982 = vpack.c.bf16 %v5607, %v5603
        %v5983 = vpack.c.bf16 %v5609, %v5605
        %v5984 = vpack.c.bf16 %v5701, %v5697
        %v5985 = vpack.c.bf16 %v5703, %v5699
        %v5986 = vpack.c.bf16 %v5795, %v5791
        %v5987 = vpack.c.bf16 %v5797, %v5793
        %v5988 = vpack.c.bf16 %v5889, %v5885
        %v5989 = vpack.c.bf16 %v5891, %v5887
        %v5990 = vpack.c.bf16 %v5534, %v5532
        %v5991 = vpack.c.bf16 %v5535, %v5533
        %v5992 = vpack.c.bf16 %v5615, %v5611
        %v5993 = vpack.c.bf16 %v5617, %v5613
        %v5994 = vpack.c.bf16 %v5709, %v5705
        %v5995 = vpack.c.bf16 %v5711, %v5707
        %v5996 = vpack.c.bf16 %v5803, %v5799
        %v5997 = vpack.c.bf16 %v5805, %v5801
        %v5998 = vpack.c.bf16 %v5897, %v5893
        %v5999 = vpack.c.bf16 %v5899, %v5895
        %v6000 = vpack.c.bf16 %v5538, %v5536
        %v6001 = vpack.c.bf16 %v5539, %v5537
        %v6002 = vpack.c.bf16 %v5623, %v5619
        %v6003 = vpack.c.bf16 %v5625, %v5621
        %v6004 = vpack.c.bf16 %v5717, %v5713
        %v6005 = vpack.c.bf16 %v5719, %v5715
        %v6006 = vpack.c.bf16 %v5811, %v5807
        %v6007 = vpack.c.bf16 %v5813, %v5809
        %v6008 = vpack.c.bf16 %v5905, %v5901
        %v6009 = vpack.c.bf16 %v5907, %v5903
        %v6010 = vpack.c.bf16 %v5542, %v5540
        %v6011 = vpack.c.bf16 %v5543, %v5541
        %v6012 = vpack.c.bf16 %v5631, %v5627
        %v6013 = vpack.c.bf16 %v5633, %v5629
        %v6014 = vpack.c.bf16 %v5725, %v5721
        %v6015 = vpack.c.bf16 %v5727, %v5723
        %v6016 = vpack.c.bf16 %v5819, %v5815
        %v6017 = vpack.c.bf16 %v5821, %v5817
        %v6018 = vpack.c.bf16 %v5913, %v5909
        %v6019 = vpack.c.bf16 %v5915, %v5911
        %v6020 = vpack.c.bf16 %v5546, %v5544
        %v6021 = vpack.c.bf16 %v5547, %v5545
        %v6022 = vpack.c.bf16 %v5639, %v5635
        %v6023 = vpack.c.bf16 %v5641, %v5637
        %v6024 = vpack.c.bf16 %v5733, %v5729
        %v6025 = vpack.c.bf16 %v5735, %v5731
        %v6026 = vpack.c.bf16 %v5827, %v5823
        %v6027 = vpack.c.bf16 %v5829, %v5825
        %v6028 = vpack.c.bf16 %v5921, %v5917
        %v6029 = vpack.c.bf16 %v5923, %v5919
        %v6030 = vpack.c.bf16 %v5550, %v5548
        %v6031 = vpack.c.bf16 %v5551, %v5549
        %v6032 = vpack.c.bf16 %v5642, %v5643
        %v6033 = vpack.c.bf16 %v5644, %v5645
        %v6034 = vpack.c.bf16 %v5736, %v5737
        %v6035 = vpack.c.bf16 %v5738, %v5739
        %v6036 = vpack.c.bf16 %v5830, %v5831
        %v6037 = vpack.c.bf16 %v5832, %v5833
        %v6038 = vpack.c.bf16 %v5924, %v5925
        %v6039 = vpack.c.bf16 %v5926, %v5927
        %v6040 = vld [vmem:[%s7] sm:$0xff]
        %v6041 = vld [vmem:[%s7 + $0x8] sm:$0xff]
        %v6042 = vld [vmem:[%s7 + $0x10] sm:$0xff]
        %v6043 = vld [vmem:[%s7 + $0x18] sm:$0xff]
        %v6044 = vld [vmem:[%s7 + $0x20] sm:$0xff]
        %v6045 = vld [vmem:[%s7 + $0x28] sm:$0xff]
        %v6046 = vld [vmem:[%s7 + $0x30] sm:$0xff]
        %v6047 = vld [vmem:[%s7 + $0x38] sm:$0xff]
        %v6048 = vld [vmem:[%s7 + $0x40] sm:$0xff]
        %v6049 = vld [vmem:[%s7 + $0x48] sm:$0xff]
        %v6050 = vld [vmem:[%s7 + $0x50] sm:$0xff]
        %v6051 = vld [vmem:[%s7 + $0x58] sm:$0xff]
        %v6052 = vld [vmem:[%s7 + $0x60] sm:$0xff]
        %v6053 = vld [vmem:[%s7 + $0x68] sm:$0xff]
        %v6054 = vld [vmem:[%s7 + $0x70] sm:$0xff]
        %v6055 = vld [vmem:[%s7 + $0x78] sm:$0xff]
        %v6056 = vld [vmem:[%s7 + $0x80] sm:$0xff]
        %v6057 = vld [vmem:[%s7 + $0x88] sm:$0xff]
        %v6058 = vld [vmem:[%s7 + $0x90] sm:$0xff]
        %v6059 = vld [vmem:[%s7 + $0x98] sm:$0xff]
        %v6060 = vld [vmem:[%s7 + $0xa0] sm:$0xff]
        %v6061 = vld [vmem:[%s7 + $0xa8] sm:$0xff]
        %v6062 = vld [vmem:[%s7 + $0xb0] sm:$0xff]
        %v6063 = vld [vmem:[%s7 + $0xb8] sm:$0xff]
        %v6064 = vld [vmem:[%s7 + $0xc0] sm:$0xff]
        %v6065 = vld [vmem:[%s7 + $0xc8] sm:$0xff]
        %v6066 = vld [vmem:[%s7 + $0xd0] sm:$0xff]
        %v6067 = vld [vmem:[%s7 + $0xd8] sm:$0xff]
        %v6068 = vld [vmem:[%s7 + $0xe0] sm:$0xff]
        %v6069 = vld [vmem:[%s7 + $0xe8] sm:$0xff]
        %v6070 = vld [vmem:[%s7 + $0xf0] sm:$0xff]
        %v6071 = vld [vmem:[%s7 + $0xf8] sm:$0xff]
        %v6072 = vld [vmem:[%s7 + $0x100] sm:$0xff]
        %v6073 = vld [vmem:[%s7 + $0x108] sm:$0xff]
        %v6074 = vld [vmem:[%s7 + $0x110] sm:$0xff]
        %v6075 = vld [vmem:[%s7 + $0x118] sm:$0xff]
        %v6076 = vld [vmem:[%s7 + $0x120] sm:$0xff]
        %v6077 = vld [vmem:[%s7 + $0x128] sm:$0xff]
        %v6078 = vld [vmem:[%s7 + $0x130] sm:$0xff]
        %v6079 = vld [vmem:[%s7 + $0x138] sm:$0xff]
        %v6080 = vld [vmem:[%s7 + $0x140] sm:$0xff]
        %v6081 = vld [vmem:[%s7 + $0x148] sm:$0xff]
        %v6082 = vld [vmem:[%s7 + $0x150] sm:$0xff]
        %v6083 = vld [vmem:[%s7 + $0x158] sm:$0xff]
        %v6084 = vld [vmem:[%s7 + $0x160] sm:$0xff]
        %v6085 = vld [vmem:[%s7 + $0x168] sm:$0xff]
        %v6086 = vld [vmem:[%s7 + $0x170] sm:$0xff]
        %v6087 = vld [vmem:[%s7 + $0x178] sm:$0xff]
        %v6088 = vld [vmem:[%s7 + $0x180] sm:$0xff]
        %v6089 = vld [vmem:[%s7 + $0x188] sm:$0xff]
        %v6090 = vld [vmem:[%s7 + $0x190] sm:$0xff]
        %v6091 = vld [vmem:[%s7 + $0x198] sm:$0xff]
        %v6092 = vld [vmem:[%s7 + $0x1a0] sm:$0xff]
        %v6093 = vld [vmem:[%s7 + $0x1a8] sm:$0xff]
        %v6094 = vld [vmem:[%s7 + $0x1b0] sm:$0xff]
        %v6095 = vld [vmem:[%s7 + $0x1b8] sm:$0xff]
        %v6096 = vld [vmem:[%s7 + $0x1c0] sm:$0xff]
        %v6097 = vld [vmem:[%s7 + $0x1c8] sm:$0xff]
        %v6098 = vld [vmem:[%s7 + $0x1d0] sm:$0xff]
        %v6099 = vld [vmem:[%s7 + $0x1d8] sm:$0xff]
        %v6100 = vld [vmem:[%s7 + $0x1e0] sm:$0xff]
        %v6101 = vld [vmem:[%s7 + $0x1e8] sm:$0xff]
        %v6102 = vld [vmem:[%s7 + $0x1f0] sm:$0xff]
        %v6103 = vld [vmem:[%s7 + $0x1f8] sm:$0xff]
        %v6104 = vld [vmem:[%s7 + $0x200] sm:$0xff]
        %v6105 = vld [vmem:[%s7 + $0x208] sm:$0xff]
        %v6106 = vld [vmem:[%s7 + $0x210] sm:$0xff]
        %v6107 = vld [vmem:[%s7 + $0x218] sm:$0xff]
        %v6108 = vld [vmem:[%s7 + $0x220] sm:$0xff]
        %v6109 = vld [vmem:[%s7 + $0x228] sm:$0xff]
        %v6110 = vld [vmem:[%s7 + $0x230] sm:$0xff]
        %v6111 = vld [vmem:[%s7 + $0x238] sm:$0xff]
        %v6112 = vld [vmem:[%s7 + $0x240] sm:$0xff]
        %v6113 = vld [vmem:[%s7 + $0x248] sm:$0xff]
        %v6114 = vld [vmem:[%s7 + $0x250] sm:$0xff]
        %v6115 = vld [vmem:[%s7 + $0x258] sm:$0xff]
        %v6116 = vld [vmem:[%s7 + $0x260] sm:$0xff]
        %v6117 = vld [vmem:[%s7 + $0x268] sm:$0xff]
        %v6118 = vld [vmem:[%s7 + $0x270] sm:$0xff]
        %v6119 = vld [vmem:[%s7 + $0x278] sm:$0xff]
        %v6120 = vld [vmem:[%s7 + $0x280] sm:$0xff]
        %v6121 = vld [vmem:[%s7 + $0x288] sm:$0xff]
        %v6122 = vld [vmem:[%s7 + $0x290] sm:$0xff]
        %v6123 = vld [vmem:[%s7 + $0x298] sm:$0xff]
        %v6124 = vld [vmem:[%s7 + $0x2a0] sm:$0xff]
        %v6125 = vld [vmem:[%s7 + $0x2a8] sm:$0xff]
        %v6126 = vld [vmem:[%s7 + $0x2b0] sm:$0xff]
        %v6127 = vld [vmem:[%s7 + $0x2b8] sm:$0xff]
        %v6128 = vld [vmem:[%s7 + $0x2c0] sm:$0xff]
        %v6129 = vld [vmem:[%s7 + $0x2c8] sm:$0xff]
        %v6130 = vld [vmem:[%s7 + $0x2d0] sm:$0xff]
        %v6131 = vld [vmem:[%s7 + $0x2d8] sm:$0xff]
        %v6132 = vld [vmem:[%s7 + $0x2e0] sm:$0xff]
        %v6133 = vld [vmem:[%s7 + $0x2e8] sm:$0xff]
        %v6134 = vld [vmem:[%s7 + $0x2f0] sm:$0xff]
        %v6135 = vld [vmem:[%s7 + $0x2f8] sm:$0xff]
        %v6136 = vld [vmem:[%s7 + $0x300] sm:$0xff]
        %v6137 = vld [vmem:[%s7 + $0x308] sm:$0xff]
        %v6138 = vld [vmem:[%s7 + $0x310] sm:$0xff]
        %v6139 = vld [vmem:[%s7 + $0x318] sm:$0xff]
        %v6140 = vld [vmem:[%s7 + $0x320] sm:$0xff]
        %v6141 = vld [vmem:[%s7 + $0x328] sm:$0xff]
        %v6142 = vld [vmem:[%s7 + $0x330] sm:$0xff]
        %v6143 = vld [vmem:[%s7 + $0x338] sm:$0xff]
        %v6144 = vld [vmem:[%s7 + $0x340] sm:$0xff]
        %v6145 = vld [vmem:[%s7 + $0x348] sm:$0xff]
        %v6146 = vld [vmem:[%s7 + $0x350] sm:$0xff]
        %v6147 = vld [vmem:[%s7 + $0x358] sm:$0xff]
        %v6148 = vld [vmem:[%s7 + $0x360] sm:$0xff]
        %v6149 = vld [vmem:[%s7 + $0x368] sm:$0xff]
        %v6150 = vld [vmem:[%s7 + $0x370] sm:$0xff]
        %v6151 = vld [vmem:[%s7 + $0x378] sm:$0xff]
        %v6152 = vld [vmem:[%s7 + $0x380] sm:$0xff]
        %v6153 = vld [vmem:[%s7 + $0x388] sm:$0xff]
        %v6154 = vld [vmem:[%s7 + $0x390] sm:$0xff]
        %v6155 = vld [vmem:[%s7 + $0x398] sm:$0xff]
        %v6156 = vld [vmem:[%s7 + $0x3a0] sm:$0xff]
        %v6157 = vld [vmem:[%s7 + $0x3a8] sm:$0xff]
        %v6158 = vld [vmem:[%s7 + $0x3b0] sm:$0xff]
        %v6159 = vld [vmem:[%s7 + $0x3b8] sm:$0xff]
        %v6160 = vld [vmem:[%s7 + $0x3c0] sm:$0xff]
        %v6161 = vld [vmem:[%s7 + $0x3c8] sm:$0xff]
        %v6162 = vld [vmem:[%s7 + $0x3d0] sm:$0xff]
        %v6163 = vld [vmem:[%s7 + $0x3d8] sm:$0xff]
        %v6164 = vld [vmem:[%s7 + $0x3e0] sm:$0xff]
        %v6165 = vld [vmem:[%s7 + $0x3e8] sm:$0xff]
        %v6166 = vld [vmem:[%s7 + $0x3f0] sm:$0xff]
        %v6167 = vld [vmem:[%s7 + $0x3f8] sm:$0xff]
        %v6168 = vld [vmem:[%s7 + $0x400] sm:$0xff]
        %v6169 = vld [vmem:[%s7 + $0x408] sm:$0xff]
        %v6170 = vld [vmem:[%s7 + $0x410] sm:$0xff]
        %v6171 = vld [vmem:[%s7 + $0x418] sm:$0xff]
        %v6172 = vld [vmem:[%s7 + $0x420] sm:$0xff]
        %v6173 = vld [vmem:[%s7 + $0x428] sm:$0xff]
        %v6174 = vld [vmem:[%s7 + $0x430] sm:$0xff]
        %v6175 = vld [vmem:[%s7 + $0x438] sm:$0xff]
        %v6176 = vld [vmem:[%s7 + $0x440] sm:$0xff]
        %v6177 = vld [vmem:[%s7 + $0x448] sm:$0xff]
        %v6178 = vld [vmem:[%s7 + $0x450] sm:$0xff]
        %v6179 = vld [vmem:[%s7 + $0x458] sm:$0xff]
        %v6180 = vld [vmem:[%s7 + $0x460] sm:$0xff]
        %v6181 = vld [vmem:[%s7 + $0x468] sm:$0xff]
        %v6182 = vld [vmem:[%s7 + $0x470] sm:$0xff]
        %v6183 = vld [vmem:[%s7 + $0x478] sm:$0xff]
        %v6184 = vld [vmem:[%s7 + $0x480] sm:$0xff]
        %v6185 = vld [vmem:[%s7 + $0x488] sm:$0xff]
        %v6186 = vld [vmem:[%s7 + $0x490] sm:$0xff]
        %v6187 = vld [vmem:[%s7 + $0x498] sm:$0xff]
        %v6188 = vld [vmem:[%s7 + $0x4a0] sm:$0xff]
        %v6189 = vld [vmem:[%s7 + $0x4a8] sm:$0xff]
        %v6190 = vld [vmem:[%s7 + $0x4b0] sm:$0xff]
        %v6191 = vld [vmem:[%s7 + $0x4b8] sm:$0xff]
        %v6192 = vld [vmem:[%s7 + $0x4c0] sm:$0xff]
        %v6193 = vld [vmem:[%s7 + $0x4c8] sm:$0xff]
        %v6194 = vld [vmem:[%s7 + $0x4d0] sm:$0xff]
        %v6195 = vld [vmem:[%s7 + $0x4d8] sm:$0xff]
        %v6196 = vld [vmem:[%s7 + $0x4e0] sm:$0xff]
        %v6197 = vld [vmem:[%s7 + $0x4e8] sm:$0xff]
        %v6198 = vld [vmem:[%s7 + $0x4f0] sm:$0xff]
        %v6199 = vld [vmem:[%s7 + $0x4f8] sm:$0xff]
        %v6200 = vld [vmem:[%s8] sm:$0x3]
        %v6202 = vperm.slane %v6200, 0
        %v6203 = vperm.slane %v6200, 1
        %v6366 = vunpack.c.l.b16 %v6040
        %v6367 = vunpack.c.h.b16 %v6040
        %v6368 = vunpack.c.l.b16 %v6041
        %v6369 = vunpack.c.h.b16 %v6041
        %v6370 = vunpack.c.l.b16 %v6042
        %v6371 = vunpack.c.h.b16 %v6042
        %v6372 = vunpack.c.l.b16 %v6043
        %v6373 = vunpack.c.h.b16 %v6043
        %v6374 = vunpack.c.l.b16 %v6044
        %v6375 = vunpack.c.h.b16 %v6044
        %v6376 = vunpack.c.l.b16 %v6045
        %v6377 = vunpack.c.h.b16 %v6045
        %v6378 = vunpack.c.l.b16 %v6046
        %v6379 = vunpack.c.h.b16 %v6046
        %v6380 = vunpack.c.l.b16 %v6047
        %v6381 = vunpack.c.h.b16 %v6047
        %v6382 = vunpack.c.l.b16 %v6048
        %v6383 = vunpack.c.h.b16 %v6048
        %v6384 = vunpack.c.l.b16 %v6049
        %v6385 = vunpack.c.h.b16 %v6049
        %v6386 = vunpack.c.l.b16 %v6050
        %v6387 = vunpack.c.h.b16 %v6050
        %v6388 = vunpack.c.l.b16 %v6051
        %v6389 = vunpack.c.h.b16 %v6051
        %v6390 = vunpack.c.l.b16 %v6052
        %v6391 = vunpack.c.h.b16 %v6052
        %v6392 = vunpack.c.l.b16 %v6053
        %v6393 = vunpack.c.h.b16 %v6053
        %v6394 = vunpack.c.l.b16 %v6054
        %v6395 = vunpack.c.h.b16 %v6054
        %v6396 = vunpack.c.l.b16 %v6055
        %v6397 = vunpack.c.h.b16 %v6055
        %v6398 = vunpack.c.l.b16 %v6056
        %v6399 = vunpack.c.h.b16 %v6056
        %v6400 = vunpack.c.l.b16 %v6057
        %v6401 = vunpack.c.h.b16 %v6057
        %v6402 = vunpack.c.l.b16 %v6058
        %v6403 = vunpack.c.h.b16 %v6058
        %v6404 = vunpack.c.l.b16 %v6059
        %v6405 = vunpack.c.h.b16 %v6059
        %v6406 = vunpack.c.l.b16 %v6060
        %v6407 = vunpack.c.h.b16 %v6060
        %v6408 = vunpack.c.l.b16 %v6061
        %v6409 = vunpack.c.h.b16 %v6061
        %v6410 = vunpack.c.l.b16 %v6062
        %v6411 = vunpack.c.h.b16 %v6062
        %v6412 = vunpack.c.l.b16 %v6063
        %v6413 = vunpack.c.h.b16 %v6063
        %v6414 = vunpack.c.l.b16 %v6064
        %v6415 = vunpack.c.h.b16 %v6064
        %v6416 = vunpack.c.l.b16 %v6065
        %v6417 = vunpack.c.h.b16 %v6065
        %v6418 = vunpack.c.l.b16 %v6066
        %v6419 = vunpack.c.h.b16 %v6066
        %v6420 = vunpack.c.l.b16 %v6067
        %v6421 = vunpack.c.h.b16 %v6067
        %v6422 = vunpack.c.l.b16 %v6068
        %v6423 = vunpack.c.h.b16 %v6068
        %v6424 = vunpack.c.l.b16 %v6069
        %v6425 = vunpack.c.h.b16 %v6069
        %v6426 = vunpack.c.l.b16 %v6070
        %v6427 = vunpack.c.h.b16 %v6070
        %v6428 = vunpack.c.l.b16 %v6071
        %v6429 = vunpack.c.h.b16 %v6071
        %v6430 = vunpack.c.l.b16 %v6072
        %v6431 = vunpack.c.h.b16 %v6072
        %v6432 = vunpack.c.l.b16 %v6073
        %v6433 = vunpack.c.h.b16 %v6073
        %v6434 = vunpack.c.l.b16 %v6074
        %v6435 = vunpack.c.h.b16 %v6074
        %v6436 = vunpack.c.l.b16 %v6075
        %v6437 = vunpack.c.h.b16 %v6075
        %v6438 = vunpack.c.l.b16 %v6076
        %v6439 = vunpack.c.h.b16 %v6076
        %v6440 = vunpack.c.l.b16 %v6077
        %v6441 = vunpack.c.h.b16 %v6077
        %v6442 = vunpack.c.l.b16 %v6078
        %v6443 = vunpack.c.h.b16 %v6078
        %v6444 = vunpack.c.l.b16 %v6079
        %v6445 = vunpack.c.h.b16 %v6079
        %v6446 = vunpack.c.l.b16 %v6080
        %v6447 = vunpack.c.h.b16 %v6080
        %v6448 = vunpack.c.l.b16 %v6081
        %v6449 = vunpack.c.h.b16 %v6081
        %v6450 = vunpack.c.l.b16 %v6082
        %v6451 = vunpack.c.h.b16 %v6082
        %v6452 = vunpack.c.l.b16 %v6083
        %v6453 = vunpack.c.h.b16 %v6083
        %v6454 = vunpack.c.l.b16 %v6084
        %v6455 = vunpack.c.h.b16 %v6084
        %v6456 = vunpack.c.l.b16 %v6085
        %v6457 = vunpack.c.h.b16 %v6085
        %v6458 = vunpack.c.l.b16 %v6086
        %v6459 = vunpack.c.h.b16 %v6086
        %v6460 = vunpack.c.l.b16 %v6087
        %v6461 = vunpack.c.h.b16 %v6087
        %v6462 = vunpack.c.l.b16 %v6088
        %v6463 = vunpack.c.h.b16 %v6088
        %v6464 = vunpack.c.l.b16 %v6089
        %v6465 = vunpack.c.h.b16 %v6089
        %v6466 = vunpack.c.l.b16 %v6090
        %v6467 = vunpack.c.h.b16 %v6090
        %v6468 = vunpack.c.l.b16 %v6091
        %v6469 = vunpack.c.h.b16 %v6091
        %v6470 = vunpack.c.l.b16 %v6092
        %v6471 = vunpack.c.h.b16 %v6092
        %v6472 = vunpack.c.l.b16 %v6093
        %v6473 = vunpack.c.h.b16 %v6093
        %v6474 = vunpack.c.l.b16 %v6094
        %v6475 = vunpack.c.h.b16 %v6094
        %v6476 = vunpack.c.l.b16 %v6095
        %v6477 = vunpack.c.h.b16 %v6095
        %v6478 = vunpack.c.l.b16 %v6096
        %v6479 = vunpack.c.h.b16 %v6096
        %v6480 = vunpack.c.l.b16 %v6097
        %v6481 = vunpack.c.h.b16 %v6097
        %v6482 = vunpack.c.l.b16 %v6098
        %v6483 = vunpack.c.h.b16 %v6098
        %v6484 = vunpack.c.l.b16 %v6099
        %v6485 = vunpack.c.h.b16 %v6099
        %v6486 = vunpack.c.l.b16 %v6100
        %v6487 = vunpack.c.h.b16 %v6100
        %v6488 = vunpack.c.l.b16 %v6101
        %v6489 = vunpack.c.h.b16 %v6101
        %v6490 = vunpack.c.l.b16 %v6102
        %v6491 = vunpack.c.h.b16 %v6102
        %v6492 = vunpack.c.l.b16 %v6103
        %v6493 = vunpack.c.h.b16 %v6103
        %v6494 = vunpack.c.l.b16 %v6104
        %v6495 = vunpack.c.h.b16 %v6104
        %v6496 = vunpack.c.l.b16 %v6105
        %v6497 = vunpack.c.h.b16 %v6105
        %v6498 = vunpack.c.l.b16 %v6106
        %v6499 = vunpack.c.h.b16 %v6106
        %v6500 = vunpack.c.l.b16 %v6107
        %v6501 = vunpack.c.h.b16 %v6107
        %v6502 = vunpack.c.l.b16 %v6108
        %v6503 = vunpack.c.h.b16 %v6108
        %v6504 = vunpack.c.l.b16 %v6109
        %v6505 = vunpack.c.h.b16 %v6109
        %v6506 = vunpack.c.l.b16 %v6110
        %v6507 = vunpack.c.h.b16 %v6110
        %v6508 = vunpack.c.l.b16 %v6111
        %v6509 = vunpack.c.h.b16 %v6111
        %v6510 = vunpack.c.l.b16 %v6112
        %v6511 = vunpack.c.h.b16 %v6112
        %v6512 = vunpack.c.l.b16 %v6113
        %v6513 = vunpack.c.h.b16 %v6113
        %v6514 = vunpack.c.l.b16 %v6114
        %v6515 = vunpack.c.h.b16 %v6114
        %v6516 = vunpack.c.l.b16 %v6115
        %v6517 = vunpack.c.h.b16 %v6115
        %v6518 = vunpack.c.l.b16 %v6116
        %v6519 = vunpack.c.h.b16 %v6116
        %v6520 = vunpack.c.l.b16 %v6117
        %v6521 = vunpack.c.h.b16 %v6117
        %v6522 = vunpack.c.l.b16 %v6118
        %v6523 = vunpack.c.h.b16 %v6118
        %v6524 = vunpack.c.l.b16 %v6119
        %v6525 = vunpack.c.h.b16 %v6119
        %v6526 = vunpack.c.l.b16 %v6120
        %v6527 = vunpack.c.h.b16 %v6120
        %v6528 = vunpack.c.l.b16 %v6121
        %v6529 = vunpack.c.h.b16 %v6121
        %v6530 = vunpack.c.l.b16 %v6122
        %v6531 = vunpack.c.h.b16 %v6122
        %v6532 = vunpack.c.l.b16 %v6123
        %v6533 = vunpack.c.h.b16 %v6123
        %v6534 = vunpack.c.l.b16 %v6124
        %v6535 = vunpack.c.h.b16 %v6124
        %v6536 = vunpack.c.l.b16 %v6125
        %v6537 = vunpack.c.h.b16 %v6125
        %v6538 = vunpack.c.l.b16 %v6126
        %v6539 = vunpack.c.h.b16 %v6126
        %v6540 = vunpack.c.l.b16 %v6127
        %v6541 = vunpack.c.h.b16 %v6127
        %v6542 = vunpack.c.l.b16 %v6128
        %v6543 = vunpack.c.h.b16 %v6128
        %v6544 = vunpack.c.l.b16 %v6129
        %v6545 = vunpack.c.h.b16 %v6129
        %v6546 = vunpack.c.l.b16 %v6130
        %v6547 = vunpack.c.h.b16 %v6130
        %v6548 = vunpack.c.l.b16 %v6131
        %v6549 = vunpack.c.h.b16 %v6131
        %v6550 = vunpack.c.l.b16 %v6132
        %v6551 = vunpack.c.h.b16 %v6132
        %v6552 = vunpack.c.l.b16 %v6133
        %v6553 = vunpack.c.h.b16 %v6133
        %v6554 = vunpack.c.l.b16 %v6134
        %v6555 = vunpack.c.h.b16 %v6134
        %v6556 = vunpack.c.l.b16 %v6135
        %v6557 = vunpack.c.h.b16 %v6135
        %v6558 = vunpack.c.l.b16 %v6136
        %v6559 = vunpack.c.h.b16 %v6136
        %v6560 = vunpack.c.l.b16 %v6137
        %v6561 = vunpack.c.h.b16 %v6137
        %v6562 = vunpack.c.l.b16 %v6138
        %v6563 = vunpack.c.h.b16 %v6138
        %v6564 = vunpack.c.l.b16 %v6139
        %v6565 = vunpack.c.h.b16 %v6139
        %v6566 = vunpack.c.l.b16 %v6140
        %v6567 = vunpack.c.h.b16 %v6140
        %v6568 = vunpack.c.l.b16 %v6141
        %v6569 = vunpack.c.h.b16 %v6141
        %v6570 = vunpack.c.l.b16 %v6142
        %v6571 = vunpack.c.h.b16 %v6142
        %v6572 = vunpack.c.l.b16 %v6143
        %v6573 = vunpack.c.h.b16 %v6143
        %v6574 = vunpack.c.l.b16 %v6144
        %v6575 = vunpack.c.h.b16 %v6144
        %v6576 = vunpack.c.l.b16 %v6145
        %v6577 = vunpack.c.h.b16 %v6145
        %v6578 = vunpack.c.l.b16 %v6146
        %v6579 = vunpack.c.h.b16 %v6146
        %v6580 = vunpack.c.l.b16 %v6147
        %v6581 = vunpack.c.h.b16 %v6147
        %v6582 = vunpack.c.l.b16 %v6148
        %v6583 = vunpack.c.h.b16 %v6148
        %v6584 = vunpack.c.l.b16 %v6149
        %v6585 = vunpack.c.h.b16 %v6149
        %v6586 = vunpack.c.l.b16 %v6150
        %v6587 = vunpack.c.h.b16 %v6150
        %v6588 = vunpack.c.l.b16 %v6151
        %v6589 = vunpack.c.h.b16 %v6151
        %v6590 = vunpack.c.l.b16 %v6152
        %v6591 = vunpack.c.h.b16 %v6152
        %v6592 = vunpack.c.l.b16 %v6153
        %v6593 = vunpack.c.h.b16 %v6153
        %v6594 = vunpack.c.l.b16 %v6154
        %v6595 = vunpack.c.h.b16 %v6154
        %v6596 = vunpack.c.l.b16 %v6155
        %v6597 = vunpack.c.h.b16 %v6155
        %v6598 = vunpack.c.l.b16 %v6156
        %v6599 = vunpack.c.h.b16 %v6156
        %v6600 = vunpack.c.l.b16 %v6157
        %v6601 = vunpack.c.h.b16 %v6157
        %v6602 = vunpack.c.l.b16 %v6158
        %v6603 = vunpack.c.h.b16 %v6158
        %v6604 = vunpack.c.l.b16 %v6159
        %v6605 = vunpack.c.h.b16 %v6159
        %v6606 = vunpack.c.l.b16 %v6160
        %v6607 = vunpack.c.h.b16 %v6160
        %v6608 = vunpack.c.l.b16 %v6161
        %v6609 = vunpack.c.h.b16 %v6161
        %v6610 = vunpack.c.l.b16 %v6162
        %v6611 = vunpack.c.h.b16 %v6162
        %v6612 = vunpack.c.l.b16 %v6163
        %v6613 = vunpack.c.h.b16 %v6163
        %v6614 = vunpack.c.l.b16 %v6164
        %v6615 = vunpack.c.h.b16 %v6164
        %v6616 = vunpack.c.l.b16 %v6165
        %v6617 = vunpack.c.h.b16 %v6165
        %v6618 = vunpack.c.l.b16 %v6166
        %v6619 = vunpack.c.h.b16 %v6166
        %v6620 = vunpack.c.l.b16 %v6167
        %v6621 = vunpack.c.h.b16 %v6167
        %v6622 = vunpack.c.l.b16 %v6168
        %v6623 = vunpack.c.h.b16 %v6168
        %v6624 = vunpack.c.l.b16 %v6169
        %v6625 = vunpack.c.h.b16 %v6169
        %v6626 = vunpack.c.l.b16 %v6170
        %v6627 = vunpack.c.h.b16 %v6170
        %v6628 = vunpack.c.l.b16 %v6171
        %v6629 = vunpack.c.h.b16 %v6171
        %v6630 = vunpack.c.l.b16 %v6172
        %v6631 = vunpack.c.h.b16 %v6172
        %v6632 = vunpack.c.l.b16 %v6173
        %v6633 = vunpack.c.h.b16 %v6173
        %v6634 = vunpack.c.l.b16 %v6174
        %v6635 = vunpack.c.h.b16 %v6174
        %v6636 = vunpack.c.l.b16 %v6175
        %v6637 = vunpack.c.h.b16 %v6175
        %v6638 = vunpack.c.l.b16 %v6176
        %v6639 = vunpack.c.h.b16 %v6176
        %v6640 = vunpack.c.l.b16 %v6177
        %v6641 = vunpack.c.h.b16 %v6177
        %v6642 = vunpack.c.l.b16 %v6178
        %v6643 = vunpack.c.h.b16 %v6178
        %v6644 = vunpack.c.l.b16 %v6179
        %v6645 = vunpack.c.h.b16 %v6179
        %v6646 = vunpack.c.l.b16 %v6180
        %v6647 = vunpack.c.h.b16 %v6180
        %v6648 = vunpack.c.l.b16 %v6181
        %v6649 = vunpack.c.h.b16 %v6181
        %v6650 = vunpack.c.l.b16 %v6182
        %v6651 = vunpack.c.h.b16 %v6182
        %v6652 = vunpack.c.l.b16 %v6183
        %v6653 = vunpack.c.h.b16 %v6183
        %v6654 = vunpack.c.l.b16 %v6184
        %v6655 = vunpack.c.h.b16 %v6184
        %v6656 = vunpack.c.l.b16 %v6185
        %v6657 = vunpack.c.h.b16 %v6185
        %v6658 = vunpack.c.l.b16 %v6186
        %v6659 = vunpack.c.h.b16 %v6186
        %v6660 = vunpack.c.l.b16 %v6187
        %v6661 = vunpack.c.h.b16 %v6187
        %v6662 = vunpack.c.l.b16 %v6188
        %v6663 = vunpack.c.h.b16 %v6188
        %v6664 = vunpack.c.l.b16 %v6189
        %v6665 = vunpack.c.h.b16 %v6189
        %v6666 = vunpack.c.l.b16 %v6190
        %v6667 = vunpack.c.h.b16 %v6190
        %v6668 = vunpack.c.l.b16 %v6191
        %v6669 = vunpack.c.h.b16 %v6191
        %v6670 = vunpack.c.l.b16 %v6192
        %v6671 = vunpack.c.h.b16 %v6192
        %v6672 = vunpack.c.l.b16 %v6193
        %v6673 = vunpack.c.h.b16 %v6193
        %v6674 = vunpack.c.l.b16 %v6194
        %v6675 = vunpack.c.h.b16 %v6194
        %v6676 = vunpack.c.l.b16 %v6195
        %v6677 = vunpack.c.h.b16 %v6195
        %v6678 = vunpack.c.l.b16 %v6196
        %v6679 = vunpack.c.h.b16 %v6196
        %v6680 = vunpack.c.l.b16 %v6197
        %v6681 = vunpack.c.h.b16 %v6197
        %v6682 = vunpack.c.l.b16 %v6198
        %v6683 = vunpack.c.h.b16 %v6198
        %v6684 = vunpack.c.l.b16 %v6199
        %v6685 = vunpack.c.h.b16 %v6199
        %v6686 = vpack.c.b16 %v6368, %v6366
        %v6687 = vpack.c.b16 %v6369, %v6367
        %v6688 = vpack.c.b16 %v6372, %v6370
        %v6689 = vpack.c.b16 %v6373, %v6371
        %v6690 = vpack.c.b16 %v6376, %v6374
        %v6691 = vpack.c.b16 %v6377, %v6375
        %v6692 = vpack.c.b16 %v6380, %v6378
        %v6693 = vpack.c.b16 %v6381, %v6379
        %v6694 = vpack.c.b16 %v6384, %v6382
        %v6695 = vpack.c.b16 %v6385, %v6383
        %v6696 = vpack.c.b16 %v6388, %v6386
        %v6697 = vpack.c.b16 %v6389, %v6387
        %v6698 = vpack.c.b16 %v6392, %v6390
        %v6699 = vpack.c.b16 %v6393, %v6391
        %v6700 = vpack.c.b16 %v6396, %v6394
        %v6701 = vpack.c.b16 %v6397, %v6395
        %v6702 = vpack.c.b16 %v6400, %v6398
        %v6703 = vpack.c.b16 %v6401, %v6399
        %v6704 = vpack.c.b16 %v6404, %v6402
        %v6705 = vpack.c.b16 %v6405, %v6403
        %v6706 = vpack.c.b16 %v6408, %v6406
        %v6707 = vpack.c.b16 %v6409, %v6407
        %v6708 = vpack.c.b16 %v6412, %v6410
        %v6709 = vpack.c.b16 %v6413, %v6411
        %v6710 = vpack.c.b16 %v6416, %v6414
        %v6711 = vpack.c.b16 %v6417, %v6415
        %v6712 = vpack.c.b16 %v6420, %v6418
        %v6713 = vpack.c.b16 %v6421, %v6419
        %v6714 = vpack.c.b16 %v6424, %v6422
        %v6715 = vpack.c.b16 %v6425, %v6423
        %v6716 = vpack.c.b16 %v6428, %v6426
        %v6717 = vpack.c.b16 %v6429, %v6427
        %v6718 = vpack.c.b16 %v6432, %v6430
        %v6719 = vpack.c.b16 %v6433, %v6431
        %v6720 = vpack.c.b16 %v6436, %v6434
        %v6721 = vpack.c.b16 %v6437, %v6435
        %v6722 = vpack.c.b16 %v6440, %v6438
        %v6723 = vpack.c.b16 %v6441, %v6439
        %v6724 = vpack.c.b16 %v6444, %v6442
        %v6725 = vpack.c.b16 %v6445, %v6443
        %v6726 = vpack.c.b16 %v6448, %v6446
        %v6727 = vpack.c.b16 %v6449, %v6447
        %v6728 = vpack.c.b16 %v6452, %v6450
        %v6729 = vpack.c.b16 %v6453, %v6451
        %v6730 = vpack.c.b16 %v6456, %v6454
        %v6731 = vpack.c.b16 %v6457, %v6455
        %v6732 = vpack.c.b16 %v6460, %v6458
        %v6733 = vpack.c.b16 %v6461, %v6459
        %v6734 = vpack.c.b16 %v6464, %v6462
        %v6735 = vpack.c.b16 %v6465, %v6463
        %v6736 = vpack.c.b16 %v6468, %v6466
        %v6737 = vpack.c.b16 %v6469, %v6467
        %v6738 = vpack.c.b16 %v6472, %v6470
        %v6739 = vpack.c.b16 %v6473, %v6471
        %v6740 = vpack.c.b16 %v6476, %v6474
        %v6741 = vpack.c.b16 %v6477, %v6475
        %v6742 = vpack.c.b16 %v6480, %v6478
        %v6743 = vpack.c.b16 %v6481, %v6479
        %v6744 = vpack.c.b16 %v6484, %v6482
        %v6745 = vpack.c.b16 %v6485, %v6483
        %v6746 = vpack.c.b16 %v6488, %v6486
        %v6747 = vpack.c.b16 %v6489, %v6487
        %v6748 = vpack.c.b16 %v6492, %v6490
        %v6749 = vpack.c.b16 %v6493, %v6491
        %v6750 = vpack.c.b16 %v6496, %v6494
        %v6751 = vpack.c.b16 %v6497, %v6495
        %v6752 = vpack.c.b16 %v6500, %v6498
        %v6753 = vpack.c.b16 %v6501, %v6499
        %v6754 = vpack.c.b16 %v6504, %v6502
        %v6755 = vpack.c.b16 %v6505, %v6503
        %v6756 = vpack.c.b16 %v6508, %v6506
        %v6757 = vpack.c.b16 %v6509, %v6507
        %v6758 = vpack.c.b16 %v6512, %v6510
        %v6759 = vpack.c.b16 %v6513, %v6511
        %v6760 = vpack.c.b16 %v6516, %v6514
        %v6761 = vpack.c.b16 %v6517, %v6515
        %v6762 = vpack.c.b16 %v6520, %v6518
        %v6763 = vpack.c.b16 %v6521, %v6519
        %v6764 = vpack.c.b16 %v6524, %v6522
        %v6765 = vpack.c.b16 %v6525, %v6523
        %v6766 = vpack.c.b16 %v6528, %v6526
        %v6767 = vpack.c.b16 %v6529, %v6527
        %v6768 = vpack.c.b16 %v6532, %v6530
        %v6769 = vpack.c.b16 %v6533, %v6531
        %v6770 = vpack.c.b16 %v6536, %v6534
        %v6771 = vpack.c.b16 %v6537, %v6535
        %v6772 = vpack.c.b16 %v6540, %v6538
        %v6773 = vpack.c.b16 %v6541, %v6539
        %v6774 = vpack.c.b16 %v6544, %v6542
        %v6775 = vpack.c.b16 %v6545, %v6543
        %v6776 = vpack.c.b16 %v6548, %v6546
        %v6777 = vpack.c.b16 %v6549, %v6547
        %v6778 = vpack.c.b16 %v6552, %v6550
        %v6779 = vpack.c.b16 %v6553, %v6551
        %v6780 = vpack.c.b16 %v6556, %v6554
        %v6781 = vpack.c.b16 %v6557, %v6555
        %v6782 = vpack.c.b16 %v6560, %v6558
        %v6783 = vpack.c.b16 %v6561, %v6559
        %v6784 = vpack.c.b16 %v6564, %v6562
        %v6785 = vpack.c.b16 %v6565, %v6563
        %v6786 = vpack.c.b16 %v6568, %v6566
        %v6787 = vpack.c.b16 %v6569, %v6567
        %v6788 = vpack.c.b16 %v6572, %v6570
        %v6789 = vpack.c.b16 %v6573, %v6571
        %v6790 = vpack.c.b16 %v6576, %v6574
        %v6791 = vpack.c.b16 %v6577, %v6575
        %v6792 = vpack.c.b16 %v6580, %v6578
        %v6793 = vpack.c.b16 %v6581, %v6579
        %v6794 = vpack.c.b16 %v6584, %v6582
        %v6795 = vpack.c.b16 %v6585, %v6583
        %v6796 = vpack.c.b16 %v6588, %v6586
        %v6797 = vpack.c.b16 %v6589, %v6587
        %v6798 = vpack.c.b16 %v6592, %v6590
        %v6799 = vpack.c.b16 %v6593, %v6591
        %v6800 = vpack.c.b16 %v6596, %v6594
        %v6801 = vpack.c.b16 %v6597, %v6595
        %v6802 = vpack.c.b16 %v6600, %v6598
        %v6803 = vpack.c.b16 %v6601, %v6599
        %v6804 = vpack.c.b16 %v6604, %v6602
        %v6805 = vpack.c.b16 %v6605, %v6603
        %v6806 = vpack.c.b16 %v6608, %v6606
        %v6807 = vpack.c.b16 %v6609, %v6607
        %v6808 = vpack.c.b16 %v6612, %v6610
        %v6809 = vpack.c.b16 %v6613, %v6611
        %v6810 = vpack.c.b16 %v6616, %v6614
        %v6811 = vpack.c.b16 %v6617, %v6615
        %v6812 = vpack.c.b16 %v6620, %v6618
        %v6813 = vpack.c.b16 %v6621, %v6619
        %v6814 = vpack.c.b16 %v6624, %v6622
        %v6815 = vpack.c.b16 %v6625, %v6623
        %v6816 = vpack.c.b16 %v6628, %v6626
        %v6817 = vpack.c.b16 %v6629, %v6627
        %v6818 = vpack.c.b16 %v6632, %v6630
        %v6819 = vpack.c.b16 %v6633, %v6631
        %v6820 = vpack.c.b16 %v6636, %v6634
        %v6821 = vpack.c.b16 %v6637, %v6635
        %v6822 = vpack.c.b16 %v6640, %v6638
        %v6823 = vpack.c.b16 %v6641, %v6639
        %v6824 = vpack.c.b16 %v6644, %v6642
        %v6825 = vpack.c.b16 %v6645, %v6643
        %v6826 = vpack.c.b16 %v6648, %v6646
        %v6827 = vpack.c.b16 %v6649, %v6647
        %v6828 = vpack.c.b16 %v6652, %v6650
        %v6829 = vpack.c.b16 %v6653, %v6651
        %v6830 = vpack.c.b16 %v6656, %v6654
        %v6831 = vpack.c.b16 %v6657, %v6655
        %v6832 = vpack.c.b16 %v6660, %v6658
        %v6833 = vpack.c.b16 %v6661, %v6659
        %v6834 = vpack.c.b16 %v6664, %v6662
        %v6835 = vpack.c.b16 %v6665, %v6663
        %v6836 = vpack.c.b16 %v6668, %v6666
        %v6837 = vpack.c.b16 %v6669, %v6667
        %v6838 = vpack.c.b16 %v6672, %v6670
        %v6839 = vpack.c.b16 %v6673, %v6671
        %v6840 = vpack.c.b16 %v6676, %v6674
        %v6841 = vpack.c.b16 %v6677, %v6675
        %v6842 = vpack.c.b16 %v6680, %v6678
        %v6843 = vpack.c.b16 %v6681, %v6679
        %v6844 = vpack.c.b16 %v6684, %v6682
        %v6845 = vpack.c.b16 %v6685, %v6683
        %7006 = vmatpush.bf16.msra.mxu0 %v6700
        %7007 = vmatpush.bf16.msra.mxu0 %v6698
        %7008 = vmatpush.bf16.msra.mxu0 %v6696
        %7009 = vmatpush.bf16.msra.mxu0 %v6694
        %7010 = vmatpush.bf16.msra.mxu0 %v6692
        %7011 = vmatpush.bf16.msra.mxu0 %v6690
        %7012 = vmatpush.bf16.msra.mxu0 %v6688
        %7013 = vmatpush.bf16.msra.mxu0 %v6686
        %7014 = vmatmul.bf16.gmra.mxu0 %v5960
        %v7015 = vpop.f32.mrf.mxu0
        %v7016 = vadd.f32 %v6202, %v7015
        %v7017 = vpop.f32.mrf.mxu0
        %v7018 = vadd.f32 %v6202, %v7017
        %7019 = vmatmul.bf16.gmra.mxu0 %v5970
        %v7020 = vpop.f32.mrf.mxu0
        %v7021 = vadd.f32 %v6202, %v7020
        %v7022 = vpop.f32.mrf.mxu0
        %v7023 = vadd.f32 %v6202, %v7022
        %7024 = vmatmul.bf16.gmra.mxu0 %v5980
        %v7025 = vpop.f32.mrf.mxu0
        %v7026 = vadd.f32 %v6202, %v7025
        %v7027 = vpop.f32.mrf.mxu0
        %v7028 = vadd.f32 %v6202, %v7027
        %7029 = vmatmul.bf16.gmra.mxu0 %v5990
        %v7030 = vpop.f32.mrf.mxu0
        %v7031 = vadd.f32 %v6202, %v7030
        %v7032 = vpop.f32.mrf.mxu0
        %v7033 = vadd.f32 %v6202, %v7032
        %7034 = vmatmul.bf16.gmra.mxu0 %v6000
        %v7035 = vpop.f32.mrf.mxu0
        %v7036 = vadd.f32 %v6202, %v7035
        %v7037 = vpop.f32.mrf.mxu0
        %v7038 = vadd.f32 %v6202, %v7037
        %7039 = vmatmul.bf16.gmra.mxu0 %v6010
        %v7040 = vpop.f32.mrf.mxu0
        %v7041 = vadd.f32 %v6202, %v7040
        %v7042 = vpop.f32.mrf.mxu0
        %v7043 = vadd.f32 %v6202, %v7042
        %7044 = vmatmul.bf16.gmra.mxu0 %v6020
        %v7045 = vpop.f32.mrf.mxu0
        %v7046 = vadd.f32 %v6202, %v7045
        %v7047 = vpop.f32.mrf.mxu0
        %v7048 = vadd.f32 %v6202, %v7047
        %7049 = vmatmul.bf16.gmra.mxu0 %v6030
        %v7050 = vpop.f32.mrf.mxu0
        %v7051 = vadd.f32 %v6202, %v7050
        %v7052 = vpop.f32.mrf.mxu0
        %v7053 = vadd.f32 %v6202, %v7052
        %7054 = vdwg.mxu0
        %7055 = vmatpush.bf16.msra.mxu0 %v6716
        %7056 = vmatpush.bf16.msra.mxu0 %v6714
        %7057 = vmatpush.bf16.msra.mxu0 %v6712
        %7058 = vmatpush.bf16.msra.mxu0 %v6710
        %7059 = vmatpush.bf16.msra.mxu0 %v6708
        %7060 = vmatpush.bf16.msra.mxu0 %v6706
        %7061 = vmatpush.bf16.msra.mxu0 %v6704
        %7062 = vmatpush.bf16.msra.mxu0 %v6702
        %7063 = vmatmul.bf16.gmra.mxu0 %v5961
        %v7064 = vpop.f32.mrf.mxu0
        %v7065 = vadd.f32 %v7016, %v7064
        %v7066 = vpop.f32.mrf.mxu0
        %v7067 = vadd.f32 %v7018, %v7066
        %7068 = vmatmul.bf16.gmra.mxu0 %v5971
        %v7069 = vpop.f32.mrf.mxu0
        %v7070 = vadd.f32 %v7021, %v7069
        %v7071 = vpop.f32.mrf.mxu0
        %v7072 = vadd.f32 %v7023, %v7071
        %7073 = vmatmul.bf16.gmra.mxu0 %v5981
        %v7074 = vpop.f32.mrf.mxu0
        %v7075 = vadd.f32 %v7026, %v7074
        %v7076 = vpop.f32.mrf.mxu0
        %v7077 = vadd.f32 %v7028, %v7076
        %7078 = vmatmul.bf16.gmra.mxu0 %v5991
        %v7079 = vpop.f32.mrf.mxu0
        %v7080 = vadd.f32 %v7031, %v7079
        %v7081 = vpop.f32.mrf.mxu0
        %v7082 = vadd.f32 %v7033, %v7081
        %7083 = vmatmul.bf16.gmra.mxu0 %v6001
        %v7084 = vpop.f32.mrf.mxu0
        %v7085 = vadd.f32 %v7036, %v7084
        %v7086 = vpop.f32.mrf.mxu0
        %v7087 = vadd.f32 %v7038, %v7086
        %7088 = vmatmul.bf16.gmra.mxu0 %v6011
        %v7089 = vpop.f32.mrf.mxu0
        %v7090 = vadd.f32 %v7041, %v7089
        %v7091 = vpop.f32.mrf.mxu0
        %v7092 = vadd.f32 %v7043, %v7091
        %7093 = vmatmul.bf16.gmra.mxu0 %v6021
        %v7094 = vpop.f32.mrf.mxu0
        %v7095 = vadd.f32 %v7046, %v7094
        %v7096 = vpop.f32.mrf.mxu0
        %v7097 = vadd.f32 %v7048, %v7096
        %7098 = vmatmul.bf16.gmra.mxu0 %v6031
        %v7099 = vpop.f32.mrf.mxu0
        %v7100 = vadd.f32 %v7051, %v7099
        %v7101 = vpop.f32.mrf.mxu0
        %v7102 = vadd.f32 %v7053, %v7101
        %7103 = vdwg.mxu0
        %7104 = vmatpush.bf16.msra.mxu0 %v6732
        %7105 = vmatpush.bf16.msra.mxu0 %v6730
        %7106 = vmatpush.bf16.msra.mxu0 %v6728
        %7107 = vmatpush.bf16.msra.mxu0 %v6726
        %7108 = vmatpush.bf16.msra.mxu0 %v6724
        %7109 = vmatpush.bf16.msra.mxu0 %v6722
        %7110 = vmatpush.bf16.msra.mxu0 %v6720
        %7111 = vmatpush.bf16.msra.mxu0 %v6718
        %7112 = vmatmul.bf16.gmra.mxu0 %v5962
        %v7113 = vpop.f32.mrf.mxu0
        %v7114 = vadd.f32 %v7065, %v7113
        %v7115 = vpop.f32.mrf.mxu0
        %v7116 = vadd.f32 %v7067, %v7115
        %7117 = vmatmul.bf16.gmra.mxu0 %v5972
        %v7118 = vpop.f32.mrf.mxu0
        %v7119 = vadd.f32 %v7070, %v7118
        %v7120 = vpop.f32.mrf.mxu0
        %v7121 = vadd.f32 %v7072, %v7120
        %7122 = vmatmul.bf16.gmra.mxu0 %v5982
        %v7123 = vpop.f32.mrf.mxu0
        %v7124 = vadd.f32 %v7075, %v7123
        %v7125 = vpop.f32.mrf.mxu0
        %v7126 = vadd.f32 %v7077, %v7125
        %7127 = vmatmul.bf16.gmra.mxu0 %v5992
        %v7128 = vpop.f32.mrf.mxu0
        %v7129 = vadd.f32 %v7080, %v7128
        %v7130 = vpop.f32.mrf.mxu0
        %v7131 = vadd.f32 %v7082, %v7130
        %7132 = vmatmul.bf16.gmra.mxu0 %v6002
        %v7133 = vpop.f32.mrf.mxu0
        %v7134 = vadd.f32 %v7085, %v7133
        %v7135 = vpop.f32.mrf.mxu0
        %v7136 = vadd.f32 %v7087, %v7135
        %7137 = vmatmul.bf16.gmra.mxu0 %v6012
        %v7138 = vpop.f32.mrf.mxu0
        %v7139 = vadd.f32 %v7090, %v7138
        %v7140 = vpop.f32.mrf.mxu0
        %v7141 = vadd.f32 %v7092, %v7140
        %7142 = vmatmul.bf16.gmra.mxu0 %v6022
        %v7143 = vpop.f32.mrf.mxu0
        %v7144 = vadd.f32 %v7095, %v7143
        %v7145 = vpop.f32.mrf.mxu0
        %v7146 = vadd.f32 %v7097, %v7145
        %7147 = vmatmul.bf16.gmra.mxu0 %v6032
        %v7148 = vpop.f32.mrf.mxu0
        %v7149 = vadd.f32 %v7100, %v7148
        %v7150 = vpop.f32.mrf.mxu0
        %v7151 = vadd.f32 %v7102, %v7150
        %7152 = vdwg.mxu0
        %7153 = vmatpush.bf16.msra.mxu0 %v6748
        %7154 = vmatpush.bf16.msra.mxu0 %v6746
        %7155 = vmatpush.bf16.msra.mxu0 %v6744
        %7156 = vmatpush.bf16.msra.mxu0 %v6742
        %7157 = vmatpush.bf16.msra.mxu0 %v6740
        %7158 = vmatpush.bf16.msra.mxu0 %v6738
        %7159 = vmatpush.bf16.msra.mxu0 %v6736
        %7160 = vmatpush.bf16.msra.mxu0 %v6734
        %7161 = vmatmul.bf16.gmra.mxu0 %v5963
        %v7162 = vpop.f32.mrf.mxu0
        %v7163 = vadd.f32 %v7114, %v7162
        %v7164 = vpop.f32.mrf.mxu0
        %v7165 = vadd.f32 %v7116, %v7164
        %7166 = vmatmul.bf16.gmra.mxu0 %v5973
        %v7167 = vpop.f32.mrf.mxu0
        %v7168 = vadd.f32 %v7119, %v7167
        %v7169 = vpop.f32.mrf.mxu0
        %v7170 = vadd.f32 %v7121, %v7169
        %7171 = vmatmul.bf16.gmra.mxu0 %v5983
        %v7172 = vpop.f32.mrf.mxu0
        %v7173 = vadd.f32 %v7124, %v7172
        %v7174 = vpop.f32.mrf.mxu0
        %v7175 = vadd.f32 %v7126, %v7174
        %7176 = vmatmul.bf16.gmra.mxu0 %v5993
        %v7177 = vpop.f32.mrf.mxu0
        %v7178 = vadd.f32 %v7129, %v7177
        %v7179 = vpop.f32.mrf.mxu0
        %v7180 = vadd.f32 %v7131, %v7179
        %7181 = vmatmul.bf16.gmra.mxu0 %v6003
        %v7182 = vpop.f32.mrf.mxu0
        %v7183 = vadd.f32 %v7134, %v7182
        %v7184 = vpop.f32.mrf.mxu0
        %v7185 = vadd.f32 %v7136, %v7184
        %7186 = vmatmul.bf16.gmra.mxu0 %v6013
        %v7187 = vpop.f32.mrf.mxu0
        %v7188 = vadd.f32 %v7139, %v7187
        %v7189 = vpop.f32.mrf.mxu0
        %v7190 = vadd.f32 %v7141, %v7189
        %7191 = vmatmul.bf16.gmra.mxu0 %v6023
        %v7192 = vpop.f32.mrf.mxu0
        %v7193 = vadd.f32 %v7144, %v7192
        %v7194 = vpop.f32.mrf.mxu0
        %v7195 = vadd.f32 %v7146, %v7194
        %7196 = vmatmul.bf16.gmra.mxu0 %v6033
        %v7197 = vpop.f32.mrf.mxu0
        %v7198 = vadd.f32 %v7149, %v7197
        %v7199 = vpop.f32.mrf.mxu0
        %v7200 = vadd.f32 %v7151, %v7199
        %7201 = vdwg.mxu0
        %7202 = vmatpush.bf16.msra.mxu0 %v6764
        %7203 = vmatpush.bf16.msra.mxu0 %v6762
        %7204 = vmatpush.bf16.msra.mxu0 %v6760
        %7205 = vmatpush.bf16.msra.mxu0 %v6758
        %7206 = vmatpush.bf16.msra.mxu0 %v6756
        %7207 = vmatpush.bf16.msra.mxu0 %v6754
        %7208 = vmatpush.bf16.msra.mxu0 %v6752
        %7209 = vmatpush.bf16.msra.mxu0 %v6750
        %7210 = vmatmul.bf16.gmra.mxu0 %v5964
        %v7211 = vpop.f32.mrf.mxu0
        %v7212 = vadd.f32 %v7163, %v7211
        %v7213 = vpop.f32.mrf.mxu0
        %v7214 = vadd.f32 %v7165, %v7213
        %7215 = vmatmul.bf16.gmra.mxu0 %v5974
        %v7216 = vpop.f32.mrf.mxu0
        %v7217 = vadd.f32 %v7168, %v7216
        %v7218 = vpop.f32.mrf.mxu0
        %v7219 = vadd.f32 %v7170, %v7218
        %7220 = vmatmul.bf16.gmra.mxu0 %v5984
        %v7221 = vpop.f32.mrf.mxu0
        %v7222 = vadd.f32 %v7173, %v7221
        %v7223 = vpop.f32.mrf.mxu0
        %v7224 = vadd.f32 %v7175, %v7223
        %7225 = vmatmul.bf16.gmra.mxu0 %v5994
        %v7226 = vpop.f32.mrf.mxu0
        %v7227 = vadd.f32 %v7178, %v7226
        %v7228 = vpop.f32.mrf.mxu0
        %v7229 = vadd.f32 %v7180, %v7228
        %7230 = vmatmul.bf16.gmra.mxu0 %v6004
        %v7231 = vpop.f32.mrf.mxu0
        %v7232 = vadd.f32 %v7183, %v7231
        %v7233 = vpop.f32.mrf.mxu0
        %v7234 = vadd.f32 %v7185, %v7233
        %7235 = vmatmul.bf16.gmra.mxu0 %v6014
        %v7236 = vpop.f32.mrf.mxu0
        %v7237 = vadd.f32 %v7188, %v7236
        %v7238 = vpop.f32.mrf.mxu0
        %v7239 = vadd.f32 %v7190, %v7238
        %7240 = vmatmul.bf16.gmra.mxu0 %v6024
        %v7241 = vpop.f32.mrf.mxu0
        %v7242 = vadd.f32 %v7193, %v7241
        %v7243 = vpop.f32.mrf.mxu0
        %v7244 = vadd.f32 %v7195, %v7243
        %7245 = vmatmul.bf16.gmra.mxu0 %v6034
        %v7246 = vpop.f32.mrf.mxu0
        %v7247 = vadd.f32 %v7198, %v7246
        %v7248 = vpop.f32.mrf.mxu0
        %v7249 = vadd.f32 %v7200, %v7248
        %7250 = vdwg.mxu0
        %7251 = vmatpush.bf16.msra.mxu0 %v6780
        %7252 = vmatpush.bf16.msra.mxu0 %v6778
        %7253 = vmatpush.bf16.msra.mxu0 %v6776
        %7254 = vmatpush.bf16.msra.mxu0 %v6774
        %7255 = vmatpush.bf16.msra.mxu0 %v6772
        %7256 = vmatpush.bf16.msra.mxu0 %v6770
        %7257 = vmatpush.bf16.msra.mxu0 %v6768
        %7258 = vmatpush.bf16.msra.mxu0 %v6766
        %7259 = vmatmul.bf16.gmra.mxu0 %v5965
        %v7260 = vpop.f32.mrf.mxu0
        %v7261 = vadd.f32 %v7212, %v7260
        %v7262 = vpop.f32.mrf.mxu0
        %v7263 = vadd.f32 %v7214, %v7262
        %7264 = vmatmul.bf16.gmra.mxu0 %v5975
        %v7265 = vpop.f32.mrf.mxu0
        %v7266 = vadd.f32 %v7217, %v7265
        %v7267 = vpop.f32.mrf.mxu0
        %v7268 = vadd.f32 %v7219, %v7267
        %7269 = vmatmul.bf16.gmra.mxu0 %v5985
        %v7270 = vpop.f32.mrf.mxu0
        %v7271 = vadd.f32 %v7222, %v7270
        %v7272 = vpop.f32.mrf.mxu0
        %v7273 = vadd.f32 %v7224, %v7272
        %7274 = vmatmul.bf16.gmra.mxu0 %v5995
        %v7275 = vpop.f32.mrf.mxu0
        %v7276 = vadd.f32 %v7227, %v7275
        %v7277 = vpop.f32.mrf.mxu0
        %v7278 = vadd.f32 %v7229, %v7277
        %7279 = vmatmul.bf16.gmra.mxu0 %v6005
        %v7280 = vpop.f32.mrf.mxu0
        %v7281 = vadd.f32 %v7232, %v7280
        %v7282 = vpop.f32.mrf.mxu0
        %v7283 = vadd.f32 %v7234, %v7282
        %7284 = vmatmul.bf16.gmra.mxu0 %v6015
        %v7285 = vpop.f32.mrf.mxu0
        %v7286 = vadd.f32 %v7237, %v7285
        %v7287 = vpop.f32.mrf.mxu0
        %v7288 = vadd.f32 %v7239, %v7287
        %7289 = vmatmul.bf16.gmra.mxu0 %v6025
        %v7290 = vpop.f32.mrf.mxu0
        %v7291 = vadd.f32 %v7242, %v7290
        %v7292 = vpop.f32.mrf.mxu0
        %v7293 = vadd.f32 %v7244, %v7292
        %7294 = vmatmul.bf16.gmra.mxu0 %v6035
        %v7295 = vpop.f32.mrf.mxu0
        %v7296 = vadd.f32 %v7247, %v7295
        %v7297 = vpop.f32.mrf.mxu0
        %v7298 = vadd.f32 %v7249, %v7297
        %7299 = vdwg.mxu0
        %7300 = vmatpush.bf16.msra.mxu0 %v6796
        %7301 = vmatpush.bf16.msra.mxu0 %v6794
        %7302 = vmatpush.bf16.msra.mxu0 %v6792
        %7303 = vmatpush.bf16.msra.mxu0 %v6790
        %7304 = vmatpush.bf16.msra.mxu0 %v6788
        %7305 = vmatpush.bf16.msra.mxu0 %v6786
        %7306 = vmatpush.bf16.msra.mxu0 %v6784
        %7307 = vmatpush.bf16.msra.mxu0 %v6782
        %7308 = vmatmul.bf16.gmra.mxu0 %v5966
        %v7309 = vpop.f32.mrf.mxu0
        %v7310 = vadd.f32 %v7261, %v7309
        %v7311 = vpop.f32.mrf.mxu0
        %v7312 = vadd.f32 %v7263, %v7311
        %7313 = vmatmul.bf16.gmra.mxu0 %v5976
        %v7314 = vpop.f32.mrf.mxu0
        %v7315 = vadd.f32 %v7266, %v7314
        %v7316 = vpop.f32.mrf.mxu0
        %v7317 = vadd.f32 %v7268, %v7316
        %7318 = vmatmul.bf16.gmra.mxu0 %v5986
        %v7319 = vpop.f32.mrf.mxu0
        %v7320 = vadd.f32 %v7271, %v7319
        %v7321 = vpop.f32.mrf.mxu0
        %v7322 = vadd.f32 %v7273, %v7321
        %7323 = vmatmul.bf16.gmra.mxu0 %v5996
        %v7324 = vpop.f32.mrf.mxu0
        %v7325 = vadd.f32 %v7276, %v7324
        %v7326 = vpop.f32.mrf.mxu0
        %v7327 = vadd.f32 %v7278, %v7326
        %7328 = vmatmul.bf16.gmra.mxu0 %v6006
        %v7329 = vpop.f32.mrf.mxu0
        %v7330 = vadd.f32 %v7281, %v7329
        %v7331 = vpop.f32.mrf.mxu0
        %v7332 = vadd.f32 %v7283, %v7331
        %7333 = vmatmul.bf16.gmra.mxu0 %v6016
        %v7334 = vpop.f32.mrf.mxu0
        %v7335 = vadd.f32 %v7286, %v7334
        %v7336 = vpop.f32.mrf.mxu0
        %v7337 = vadd.f32 %v7288, %v7336
        %7338 = vmatmul.bf16.gmra.mxu0 %v6026
        %v7339 = vpop.f32.mrf.mxu0
        %v7340 = vadd.f32 %v7291, %v7339
        %v7341 = vpop.f32.mrf.mxu0
        %v7342 = vadd.f32 %v7293, %v7341
        %7343 = vmatmul.bf16.gmra.mxu0 %v6036
        %v7344 = vpop.f32.mrf.mxu0
        %v7345 = vadd.f32 %v7296, %v7344
        %v7346 = vpop.f32.mrf.mxu0
        %v7347 = vadd.f32 %v7298, %v7346
        %7348 = vdwg.mxu0
        %7349 = vmatpush.bf16.msra.mxu0 %v6812
        %7350 = vmatpush.bf16.msra.mxu0 %v6810
        %7351 = vmatpush.bf16.msra.mxu0 %v6808
        %7352 = vmatpush.bf16.msra.mxu0 %v6806
        %7353 = vmatpush.bf16.msra.mxu0 %v6804
        %7354 = vmatpush.bf16.msra.mxu0 %v6802
        %7355 = vmatpush.bf16.msra.mxu0 %v6800
        %7356 = vmatpush.bf16.msra.mxu0 %v6798
        %7357 = vmatmul.bf16.gmra.mxu0 %v5967
        %v7358 = vpop.f32.mrf.mxu0
        %v7359 = vadd.f32 %v7310, %v7358
        %v7360 = vpop.f32.mrf.mxu0
        %v7361 = vadd.f32 %v7312, %v7360
        %7362 = vmatmul.bf16.gmra.mxu0 %v5977
        %v7363 = vpop.f32.mrf.mxu0
        %v7364 = vadd.f32 %v7315, %v7363
        %v7365 = vpop.f32.mrf.mxu0
        %v7366 = vadd.f32 %v7317, %v7365
        %7367 = vmatmul.bf16.gmra.mxu0 %v5987
        %v7368 = vpop.f32.mrf.mxu0
        %v7369 = vadd.f32 %v7320, %v7368
        %v7370 = vpop.f32.mrf.mxu0
        %v7371 = vadd.f32 %v7322, %v7370
        %7372 = vmatmul.bf16.gmra.mxu0 %v5997
        %v7373 = vpop.f32.mrf.mxu0
        %v7374 = vadd.f32 %v7325, %v7373
        %v7375 = vpop.f32.mrf.mxu0
        %v7376 = vadd.f32 %v7327, %v7375
        %7377 = vmatmul.bf16.gmra.mxu0 %v6007
        %v7378 = vpop.f32.mrf.mxu0
        %v7379 = vadd.f32 %v7330, %v7378
        %v7380 = vpop.f32.mrf.mxu0
        %v7381 = vadd.f32 %v7332, %v7380
        %7382 = vmatmul.bf16.gmra.mxu0 %v6017
        %v7383 = vpop.f32.mrf.mxu0
        %v7384 = vadd.f32 %v7335, %v7383
        %v7385 = vpop.f32.mrf.mxu0
        %v7386 = vadd.f32 %v7337, %v7385
        %7387 = vmatmul.bf16.gmra.mxu0 %v6027
        %v7388 = vpop.f32.mrf.mxu0
        %v7389 = vadd.f32 %v7340, %v7388
        %v7390 = vpop.f32.mrf.mxu0
        %v7391 = vadd.f32 %v7342, %v7390
        %7392 = vmatmul.bf16.gmra.mxu0 %v6037
        %v7393 = vpop.f32.mrf.mxu0
        %v7394 = vadd.f32 %v7345, %v7393
        %v7395 = vpop.f32.mrf.mxu0
        %v7396 = vadd.f32 %v7347, %v7395
        %7397 = vdwg.mxu0
        %7398 = vmatpush.bf16.msra.mxu0 %v6828
        %7399 = vmatpush.bf16.msra.mxu0 %v6826
        %7400 = vmatpush.bf16.msra.mxu0 %v6824
        %7401 = vmatpush.bf16.msra.mxu0 %v6822
        %7402 = vmatpush.bf16.msra.mxu0 %v6820
        %7403 = vmatpush.bf16.msra.mxu0 %v6818
        %7404 = vmatpush.bf16.msra.mxu0 %v6816
        %7405 = vmatpush.bf16.msra.mxu0 %v6814
        %7406 = vmatmul.bf16.gmra.mxu0 %v5968
        %v7407 = vpop.f32.mrf.mxu0
        %v7408 = vadd.f32 %v7359, %v7407
        %v7409 = vpop.f32.mrf.mxu0
        %v7410 = vadd.f32 %v7361, %v7409
        %7411 = vmatmul.bf16.gmra.mxu0 %v5978
        %v7412 = vpop.f32.mrf.mxu0
        %v7413 = vadd.f32 %v7364, %v7412
        %v7414 = vpop.f32.mrf.mxu0
        %v7415 = vadd.f32 %v7366, %v7414
        %7416 = vmatmul.bf16.gmra.mxu0 %v5988
        %v7417 = vpop.f32.mrf.mxu0
        %v7418 = vadd.f32 %v7369, %v7417
        %v7419 = vpop.f32.mrf.mxu0
        %v7420 = vadd.f32 %v7371, %v7419
        %7421 = vmatmul.bf16.gmra.mxu0 %v5998
        %v7422 = vpop.f32.mrf.mxu0
        %v7423 = vadd.f32 %v7374, %v7422
        %v7424 = vpop.f32.mrf.mxu0
        %v7425 = vadd.f32 %v7376, %v7424
        %7426 = vmatmul.bf16.gmra.mxu0 %v6008
        %v7427 = vpop.f32.mrf.mxu0
        %v7428 = vadd.f32 %v7379, %v7427
        %v7429 = vpop.f32.mrf.mxu0
        %v7430 = vadd.f32 %v7381, %v7429
        %7431 = vmatmul.bf16.gmra.mxu0 %v6018
        %v7432 = vpop.f32.mrf.mxu0
        %v7433 = vadd.f32 %v7384, %v7432
        %v7434 = vpop.f32.mrf.mxu0
        %v7435 = vadd.f32 %v7386, %v7434
        %7436 = vmatmul.bf16.gmra.mxu0 %v6028
        %v7437 = vpop.f32.mrf.mxu0
        %v7438 = vadd.f32 %v7389, %v7437
        %v7439 = vpop.f32.mrf.mxu0
        %v7440 = vadd.f32 %v7391, %v7439
        %7441 = vmatmul.bf16.gmra.mxu0 %v6038
        %v7442 = vpop.f32.mrf.mxu0
        %v7443 = vadd.f32 %v7394, %v7442
        %v7444 = vpop.f32.mrf.mxu0
        %v7445 = vadd.f32 %v7396, %v7444
        %7446 = vdwg.mxu0
        %7447 = vmatpush.bf16.msra.mxu0 %v6844
        %7448 = vmatpush.bf16.msra.mxu0 %v6842
        %7449 = vmatpush.bf16.msra.mxu0 %v6840
        %7450 = vmatpush.bf16.msra.mxu0 %v6838
        %7451 = vmatpush.bf16.msra.mxu0 %v6836
        %7452 = vmatpush.bf16.msra.mxu0 %v6834
        %7453 = vmatpush.bf16.msra.mxu0 %v6832
        %7454 = vmatpush.bf16.msra.mxu0 %v6830
        %7455 = vmatmul.bf16.gmra.mxu0 %v5969
        %v7456 = vpop.f32.mrf.mxu0
        %v7457 = vadd.f32 %v7408, %v7456
        %v7458 = vpop.f32.mrf.mxu0
        %v7459 = vadd.f32 %v7410, %v7458
        %7460 = vmatmul.bf16.gmra.mxu0 %v5979
        %v7461 = vpop.f32.mrf.mxu0
        %v7462 = vadd.f32 %v7413, %v7461
        %v7463 = vpop.f32.mrf.mxu0
        %v7464 = vadd.f32 %v7415, %v7463
        %7465 = vmatmul.bf16.gmra.mxu0 %v5989
        %v7466 = vpop.f32.mrf.mxu0
        %v7467 = vadd.f32 %v7418, %v7466
        %v7468 = vpop.f32.mrf.mxu0
        %v7469 = vadd.f32 %v7420, %v7468
        %7470 = vmatmul.bf16.gmra.mxu0 %v5999
        %v7471 = vpop.f32.mrf.mxu0
        %v7472 = vadd.f32 %v7423, %v7471
        %v7473 = vpop.f32.mrf.mxu0
        %v7474 = vadd.f32 %v7425, %v7473
        %7475 = vmatmul.bf16.gmra.mxu0 %v6009
        %v7476 = vpop.f32.mrf.mxu0
        %v7477 = vadd.f32 %v7428, %v7476
        %v7478 = vpop.f32.mrf.mxu0
        %v7479 = vadd.f32 %v7430, %v7478
        %7480 = vmatmul.bf16.gmra.mxu0 %v6019
        %v7481 = vpop.f32.mrf.mxu0
        %v7482 = vadd.f32 %v7433, %v7481
        %v7483 = vpop.f32.mrf.mxu0
        %v7484 = vadd.f32 %v7435, %v7483
        %7485 = vmatmul.bf16.gmra.mxu0 %v6029
        %v7486 = vpop.f32.mrf.mxu0
        %v7487 = vadd.f32 %v7438, %v7486
        %v7488 = vpop.f32.mrf.mxu0
        %v7489 = vadd.f32 %v7440, %v7488
        %7490 = vmatmul.bf16.gmra.mxu0 %v6039
        %v7491 = vpop.f32.mrf.mxu0
        %v7492 = vadd.f32 %v7443, %v7491
        %v7493 = vpop.f32.mrf.mxu0
        %v7494 = vadd.f32 %v7445, %v7493
        %7495 = vdwg.mxu0
        %7496 = vmatpush.bf16.msra.mxu0 %v6701
        %7497 = vmatpush.bf16.msra.mxu0 %v6699
        %7498 = vmatpush.bf16.msra.mxu0 %v6697
        %7499 = vmatpush.bf16.msra.mxu0 %v6695
        %7500 = vmatpush.bf16.msra.mxu0 %v6693
        %7501 = vmatpush.bf16.msra.mxu0 %v6691
        %7502 = vmatpush.bf16.msra.mxu0 %v6689
        %7503 = vmatpush.bf16.msra.mxu0 %v6687
        %7504 = vmatmul.bf16.gmra.mxu0 %v5960
        %v7505 = vpop.f32.mrf.mxu0
        %v7506 = vadd.f32 %v6203, %v7505
        %v7507 = vpop.f32.mrf.mxu0
        %v7508 = vadd.f32 %v6203, %v7507
        %7509 = vmatmul.bf16.gmra.mxu0 %v5970
        %v7510 = vpop.f32.mrf.mxu0
        %v7511 = vadd.f32 %v6203, %v7510
        %v7512 = vpop.f32.mrf.mxu0
        %v7513 = vadd.f32 %v6203, %v7512
        %7514 = vmatmul.bf16.gmra.mxu0 %v5980
        %v7515 = vpop.f32.mrf.mxu0
        %v7516 = vadd.f32 %v6203, %v7515
        %v7517 = vpop.f32.mrf.mxu0
        %v7518 = vadd.f32 %v6203, %v7517
        %7519 = vmatmul.bf16.gmra.mxu0 %v5990
        %v7520 = vpop.f32.mrf.mxu0
        %v7521 = vadd.f32 %v6203, %v7520
        %v7522 = vpop.f32.mrf.mxu0
        %v7523 = vadd.f32 %v6203, %v7522
        %7524 = vmatmul.bf16.gmra.mxu0 %v6000
        %v7525 = vpop.f32.mrf.mxu0
        %v7526 = vadd.f32 %v6203, %v7525
        %v7527 = vpop.f32.mrf.mxu0
        %v7528 = vadd.f32 %v6203, %v7527
        %7529 = vmatmul.bf16.gmra.mxu0 %v6010
        %v7530 = vpop.f32.mrf.mxu0
        %v7531 = vadd.f32 %v6203, %v7530
        %v7532 = vpop.f32.mrf.mxu0
        %v7533 = vadd.f32 %v6203, %v7532
        %7534 = vmatmul.bf16.gmra.mxu0 %v6020
        %v7535 = vpop.f32.mrf.mxu0
        %v7536 = vadd.f32 %v6203, %v7535
        %v7537 = vpop.f32.mrf.mxu0
        %v7538 = vadd.f32 %v6203, %v7537
        %7539 = vmatmul.bf16.gmra.mxu0 %v6030
        %v7540 = vpop.f32.mrf.mxu0
        %v7541 = vadd.f32 %v6203, %v7540
        %v7542 = vpop.f32.mrf.mxu0
        %v7543 = vadd.f32 %v6203, %v7542
        %7544 = vdwg.mxu0
        %7545 = vmatpush.bf16.msra.mxu0 %v6717
        %7546 = vmatpush.bf16.msra.mxu0 %v6715
        %7547 = vmatpush.bf16.msra.mxu0 %v6713
        %7548 = vmatpush.bf16.msra.mxu0 %v6711
        %7549 = vmatpush.bf16.msra.mxu0 %v6709
        %7550 = vmatpush.bf16.msra.mxu0 %v6707
        %7551 = vmatpush.bf16.msra.mxu0 %v6705
        %7552 = vmatpush.bf16.msra.mxu0 %v6703
        %7553 = vmatmul.bf16.gmra.mxu0 %v5961
        %v7554 = vpop.f32.mrf.mxu0
        %v7555 = vadd.f32 %v7506, %v7554
        %v7556 = vpop.f32.mrf.mxu0
        %v7557 = vadd.f32 %v7508, %v7556
        %7558 = vmatmul.bf16.gmra.mxu0 %v5971
        %v7559 = vpop.f32.mrf.mxu0
        %v7560 = vadd.f32 %v7511, %v7559
        %v7561 = vpop.f32.mrf.mxu0
        %v7562 = vadd.f32 %v7513, %v7561
        %7563 = vmatmul.bf16.gmra.mxu0 %v5981
        %v7564 = vpop.f32.mrf.mxu0
        %v7565 = vadd.f32 %v7516, %v7564
        %v7566 = vpop.f32.mrf.mxu0
        %v7567 = vadd.f32 %v7518, %v7566
        %7568 = vmatmul.bf16.gmra.mxu0 %v5991
        %v7569 = vpop.f32.mrf.mxu0
        %v7570 = vadd.f32 %v7521, %v7569
        %v7571 = vpop.f32.mrf.mxu0
        %v7572 = vadd.f32 %v7523, %v7571
        %7573 = vmatmul.bf16.gmra.mxu0 %v6001
        %v7574 = vpop.f32.mrf.mxu0
        %v7575 = vadd.f32 %v7526, %v7574
        %v7576 = vpop.f32.mrf.mxu0
        %v7577 = vadd.f32 %v7528, %v7576
        %7578 = vmatmul.bf16.gmra.mxu0 %v6011
        %v7579 = vpop.f32.mrf.mxu0
        %v7580 = vadd.f32 %v7531, %v7579
        %v7581 = vpop.f32.mrf.mxu0
        %v7582 = vadd.f32 %v7533, %v7581
        %7583 = vmatmul.bf16.gmra.mxu0 %v6021
        %v7584 = vpop.f32.mrf.mxu0
        %v7585 = vadd.f32 %v7536, %v7584
        %v7586 = vpop.f32.mrf.mxu0
        %v7587 = vadd.f32 %v7538, %v7586
        %7588 = vmatmul.bf16.gmra.mxu0 %v6031
        %v7589 = vpop.f32.mrf.mxu0
        %v7590 = vadd.f32 %v7541, %v7589
        %v7591 = vpop.f32.mrf.mxu0
        %v7592 = vadd.f32 %v7543, %v7591
        %7593 = vdwg.mxu0
        %7594 = vmatpush.bf16.msra.mxu0 %v6733
        %7595 = vmatpush.bf16.msra.mxu0 %v6731
        %7596 = vmatpush.bf16.msra.mxu0 %v6729
        %7597 = vmatpush.bf16.msra.mxu0 %v6727
        %7598 = vmatpush.bf16.msra.mxu0 %v6725
        %7599 = vmatpush.bf16.msra.mxu0 %v6723
        %7600 = vmatpush.bf16.msra.mxu0 %v6721
        %7601 = vmatpush.bf16.msra.mxu0 %v6719
        %7602 = vmatmul.bf16.gmra.mxu0 %v5962
        %v7603 = vpop.f32.mrf.mxu0
        %v7604 = vadd.f32 %v7555, %v7603
        %v7605 = vpop.f32.mrf.mxu0
        %v7606 = vadd.f32 %v7557, %v7605
        %7607 = vmatmul.bf16.gmra.mxu0 %v5972
        %v7608 = vpop.f32.mrf.mxu0
        %v7609 = vadd.f32 %v7560, %v7608
        %v7610 = vpop.f32.mrf.mxu0
        %v7611 = vadd.f32 %v7562, %v7610
        %7612 = vmatmul.bf16.gmra.mxu0 %v5982
        %v7613 = vpop.f32.mrf.mxu0
        %v7614 = vadd.f32 %v7565, %v7613
        %v7615 = vpop.f32.mrf.mxu0
        %v7616 = vadd.f32 %v7567, %v7615
        %7617 = vmatmul.bf16.gmra.mxu0 %v5992
        %v7618 = vpop.f32.mrf.mxu0
        %v7619 = vadd.f32 %v7570, %v7618
        %v7620 = vpop.f32.mrf.mxu0
        %v7621 = vadd.f32 %v7572, %v7620
        %7622 = vmatmul.bf16.gmra.mxu0 %v6002
        %v7623 = vpop.f32.mrf.mxu0
        %v7624 = vadd.f32 %v7575, %v7623
        %v7625 = vpop.f32.mrf.mxu0
        %v7626 = vadd.f32 %v7577, %v7625
        %7627 = vmatmul.bf16.gmra.mxu0 %v6012
        %v7628 = vpop.f32.mrf.mxu0
        %v7629 = vadd.f32 %v7580, %v7628
        %v7630 = vpop.f32.mrf.mxu0
        %v7631 = vadd.f32 %v7582, %v7630
        %7632 = vmatmul.bf16.gmra.mxu0 %v6022
        %v7633 = vpop.f32.mrf.mxu0
        %v7634 = vadd.f32 %v7585, %v7633
        %v7635 = vpop.f32.mrf.mxu0
        %v7636 = vadd.f32 %v7587, %v7635
        %7637 = vmatmul.bf16.gmra.mxu0 %v6032
        %v7638 = vpop.f32.mrf.mxu0
        %v7639 = vadd.f32 %v7590, %v7638
        %v7640 = vpop.f32.mrf.mxu0
        %v7641 = vadd.f32 %v7592, %v7640
        %7642 = vdwg.mxu0
        %7643 = vmatpush.bf16.msra.mxu0 %v6749
        %7644 = vmatpush.bf16.msra.mxu0 %v6747
        %7645 = vmatpush.bf16.msra.mxu0 %v6745
        %7646 = vmatpush.bf16.msra.mxu0 %v6743
        %7647 = vmatpush.bf16.msra.mxu0 %v6741
        %7648 = vmatpush.bf16.msra.mxu0 %v6739
        %7649 = vmatpush.bf16.msra.mxu0 %v6737
        %7650 = vmatpush.bf16.msra.mxu0 %v6735
        %7651 = vmatmul.bf16.gmra.mxu0 %v5963
        %v7652 = vpop.f32.mrf.mxu0
        %v7653 = vadd.f32 %v7604, %v7652
        %v7654 = vpop.f32.mrf.mxu0
        %v7655 = vadd.f32 %v7606, %v7654
        %7656 = vmatmul.bf16.gmra.mxu0 %v5973
        %v7657 = vpop.f32.mrf.mxu0
        %v7658 = vadd.f32 %v7609, %v7657
        %v7659 = vpop.f32.mrf.mxu0
        %v7660 = vadd.f32 %v7611, %v7659
        %7661 = vmatmul.bf16.gmra.mxu0 %v5983
        %v7662 = vpop.f32.mrf.mxu0
        %v7663 = vadd.f32 %v7614, %v7662
        %v7664 = vpop.f32.mrf.mxu0
        %v7665 = vadd.f32 %v7616, %v7664
        %7666 = vmatmul.bf16.gmra.mxu0 %v5993
        %v7667 = vpop.f32.mrf.mxu0
        %v7668 = vadd.f32 %v7619, %v7667
        %v7669 = vpop.f32.mrf.mxu0
        %v7670 = vadd.f32 %v7621, %v7669
        %7671 = vmatmul.bf16.gmra.mxu0 %v6003
        %v7672 = vpop.f32.mrf.mxu0
        %v7673 = vadd.f32 %v7624, %v7672
        %v7674 = vpop.f32.mrf.mxu0
        %v7675 = vadd.f32 %v7626, %v7674
        %7676 = vmatmul.bf16.gmra.mxu0 %v6013
        %v7677 = vpop.f32.mrf.mxu0
        %v7678 = vadd.f32 %v7629, %v7677
        %v7679 = vpop.f32.mrf.mxu0
        %v7680 = vadd.f32 %v7631, %v7679
        %7681 = vmatmul.bf16.gmra.mxu0 %v6023
        %v7682 = vpop.f32.mrf.mxu0
        %v7683 = vadd.f32 %v7634, %v7682
        %v7684 = vpop.f32.mrf.mxu0
        %v7685 = vadd.f32 %v7636, %v7684
        %7686 = vmatmul.bf16.gmra.mxu0 %v6033
        %v7687 = vpop.f32.mrf.mxu0
        %v7688 = vadd.f32 %v7639, %v7687
        %v7689 = vpop.f32.mrf.mxu0
        %v7690 = vadd.f32 %v7641, %v7689
        %7691 = vdwg.mxu0
        %7692 = vmatpush.bf16.msra.mxu0 %v6765
        %7693 = vmatpush.bf16.msra.mxu0 %v6763
        %7694 = vmatpush.bf16.msra.mxu0 %v6761
        %7695 = vmatpush.bf16.msra.mxu0 %v6759
        %7696 = vmatpush.bf16.msra.mxu0 %v6757
        %7697 = vmatpush.bf16.msra.mxu0 %v6755
        %7698 = vmatpush.bf16.msra.mxu0 %v6753
        %7699 = vmatpush.bf16.msra.mxu0 %v6751
        %7700 = vmatmul.bf16.gmra.mxu0 %v5964
        %v7701 = vpop.f32.mrf.mxu0
        %v7702 = vadd.f32 %v7653, %v7701
        %v7703 = vpop.f32.mrf.mxu0
        %v7704 = vadd.f32 %v7655, %v7703
        %7705 = vmatmul.bf16.gmra.mxu0 %v5974
        %v7706 = vpop.f32.mrf.mxu0
        %v7707 = vadd.f32 %v7658, %v7706
        %v7708 = vpop.f32.mrf.mxu0
        %v7709 = vadd.f32 %v7660, %v7708
        %7710 = vmatmul.bf16.gmra.mxu0 %v5984
        %v7711 = vpop.f32.mrf.mxu0
        %v7712 = vadd.f32 %v7663, %v7711
        %v7713 = vpop.f32.mrf.mxu0
        %v7714 = vadd.f32 %v7665, %v7713
        %7715 = vmatmul.bf16.gmra.mxu0 %v5994
        %v7716 = vpop.f32.mrf.mxu0
        %v7717 = vadd.f32 %v7668, %v7716
        %v7718 = vpop.f32.mrf.mxu0
        %v7719 = vadd.f32 %v7670, %v7718
        %7720 = vmatmul.bf16.gmra.mxu0 %v6004
        %v7721 = vpop.f32.mrf.mxu0
        %v7722 = vadd.f32 %v7673, %v7721
        %v7723 = vpop.f32.mrf.mxu0
        %v7724 = vadd.f32 %v7675, %v7723
        %7725 = vmatmul.bf16.gmra.mxu0 %v6014
        %v7726 = vpop.f32.mrf.mxu0
        %v7727 = vadd.f32 %v7678, %v7726
        %v7728 = vpop.f32.mrf.mxu0
        %v7729 = vadd.f32 %v7680, %v7728
        %7730 = vmatmul.bf16.gmra.mxu0 %v6024
        %v7731 = vpop.f32.mrf.mxu0
        %v7732 = vadd.f32 %v7683, %v7731
        %v7733 = vpop.f32.mrf.mxu0
        %v7734 = vadd.f32 %v7685, %v7733
        %7735 = vmatmul.bf16.gmra.mxu0 %v6034
        %v7736 = vpop.f32.mrf.mxu0
        %v7737 = vadd.f32 %v7688, %v7736
        %v7738 = vpop.f32.mrf.mxu0
        %v7739 = vadd.f32 %v7690, %v7738
        %7740 = vdwg.mxu0
        %7741 = vmatpush.bf16.msra.mxu0 %v6781
        %7742 = vmatpush.bf16.msra.mxu0 %v6779
        %7743 = vmatpush.bf16.msra.mxu0 %v6777
        %7744 = vmatpush.bf16.msra.mxu0 %v6775
        %7745 = vmatpush.bf16.msra.mxu0 %v6773
        %7746 = vmatpush.bf16.msra.mxu0 %v6771
        %7747 = vmatpush.bf16.msra.mxu0 %v6769
        %7748 = vmatpush.bf16.msra.mxu0 %v6767
        %7749 = vmatmul.bf16.gmra.mxu0 %v5965
        %v7750 = vpop.f32.mrf.mxu0
        %v7751 = vadd.f32 %v7702, %v7750
        %v7752 = vpop.f32.mrf.mxu0
        %v7753 = vadd.f32 %v7704, %v7752
        %7754 = vmatmul.bf16.gmra.mxu0 %v5975
        %v7755 = vpop.f32.mrf.mxu0
        %v7756 = vadd.f32 %v7707, %v7755
        %v7757 = vpop.f32.mrf.mxu0
        %v7758 = vadd.f32 %v7709, %v7757
        %7759 = vmatmul.bf16.gmra.mxu0 %v5985
        %v7760 = vpop.f32.mrf.mxu0
        %v7761 = vadd.f32 %v7712, %v7760
        %v7762 = vpop.f32.mrf.mxu0
        %v7763 = vadd.f32 %v7714, %v7762
        %7764 = vmatmul.bf16.gmra.mxu0 %v5995
        %v7765 = vpop.f32.mrf.mxu0
        %v7766 = vadd.f32 %v7717, %v7765
        %v7767 = vpop.f32.mrf.mxu0
        %v7768 = vadd.f32 %v7719, %v7767
        %7769 = vmatmul.bf16.gmra.mxu0 %v6005
        %v7770 = vpop.f32.mrf.mxu0
        %v7771 = vadd.f32 %v7722, %v7770
        %v7772 = vpop.f32.mrf.mxu0
        %v7773 = vadd.f32 %v7724, %v7772
        %7774 = vmatmul.bf16.gmra.mxu0 %v6015
        %v7775 = vpop.f32.mrf.mxu0
        %v7776 = vadd.f32 %v7727, %v7775
        %v7777 = vpop.f32.mrf.mxu0
        %v7778 = vadd.f32 %v7729, %v7777
        %7779 = vmatmul.bf16.gmra.mxu0 %v6025
        %v7780 = vpop.f32.mrf.mxu0
        %v7781 = vadd.f32 %v7732, %v7780
        %v7782 = vpop.f32.mrf.mxu0
        %v7783 = vadd.f32 %v7734, %v7782
        %7784 = vmatmul.bf16.gmra.mxu0 %v6035
        %v7785 = vpop.f32.mrf.mxu0
        %v7786 = vadd.f32 %v7737, %v7785
        %v7787 = vpop.f32.mrf.mxu0
        %v7788 = vadd.f32 %v7739, %v7787
        %7789 = vdwg.mxu0
        %7790 = vmatpush.bf16.msra.mxu0 %v6797
        %7791 = vmatpush.bf16.msra.mxu0 %v6795
        %7792 = vmatpush.bf16.msra.mxu0 %v6793
        %7793 = vmatpush.bf16.msra.mxu0 %v6791
        %7794 = vmatpush.bf16.msra.mxu0 %v6789
        %7795 = vmatpush.bf16.msra.mxu0 %v6787
        %7796 = vmatpush.bf16.msra.mxu0 %v6785
        %7797 = vmatpush.bf16.msra.mxu0 %v6783
        %7798 = vmatmul.bf16.gmra.mxu0 %v5966
        %v7799 = vpop.f32.mrf.mxu0
        %v7800 = vadd.f32 %v7751, %v7799
        %v7801 = vpop.f32.mrf.mxu0
        %v7802 = vadd.f32 %v7753, %v7801
        %7803 = vmatmul.bf16.gmra.mxu0 %v5976
        %v7804 = vpop.f32.mrf.mxu0
        %v7805 = vadd.f32 %v7756, %v7804
        %v7806 = vpop.f32.mrf.mxu0
        %v7807 = vadd.f32 %v7758, %v7806
        %7808 = vmatmul.bf16.gmra.mxu0 %v5986
        %v7809 = vpop.f32.mrf.mxu0
        %v7810 = vadd.f32 %v7761, %v7809
        %v7811 = vpop.f32.mrf.mxu0
        %v7812 = vadd.f32 %v7763, %v7811
        %7813 = vmatmul.bf16.gmra.mxu0 %v5996
        %v7814 = vpop.f32.mrf.mxu0
        %v7815 = vadd.f32 %v7766, %v7814
        %v7816 = vpop.f32.mrf.mxu0
        %v7817 = vadd.f32 %v7768, %v7816
        %7818 = vmatmul.bf16.gmra.mxu0 %v6006
        %v7819 = vpop.f32.mrf.mxu0
        %v7820 = vadd.f32 %v7771, %v7819
        %v7821 = vpop.f32.mrf.mxu0
        %v7822 = vadd.f32 %v7773, %v7821
        %7823 = vmatmul.bf16.gmra.mxu0 %v6016
        %v7824 = vpop.f32.mrf.mxu0
        %v7825 = vadd.f32 %v7776, %v7824
        %v7826 = vpop.f32.mrf.mxu0
        %v7827 = vadd.f32 %v7778, %v7826
        %7828 = vmatmul.bf16.gmra.mxu0 %v6026
        %v7829 = vpop.f32.mrf.mxu0
        %v7830 = vadd.f32 %v7781, %v7829
        %v7831 = vpop.f32.mrf.mxu0
        %v7832 = vadd.f32 %v7783, %v7831
        %7833 = vmatmul.bf16.gmra.mxu0 %v6036
        %v7834 = vpop.f32.mrf.mxu0
        %v7835 = vadd.f32 %v7786, %v7834
        %v7836 = vpop.f32.mrf.mxu0
        %v7837 = vadd.f32 %v7788, %v7836
        %7838 = vdwg.mxu0
        %7839 = vmatpush.bf16.msra.mxu0 %v6813
        %7840 = vmatpush.bf16.msra.mxu0 %v6811
        %7841 = vmatpush.bf16.msra.mxu0 %v6809
        %7842 = vmatpush.bf16.msra.mxu0 %v6807
        %7843 = vmatpush.bf16.msra.mxu0 %v6805
        %7844 = vmatpush.bf16.msra.mxu0 %v6803
        %7845 = vmatpush.bf16.msra.mxu0 %v6801
        %7846 = vmatpush.bf16.msra.mxu0 %v6799
        %7847 = vmatmul.bf16.gmra.mxu0 %v5967
        %v7848 = vpop.f32.mrf.mxu0
        %v7849 = vadd.f32 %v7800, %v7848
        %v7850 = vpop.f32.mrf.mxu0
        %v7851 = vadd.f32 %v7802, %v7850
        %7852 = vmatmul.bf16.gmra.mxu0 %v5977
        %v7853 = vpop.f32.mrf.mxu0
        %v7854 = vadd.f32 %v7805, %v7853
        %v7855 = vpop.f32.mrf.mxu0
        %v7856 = vadd.f32 %v7807, %v7855
        %7857 = vmatmul.bf16.gmra.mxu0 %v5987
        %v7858 = vpop.f32.mrf.mxu0
        %v7859 = vadd.f32 %v7810, %v7858
        %v7860 = vpop.f32.mrf.mxu0
        %v7861 = vadd.f32 %v7812, %v7860
        %7862 = vmatmul.bf16.gmra.mxu0 %v5997
        %v7863 = vpop.f32.mrf.mxu0
        %v7864 = vadd.f32 %v7815, %v7863
        %v7865 = vpop.f32.mrf.mxu0
        %v7866 = vadd.f32 %v7817, %v7865
        %7867 = vmatmul.bf16.gmra.mxu0 %v6007
        %v7868 = vpop.f32.mrf.mxu0
        %v7869 = vadd.f32 %v7820, %v7868
        %v7870 = vpop.f32.mrf.mxu0
        %v7871 = vadd.f32 %v7822, %v7870
        %7872 = vmatmul.bf16.gmra.mxu0 %v6017
        %v7873 = vpop.f32.mrf.mxu0
        %v7874 = vadd.f32 %v7825, %v7873
        %v7875 = vpop.f32.mrf.mxu0
        %v7876 = vadd.f32 %v7827, %v7875
        %7877 = vmatmul.bf16.gmra.mxu0 %v6027
        %v7878 = vpop.f32.mrf.mxu0
        %v7879 = vadd.f32 %v7830, %v7878
        %v7880 = vpop.f32.mrf.mxu0
        %v7881 = vadd.f32 %v7832, %v7880
        %7882 = vmatmul.bf16.gmra.mxu0 %v6037
        %v7883 = vpop.f32.mrf.mxu0
        %v7884 = vadd.f32 %v7835, %v7883
        %v7885 = vpop.f32.mrf.mxu0
        %v7886 = vadd.f32 %v7837, %v7885
        %7887 = vdwg.mxu0
        %7888 = vmatpush.bf16.msra.mxu0 %v6829
        %7889 = vmatpush.bf16.msra.mxu0 %v6827
        %7890 = vmatpush.bf16.msra.mxu0 %v6825
        %7891 = vmatpush.bf16.msra.mxu0 %v6823
        %7892 = vmatpush.bf16.msra.mxu0 %v6821
        %7893 = vmatpush.bf16.msra.mxu0 %v6819
        %7894 = vmatpush.bf16.msra.mxu0 %v6817
        %7895 = vmatpush.bf16.msra.mxu0 %v6815
        %7896 = vmatmul.bf16.gmra.mxu0 %v5968
        %v7897 = vpop.f32.mrf.mxu0
        %v7898 = vadd.f32 %v7849, %v7897
        %v7899 = vpop.f32.mrf.mxu0
        %v7900 = vadd.f32 %v7851, %v7899
        %7901 = vmatmul.bf16.gmra.mxu0 %v5978
        %v7902 = vpop.f32.mrf.mxu0
        %v7903 = vadd.f32 %v7854, %v7902
        %v7904 = vpop.f32.mrf.mxu0
        %v7905 = vadd.f32 %v7856, %v7904
        %7906 = vmatmul.bf16.gmra.mxu0 %v5988
        %v7907 = vpop.f32.mrf.mxu0
        %v7908 = vadd.f32 %v7859, %v7907
        %v7909 = vpop.f32.mrf.mxu0
        %v7910 = vadd.f32 %v7861, %v7909
        %7911 = vmatmul.bf16.gmra.mxu0 %v5998
        %v7912 = vpop.f32.mrf.mxu0
        %v7913 = vadd.f32 %v7864, %v7912
        %v7914 = vpop.f32.mrf.mxu0
        %v7915 = vadd.f32 %v7866, %v7914
        %7916 = vmatmul.bf16.gmra.mxu0 %v6008
        %v7917 = vpop.f32.mrf.mxu0
        %v7918 = vadd.f32 %v7869, %v7917
        %v7919 = vpop.f32.mrf.mxu0
        %v7920 = vadd.f32 %v7871, %v7919
        %7921 = vmatmul.bf16.gmra.mxu0 %v6018
        %v7922 = vpop.f32.mrf.mxu0
        %v7923 = vadd.f32 %v7874, %v7922
        %v7924 = vpop.f32.mrf.mxu0
        %v7925 = vadd.f32 %v7876, %v7924
        %7926 = vmatmul.bf16.gmra.mxu0 %v6028
        %v7927 = vpop.f32.mrf.mxu0
        %v7928 = vadd.f32 %v7879, %v7927
        %v7929 = vpop.f32.mrf.mxu0
        %v7930 = vadd.f32 %v7881, %v7929
        %7931 = vmatmul.bf16.gmra.mxu0 %v6038
        %v7932 = vpop.f32.mrf.mxu0
        %v7933 = vadd.f32 %v7884, %v7932
        %v7934 = vpop.f32.mrf.mxu0
        %v7935 = vadd.f32 %v7886, %v7934
        %7936 = vdwg.mxu0
        %7937 = vmatpush.bf16.msra.mxu0 %v6845
        %7938 = vmatpush.bf16.msra.mxu0 %v6843
        %7939 = vmatpush.bf16.msra.mxu0 %v6841
        %7940 = vmatpush.bf16.msra.mxu0 %v6839
        %7941 = vmatpush.bf16.msra.mxu0 %v6837
        %7942 = vmatpush.bf16.msra.mxu0 %v6835
        %7943 = vmatpush.bf16.msra.mxu0 %v6833
        %7944 = vmatpush.bf16.msra.mxu0 %v6831
        %7945 = vmatmul.bf16.gmra.mxu0 %v5969
        %v7946 = vpop.f32.mrf.mxu0
        %v7947 = vadd.f32 %v7898, %v7946
        %v7948 = vpop.f32.mrf.mxu0
        %v7949 = vadd.f32 %v7900, %v7948
        %7950 = vmatmul.bf16.gmra.mxu0 %v5979
        %v7951 = vpop.f32.mrf.mxu0
        %v7952 = vadd.f32 %v7903, %v7951
        %v7953 = vpop.f32.mrf.mxu0
        %v7954 = vadd.f32 %v7905, %v7953
        %7955 = vmatmul.bf16.gmra.mxu0 %v5989
        %v7956 = vpop.f32.mrf.mxu0
        %v7957 = vadd.f32 %v7908, %v7956
        %v7958 = vpop.f32.mrf.mxu0
        %v7959 = vadd.f32 %v7910, %v7958
        %7960 = vmatmul.bf16.gmra.mxu0 %v5999
        %v7961 = vpop.f32.mrf.mxu0
        %v7962 = vadd.f32 %v7913, %v7961
        %v7963 = vpop.f32.mrf.mxu0
        %v7964 = vadd.f32 %v7915, %v7963
        %7965 = vmatmul.bf16.gmra.mxu0 %v6009
        %v7966 = vpop.f32.mrf.mxu0
        %v7967 = vadd.f32 %v7918, %v7966
        %v7968 = vpop.f32.mrf.mxu0
        %v7969 = vadd.f32 %v7920, %v7968
        %7970 = vmatmul.bf16.gmra.mxu0 %v6019
        %v7971 = vpop.f32.mrf.mxu0
        %v7972 = vadd.f32 %v7923, %v7971
        %v7973 = vpop.f32.mrf.mxu0
        %v7974 = vadd.f32 %v7925, %v7973
        %7975 = vmatmul.bf16.gmra.mxu0 %v6029
        %v7976 = vpop.f32.mrf.mxu0
        %v7977 = vadd.f32 %v7928, %v7976
        %v7978 = vpop.f32.mrf.mxu0
        %v7979 = vadd.f32 %v7930, %v7978
        %7980 = vmatmul.bf16.gmra.mxu0 %v6039
        %v7981 = vpop.f32.mrf.mxu0
        %v7982 = vadd.f32 %v7933, %v7981
        %v7983 = vpop.f32.mrf.mxu0
        %v7984 = vadd.f32 %v7935, %v7983
        %7985 = vdwg.mxu0
        %v7986 = vmax.f32 %v7457, 0.0
        %v7987 = vmax.f32 %v7947, 0.0
        %v7988 = vmax.f32 %v7459, 0.0
        %v7989 = vmax.f32 %v7949, 0.0
        %v7990 = vmax.f32 %v7462, 0.0
        %v7991 = vmax.f32 %v7952, 0.0
        %v7992 = vmax.f32 %v7464, 0.0
        %v7993 = vmax.f32 %v7954, 0.0
        %v7994 = vmax.f32 %v7467, 0.0
        %v7995 = vmax.f32 %v7957, 0.0
        %v7996 = vmax.f32 %v7469, 0.0
        %v7997 = vmax.f32 %v7959, 0.0
        %v7998 = vmax.f32 %v7472, 0.0
        %v7999 = vmax.f32 %v7962, 0.0
        %v8000 = vmax.f32 %v7474, 0.0
        %v8001 = vmax.f32 %v7964, 0.0
        %v8002 = vmax.f32 %v7477, 0.0
        %v8003 = vmax.f32 %v7967, 0.0
        %v8004 = vmax.f32 %v7479, 0.0
        %v8005 = vmax.f32 %v7969, 0.0
        %v8006 = vmax.f32 %v7482, 0.0
        %v8007 = vmax.f32 %v7972, 0.0
        %v8008 = vmax.f32 %v7484, 0.0
        %v8009 = vmax.f32 %v7974, 0.0
        %v8010 = vmax.f32 %v7487, 0.0
        %v8011 = vmax.f32 %v7977, 0.0
        %v8012 = vmax.f32 %v7489, 0.0
        %v8013 = vmax.f32 %v7979, 0.0
        %v8014 = vmax.f32 %v7492, 0.0
        %v8015 = vmax.f32 %v7982, 0.0
        %v8016 = vmax.f32 %v7494, 0.0
        %v8017 = vmax.f32 %v7984, 0.0
        %v8018 = vpack.c.bf16 %v7988, %v7986
        %v8019 = vpack.c.bf16 %v7989, %v7987
        %v8020 = vpack.c.bf16 %v7992, %v7990
        %v8021 = vpack.c.bf16 %v7993, %v7991
        %v8022 = vpack.c.bf16 %v7996, %v7994
        %v8023 = vpack.c.bf16 %v7997, %v7995
        %v8024 = vpack.c.bf16 %v8000, %v7998
        %v8025 = vpack.c.bf16 %v8001, %v7999
        %v8026 = vpack.c.bf16 %v8004, %v8002
        %v8027 = vpack.c.bf16 %v8005, %v8003
        %v8028 = vpack.c.bf16 %v8008, %v8006
        %v8029 = vpack.c.bf16 %v8009, %v8007
        %v8030 = vpack.c.bf16 %v8012, %v8010
        %v8031 = vpack.c.bf16 %v8013, %v8011
        %v8032 = vpack.c.bf16 %v8016, %v8014
        %v8033 = vpack.c.bf16 %v8017, %v8015
        %v8034 = vld [vmem:[%s9] sm:$0xf]
        %v8035 = vld [vmem:[%s9 + $0x4] sm:$0xf]
        %v8036 = vld [vmem:[%s9 + $0x8] sm:$0xf]
        %v8037 = vld [vmem:[%s9 + $0xc] sm:$0xf]
        %v8038 = vld [vmem:[%s9 + $0x10] sm:$0xf]
        %v8039 = vld [vmem:[%s9 + $0x14] sm:$0xf]
        %v8046 = vunpack.c.l.b16 %v8034
        %v8047 = vunpack.c.l.b16 %v8035
        %v8048 = vunpack.c.l.b16 %v8036
        %v8049 = vunpack.c.l.b16 %v8037
        %v8050 = vunpack.c.l.b16 %v8038
        %v8051 = vunpack.c.l.b16 %v8039
        %v8052 = vpack.c.b16 %v8047, %v8046
        %v8053 = vpack.c.b16 %v8049, %v8048
        %v8054 = vpack.c.b16 %v8051, %v8050
        %v8056 = vsel %vm3669, %v8052, 0
        %v8059 = vsel %vm3669, %v8053, 0
        %v8062 = vsel %vm3669, %v8054, 0
        %v8065 = vsel %vm926, %v8032, 0
        %v8068 = vsel %vm926, %v8033, 0
        %8070 = vmatpush.bf16.msra.mxu0 %v8065
        %8071 = vmatpush.bf16.msra.mxu0 %v8030
        %8072 = vmatpush.bf16.msra.mxu0 %v8028
        %8073 = vmatpush.bf16.msra.mxu0 %v8026
        %8074 = vmatpush.bf16.msra.mxu0 %v8024
        %8075 = vmatpush.bf16.msra.mxu0 %v8022
        %8076 = vmatpush.bf16.msra.mxu0 %v8020
        %8077 = vmatpush.bf16.msra.mxu0 %v8018
        %8078 = vmatmul.bf16.gmra.mxu0 %v8056
        %v8079 = vpop.f32.mrf.mxu0
        %v8080 = vadd.f32 0.0, %v8079
        %v8081 = vpop.f32.mrf.mxu0
        %v8082 = vadd.f32 0.0, %v8081
        %8083 = vmatmul.bf16.gmra.mxu0 %v8059
        %v8084 = vpop.f32.mrf.mxu0
        %v8085 = vadd.f32 0.0, %v8084
        %v8086 = vpop.f32.mrf.mxu0
        %v8087 = vadd.f32 0.0, %v8086
        %8088 = vmatmul.bf16.gmra.mxu0 %v8062
        %v8089 = vpop.f32.mrf.mxu0
        %v8090 = vadd.f32 0.0, %v8089
        %v8091 = vpop.f32.mrf.mxu0
        %v8092 = vadd.f32 0.0, %v8091
        %8093 = vdwg.mxu0
        %8094 = vmatpush.bf16.msra.mxu0 %v8068
        %8095 = vmatpush.bf16.msra.mxu0 %v8031
        %8096 = vmatpush.bf16.msra.mxu0 %v8029
        %8097 = vmatpush.bf16.msra.mxu0 %v8027
        %8098 = vmatpush.bf16.msra.mxu0 %v8025
        %8099 = vmatpush.bf16.msra.mxu0 %v8023
        %8100 = vmatpush.bf16.msra.mxu0 %v8021
        %8101 = vmatpush.bf16.msra.mxu0 %v8019
        %8102 = vmatmul.bf16.gmra.mxu0 %v8056
        %v8103 = vpop.f32.mrf.mxu0
        %v8104 = vadd.f32 0.0, %v8103
        %v8105 = vpop.f32.mrf.mxu0
        %v8106 = vadd.f32 0.0, %v8105
        %8107 = vmatmul.bf16.gmra.mxu0 %v8059
        %v8108 = vpop.f32.mrf.mxu0
        %v8109 = vadd.f32 0.0, %v8108
        %v8110 = vpop.f32.mrf.mxu0
        %v8111 = vadd.f32 0.0, %v8110
        %8112 = vmatmul.bf16.gmra.mxu0 %v8062
        %v8113 = vpop.f32.mrf.mxu0
        %v8114 = vadd.f32 0.0, %v8113
        %v8115 = vpop.f32.mrf.mxu0
        %v8116 = vadd.f32 0.0, %v8115
        %8117 = vdwg.mxu0
        %v8118 = vld [vmem:[%s10] sm:$0xf]
        %v8119 = vld [vmem:[%s10 + $0x4] sm:$0xf]
        %v8120 = vld [vmem:[%s10 + $0x8] sm:$0xf]
        %v8121 = vld [vmem:[%s10 + $0xc] sm:$0xf]
        %v8122 = vld [vmem:[%s10 + $0x10] sm:$0xf]
        %v8123 = vld [vmem:[%s10 + $0x14] sm:$0xf]
        %v8130 = vunpack.c.l.b16 %v8118
        %v8131 = vunpack.c.l.b16 %v8119
        %v8132 = vunpack.c.l.b16 %v8120
        %v8133 = vunpack.c.l.b16 %v8121
        %v8134 = vunpack.c.l.b16 %v8122
        %v8135 = vunpack.c.l.b16 %v8123
        %v8136 = vpack.c.b16 %v8131, %v8130
        %v8137 = vpack.c.b16 %v8133, %v8132
        %v8138 = vpack.c.b16 %v8135, %v8134
        %v8140 = vsel %vm3669, %v8136, 0
        %v8143 = vsel %vm3669, %v8137, 0
        %v8146 = vsel %vm3669, %v8138, 0
        %8148 = vmatpush.bf16.msra.mxu0 %v8065
        %8149 = vmatpush.bf16.msra.mxu0 %v8030
        %8150 = vmatpush.bf16.msra.mxu0 %v8028
        %8151 = vmatpush.bf16.msra.mxu0 %v8026
        %8152 = vmatpush.bf16.msra.mxu0 %v8024
        %8153 = vmatpush.bf16.msra.mxu0 %v8022
        %8154 = vmatpush.bf16.msra.mxu0 %v8020
        %8155 = vmatpush.bf16.msra.mxu0 %v8018
        %8156 = vmatmul.bf16.gmra.mxu0 %v8140
        %v8157 = vpop.f32.mrf.mxu0
        %v8158 = vadd.f32 0.0, %v8157
        %v8159 = vpop.f32.mrf.mxu0
        %v8160 = vadd.f32 0.0, %v8159
        %8161 = vmatmul.bf16.gmra.mxu0 %v8143
        %v8162 = vpop.f32.mrf.mxu0
        %v8163 = vadd.f32 0.0, %v8162
        %v8164 = vpop.f32.mrf.mxu0
        %v8165 = vadd.f32 0.0, %v8164
        %8166 = vmatmul.bf16.gmra.mxu0 %v8146
        %v8167 = vpop.f32.mrf.mxu0
        %v8168 = vadd.f32 0.0, %v8167
        %v8169 = vpop.f32.mrf.mxu0
        %v8170 = vadd.f32 0.0, %v8169
        %8171 = vdwg.mxu0
        %8172 = vmatpush.bf16.msra.mxu0 %v8068
        %8173 = vmatpush.bf16.msra.mxu0 %v8031
        %8174 = vmatpush.bf16.msra.mxu0 %v8029
        %8175 = vmatpush.bf16.msra.mxu0 %v8027
        %8176 = vmatpush.bf16.msra.mxu0 %v8025
        %8177 = vmatpush.bf16.msra.mxu0 %v8023
        %8178 = vmatpush.bf16.msra.mxu0 %v8021
        %8179 = vmatpush.bf16.msra.mxu0 %v8019
        %8180 = vmatmul.bf16.gmra.mxu0 %v8140
        %v8181 = vpop.f32.mrf.mxu0
        %v8182 = vadd.f32 0.0, %v8181
        %v8183 = vpop.f32.mrf.mxu0
        %v8184 = vadd.f32 0.0, %v8183
        %8185 = vmatmul.bf16.gmra.mxu0 %v8143
        %v8186 = vpop.f32.mrf.mxu0
        %v8187 = vadd.f32 0.0, %v8186
        %v8188 = vpop.f32.mrf.mxu0
        %v8189 = vadd.f32 0.0, %v8188
        %8190 = vmatmul.bf16.gmra.mxu0 %v8146
        %v8191 = vpop.f32.mrf.mxu0
        %v8192 = vadd.f32 0.0, %v8191
        %v8193 = vpop.f32.mrf.mxu0
        %v8194 = vadd.f32 0.0, %v8193
        %8195 = vdwg.mxu0
        %v8196 = vmax.f32 %v8080, %v8158
        %v8197 = vmax.f32 %v8104, %v8182
        %v8198 = vmax.f32 %v8082, %v8160
        %v8199 = vmax.f32 %v8106, %v8184
        %v8200 = vmax.f32 %v8085, %v8163
        %v8201 = vmax.f32 %v8109, %v8187
        %v8202 = vmax.f32 %v8087, %v8165
        %v8203 = vmax.f32 %v8111, %v8189
        %v8204 = vmax.f32 %v8090, %v8168
        %v8205 = vmax.f32 %v8114, %v8192
        %v8206 = vmax.f32 %v8092, %v8170
        %v8207 = vmax.f32 %v8116, %v8194
        %v8208 = vpack.c.bf16 %v8198, %v8196
        %v8209 = vpack.c.bf16 %v8199, %v8197
        %v8210 = vpack.c.bf16 %v8202, %v8200
        %v8211 = vpack.c.bf16 %v8203, %v8201
        %v8212 = vpack.c.bf16 %v8206, %v8204
        %v8213 = vpack.c.bf16 %v8207, %v8205
        %v8214 = vld [vmem:[%s11] sm:$0xf]
        %v8215 = vld [vmem:[%s11 + $0x4] sm:$0xf]
        %v8216 = vld [vmem:[%s11 + $0x8] sm:$0xf]
        %v8217 = vld [vmem:[%s11 + $0xc] sm:$0xf]
        %v8218 = vld [vmem:[%s11 + $0x10] sm:$0xf]
        %v8219 = vld [vmem:[%s11 + $0x14] sm:$0xf]
        %v8220 = vld [vmem:[%s11 + $0x18] sm:$0xf]
        %v8221 = vld [vmem:[%s11 + $0x1c] sm:$0xf]
        %v8222 = vld [vmem:[%s11 + $0x20] sm:$0xf]
        %v8223 = vld [vmem:[%s11 + $0x24] sm:$0xf]
        %v8224 = vld [vmem:[%s11 + $0x28] sm:$0xf]
        %v8225 = vld [vmem:[%s11 + $0x2c] sm:$0xf]
        %v8226 = vld [vmem:[%s11 + $0x30] sm:$0xf]
        %v8227 = vld [vmem:[%s11 + $0x34] sm:$0xf]
        %v8228 = vld [vmem:[%s11 + $0x38] sm:$0xf]
        %v8229 = vld [vmem:[%s11 + $0x3c] sm:$0xf]
        %v8230 = vld [vmem:[%s11 + $0x40] sm:$0xf]
        %v8231 = vld [vmem:[%s11 + $0x44] sm:$0xf]
        %v8232 = vld [vmem:[%s11 + $0x48] sm:$0xf]
        %v8233 = vld [vmem:[%s11 + $0x4c] sm:$0xf]
        %v8234 = vld [vmem:[%s11 + $0x50] sm:$0xf]
        %v8235 = vld [vmem:[%s11 + $0x54] sm:$0xf]
        %v8236 = vld [vmem:[%s11 + $0x58] sm:$0xf]
        %v8237 = vld [vmem:[%s11 + $0x5c] sm:$0xf]
        %v8238 = vld [vmem:[%s11 + $0x60] sm:$0xf]
        %v8239 = vld [vmem:[%s11 + $0x64] sm:$0xf]
        %v8240 = vld [vmem:[%s11 + $0x68] sm:$0xf]
        %v8241 = vld [vmem:[%s11 + $0x6c] sm:$0xf]
        %v8242 = vld [vmem:[%s11 + $0x70] sm:$0xf]
        %v8243 = vld [vmem:[%s11 + $0x74] sm:$0xf]
        %v8274 = vunpack.c.l.b16 %v8214
        %v8275 = vunpack.c.l.b16 %v8215
        %v8276 = vunpack.c.l.b16 %v8216
        %v8277 = vunpack.c.l.b16 %v8217
        %v8278 = vunpack.c.l.b16 %v8218
        %v8279 = vunpack.c.l.b16 %v8219
        %v8280 = vunpack.c.l.b16 %v8220
        %v8281 = vunpack.c.l.b16 %v8221
        %v8282 = vunpack.c.l.b16 %v8222
        %v8283 = vunpack.c.l.b16 %v8223
        %v8284 = vunpack.c.l.b16 %v8224
        %v8285 = vunpack.c.l.b16 %v8225
        %v8286 = vunpack.c.l.b16 %v8226
        %v8287 = vunpack.c.l.b16 %v8227
        %v8288 = vunpack.c.l.b16 %v8228
        %v8289 = vunpack.c.l.b16 %v8229
        %v8290 = vunpack.c.l.b16 %v8230
        %v8291 = vunpack.c.l.b16 %v8231
        %v8292 = vunpack.c.l.b16 %v8232
        %v8293 = vunpack.c.l.b16 %v8233
        %v8294 = vunpack.c.l.b16 %v8234
        %v8295 = vunpack.c.l.b16 %v8235
        %v8296 = vunpack.c.l.b16 %v8236
        %v8297 = vunpack.c.l.b16 %v8237
        %v8298 = vunpack.c.l.b16 %v8238
        %v8299 = vunpack.c.l.b16 %v8239
        %v8300 = vunpack.c.l.b16 %v8240
        %v8301 = vunpack.c.l.b16 %v8241
        %v8302 = vunpack.c.l.b16 %v8242
        %v8303 = vunpack.c.l.b16 %v8243
        %v8304 = vpack.c.b16 %v8275, %v8274
        %v8305 = vpack.c.b16 %v8277, %v8276
        %v8306 = vpack.c.b16 %v8279, %v8278
        %v8307 = vpack.c.b16 %v8281, %v8280
        %v8308 = vpack.c.b16 %v8283, %v8282
        %v8309 = vpack.c.b16 %v8285, %v8284
        %v8310 = vpack.c.b16 %v8287, %v8286
        %v8311 = vpack.c.b16 %v8289, %v8288
        %v8312 = vpack.c.b16 %v8291, %v8290
        %v8313 = vpack.c.b16 %v8293, %v8292
        %v8314 = vpack.c.b16 %v8295, %v8294
        %v8315 = vpack.c.b16 %v8297, %v8296
        %v8316 = vpack.c.b16 %v8299, %v8298
        %v8317 = vpack.c.b16 %v8301, %v8300
        %v8318 = vpack.c.b16 %v8303, %v8302
        %vm8334 = vcmask 916480
        %v8336 = vsel %vm8334, %v8209, 0
        %v8339 = vsel %vm8334, %v8211, 0
        %v8342 = vsel %vm8334, %v8213, 0
        %8344 = vmatpush.bf16.msra.mxu0 %v8311
        %8345 = vmatpush.bf16.msra.mxu0 %v8310
        %8346 = vmatpush.bf16.msra.mxu0 %v8309
        %8347 = vmatpush.bf16.msra.mxu0 %v8308
        %8348 = vmatpush.bf16.msra.mxu0 %v8307
        %8349 = vmatpush.bf16.msra.mxu0 %v8306
        %8350 = vmatpush.bf16.msra.mxu0 %v8305
        %8351 = vmatpush.bf16.msra.mxu0 %v8304
        %8352 = vmatmul.bf16.gmra.mxu0 %v8208
        %v8353 = vpop.f32.mrf.mxu0
        %v8354 = vadd.f32 0.0, %v8353
        %v8355 = vpop.f32.mrf.mxu0
        %v8356 = vadd.f32 0.0, %v8355
        %8357 = vmatmul.bf16.gmra.mxu0 %v8210
        %v8358 = vpop.f32.mrf.mxu0
        %v8359 = vadd.f32 0.0, %v8358
        %v8360 = vpop.f32.mrf.mxu0
        %v8361 = vadd.f32 0.0, %v8360
        %8362 = vmatmul.bf16.gmra.mxu0 %v8212
        %v8363 = vpop.f32.mrf.mxu0
        %v8364 = vadd.f32 0.0, %v8363
        %v8365 = vpop.f32.mrf.mxu0
        %v8366 = vadd.f32 0.0, %v8365
        %8367 = vdwg.mxu0
        %8368 = vmatpush.bf16.msra.mxu0 0
        %8369 = vmatpush.bf16.msra.mxu0 %v8318
        %8370 = vmatpush.bf16.msra.mxu0 %v8317
        %8371 = vmatpush.bf16.msra.mxu0 %v8316
        %8372 = vmatpush.bf16.msra.mxu0 %v8315
        %8373 = vmatpush.bf16.msra.mxu0 %v8314
        %8374 = vmatpush.bf16.msra.mxu0 %v8313
        %8375 = vmatpush.bf16.msra.mxu0 %v8312
        %8376 = vmatmul.bf16.gmra.mxu0 %v8336
        %v8377 = vpop.f32.mrf.mxu0
        %v8378 = vadd.f32 %v8354, %v8377
        %v8379 = vpop.f32.mrf.mxu0
        %v8380 = vadd.f32 %v8356, %v8379
        %8381 = vmatmul.bf16.gmra.mxu0 %v8339
        %v8382 = vpop.f32.mrf.mxu0
        %v8383 = vadd.f32 %v8359, %v8382
        %v8384 = vpop.f32.mrf.mxu0
        %v8385 = vadd.f32 %v8361, %v8384
        %8386 = vmatmul.bf16.gmra.mxu0 %v8342
        %v8387 = vpop.f32.mrf.mxu0
        %v8388 = vadd.f32 %v8364, %v8387
        %v8389 = vpop.f32.mrf.mxu0
        %v8390 = vadd.f32 %v8366, %v8389
        %8391 = vdwg.mxu0
        %v8392 = vld [vmem:[%s12] sm:$0xf]
        %v8393 = vld [vmem:[%s12 + $0x4] sm:$0xf]
        %v8394 = vld [vmem:[%s12 + $0x8] sm:$0xf]
        %v8395 = vld [vmem:[%s12 + $0xc] sm:$0xf]
        %v8396 = vld [vmem:[%s12 + $0x10] sm:$0xf]
        %v8397 = vld [vmem:[%s12 + $0x14] sm:$0xf]
        %v8398 = vld [vmem:[%s12 + $0x18] sm:$0xf]
        %v8399 = vld [vmem:[%s12 + $0x1c] sm:$0xf]
        %v8400 = vld [vmem:[%s12 + $0x20] sm:$0xf]
        %v8401 = vld [vmem:[%s12 + $0x24] sm:$0xf]
        %v8402 = vld [vmem:[%s12 + $0x28] sm:$0xf]
        %v8403 = vld [vmem:[%s12 + $0x2c] sm:$0xf]
        %v8404 = vld [vmem:[%s12 + $0x30] sm:$0xf]
        %v8405 = vld [vmem:[%s12 + $0x34] sm:$0xf]
        %v8406 = vld [vmem:[%s12 + $0x38] sm:$0xf]
        %v8407 = vld [vmem:[%s12 + $0x3c] sm:$0xf]
        %v8408 = vld [vmem:[%s12 + $0x40] sm:$0xf]
        %v8409 = vld [vmem:[%s12 + $0x44] sm:$0xf]
        %v8410 = vld [vmem:[%s12 + $0x48] sm:$0xf]
        %v8411 = vld [vmem:[%s12 + $0x4c] sm:$0xf]
        %v8412 = vld [vmem:[%s12 + $0x50] sm:$0xf]
        %v8413 = vld [vmem:[%s12 + $0x54] sm:$0xf]
        %v8414 = vld [vmem:[%s12 + $0x58] sm:$0xf]
        %v8415 = vld [vmem:[%s12 + $0x5c] sm:$0xf]
        %v8416 = vld [vmem:[%s12 + $0x60] sm:$0xf]
        %v8417 = vld [vmem:[%s12 + $0x64] sm:$0xf]
        %v8418 = vld [vmem:[%s12 + $0x68] sm:$0xf]
        %v8419 = vld [vmem:[%s12 + $0x6c] sm:$0xf]
        %v8420 = vld [vmem:[%s12 + $0x70] sm:$0xf]
        %v8421 = vld [vmem:[%s12 + $0x74] sm:$0xf]
        %v8452 = vunpack.c.l.b16 %v8392
        %v8453 = vunpack.c.l.b16 %v8393
        %v8454 = vunpack.c.l.b16 %v8394
        %v8455 = vunpack.c.l.b16 %v8395
        %v8456 = vunpack.c.l.b16 %v8396
        %v8457 = vunpack.c.l.b16 %v8397
        %v8458 = vunpack.c.l.b16 %v8398
        %v8459 = vunpack.c.l.b16 %v8399
        %v8460 = vunpack.c.l.b16 %v8400
        %v8461 = vunpack.c.l.b16 %v8401
        %v8462 = vunpack.c.l.b16 %v8402
        %v8463 = vunpack.c.l.b16 %v8403
        %v8464 = vunpack.c.l.b16 %v8404
        %v8465 = vunpack.c.l.b16 %v8405
        %v8466 = vunpack.c.l.b16 %v8406
        %v8467 = vunpack.c.l.b16 %v8407
        %v8468 = vunpack.c.l.b16 %v8408
        %v8469 = vunpack.c.l.b16 %v8409
        %v8470 = vunpack.c.l.b16 %v8410
        %v8471 = vunpack.c.l.b16 %v8411
        %v8472 = vunpack.c.l.b16 %v8412
        %v8473 = vunpack.c.l.b16 %v8413
        %v8474 = vunpack.c.l.b16 %v8414
        %v8475 = vunpack.c.l.b16 %v8415
        %v8476 = vunpack.c.l.b16 %v8416
        %v8477 = vunpack.c.l.b16 %v8417
        %v8478 = vunpack.c.l.b16 %v8418
        %v8479 = vunpack.c.l.b16 %v8419
        %v8480 = vunpack.c.l.b16 %v8420
        %v8481 = vunpack.c.l.b16 %v8421
        %v8482 = vpack.c.b16 %v8453, %v8452
        %v8483 = vpack.c.b16 %v8455, %v8454
        %v8484 = vpack.c.b16 %v8457, %v8456
        %v8485 = vpack.c.b16 %v8459, %v8458
        %v8486 = vpack.c.b16 %v8461, %v8460
        %v8487 = vpack.c.b16 %v8463, %v8462
        %v8488 = vpack.c.b16 %v8465, %v8464
        %v8489 = vpack.c.b16 %v8467, %v8466
        %v8490 = vpack.c.b16 %v8469, %v8468
        %v8491 = vpack.c.b16 %v8471, %v8470
        %v8492 = vpack.c.b16 %v8473, %v8472
        %v8493 = vpack.c.b16 %v8475, %v8474
        %v8494 = vpack.c.b16 %v8477, %v8476
        %v8495 = vpack.c.b16 %v8479, %v8478
        %v8496 = vpack.c.b16 %v8481, %v8480
        %8512 = vmatpush.bf16.msra.mxu0 %v8489
        %8513 = vmatpush.bf16.msra.mxu0 %v8488
        %8514 = vmatpush.bf16.msra.mxu0 %v8487
        %8515 = vmatpush.bf16.msra.mxu0 %v8486
        %8516 = vmatpush.bf16.msra.mxu0 %v8485
        %8517 = vmatpush.bf16.msra.mxu0 %v8484
        %8518 = vmatpush.bf16.msra.mxu0 %v8483
        %8519 = vmatpush.bf16.msra.mxu0 %v8482
        %8520 = vmatmul.bf16.gmra.mxu0 %v8208
        %v8521 = vpop.f32.mrf.mxu0
        %v8522 = vadd.f32 0.0, %v8521
        %v8523 = vpop.f32.mrf.mxu0
        %v8524 = vadd.f32 0.0, %v8523
        %8525 = vmatmul.bf16.gmra.mxu0 %v8210
        %v8526 = vpop.f32.mrf.mxu0
        %v8527 = vadd.f32 0.0, %v8526
        %v8528 = vpop.f32.mrf.mxu0
        %v8529 = vadd.f32 0.0, %v8528
        %8530 = vmatmul.bf16.gmra.mxu0 %v8212
        %v8531 = vpop.f32.mrf.mxu0
        %v8532 = vadd.f32 0.0, %v8531
        %v8533 = vpop.f32.mrf.mxu0
        %v8534 = vadd.f32 0.0, %v8533
        %8535 = vdwg.mxu0
        %8536 = vmatpush.bf16.msra.mxu0 0
        %8537 = vmatpush.bf16.msra.mxu0 %v8496
        %8538 = vmatpush.bf16.msra.mxu0 %v8495
        %8539 = vmatpush.bf16.msra.mxu0 %v8494
        %8540 = vmatpush.bf16.msra.mxu0 %v8493
        %8541 = vmatpush.bf16.msra.mxu0 %v8492
        %8542 = vmatpush.bf16.msra.mxu0 %v8491
        %8543 = vmatpush.bf16.msra.mxu0 %v8490
        %8544 = vmatmul.bf16.gmra.mxu0 %v8336
        %v8545 = vpop.f32.mrf.mxu0
        %v8546 = vadd.f32 %v8522, %v8545
        %v8547 = vpop.f32.mrf.mxu0
        %v8548 = vadd.f32 %v8524, %v8547
        %8549 = vmatmul.bf16.gmra.mxu0 %v8339
        %v8550 = vpop.f32.mrf.mxu0
        %v8551 = vadd.f32 %v8527, %v8550
        %v8552 = vpop.f32.mrf.mxu0
        %v8553 = vadd.f32 %v8529, %v8552
        %8554 = vmatmul.bf16.gmra.mxu0 %v8342
        %v8555 = vpop.f32.mrf.mxu0
        %v8556 = vadd.f32 %v8532, %v8555
        %v8557 = vpop.f32.mrf.mxu0
        %v8558 = vadd.f32 %v8534, %v8557
        %8559 = vdwg.mxu0
        %v8560 = vmax.f32 %v8378, %v8546
        %v8561 = vmax.f32 %v8380, %v8548
        %v8562 = vmax.f32 %v8383, %v8551
        %v8563 = vmax.f32 %v8385, %v8553
        %v8564 = vmax.f32 %v8388, %v8556
        %v8565 = vmax.f32 %v8390, %v8558
        %v8572 = vrot.slane %v8560, 1
        %v8573 = vrot.slane %v8561, 1
        %v8574 = vsel %vm830, %v8572, %v8573
        %v8575 = vrot.slane %v8562, 1
        %v8576 = vsel %vm830, %v8573, %v8575
        %v8577 = vrot.slane %v8563, 1
        %v8578 = vsel %vm830, %v8575, %v8577
        %v8579 = vrot.slane %v8564, 1
        %v8580 = vsel %vm830, %v8577, %v8579
        %v8581 = vrot.slane %v8565, 1
        %v8582 = vsel %vm830, %v8579, %v8581
        %v8589 = vrot.slane %v8560, 2
        %v8590 = vrot.slane %v8561, 2
        %v8591 = vsel %vm926, %v8589, %v8590
        %v8592 = vrot.slane %v8562, 2
        %v8593 = vsel %vm926, %v8590, %v8592
        %v8594 = vrot.slane %v8563, 2
        %v8595 = vsel %vm926, %v8592, %v8594
        %v8596 = vrot.slane %v8564, 2
        %v8597 = vsel %vm926, %v8594, %v8596
        %v8598 = vrot.slane %v8565, 2
        %v8599 = vsel %vm926, %v8596, %v8598
        %v8606 = vrot.slane %v8560, 3
        %v8607 = vrot.slane %v8561, 3
        %v8608 = vsel %vm1022, %v8606, %v8607
        %v8609 = vrot.slane %v8562, 3
        %v8610 = vsel %vm1022, %v8607, %v8609
        %v8611 = vrot.slane %v8563, 3
        %v8612 = vsel %vm1022, %v8609, %v8611
        %v8613 = vrot.slane %v8564, 3
        %v8614 = vsel %vm1022, %v8611, %v8613
        %v8615 = vrot.slane %v8565, 3
        %v8616 = vsel %vm1022, %v8613, %v8615
        %v8623 = vrot.slane %v8560, 4
        %v8624 = vrot.slane %v8561, 4
        %v8625 = vsel %vm1118, %v8623, %v8624
        %v8626 = vrot.slane %v8562, 4
        %v8627 = vsel %vm1118, %v8624, %v8626
        %v8628 = vrot.slane %v8563, 4
        %v8629 = vsel %vm1118, %v8626, %v8628
        %v8630 = vrot.slane %v8564, 4
        %v8631 = vsel %vm1118, %v8628, %v8630
        %v8632 = vrot.slane %v8565, 4
        %v8633 = vsel %vm1118, %v8630, %v8632
        %v8640 = vpack.c.bf16 %v8561, %v8560
        %v8641 = vpack.c.bf16 %v8576, %v8574
        %v8642 = vpack.c.bf16 %v8593, %v8591
        %v8643 = vpack.c.bf16 %v8610, %v8608
        %v8644 = vpack.c.bf16 %v8627, %v8625
        %v8645 = vpack.c.bf16 %v8563, %v8562
        %v8646 = vpack.c.bf16 %v8580, %v8578
        %v8647 = vpack.c.bf16 %v8597, %v8595
        %v8648 = vpack.c.bf16 %v8614, %v8612
        %v8649 = vpack.c.bf16 %v8631, %v8629
        %v8650 = vpack.c.bf16 %v8565, %v8564
        %v8651 = vpack.c.bf16 %v8581, %v8582
        %v8652 = vpack.c.bf16 %v8598, %v8599
        %v8653 = vpack.c.bf16 %v8615, %v8616
        %v8654 = vpack.c.bf16 %v8632, %v8633
        %v8655 = vld [vmem:[%s13] sm:$0xf]
        %v8656 = vld [vmem:[%s13 + $0x4] sm:$0xf]
        %v8657 = vld [vmem:[%s13 + $0x8] sm:$0xf]
        %v8658 = vld [vmem:[%s13 + $0xc] sm:$0xf]
        %v8659 = vld [vmem:[%s13 + $0x10] sm:$0xf]
        %v8660 = vld [vmem:[%s13 + $0x14] sm:$0xf]
        %v8661 = vld [vmem:[%s13 + $0x18] sm:$0xf]
        %v8662 = vld [vmem:[%s13 + $0x1c] sm:$0xf]
        %v8663 = vld [vmem:[%s13 + $0x20] sm:$0xf]
        %v8664 = vld [vmem:[%s13 + $0x24] sm:$0xf]
        %v8665 = vld [vmem:[%s13 + $0x28] sm:$0xf]
        %v8666 = vld [vmem:[%s13 + $0x2c] sm:$0xf]
        %v8667 = vld [vmem:[%s13 + $0x30] sm:$0xf]
        %v8668 = vld [vmem:[%s13 + $0x34] sm:$0xf]
        %v8669 = vld [vmem:[%s13 + $0x38] sm:$0xf]
        %v8670 = vld [vmem:[%s13 + $0x3c] sm:$0xf]
        %v8671 = vld [vmem:[%s13 + $0x40] sm:$0xf]
        %v8672 = vld [vmem:[%s13 + $0x44] sm:$0xf]
        %v8673 = vld [vmem:[%s13 + $0x48] sm:$0xf]
        %v8674 = vld [vmem:[%s13 + $0x4c] sm:$0xf]
        %v8675 = vld [vmem:[%s13 + $0x50] sm:$0xf]
        %v8676 = vld [vmem:[%s13 + $0x54] sm:$0xf]
        %v8677 = vld [vmem:[%s13 + $0x58] sm:$0xf]
        %v8678 = vld [vmem:[%s13 + $0x5c] sm:$0xf]
        %v8679 = vld [vmem:[%s13 + $0x60] sm:$0xf]
        %v8680 = vld [vmem:[%s13 + $0x64] sm:$0xf]
        %v8681 = vld [vmem:[%s13 + $0x68] sm:$0xf]
        %v8682 = vld [vmem:[%s13 + $0x6c] sm:$0xf]
        %v8683 = vld [vmem:[%s13 + $0x70] sm:$0xf]
        %v8684 = vld [vmem:[%s13 + $0x74] sm:$0xf]
        %v8685 = vld [vmem:[%s13 + $0x78] sm:$0xf]
        %v8686 = vld [vmem:[%s13 + $0x7c] sm:$0xf]
        %v8687 = vld [vmem:[%s13 + $0x80] sm:$0xf]
        %v8688 = vld [vmem:[%s13 + $0x84] sm:$0xf]
        %v8689 = vld [vmem:[%s13 + $0x88] sm:$0xf]
        %v8690 = vld [vmem:[%s13 + $0x8c] sm:$0xf]
        %v8691 = vld [vmem:[%s13 + $0x90] sm:$0xf]
        %v8692 = vld [vmem:[%s13 + $0x94] sm:$0xf]
        %v8693 = vld [vmem:[%s13 + $0x98] sm:$0xf]
        %v8694 = vld [vmem:[%s13 + $0x9c] sm:$0xf]
        %v8695 = vld [vmem:[%s13 + $0xa0] sm:$0xf]
        %v8696 = vld [vmem:[%s13 + $0xa4] sm:$0xf]
        %v8697 = vld [vmem:[%s13 + $0xa8] sm:$0xf]
        %v8698 = vld [vmem:[%s13 + $0xac] sm:$0xf]
        %v8699 = vld [vmem:[%s13 + $0xb0] sm:$0xf]
        %v8700 = vld [vmem:[%s13 + $0xb4] sm:$0xf]
        %v8701 = vld [vmem:[%s13 + $0xb8] sm:$0xf]
        %v8702 = vld [vmem:[%s13 + $0xbc] sm:$0xf]
        %v8703 = vld [vmem:[%s13 + $0xc0] sm:$0xf]
        %v8704 = vld [vmem:[%s13 + $0xc4] sm:$0xf]
        %v8705 = vld [vmem:[%s13 + $0xc8] sm:$0xf]
        %v8706 = vld [vmem:[%s13 + $0xcc] sm:$0xf]
        %v8707 = vld [vmem:[%s13 + $0xd0] sm:$0xf]
        %v8708 = vld [vmem:[%s13 + $0xd4] sm:$0xf]
        %v8709 = vld [vmem:[%s13 + $0xd8] sm:$0xf]
        %v8710 = vld [vmem:[%s13 + $0xdc] sm:$0xf]
        %v8711 = vld [vmem:[%s13 + $0xe0] sm:$0xf]
        %v8712 = vld [vmem:[%s13 + $0xe4] sm:$0xf]
        %v8713 = vld [vmem:[%s13 + $0xe8] sm:$0xf]
        %v8714 = vld [vmem:[%s13 + $0xec] sm:$0xf]
        %v8715 = vld [vmem:[%s13 + $0xf0] sm:$0xf]
        %v8716 = vld [vmem:[%s13 + $0xf4] sm:$0xf]
        %v8717 = vld [vmem:[%s13 + $0xf8] sm:$0xf]
        %v8718 = vld [vmem:[%s13 + $0xfc] sm:$0xf]
        %v8719 = vld [vmem:[%s13 + $0x100] sm:$0xf]
        %v8720 = vld [vmem:[%s13 + $0x104] sm:$0xf]
        %v8721 = vld [vmem:[%s13 + $0x108] sm:$0xf]
        %v8722 = vld [vmem:[%s13 + $0x10c] sm:$0xf]
        %v8723 = vld [vmem:[%s13 + $0x110] sm:$0xf]
        %v8724 = vld [vmem:[%s13 + $0x114] sm:$0xf]
        %v8725 = vld [vmem:[%s13 + $0x118] sm:$0xf]
        %v8726 = vld [vmem:[%s13 + $0x11c] sm:$0xf]
        %v8727 = vld [vmem:[%s13 + $0x120] sm:$0xf]
        %v8728 = vld [vmem:[%s13 + $0x124] sm:$0xf]
        %v8729 = vld [vmem:[%s13 + $0x128] sm:$0xf]
        %v8730 = vld [vmem:[%s13 + $0x12c] sm:$0xf]
        %v8731 = vld [vmem:[%s13 + $0x130] sm:$0xf]
        %v8732 = vld [vmem:[%s13 + $0x134] sm:$0xf]
        %v8733 = vld [vmem:[%s13 + $0x138] sm:$0xf]
        %v8734 = vld [vmem:[%s13 + $0x13c] sm:$0xf]
        %v8735 = vld [vmem:[%s14] sm:$0x1]
        %v8737 = vperm.slane %v8735, 0
        %v8819 = vunpack.c.l.b16 %v8655
        %v8820 = vunpack.c.l.b16 %v8656
        %v8821 = vunpack.c.l.b16 %v8657
        %v8822 = vunpack.c.l.b16 %v8658
        %v8823 = vunpack.c.l.b16 %v8659
        %v8824 = vunpack.c.l.b16 %v8660
        %v8825 = vunpack.c.l.b16 %v8661
        %v8826 = vunpack.c.l.b16 %v8662
        %v8827 = vunpack.c.l.b16 %v8663
        %v8828 = vunpack.c.l.b16 %v8664
        %v8829 = vunpack.c.l.b16 %v8665
        %v8830 = vunpack.c.l.b16 %v8666
        %v8831 = vunpack.c.l.b16 %v8667
        %v8832 = vunpack.c.l.b16 %v8668
        %v8833 = vunpack.c.l.b16 %v8669
        %v8834 = vunpack.c.l.b16 %v8670
        %v8835 = vunpack.c.l.b16 %v8671
        %v8836 = vunpack.c.l.b16 %v8672
        %v8837 = vunpack.c.l.b16 %v8673
        %v8838 = vunpack.c.l.b16 %v8674
        %v8839 = vunpack.c.l.b16 %v8675
        %v8840 = vunpack.c.l.b16 %v8676
        %v8841 = vunpack.c.l.b16 %v8677
        %v8842 = vunpack.c.l.b16 %v8678
        %v8843 = vunpack.c.l.b16 %v8679
        %v8844 = vunpack.c.l.b16 %v8680
        %v8845 = vunpack.c.l.b16 %v8681
        %v8846 = vunpack.c.l.b16 %v8682
        %v8847 = vunpack.c.l.b16 %v8683
        %v8848 = vunpack.c.l.b16 %v8684
        %v8849 = vunpack.c.l.b16 %v8685
        %v8850 = vunpack.c.l.b16 %v8686
        %v8851 = vunpack.c.l.b16 %v8687
        %v8852 = vunpack.c.l.b16 %v8688
        %v8853 = vunpack.c.l.b16 %v8689
        %v8854 = vunpack.c.l.b16 %v8690
        %v8855 = vunpack.c.l.b16 %v8691
        %v8856 = vunpack.c.l.b16 %v8692
        %v8857 = vunpack.c.l.b16 %v8693
        %v8858 = vunpack.c.l.b16 %v8694
        %v8859 = vunpack.c.l.b16 %v8695
        %v8860 = vunpack.c.l.b16 %v8696
        %v8861 = vunpack.c.l.b16 %v8697
        %v8862 = vunpack.c.l.b16 %v8698
        %v8863 = vunpack.c.l.b16 %v8699
        %v8864 = vunpack.c.l.b16 %v8700
        %v8865 = vunpack.c.l.b16 %v8701
        %v8866 = vunpack.c.l.b16 %v8702
        %v8867 = vunpack.c.l.b16 %v8703
        %v8868 = vunpack.c.l.b16 %v8704
        %v8869 = vunpack.c.l.b16 %v8705
        %v8870 = vunpack.c.l.b16 %v8706
        %v8871 = vunpack.c.l.b16 %v8707
        %v8872 = vunpack.c.l.b16 %v8708
        %v8873 = vunpack.c.l.b16 %v8709
        %v8874 = vunpack.c.l.b16 %v8710
        %v8875 = vunpack.c.l.b16 %v8711
        %v8876 = vunpack.c.l.b16 %v8712
        %v8877 = vunpack.c.l.b16 %v8713
        %v8878 = vunpack.c.l.b16 %v8714
        %v8879 = vunpack.c.l.b16 %v8715
        %v8880 = vunpack.c.l.b16 %v8716
        %v8881 = vunpack.c.l.b16 %v8717
        %v8882 = vunpack.c.l.b16 %v8718
        %v8883 = vunpack.c.l.b16 %v8719
        %v8884 = vunpack.c.l.b16 %v8720
        %v8885 = vunpack.c.l.b16 %v8721
        %v8886 = vunpack.c.l.b16 %v8722
        %v8887 = vunpack.c.l.b16 %v8723
        %v8888 = vunpack.c.l.b16 %v8724
        %v8889 = vunpack.c.l.b16 %v8725
        %v8890 = vunpack.c.l.b16 %v8726
        %v8891 = vunpack.c.l.b16 %v8727
        %v8892 = vunpack.c.l.b16 %v8728
        %v8893 = vunpack.c.l.b16 %v8729
        %v8894 = vunpack.c.l.b16 %v8730
        %v8895 = vunpack.c.l.b16 %v8731
        %v8896 = vunpack.c.l.b16 %v8732
        %v8897 = vunpack.c.l.b16 %v8733
        %v8898 = vunpack.c.l.b16 %v8734
        %v8899 = vpack.c.b16 %v8820, %v8819
        %v8900 = vpack.c.b16 %v8822, %v8821
        %v8901 = vpack.c.b16 %v8824, %v8823
        %v8902 = vpack.c.b16 %v8826, %v8825
        %v8903 = vpack.c.b16 %v8828, %v8827
        %v8904 = vpack.c.b16 %v8830, %v8829
        %v8905 = vpack.c.b16 %v8832, %v8831
        %v8906 = vpack.c.b16 %v8834, %v8833
        %v8907 = vpack.c.b16 %v8836, %v8835
        %v8908 = vpack.c.b16 %v8838, %v8837
        %v8909 = vpack.c.b16 %v8840, %v8839
        %v8910 = vpack.c.b16 %v8842, %v8841
        %v8911 = vpack.c.b16 %v8844, %v8843
        %v8912 = vpack.c.b16 %v8846, %v8845
        %v8913 = vpack.c.b16 %v8848, %v8847
        %v8914 = vpack.c.b16 %v8850, %v8849
        %v8915 = vpack.c.b16 %v8852, %v8851
        %v8916 = vpack.c.b16 %v8854, %v8853
        %v8917 = vpack.c.b16 %v8856, %v8855
        %v8918 = vpack.c.b16 %v8858, %v8857
        %v8919 = vpack.c.b16 %v8860, %v8859
        %v8920 = vpack.c.b16 %v8862, %v8861
        %v8921 = vpack.c.b16 %v8864, %v8863
        %v8922 = vpack.c.b16 %v8866, %v8865
        %v8923 = vpack.c.b16 %v8868, %v8867
        %v8924 = vpack.c.b16 %v8870, %v8869
        %v8925 = vpack.c.b16 %v8872, %v8871
        %v8926 = vpack.c.b16 %v8874, %v8873
        %v8927 = vpack.c.b16 %v8876, %v8875
        %v8928 = vpack.c.b16 %v8878, %v8877
        %v8929 = vpack.c.b16 %v8880, %v8879
        %v8930 = vpack.c.b16 %v8882, %v8881
        %v8931 = vpack.c.b16 %v8884, %v8883
        %v8932 = vpack.c.b16 %v8886, %v8885
        %v8933 = vpack.c.b16 %v8888, %v8887
        %v8934 = vpack.c.b16 %v8890, %v8889
        %v8935 = vpack.c.b16 %v8892, %v8891
        %v8936 = vpack.c.b16 %v8894, %v8893
        %v8937 = vpack.c.b16 %v8896, %v8895
        %v8938 = vpack.c.b16 %v8898, %v8897
        %8979 = vmatpush.bf16.msra.mxu0 %v8906
        %8980 = vmatpush.bf16.msra.mxu0 %v8905
        %8981 = vmatpush.bf16.msra.mxu0 %v8904
        %8982 = vmatpush.bf16.msra.mxu0 %v8903
        %8983 = vmatpush.bf16.msra.mxu0 %v8902
        %8984 = vmatpush.bf16.msra.mxu0 %v8901
        %8985 = vmatpush.bf16.msra.mxu0 %v8900
        %8986 = vmatpush.bf16.msra.mxu0 %v8899
        %8987 = vmatmul.bf16.gmra.mxu0 %v8640
        %v8988 = vpop.f32.mrf.mxu0
        %v8989 = vadd.f32 %v8737, %v8988
        %v8990 = vpop.f32.mrf.mxu0
        %v8991 = vadd.f32 %v8737, %v8990
        %8992 = vmatmul.bf16.gmra.mxu0 %v8645
        %v8993 = vpop.f32.mrf.mxu0
        %v8994 = vadd.f32 %v8737, %v8993
        %v8995 = vpop.f32.mrf.mxu0
        %v8996 = vadd.f32 %v8737, %v8995
        %8997 = vmatmul.bf16.gmra.mxu0 %v8650
        %v8998 = vpop.f32.mrf.mxu0
        %v8999 = vadd.f32 %v8737, %v8998
        %v9000 = vpop.f32.mrf.mxu0
        %v9001 = vadd.f32 %v8737, %v9000
        %9002 = vdwg.mxu0
        %9003 = vmatpush.bf16.msra.mxu0 %v8914
        %9004 = vmatpush.bf16.msra.mxu0 %v8913
        %9005 = vmatpush.bf16.msra.mxu0 %v8912
        %9006 = vmatpush.bf16.msra.mxu0 %v8911
        %9007 = vmatpush.bf16.msra.mxu0 %v8910
        %9008 = vmatpush.bf16.msra.mxu0 %v8909
        %9009 = vmatpush.bf16.msra.mxu0 %v8908
        %9010 = vmatpush.bf16.msra.mxu0 %v8907
        %9011 = vmatmul.bf16.gmra.mxu0 %v8641
        %v9012 = vpop.f32.mrf.mxu0
        %v9013 = vadd.f32 %v8989, %v9012
        %v9014 = vpop.f32.mrf.mxu0
        %v9015 = vadd.f32 %v8991, %v9014
        %9016 = vmatmul.bf16.gmra.mxu0 %v8646
        %v9017 = vpop.f32.mrf.mxu0
        %v9018 = vadd.f32 %v8994, %v9017
        %v9019 = vpop.f32.mrf.mxu0
        %v9020 = vadd.f32 %v8996, %v9019
        %9021 = vmatmul.bf16.gmra.mxu0 %v8651
        %v9022 = vpop.f32.mrf.mxu0
        %v9023 = vadd.f32 %v8999, %v9022
        %v9024 = vpop.f32.mrf.mxu0
        %v9025 = vadd.f32 %v9001, %v9024
        %9026 = vdwg.mxu0
        %9027 = vmatpush.bf16.msra.mxu0 %v8922
        %9028 = vmatpush.bf16.msra.mxu0 %v8921
        %9029 = vmatpush.bf16.msra.mxu0 %v8920
        %9030 = vmatpush.bf16.msra.mxu0 %v8919
        %9031 = vmatpush.bf16.msra.mxu0 %v8918
        %9032 = vmatpush.bf16.msra.mxu0 %v8917
        %9033 = vmatpush.bf16.msra.mxu0 %v8916
        %9034 = vmatpush.bf16.msra.mxu0 %v8915
        %9035 = vmatmul.bf16.gmra.mxu0 %v8642
        %v9036 = vpop.f32.mrf.mxu0
        %v9037 = vadd.f32 %v9013, %v9036
        %v9038 = vpop.f32.mrf.mxu0
        %v9039 = vadd.f32 %v9015, %v9038
        %9040 = vmatmul.bf16.gmra.mxu0 %v8647
        %v9041 = vpop.f32.mrf.mxu0
        %v9042 = vadd.f32 %v9018, %v9041
        %v9043 = vpop.f32.mrf.mxu0
        %v9044 = vadd.f32 %v9020, %v9043
        %9045 = vmatmul.bf16.gmra.mxu0 %v8652
        %v9046 = vpop.f32.mrf.mxu0
        %v9047 = vadd.f32 %v9023, %v9046
        %v9048 = vpop.f32.mrf.mxu0
        %v9049 = vadd.f32 %v9025, %v9048
        %9050 = vdwg.mxu0
        %9051 = vmatpush.bf16.msra.mxu0 %v8930
        %9052 = vmatpush.bf16.msra.mxu0 %v8929
        %9053 = vmatpush.bf16.msra.mxu0 %v8928
        %9054 = vmatpush.bf16.msra.mxu0 %v8927
        %9055 = vmatpush.bf16.msra.mxu0 %v8926
        %9056 = vmatpush.bf16.msra.mxu0 %v8925
        %9057 = vmatpush.bf16.msra.mxu0 %v8924
        %9058 = vmatpush.bf16.msra.mxu0 %v8923
        %9059 = vmatmul.bf16.gmra.mxu0 %v8643
        %v9060 = vpop.f32.mrf.mxu0
        %v9061 = vadd.f32 %v9037, %v9060
        %v9062 = vpop.f32.mrf.mxu0
        %v9063 = vadd.f32 %v9039, %v9062
        %9064 = vmatmul.bf16.gmra.mxu0 %v8648
        %v9065 = vpop.f32.mrf.mxu0
        %v9066 = vadd.f32 %v9042, %v9065
        %v9067 = vpop.f32.mrf.mxu0
        %v9068 = vadd.f32 %v9044, %v9067
        %9069 = vmatmul.bf16.gmra.mxu0 %v8653
        %v9070 = vpop.f32.mrf.mxu0
        %v9071 = vadd.f32 %v9047, %v9070
        %v9072 = vpop.f32.mrf.mxu0
        %v9073 = vadd.f32 %v9049, %v9072
        %9074 = vdwg.mxu0
        %9075 = vmatpush.bf16.msra.mxu0 %v8938
        %9076 = vmatpush.bf16.msra.mxu0 %v8937
        %9077 = vmatpush.bf16.msra.mxu0 %v8936
        %9078 = vmatpush.bf16.msra.mxu0 %v8935
        %9079 = vmatpush.bf16.msra.mxu0 %v8934
        %9080 = vmatpush.bf16.msra.mxu0 %v8933
        %9081 = vmatpush.bf16.msra.mxu0 %v8932
        %9082 = vmatpush.bf16.msra.mxu0 %v8931
        %9083 = vmatmul.bf16.gmra.mxu0 %v8644
        %v9084 = vpop.f32.mrf.mxu0
        %v9085 = vadd.f32 %v9061, %v9084
        %v9086 = vpop.f32.mrf.mxu0
        %v9087 = vadd.f32 %v9063, %v9086
        %9088 = vmatmul.bf16.gmra.mxu0 %v8649
        %v9089 = vpop.f32.mrf.mxu0
        %v9090 = vadd.f32 %v9066, %v9089
        %v9091 = vpop.f32.mrf.mxu0
        %v9092 = vadd.f32 %v9068, %v9091
        %9093 = vmatmul.bf16.gmra.mxu0 %v8654
        %v9094 = vpop.f32.mrf.mxu0
        %v9095 = vadd.f32 %v9071, %v9094
        %v9096 = vpop.f32.mrf.mxu0
        %v9097 = vadd.f32 %v9073, %v9096
        %9098 = vdwg.mxu0
        %v9099 = vmax.f32 %v9085, 0.0
        %v9100 = vmax.f32 %v9087, 0.0
        %v9101 = vmax.f32 %v9090, 0.0
        %v9102 = vmax.f32 %v9092, 0.0
        %v9103 = vmax.f32 %v9095, 0.0
        %v9104 = vmax.f32 %v9097, 0.0
        %v9105 = vpack.c.bf16 %v9100, %v9099
        %v9106 = vpack.c.bf16 %v9102, %v9101
        %v9107 = vpack.c.bf16 %v9104, %v9103
        %v9108 = vld [vmem:[%s15] sm:$0xf]
        %vm9109 = vcmask 359424
        %v9111 = vsel %vm9109, %v9108, 0
        %v9114 = vsel %vm926, %v9107, 0
        %9116 = vmatpush.bf16.msra.mxu0 0
        %9117 = vmatpush.bf16.msra.mxu0 0
        %9118 = vmatpush.bf16.msra.mxu0 0
        %9119 = vmatpush.bf16.msra.mxu0 0
        %9120 = vmatpush.bf16.msra.mxu0 0
        %9121 = vmatpush.bf16.msra.mxu0 %v9114
        %9122 = vmatpush.bf16.msra.mxu0 %v9106
        %9123 = vmatpush.bf16.msra.mxu0 %v9105
        %9124 = vmatmul.bf16.gmra.mxu0 %v9111
        %v9125 = vpop.f32.mrf.mxu0
        %v9126 = vadd.f32 0.0, %v9125
        %v9127 = vpop.f32.mrf.mxu0
        %9128 = vdwg.mxu0
        %v9129 = vld [vmem:[%s16] sm:$0xf]
        %v9131 = vsel %vm9109, %v9129, 0
        %9133 = vmatpush.bf16.msra.mxu0 0
        %9134 = vmatpush.bf16.msra.mxu0 0
        %9135 = vmatpush.bf16.msra.mxu0 0
        %9136 = vmatpush.bf16.msra.mxu0 0
        %9137 = vmatpush.bf16.msra.mxu0 0
        %9138 = vmatpush.bf16.msra.mxu0 %v9114
        %9139 = vmatpush.bf16.msra.mxu0 %v9106
        %9140 = vmatpush.bf16.msra.mxu0 %v9105
        %9141 = vmatmul.bf16.gmra.mxu0 %v9131
        %v9142 = vpop.f32.mrf.mxu0
        %v9143 = vadd.f32 0.0, %v9142
        %v9144 = vpop.f32.mrf.mxu0
        %9145 = vdwg.mxu0
        %v9146 = vmax.f32 %v9126, %v9143
        %v9147 = vpack.c.bf16 %v9146, %v9146
        %v9148 = vld [vmem:[%s17] sm:$0xf]
        %v9149 = vld [vmem:[%s17 + $0x4] sm:$0xf]
        %v9150 = vld [vmem:[%s17 + $0x8] sm:$0xf]
        %v9151 = vld [vmem:[%s17 + $0xc] sm:$0xf]
        %v9152 = vld [vmem:[%s17 + $0x10] sm:$0xf]
        %v9153 = vld [vmem:[%s17 + $0x14] sm:$0xf]
        %v9154 = vld [vmem:[%s17 + $0x18] sm:$0xf]
        %v9155 = vld [vmem:[%s17 + $0x1c] sm:$0xf]
        %v9156 = vld [vmem:[%s17 + $0x20] sm:$0x7]
        %v9166 = vunpack.c.l.b16 %v9148
        %v9167 = vunpack.c.l.b16 %v9149
        %v9168 = vunpack.c.l.b16 %v9150
        %v9169 = vunpack.c.l.b16 %v9151
        %v9170 = vunpack.c.l.b16 %v9152
        %v9171 = vunpack.c.l.b16 %v9153
        %v9172 = vunpack.c.l.b16 %v9154
        %v9173 = vunpack.c.l.b16 %v9155
        %v9174 = vunpack.c.l.b16 %v9156
        %v9175 = vpack.c.b16 %v9167, %v9166
        %v9176 = vpack.c.b16 %v9169, %v9168
        %v9177 = vpack.c.b16 %v9171, %v9170
        %v9178 = vpack.c.b16 %v9173, %v9172
        %v9179 = vpack.c.b16 %v9174, %v9174
        %vm9184 = vcmask 572416
        %v9186 = vsel %vm9184, %v9147, 0
        %vm9188 = vcmask 1042432
        %v9190 = vsel %vm9188, %v9179, 0
        %9192 = vmatpush.bf16.msra.mxu0 0
        %9193 = vmatpush.bf16.msra.mxu0 0
        %9194 = vmatpush.bf16.msra.mxu0 0
        %9195 = vmatpush.bf16.msra.mxu0 %v9190
        %9196 = vmatpush.bf16.msra.mxu0 %v9178
        %9197 = vmatpush.bf16.msra.mxu0 %v9177
        %9198 = vmatpush.bf16.msra.mxu0 %v9176
        %9199 = vmatpush.bf16.msra.mxu0 %v9175
        %9200 = vmatmul.bf16.gmra.mxu0 %v9186
        %v9201 = vpop.f32.mrf.mxu0
        %v9202 = vadd.f32 0.0, %v9201
        %v9203 = vpop.f32.mrf.mxu0
        %9204 = vdwg.mxu0
        %v9205 = vld [vmem:[%s18] sm:$0xf]
        %v9206 = vld [vmem:[%s18 + $0x4] sm:$0xf]
        %v9207 = vld [vmem:[%s18 + $0x8] sm:$0xf]
        %v9208 = vld [vmem:[%s18 + $0xc] sm:$0xf]
        %v9209 = vld [vmem:[%s18 + $0x10] sm:$0xf]
        %v9210 = vld [vmem:[%s18 + $0x14] sm:$0xf]
        %v9211 = vld [vmem:[%s18 + $0x18] sm:$0xf]
        %v9212 = vld [vmem:[%s18 + $0x1c] sm:$0xf]
        %v9213 = vld [vmem:[%s18 + $0x20] sm:$0x7]
        %v9223 = vunpack.c.l.b16 %v9205
        %v9224 = vunpack.c.l.b16 %v9206
        %v9225 = vunpack.c.l.b16 %v9207
        %v9226 = vunpack.c.l.b16 %v9208
        %v9227 = vunpack.c.l.b16 %v9209
        %v9228 = vunpack.c.l.b16 %v9210
        %v9229 = vunpack.c.l.b16 %v9211
        %v9230 = vunpack.c.l.b16 %v9212
        %v9231 = vunpack.c.l.b16 %v9213
        %v9232 = vpack.c.b16 %v9224, %v9223
        %v9233 = vpack.c.b16 %v9226, %v9225
        %v9234 = vpack.c.b16 %v9228, %v9227
        %v9235 = vpack.c.b16 %v9230, %v9229
        %v9236 = vpack.c.b16 %v9231, %v9231
        %v9242 = vsel %vm9188, %v9236, 0
        %9244 = vmatpush.bf16.msra.mxu0 0
        %9245 = vmatpush.bf16.msra.mxu0 0
        %9246 = vmatpush.bf16.msra.mxu0 0
        %9247 = vmatpush.bf16.msra.mxu0 %v9242
        %9248 = vmatpush.bf16.msra.mxu0 %v9235
        %9249 = vmatpush.bf16.msra.mxu0 %v9234
        %9250 = vmatpush.bf16.msra.mxu0 %v9233
        %9251 = vmatpush.bf16.msra.mxu0 %v9232
        %9252 = vmatmul.bf16.gmra.mxu0 %v9186
        %v9253 = vpop.f32.mrf.mxu0
        %v9254 = vadd.f32 0.0, %v9253
        %v9255 = vpop.f32.mrf.mxu0
        %9256 = vdwg.mxu0
        %v9257 = vmax.f32 %v9202, %v9254
        %v9258 = vpack.c.bf16 %v9257, %v9257
        %v9259 = vld [vmem:[%s19] sm:$0xf]
        %v9260 = vld [vmem:[%s19 + $0x4] sm:$0xf]
        %v9261 = vld [vmem:[%s19 + $0x8] sm:$0xf]
        %v9262 = vld [vmem:[%s19 + $0xc] sm:$0xf]
        %v9263 = vld [vmem:[%s19 + $0x10] sm:$0x3]
        %v9264 = vld [vmem:[%s20] sm:$0x1]
        %v9266 = vperm.slane %v9264, 0
        %v9273 = vunpack.c.l.b16 %v9259
        %v9274 = vunpack.c.l.b16 %v9260
        %v9275 = vunpack.c.l.b16 %v9261
        %v9276 = vunpack.c.l.b16 %v9262
        %v9277 = vunpack.c.l.b16 %v9263
        %v9278 = vpack.c.b16 %v9274, %v9273
        %v9279 = vpack.c.b16 %v9276, %v9275
        %v9280 = vpack.c.b16 %v9277, %v9277
        %vm9283 = vcmask 285696
        %v9285 = vsel %vm9283, %v9258, 0
        %vm9287 = vcmask 1040384
        %vm9288 = vcmask 1041408
        %v9289 = vsel %vm9287, 4294967295, 65535
        %v9290 = vsel %vm9288, %v9289, 0
        %v9292 = vand.u32 %v9280, %v9290
        %9294 = vmatpush.bf16.msra.mxu0 0
        %9295 = vmatpush.bf16.msra.mxu0 0
        %9296 = vmatpush.bf16.msra.mxu0 0
        %9297 = vmatpush.bf16.msra.mxu0 0
        %9298 = vmatpush.bf16.msra.mxu0 0
        %9299 = vmatpush.bf16.msra.mxu0 %v9292
        %9300 = vmatpush.bf16.msra.mxu0 %v9279
        %9301 = vmatpush.bf16.msra.mxu0 %v9278
        %9302 = vmatmul.bf16.gmra.mxu0 %v9285
        %v9303 = vpop.f32.mrf.mxu0
        %v9304 = vadd.f32 %v9266, %v9303
        %v9305 = vpop.f32.mrf.mxu0
        %9306 = vdwg.mxu0
        %v9307 = vmax.f32 %v9304, 0.0
        %v9308 = vpack.c.bf16 %v9307, %v9307
        %v9309 = vld [vmem:[%s21] sm:$0xf]
        %v9310 = vld [vmem:[%s21 + $0x4] sm:$0xf]
        %v9311 = vld [vmem:[%s21 + $0x8] sm:$0xf]
        %v9312 = vld [vmem:[%s21 + $0xc] sm:$0x7]
        %v9313 = vld [vmem:[%s22] sm:$0x1]
        %v9315 = vperm.slane %v9313, 0
        %v9321 = vunpack.c.l.b16 %v9309
        %v9322 = vunpack.c.l.b16 %v9310
        %v9323 = vunpack.c.l.b16 %v9311
        %v9324 = vunpack.c.l.b16 %v9312
        %v9325 = vpack.c.b16 %v9322, %v9321
        %v9326 = vpack.c.b16 %v9324, %v9323
        %vm9328 = vcmask 244736
        %v9330 = vsel %vm9328, %v9308, 0
        %v9333 = vsel %vm830, %v9326, 0
        %9335 = vmatpush.bf16.msra.mxu0 0
        %9336 = vmatpush.bf16.msra.mxu0 0
        %9337 = vmatpush.bf16.msra.mxu0 0
        %9338 = vmatpush.bf16.msra.mxu0 0
        %9339 = vmatpush.bf16.msra.mxu0 0
        %9340 = vmatpush.bf16.msra.mxu0 0
        %9341 = vmatpush.bf16.msra.mxu0 %v9333
        %9342 = vmatpush.bf16.msra.mxu0 %v9325
        %9343 = vmatmul.bf16.gmra.mxu0 %v9330
        %v9344 = vpop.f32.mrf.mxu0
        %v9345 = vadd.f32 %v9315, %v9344
        %v9346 = vpop.f32.mrf.mxu0
        %9347 = vdwg.mxu0
        %v9348 = vmax.f32 %v9345, 0.0
        %v9349 = vpack.c.bf16 %v9348, %v9348
        %v9350 = vld [vmem:[%s23] sm:$0xf]
        %v9351 = vld [vmem:[%s23 + $0x4] sm:$0xf]
        %v9352 = vld [vmem:[%s23 + $0x8] sm:$0x3]
        %v9353 = vld [vmem:[%s24] sm:$0x1]
        %v9355 = vperm.slane %v9353, 0
        %v9360 = vunpack.c.l.b16 %v9350
        %v9361 = vunpack.c.l.b16 %v9351
        %v9362 = vunpack.c.l.b16 %v9352
        %v9363 = vpack.c.b16 %v9361, %v9360
        %v9364 = vpack.c.b16 %v9362, %v9362
        %vm9366 = vcmask 162816
        %v9368 = vsel %vm9366, %v9349, 0
        %v9371 = vsel %vm9288, %v9364, 0
        %9373 = vmatpush.bf16.msra.mxu0 0
        %9374 = vmatpush.bf16.msra.mxu0 0
        %9375 = vmatpush.bf16.msra.mxu0 0
        %9376 = vmatpush.bf16.msra.mxu0 0
        %9377 = vmatpush.bf16.msra.mxu0 0
        %9378 = vmatpush.bf16.msra.mxu0 0
        %9379 = vmatpush.bf16.msra.mxu0 %v9371
        %9380 = vmatpush.bf16.msra.mxu0 %v9363
        %9381 = vmatmul.bf16.gmra.mxu0 %v9368
        %v9382 = vpop.f32.mrf.mxu0
        %v9383 = vadd.f32 %v9355, %v9382
        %v9384 = vpop.f32.mrf.mxu0
        %9385 = vdwg.mxu0
        %vm9386 = vcmask 80896
        %9387 = vst.msk [vmem:[%s758] sm:$0xff] %vm9386, %v9383
        %s9388 = sand.u32 %s577, 1
        %s9389 = scalar_lea.sflag [#allocation3], %s9388
        %s9390 = sand.u32 %s577, 1
        %s9391 = smul.addr %s9390, 8
        %s9392 = scalar_lea.vmem [#allocation2], %s9391
        // Predicated region
        $region121: #{net_forward.1} parent=119 // pred_check
          %p9393 = pneg %p587
        $region122: #{net_forward.1} parent=119 // pred_check_branch
          %9395 = sbr.rel (%p9393) target = $region124
        $region123: #{net_forward.1} parent=119 // pred_region
          %9397 = vsyncadd %s9389, 0
          %s9398 = smul.addr %s39, 8
          %s9399 = scalar_lea.hbm %s25, %s9398
          %s9401 = sshll.u32 %s9392, 4
          %s9402 = int_to_ptr.vmem [resolvable:$true] %s9401
          %s9403 = sshll.u32 %s9399, 4
          %s9404 = int_to_ptr.hbm [resolvable:$true] %s9403
          %9406 = dma.vmem_to_hbm [thread:$0]  %s9402, 128, %s9404, %s9389
        $region124: #{net_forward.1} parent=119 // pred_fallthru
          _
      $region120: #{net_forward.1} parent=5 // pred_fallthru
        _
      %p9407 = scmp.le.s32.totalorder 2, %s34
      // Predicated region
      $region125: #{net_forward.1} parent=5 // pred_check
        %p9408 = pneg %p9407
      $region126: #{net_forward.1} parent=5 // pred_check_branch
        %9410 = sbr.rel (%p9408) target = $region128
      $region127: #{net_forward.1} parent=5 // pred_region
        %s9411 = ssub.s32 %s34, 2
        // Predicated region
        $region129: #{net_forward.1} parent=127 // pred_check
          %p9412 = pneg %p593
        $region130: #{net_forward.1} parent=127 // pred_check_branch
          %9414 = sbr.rel (%p9412) target = $region132
        $region131: #{net_forward.1} parent=127 // pred_region
          %s9415 = sand.u32 %s578, 1
          %s9416 = scalar_lea.sflag [#allocation3], %s9415
          %s9417 = sand.u32 %s578, 1
          %s9418 = smul.addr %s9417, 8
          %s9419 = scalar_lea.vmem [#allocation2], %s9418
          %9421 = dma.done %s9416, 128
        $region132: #{net_forward.1} parent=127 // pred_fallthru
          _
      $region128: #{net_forward.1} parent=5 // pred_fallthru
        _
    $region6: #{net_forward.1} parent=1 // loop_footer
      %s38 = sadd.s32 1, %s34
    $region7: #{net_forward.1} parent=1 // loop_footer_branch
      %33 = sbr.rel target = $region3
    $region8: #{net_forward.1} parent=1 // loop_exit
      _
    %9422 = vsyncpa [#allocation3], 1
    %s9423 = scalar_lea.sflag [#allocation3], 1
    %9424 = vsyncpa %s9423, 1

</llo_original>
